<compile_context>
chip_gen: v7x
topology: tpu7x:2x2x1
jax: 0.10.0
libtpu: 0.0.40
codegen_flags: <defaults>
</compile_context>

<pallas_src>
import jax
import jax.numpy as jnp
from jax import lax
from jax.experimental import pallas as pl
from jax.experimental.pallas import tpu as pltpu

HIDDEN = 400        # self.hidden_size in the PyTorch module
HEAD = 300          # layer_test / layer_test2 output width
OUTP = 128          # lane-dense packing of the two scalar Q outputs


def _round_up(x, m):
    return ((x + m - 1) // m) * m


# ----------------------------------------------------------------------------
# Fused Critic kernel: LSTM recurrence + twin Q heads, single invocation.
#   x_ref   : (T*BP, D)  f32   time-major, batch padded to BP (mult of 8)
#   u_ref   : (BP, A)    f32
#   wih_ref : (D, 4*HP)  bf16  gate order (i, f, g, o), each gate HP wide
#   b_ref   : (1, 4*HP)  f32   b_ih + b_hh combined
#   whh_hbm : (HP, 4*HP) bf16  (HBM, manual DMA)
#   wfh_hbm : (HP, 2*HEADP) bf16 (HBM)  [head1 | head2] first layer, h rows
#   wfu_hbm : (A,  2*HEADP) bf16 (HBM)  [head1 | head2] first layer, u rows
#   bf_ref  : (1, 2*HEADP) f32
#   wo_ref  : (2*HEADP, OUTP) bf16   col 0 = w3, col 1 = w6, rest zero
#   bo_ref  : (1, OUTP)  f32
#   q_ref   : (BP, OUTP) f32   column 0 = q1, column 1 = q2
# scratch:
#   whh_v / wfh_v / wfu_v : VMEM landing buffers for the manual weight DMAs
#   xproj_ref             : (T, BP, 4*HP) f32
#   sem                   : DMA semaphores (3,)
# ----------------------------------------------------------------------------
def critic_kernel(x_ref, u_ref, wih_ref, b_ref, whh_hbm, wfh_hbm, wfu_hbm,
                  bf_ref, wo_ref, bo_ref, q_ref,
                  whh_v, wfh_v, wfu_v, xproj_ref, sem):
    BP = u_ref.shape[0]
    T = x_ref.shape[0] // BP
    HP = whh_v.shape[0]

    # Kick off the big weight DMAs immediately; they overlap with the
    # x-projection (whh) and with the whole recurrence (head weights).
    cp_whh = pltpu.make_async_copy(whh_hbm, whh_v, sem.at[0])
    cp_wfh = pltpu.make_async_copy(wfh_hbm, wfh_v, sem.at[1])
    cp_wfu = pltpu.make_async_copy(wfu_hbm, wfu_v, sem.at[2])
    cp_whh.start()
    cp_wfh.start()
    cp_wfu.start()

    # Input projection for ALL time steps at once (off the serial path),
    # bias folded in so the recurrence only adds h @ Whh.  bf16 operands,
    # f32 accumulation.
    xproj = (jnp.dot(x_ref[...].astype(jnp.bfloat16), wih_ref[...],
                     preferred_element_type=jnp.float32)
             + b_ref[...])                                   # (T*BP, 4*HP) f32
    xproj_ref[...] = xproj.reshape(T, BP, 4 * HP)

    # Need whh before the first recurrence step.
    cp_whh.wait()

    def sigmoid_via_tanh(z):
        # sigmoid(z) == 0.5 * tanh(0.5 * z) + 0.5  -> single EUP op per gate.
        return 0.5 * jnp.tanh(0.5 * z) + 0.5

    def step(t, carry):
        h, c = carry
        gates = xproj_ref[t] + jnp.dot(
            h.astype(jnp.bfloat16), whh_v[...],
            preferred_element_type=jnp.float32)              # (BP, 4*HP) f32
        i = sigmoid_via_tanh(gates[:, 0 * HP:1 * HP])
        f = sigmoid_via_tanh(gates[:, 1 * HP:2 * HP])
        g = jnp.tanh(gates[:, 2 * HP:3 * HP])
        o = sigmoid_via_tanh(gates[:, 3 * HP:4 * HP])
        c = f * c + i * g
        h = o * jnp.tanh(c)
        return (h, c)

    h, _ = lax.fori_loop(
        0, T, step,
        (jnp.zeros((BP, HP), jnp.float32),
         jnp.zeros((BP, HP), jnp.float32)),
        unroll=True)

    # Twin Q heads, fused: hh[:, :HEADP] is head 1, hh[:, HEADP:] is head 2.
    cp_wfh.wait()
    cp_wfu.wait()
    hh = jnp.maximum(
        jnp.dot(h.astype(jnp.bfloat16), wfh_v[...],
                preferred_element_type=jnp.float32)
        + jnp.dot(u_ref[...].astype(jnp.bfloat16), wfu_v[...],
                  preferred_element_type=jnp.float32)
        + bf_ref[...],
        0.0)                                                 # (BP, 2*HEADP)
    q_ref[...] = (jnp.dot(hh.astype(jnp.bfloat16), wo_ref[...],
                          preferred_element_type=jnp.float32)
                  + bo_ref[...])                             # (BP, OUTP)


# ----------------------------------------------------------------------------
# Wrapper: batch padding / time-major flattening in plain JAX (tiny glue),
# one pallas_call, split q1/q2 at the end.
# ----------------------------------------------------------------------------
@jax.jit
def critic_forward(packed, x, u):
    B, T, D = x.shape
    BP = _round_up(B, 8)
    x_p = jnp.pad(x.astype(jnp.float32), ((0, BP - B), (0, 0), (0, 0)))
    u_p = jnp.pad(u.astype(jnp.float32), ((0, BP - B), (0, 0)))
    x2d = jnp.transpose(x_p, (1, 0, 2)).reshape(T * BP, D)   # time-major rows

    HP = packed["whh"].shape[0]
    vmem = pl.BlockSpec(memory_space=pltpu.MemorySpace.VMEM)
    hbm = pl.BlockSpec(memory_space=pl.ANY)

    q = pl.pallas_call(
        critic_kernel,
        out_shape=jax.ShapeDtypeStruct((BP, OUTP), jnp.float32),
        in_specs=[vmem, vmem,        # x2d, u
                  vmem, vmem,        # wih, b
                  hbm, hbm, hbm,     # whh, wfh, wfu (manual DMA)
                  vmem, vmem, vmem],  # bf, wo, bo
        out_specs=vmem,
        scratch_shapes=[
            pltpu.VMEM(packed["whh"].shape, jnp.bfloat16),   # whh_v
            pltpu.VMEM(packed["wfh"].shape, jnp.bfloat16),   # wfh_v
            pltpu.VMEM(packed["wfu"].shape, jnp.bfloat16),   # wfu_v
            pltpu.VMEM((T, BP, 4 * HP), jnp.float32),        # xproj
            pltpu.SemaphoreType.DMA((3,)),
        ],
        compiler_params=pltpu.CompilerParams(
            vmem_limit_bytes=32 * 1024 * 1024),
    )(x2d, u_p,
      packed["wih"], packed["b"],
      packed["whh"], packed["wfh"], packed["wfu"],
      packed["bf"], packed["wo"], packed["bo"])

    return q[:B, 0:1], q[:B, 1:2]


# ----------------------------------------------------------------------------
# Parameter construction (deterministic, synthetic — mirrors __init__ shapes;
# biases init to 0.0 exactly like the PyTorch module).
# Unpadded / per-gate f32 layout; `pack_params` pads + fuses + casts to bf16.
# ----------------------------------------------------------------------------
def init_params(key, state_dim, action_dim, hidden=HIDDEN, head=HEAD):
    D = state_dim[1]
    A = action_dim
    ks = jax.random.split(key, 6)

    def kaiming(k, shape, fan_in):
        return (jax.random.normal(k, shape, jnp.float32)
                * jnp.sqrt(2.0 / fan_in)).astype(jnp.float32)

    return {
        # LSTM weights, per-gate (i, f, g, o), pre-transposed for x @ W
        "wih": kaiming(ks[0], (4, D, hidden), D),
        "whh": kaiming(ks[1], (4, hidden, hidden), hidden),
        "b":   jnp.zeros((4, 1, hidden), jnp.float32),   # b_ih + b_hh, init 0
        # head 1
        "w1": kaiming(ks[2], (hidden + A, head), hidden + A),
        "b1": jnp.zeros((1, head), jnp.float32),
        "w3": kaiming(ks[3], (head, 1), head),
        "b3": jnp.zeros((1, 1), jnp.float32),
        # head 2
        "w2": kaiming(ks[4], (hidden + A, head), hidden + A),
        "b2": jnp.zeros((1, head), jnp.float32),
        "w6": kaiming(ks[5], (head, 1), head),
        "b6": jnp.zeros((1, 1), jnp.float32),
    }


def pack_params(params):
    """Pad to lane multiples, fuse gates / heads, cast matmul weights to bf16."""
    wih, whh, b = params["wih"], params["whh"], params["b"]
    w1, b1, w3, b3 = params["w1"], params["b1"], params["w3"], params["b3"]
    w2, b2, w6, b6 = params["w2"], params["b2"], params["w6"], params["b6"]

    D, H = wih.shape[1], wih.shape[2]
    head = w1.shape[1]
    A = w1.shape[0] - H
    HP = _round_up(H, 128)        # 400 -> 512
    HEADP = _round_up(head, 128)  # 300 -> 384

    wih_p = jnp.zeros((D, 4 * HP), jnp.float32)
    whh_p = jnp.zeros((HP, 4 * HP), jnp.float32)
    b_p = jnp.zeros((1, 4 * HP), jnp.float32)
    for k in range(4):
        wih_p = wih_p.at[:, k * HP:k * HP + H].set(wih[k])
        whh_p = whh_p.at[:H, k * HP:k * HP + H].set(whh[k])
        b_p = b_p.at[:, k * HP:k * HP + H].set(b[k])

    wfh = jnp.zeros((HP, 2 * HEADP), jnp.float32)
    wfu = jnp.zeros((A, 2 * HEADP), jnp.float32)
    bf = jnp.zeros((1, 2 * HEADP), jnp.float32)
    wfh = wfh.at[:H, :head].set(w1[:H]).at[:H, HEADP:HEADP + head].set(w2[:H])
    wfu = wfu.at[:, :head].set(w1[H:]).at[:, HEADP:HEADP + head].set(w2[H:])
    bf = bf.at[:, :head].set(b1).at[:, HEADP:HEADP + head].set(b2)

    wo = jnp.zeros((2 * HEADP, OUTP), jnp.float32)
    wo = wo.at[:head, 0:1].set(w3).at[HEADP:HEADP + head, 1:2].set(w6)
    bo = jnp.zeros((1, OUTP), jnp.float32)
    bo = bo.at[:, 0:1].set(b3).at[:, 1:2].set(b6)

    # bf16 for MXU operands, f32 for biases (added post-accumulation).
    return {"wih": wih_p.astype(jnp.bfloat16),
            "whh": whh_p.astype(jnp.bfloat16),
            "b": b_p,
            "wfh": wfh.astype(jnp.bfloat16),
            "wfu": wfu.astype(jnp.bfloat16),
            "bf": bf,
            "wo": wo.astype(jnp.bfloat16),
            "bo": bo}


# ----------------------------------------------------------------------------
# Pure-JAX f32 reference on the UNPADDED parameters (correctness check).
# ----------------------------------------------------------------------------
def critic_forward_ref(params, x, u):
    B, T, D = x.shape
    H = params["whh"].shape[-1]
    wih, whh, b = params["wih"], params["whh"], params["b"]

    def step(carry, x_t):
        h, c = carry
        i = jax.nn.sigmoid(x_t @ wih[0] + h @ whh[0] + b[0])
        f = jax.nn.sigmoid(x_t @ wih[1] + h @ whh[1] + b[1])
        g = jnp.tanh(x_t @ wih[2] + h @ whh[2] + b[2])
        o = jax.nn.sigmoid(x_t @ wih[3] + h @ whh[3] + b[3])
        c = f * c + i * g
        h = o * jnp.tanh(c)
        return (h, c), None

    (h, _), _ = lax.scan(step,
                         (jnp.zeros((B, H), jnp.float32),
                          jnp.zeros((B, H), jnp.float32)),
                         jnp.transpose(x, (1, 0, 2)))
    xu = jnp.concatenate([h, u], axis=1)
    h1 = jnp.maximum(xu @ params["w1"] + params["b1"], 0.0)
    q1 = h1 @ params["w3"] + params["b3"]
    h2 = jnp.maximum(xu @ params["w2"] + params["b2"], 0.0)
    q2 = h2 @ params["w6"] + params["b6"]
    return q1, q2


if __name__ == "__main__":
    B, T, D, A = 2, 8, 8, 4       # state_dim=(8, 8), action_dim=4
    key = jax.random.PRNGKey(0)
    kp, kx, ku = jax.random.split(key, 3)

    params = init_params(kp, state_dim=(T, D), action_dim=A)
    packed = pack_params(params)
    x = jax.random.normal(kx, (B, T, D), jnp.float32)
    u = jax.random.normal(ku, (B, A), jnp.float32)

    q1, q2 = critic_forward(packed, x, u)
    jax.block_until_ready((q1, q2))

    r1, r2 = critic_forward_ref(params, x, u)
    assert q1.shape == (B, 1) and q2.shape == (B, 1)
    # bf16 MXU operands (f32 accumulation / state) -> looser tolerance than
    # the all-f32 version.
    assert jnp.allclose(q1, r1, rtol=2e-2, atol=2e-2), (q1, r1)
    assert jnp.allclose(q2, r2, rtol=2e-2, atol=2e-2), (q2, r2)

    print("KERNEL_OK")
</pallas_src>

<mosaic_0001>
module attributes {stable_mosaic.version = 11 : i64} {
  func.func @critic_kernel(%arg0: memref<64x8xf32, #tpu.memory_space<vmem>>, %arg1: memref<8x4xf32, #tpu.memory_space<vmem>>, %arg2: memref<8x2048xbf16, #tpu.memory_space<vmem>>, %arg3: memref<1x2048xf32, #tpu.memory_space<vmem>>, %arg4: memref<512x2048xbf16, #tpu.memory_space<any>>, %arg5: memref<512x768xbf16, #tpu.memory_space<any>>, %arg6: memref<4x768xbf16, #tpu.memory_space<any>>, %arg7: memref<1x768xf32, #tpu.memory_space<vmem>>, %arg8: memref<768x128xbf16, #tpu.memory_space<vmem>>, %arg9: memref<1x128xf32, #tpu.memory_space<vmem>>, %arg10: memref<8x128xf32, #tpu.memory_space<vmem>>, %arg11: memref<512x2048xbf16, #tpu.memory_space<vmem>>, %arg12: memref<512x768xbf16, #tpu.memory_space<vmem>>, %arg13: memref<4x768xbf16, #tpu.memory_space<vmem>>, %arg14: memref<8x8x2048xf32, #tpu.memory_space<vmem>>, %arg15: memref<3x!tpu.dma_semaphore, #tpu.memory_space<semaphore_mem>>) attributes {dimension_semantics = [], scalar_prefetch = 0 : i64, scratch_operands = 5 : i64, tpu.core_type = #tpu.core_type<tc>} {
    %c0_i32 = arith.constant 0 : i32
    %0 = tpu.memref_slice %arg15[%c0_i32] : memref<3x!tpu.dma_semaphore, #tpu.memory_space<semaphore_mem>> -> memref<1x!tpu.dma_semaphore, #tpu.memory_space<semaphore_mem>>
    %1 = tpu.memref_squeeze %0 : memref<1x!tpu.dma_semaphore, #tpu.memory_space<semaphore_mem>> -> memref<!tpu.dma_semaphore, #tpu.memory_space<semaphore_mem>>
    tpu.enqueue_dma source(%arg4 : memref<512x2048xbf16, #tpu.memory_space<any>>) target(%arg11 : memref<512x2048xbf16, #tpu.memory_space<vmem>>) target_semaphore(%1 : memref<!tpu.dma_semaphore, #tpu.memory_space<semaphore_mem>>)
    %c1_i32 = arith.constant 1 : i32
    %2 = tpu.memref_slice %arg15[%c1_i32] : memref<3x!tpu.dma_semaphore, #tpu.memory_space<semaphore_mem>> -> memref<1x!tpu.dma_semaphore, #tpu.memory_space<semaphore_mem>>
    %3 = tpu.memref_squeeze %2 : memref<1x!tpu.dma_semaphore, #tpu.memory_space<semaphore_mem>> -> memref<!tpu.dma_semaphore, #tpu.memory_space<semaphore_mem>>
    tpu.enqueue_dma source(%arg5 : memref<512x768xbf16, #tpu.memory_space<any>>) target(%arg12 : memref<512x768xbf16, #tpu.memory_space<vmem>>) target_semaphore(%3 : memref<!tpu.dma_semaphore, #tpu.memory_space<semaphore_mem>>)
    %c2_i32 = arith.constant 2 : i32
    %4 = tpu.memref_slice %arg15[%c2_i32] : memref<3x!tpu.dma_semaphore, #tpu.memory_space<semaphore_mem>> -> memref<1x!tpu.dma_semaphore, #tpu.memory_space<semaphore_mem>>
    %5 = tpu.memref_squeeze %4 : memref<1x!tpu.dma_semaphore, #tpu.memory_space<semaphore_mem>> -> memref<!tpu.dma_semaphore, #tpu.memory_space<semaphore_mem>>
    tpu.enqueue_dma source(%arg6 : memref<4x768xbf16, #tpu.memory_space<any>>) target(%arg13 : memref<4x768xbf16, #tpu.memory_space<vmem>>) target_semaphore(%5 : memref<!tpu.dma_semaphore, #tpu.memory_space<semaphore_mem>>)
    %c0 = arith.constant 0 : index
    %c0_0 = arith.constant 0 : index
    %6 = vector.load %arg0[%c0, %c0_0] : memref<64x8xf32, #tpu.memory_space<vmem>>, vector<64x8xf32>
    %7 = arith.truncf %6 : vector<64x8xf32> to vector<64x8xbf16>
    %c0_1 = arith.constant 0 : index
    %c0_2 = arith.constant 0 : index
    %8 = vector.load %arg2[%c0_1, %c0_2] : memref<8x2048xbf16, #tpu.memory_space<vmem>>, vector<8x2048xbf16>
    %cst = arith.constant dense<0.000000e+00> : vector<64x2048xf32>
    %9 = tpu.matmul %7, %8, %cst {dimension_numbers = #tpu.dot_dimension_numbers<[1], [0], [0], [1], [0, 0, 1, 1], [], []>} : vector<64x8xbf16>, vector<8x2048xbf16>, vector<64x2048xf32> -> vector<64x2048xf32>
    %c0_3 = arith.constant 0 : index
    %c0_4 = arith.constant 0 : index
    %10 = vector.load %arg3[%c0_3, %c0_4] : memref<1x2048xf32, #tpu.memory_space<vmem>>, vector<1x2048xf32>
    %11 = vector.broadcast %10 : vector<1x2048xf32> to vector<64x2048xf32>
    %12 = arith.addf %9, %11 : vector<64x2048xf32>
    %13 = vector.shape_cast %12 : vector<64x2048xf32> to vector<8x8x2048xf32>
    %c0_5 = arith.constant 0 : index
    %c0_6 = arith.constant 0 : index
    %c0_7 = arith.constant 0 : index
    %14 = vector.load %arg14[%c0_5, %c0_6, %c0_7] : memref<8x8x2048xf32, #tpu.memory_space<vmem>>, vector<8x8x2048xf32>
    tpu.vector_store %arg14[%c0_5, %c0_6, %c0_7], %13 {strides = array<i32>} : memref<8x8x2048xf32, #tpu.memory_space<vmem>>, vector<8x8x2048xf32>,
    %c0_i32_8 = arith.constant 0 : i32
    %15 = tpu.memref_slice %arg15[%c0_i32_8] : memref<3x!tpu.dma_semaphore, #tpu.memory_space<semaphore_mem>> -> memref<1x!tpu.dma_semaphore, #tpu.memory_space<semaphore_mem>>
    %16 = tpu.memref_squeeze %15 : memref<1x!tpu.dma_semaphore, #tpu.memory_space<semaphore_mem>> -> memref<!tpu.dma_semaphore, #tpu.memory_space<semaphore_mem>>
    tpu.wait_dma2 semaphore(%16 : memref<!tpu.dma_semaphore, #tpu.memory_space<semaphore_mem>>) src(%arg4 : memref<512x2048xbf16, #tpu.memory_space<any>>) dst(%arg11 : memref<512x2048xbf16, #tpu.memory_space<vmem>>)
    %cst_9 = arith.constant 0.000000e+00 : f32
    %17 = vector.broadcast %cst_9 : f32 to vector<8x512xf32>
    %cst_10 = arith.constant 0.000000e+00 : f32
    %18 = vector.broadcast %cst_10 : f32 to vector<8x512xf32>
    %c0_i32_11 = arith.constant 0 : i32
    %19 = arith.index_cast %c0_i32_11 : i32 to index
    %c0_12 = arith.constant 0 : index
    %c0_13 = arith.constant 0 : index
    %20 = vector.load %arg14[%19, %c0_12, %c0_13] : memref<8x8x2048xf32, #tpu.memory_space<vmem>>, vector<1x8x2048xf32>
    %21 = vector.shape_cast %20 : vector<1x8x2048xf32> to vector<8x2048xf32>
    %22 = arith.truncf %17 : vector<8x512xf32> to vector<8x512xbf16>
    %c0_14 = arith.constant 0 : index
    %c0_15 = arith.constant 0 : index
    %23 = vector.load %arg11[%c0_14, %c0_15] : memref<512x2048xbf16, #tpu.memory_space<vmem>>, vector<512x2048xbf16>
    %cst_16 = arith.constant dense<0.000000e+00> : vector<8x2048xf32>
    %24 = tpu.matmul %22, %23, %cst_16 {dimension_numbers = #tpu.dot_dimension_numbers<[1], [0], [0], [1], [0, 0, 1, 1], [], []>} : vector<8x512xbf16>, vector<512x2048xbf16>, vector<8x2048xf32> -> vector<8x2048xf32>
    %25 = arith.addf %21, %24 : vector<8x2048xf32>
    %26 = vector.extract_strided_slice %25 {offsets = [0, 0], sizes = [8, 512], strides = [1, 1]} : vector<8x2048xf32> to vector<8x512xf32>
    %cst_17 = arith.constant 5.000000e-01 : f32
    %27 = vector.broadcast %cst_17 : f32 to vector<8x512xf32>
    %28 = arith.mulf %27, %26 : vector<8x512xf32>
    %29 = math.tanh %28 : vector<8x512xf32>
    %cst_18 = arith.constant 5.000000e-01 : f32
    %30 = vector.broadcast %cst_18 : f32 to vector<8x512xf32>
    %31 = arith.mulf %30, %29 : vector<8x512xf32>
    %cst_19 = arith.constant 5.000000e-01 : f32
    %32 = vector.broadcast %cst_19 : f32 to vector<8x512xf32>
    %33 = arith.addf %31, %32 : vector<8x512xf32>
    %34 = vector.extract_strided_slice %25 {offsets = [0, 512], sizes = [8, 512], strides = [1, 1]} : vector<8x2048xf32> to vector<8x512xf32>
    %cst_20 = arith.constant 5.000000e-01 : f32
    %35 = vector.broadcast %cst_20 : f32 to vector<8x512xf32>
    %36 = arith.mulf %35, %34 : vector<8x512xf32>
    %37 = math.tanh %36 : vector<8x512xf32>
    %cst_21 = arith.constant 5.000000e-01 : f32
    %38 = vector.broadcast %cst_21 : f32 to vector<8x512xf32>
    %39 = arith.mulf %38, %37 : vector<8x512xf32>
    %cst_22 = arith.constant 5.000000e-01 : f32
    %40 = vector.broadcast %cst_22 : f32 to vector<8x512xf32>
    %41 = arith.addf %39, %40 : vector<8x512xf32>
    %42 = vector.extract_strided_slice %25 {offsets = [0, 1024], sizes = [8, 512], strides = [1, 1]} : vector<8x2048xf32> to vector<8x512xf32>
    %43 = math.tanh %42 : vector<8x512xf32>
    %44 = vector.extract_strided_slice %25 {offsets = [0, 1536], sizes = [8, 512], strides = [1, 1]} : vector<8x2048xf32> to vector<8x512xf32>
    %cst_23 = arith.constant 5.000000e-01 : f32
    %45 = vector.broadcast %cst_23 : f32 to vector<8x512xf32>
    %46 = arith.mulf %45, %44 : vector<8x512xf32>
    %47 = math.tanh %46 : vector<8x512xf32>
    %cst_24 = arith.constant 5.000000e-01 : f32
    %48 = vector.broadcast %cst_24 : f32 to vector<8x512xf32>
    %49 = arith.mulf %48, %47 : vector<8x512xf32>
    %cst_25 = arith.constant 5.000000e-01 : f32
    %50 = vector.broadcast %cst_25 : f32 to vector<8x512xf32>
    %51 = arith.addf %49, %50 : vector<8x512xf32>
    %52 = arith.mulf %41, %18 : vector<8x512xf32>
    %53 = arith.mulf %33, %43 : vector<8x512xf32>
    %54 = arith.addf %52, %53 : vector<8x512xf32>
    %55 = math.tanh %54 : vector<8x512xf32>
    %56 = arith.mulf %51, %55 : vector<8x512xf32>
    %c1_i32_26 = arith.constant 1 : i32
    %57 = arith.index_cast %c1_i32_26 : i32 to index
    %c0_27 = arith.constant 0 : index
    %c0_28 = arith.constant 0 : index
    %58 = vector.load %arg14[%57, %c0_27, %c0_28] : memref<8x8x2048xf32, #tpu.memory_space<vmem>>, vector<1x8x2048xf32>
    %59 = vector.shape_cast %58 : vector<1x8x2048xf32> to vector<8x2048xf32>
    %60 = arith.truncf %56 : vector<8x512xf32> to vector<8x512xbf16>
    %c0_29 = arith.constant 0 : index
    %c0_30 = arith.constant 0 : index
    %61 = vector.load %arg11[%c0_29, %c0_30] : memref<512x2048xbf16, #tpu.memory_space<vmem>>, vector<512x2048xbf16>
    %cst_31 = arith.constant dense<0.000000e+00> : vector<8x2048xf32>
    %62 = tpu.matmul %60, %61, %cst_31 {dimension_numbers = #tpu.dot_dimension_numbers<[1], [0], [0], [1], [0, 0, 1, 1], [], []>} : vector<8x512xbf16>, vector<512x2048xbf16>, vector<8x2048xf32> -> vector<8x2048xf32>
    %63 = arith.addf %59, %62 : vector<8x2048xf32>
    %64 = vector.extract_strided_slice %63 {offsets = [0, 0], sizes = [8, 512], strides = [1, 1]} : vector<8x2048xf32> to vector<8x512xf32>
    %cst_32 = arith.constant 5.000000e-01 : f32
    %65 = vector.broadcast %cst_32 : f32 to vector<8x512xf32>
    %66 = arith.mulf %65, %64 : vector<8x512xf32>
    %67 = math.tanh %66 : vector<8x512xf32>
    %cst_33 = arith.constant 5.000000e-01 : f32
    %68 = vector.broadcast %cst_33 : f32 to vector<8x512xf32>
    %69 = arith.mulf %68, %67 : vector<8x512xf32>
    %cst_34 = arith.constant 5.000000e-01 : f32
    %70 = vector.broadcast %cst_34 : f32 to vector<8x512xf32>
    %71 = arith.addf %69, %70 : vector<8x512xf32>
    %72 = vector.extract_strided_slice %63 {offsets = [0, 512], sizes = [8, 512], strides = [1, 1]} : vector<8x2048xf32> to vector<8x512xf32>
    %cst_35 = arith.constant 5.000000e-01 : f32
    %73 = vector.broadcast %cst_35 : f32 to vector<8x512xf32>
    %74 = arith.mulf %73, %72 : vector<8x512xf32>
    %75 = math.tanh %74 : vector<8x512xf32>
    %cst_36 = arith.constant 5.000000e-01 : f32
    %76 = vector.broadcast %cst_36 : f32 to vector<8x512xf32>
    %77 = arith.mulf %76, %75 : vector<8x512xf32>
    %cst_37 = arith.constant 5.000000e-01 : f32
    %78 = vector.broadcast %cst_37 : f32 to vector<8x512xf32>
    %79 = arith.addf %77, %78 : vector<8x512xf32>
    %80 = vector.extract_strided_slice %63 {offsets = [0, 1024], sizes = [8, 512], strides = [1, 1]} : vector<8x2048xf32> to vector<8x512xf32>
    %81 = math.tanh %80 : vector<8x512xf32>
    %82 = vector.extract_strided_slice %63 {offsets = [0, 1536], sizes = [8, 512], strides = [1, 1]} : vector<8x2048xf32> to vector<8x512xf32>
    %cst_38 = arith.constant 5.000000e-01 : f32
    %83 = vector.broadcast %cst_38 : f32 to vector<8x512xf32>
    %84 = arith.mulf %83, %82 : vector<8x512xf32>
    %85 = math.tanh %84 : vector<8x512xf32>
    %cst_39 = arith.constant 5.000000e-01 : f32
    %86 = vector.broadcast %cst_39 : f32 to vector<8x512xf32>
    %87 = arith.mulf %86, %85 : vector<8x512xf32>
    %cst_40 = arith.constant 5.000000e-01 : f32
    %88 = vector.broadcast %cst_40 : f32 to vector<8x512xf32>
    %89 = arith.addf %87, %88 : vector<8x512xf32>
    %90 = arith.mulf %79, %54 : vector<8x512xf32>
    %91 = arith.mulf %71, %81 : vector<8x512xf32>
    %92 = arith.addf %90, %91 : vector<8x512xf32>
    %93 = math.tanh %92 : vector<8x512xf32>
    %94 = arith.mulf %89, %93 : vector<8x512xf32>
    %c2_i32_41 = arith.constant 2 : i32
    %95 = arith.index_cast %c2_i32_41 : i32 to index
    %c0_42 = arith.constant 0 : index
    %c0_43 = arith.constant 0 : index
    %96 = vector.load %arg14[%95, %c0_42, %c0_43] : memref<8x8x2048xf32, #tpu.memory_space<vmem>>, vector<1x8x2048xf32>
    %97 = vector.shape_cast %96 : vector<1x8x2048xf32> to vector<8x2048xf32>
    %98 = arith.truncf %94 : vector<8x512xf32> to vector<8x512xbf16>
    %c0_44 = arith.constant 0 : index
    %c0_45 = arith.constant 0 : index
    %99 = vector.load %arg11[%c0_44, %c0_45] : memref<512x2048xbf16, #tpu.memory_space<vmem>>, vector<512x2048xbf16>
    %cst_46 = arith.constant dense<0.000000e+00> : vector<8x2048xf32>
    %100 = tpu.matmul %98, %99, %cst_46 {dimension_numbers = #tpu.dot_dimension_numbers<[1], [0], [0], [1], [0, 0, 1, 1], [], []>} : vector<8x512xbf16>, vector<512x2048xbf16>, vector<8x2048xf32> -> vector<8x2048xf32>
    %101 = arith.addf %97, %100 : vector<8x2048xf32>
    %102 = vector.extract_strided_slice %101 {offsets = [0, 0], sizes = [8, 512], strides = [1, 1]} : vector<8x2048xf32> to vector<8x512xf32>
    %cst_47 = arith.constant 5.000000e-01 : f32
    %103 = vector.broadcast %cst_47 : f32 to vector<8x512xf32>
    %104 = arith.mulf %103, %102 : vector<8x512xf32>
    %105 = math.tanh %104 : vector<8x512xf32>
    %cst_48 = arith.constant 5.000000e-01 : f32
    %106 = vector.broadcast %cst_48 : f32 to vector<8x512xf32>
    %107 = arith.mulf %106, %105 : vector<8x512xf32>
    %cst_49 = arith.constant 5.000000e-01 : f32
    %108 = vector.broadcast %cst_49 : f32 to vector<8x512xf32>
    %109 = arith.addf %107, %108 : vector<8x512xf32>
    %110 = vector.extract_strided_slice %101 {offsets = [0, 512], sizes = [8, 512], strides = [1, 1]} : vector<8x2048xf32> to vector<8x512xf32>
    %cst_50 = arith.constant 5.000000e-01 : f32
    %111 = vector.broadcast %cst_50 : f32 to vector<8x512xf32>
    %112 = arith.mulf %111, %110 : vector<8x512xf32>
    %113 = math.tanh %112 : vector<8x512xf32>
    %cst_51 = arith.constant 5.000000e-01 : f32
    %114 = vector.broadcast %cst_51 : f32 to vector<8x512xf32>
    %115 = arith.mulf %114, %113 : vector<8x512xf32>
    %cst_52 = arith.constant 5.000000e-01 : f32
    %116 = vector.broadcast %cst_52 : f32 to vector<8x512xf32>
    %117 = arith.addf %115, %116 : vector<8x512xf32>
    %118 = vector.extract_strided_slice %101 {offsets = [0, 1024], sizes = [8, 512], strides = [1, 1]} : vector<8x2048xf32> to vector<8x512xf32>
    %119 = math.tanh %118 : vector<8x512xf32>
    %120 = vector.extract_strided_slice %101 {offsets = [0, 1536], sizes = [8, 512], strides = [1, 1]} : vector<8x2048xf32> to vector<8x512xf32>
    %cst_53 = arith.constant 5.000000e-01 : f32
    %121 = vector.broadcast %cst_53 : f32 to vector<8x512xf32>
    %122 = arith.mulf %121, %120 : vector<8x512xf32>
    %123 = math.tanh %122 : vector<8x512xf32>
    %cst_54 = arith.constant 5.000000e-01 : f32
    %124 = vector.broadcast %cst_54 : f32 to vector<8x512xf32>
    %125 = arith.mulf %124, %123 : vector<8x512xf32>
    %cst_55 = arith.constant 5.000000e-01 : f32
    %126 = vector.broadcast %cst_55 : f32 to vector<8x512xf32>
    %127 = arith.addf %125, %126 : vector<8x512xf32>
    %128 = arith.mulf %117, %92 : vector<8x512xf32>
    %129 = arith.mulf %109, %119 : vector<8x512xf32>
    %130 = arith.addf %128, %129 : vector<8x512xf32>
    %131 = math.tanh %130 : vector<8x512xf32>
    %132 = arith.mulf %127, %131 : vector<8x512xf32>
    %c3_i32 = arith.constant 3 : i32
    %133 = arith.index_cast %c3_i32 : i32 to index
    %c0_56 = arith.constant 0 : index
    %c0_57 = arith.constant 0 : index
    %134 = vector.load %arg14[%133, %c0_56, %c0_57] : memref<8x8x2048xf32, #tpu.memory_space<vmem>>, vector<1x8x2048xf32>
    %135 = vector.shape_cast %134 : vector<1x8x2048xf32> to vector<8x2048xf32>
    %136 = arith.truncf %132 : vector<8x512xf32> to vector<8x512xbf16>
    %c0_58 = arith.constant 0 : index
    %c0_59 = arith.constant 0 : index
    %137 = vector.load %arg11[%c0_58, %c0_59] : memref<512x2048xbf16, #tpu.memory_space<vmem>>, vector<512x2048xbf16>
    %cst_60 = arith.constant dense<0.000000e+00> : vector<8x2048xf32>
    %138 = tpu.matmul %136, %137, %cst_60 {dimension_numbers = #tpu.dot_dimension_numbers<[1], [0], [0], [1], [0, 0, 1, 1], [], []>} : vector<8x512xbf16>, vector<512x2048xbf16>, vector<8x2048xf32> -> vector<8x2048xf32>
    %139 = arith.addf %135, %138 : vector<8x2048xf32>
    %140 = vector.extract_strided_slice %139 {offsets = [0, 0], sizes = [8, 512], strides = [1, 1]} : vector<8x2048xf32> to vector<8x512xf32>
    %cst_61 = arith.constant 5.000000e-01 : f32
    %141 = vector.broadcast %cst_61 : f32 to vector<8x512xf32>
    %142 = arith.mulf %141, %140 : vector<8x512xf32>
    %143 = math.tanh %142 : vector<8x512xf32>
    %cst_62 = arith.constant 5.000000e-01 : f32
    %144 = vector.broadcast %cst_62 : f32 to vector<8x512xf32>
    %145 = arith.mulf %144, %143 : vector<8x512xf32>
    %cst_63 = arith.constant 5.000000e-01 : f32
    %146 = vector.broadcast %cst_63 : f32 to vector<8x512xf32>
    %147 = arith.addf %145, %146 : vector<8x512xf32>
    %148 = vector.extract_strided_slice %139 {offsets = [0, 512], sizes = [8, 512], strides = [1, 1]} : vector<8x2048xf32> to vector<8x512xf32>
    %cst_64 = arith.constant 5.000000e-01 : f32
    %149 = vector.broadcast %cst_64 : f32 to vector<8x512xf32>
    %150 = arith.mulf %149, %148 : vector<8x512xf32>
    %151 = math.tanh %150 : vector<8x512xf32>
    %cst_65 = arith.constant 5.000000e-01 : f32
    %152 = vector.broadcast %cst_65 : f32 to vector<8x512xf32>
    %153 = arith.mulf %152, %151 : vector<8x512xf32>
    %cst_66 = arith.constant 5.000000e-01 : f32
    %154 = vector.broadcast %cst_66 : f32 to vector<8x512xf32>
    %155 = arith.addf %153, %154 : vector<8x512xf32>
    %156 = vector.extract_strided_slice %139 {offsets = [0, 1024], sizes = [8, 512], strides = [1, 1]} : vector<8x2048xf32> to vector<8x512xf32>
    %157 = math.tanh %156 : vector<8x512xf32>
    %158 = vector.extract_strided_slice %139 {offsets = [0, 1536], sizes = [8, 512], strides = [1, 1]} : vector<8x2048xf32> to vector<8x512xf32>
    %cst_67 = arith.constant 5.000000e-01 : f32
    %159 = vector.broadcast %cst_67 : f32 to vector<8x512xf32>
    %160 = arith.mulf %159, %158 : vector<8x512xf32>
    %161 = math.tanh %160 : vector<8x512xf32>
    %cst_68 = arith.constant 5.000000e-01 : f32
    %162 = vector.broadcast %cst_68 : f32 to vector<8x512xf32>
    %163 = arith.mulf %162, %161 : vector<8x512xf32>
    %cst_69 = arith.constant 5.000000e-01 : f32
    %164 = vector.broadcast %cst_69 : f32 to vector<8x512xf32>
    %165 = arith.addf %163, %164 : vector<8x512xf32>
    %166 = arith.mulf %155, %130 : vector<8x512xf32>
    %167 = arith.mulf %147, %157 : vector<8x512xf32>
    %168 = arith.addf %166, %167 : vector<8x512xf32>
    %169 = math.tanh %168 : vector<8x512xf32>
    %170 = arith.mulf %165, %169 : vector<8x512xf32>
    %c4_i32 = arith.constant 4 : i32
    %171 = arith.index_cast %c4_i32 : i32 to index
    %c0_70 = arith.constant 0 : index
    %c0_71 = arith.constant 0 : index
    %172 = vector.load %arg14[%171, %c0_70, %c0_71] : memref<8x8x2048xf32, #tpu.memory_space<vmem>>, vector<1x8x2048xf32>
    %173 = vector.shape_cast %172 : vector<1x8x2048xf32> to vector<8x2048xf32>
    %174 = arith.truncf %170 : vector<8x512xf32> to vector<8x512xbf16>
    %c0_72 = arith.constant 0 : index
    %c0_73 = arith.constant 0 : index
    %175 = vector.load %arg11[%c0_72, %c0_73] : memref<512x2048xbf16, #tpu.memory_space<vmem>>, vector<512x2048xbf16>
    %cst_74 = arith.constant dense<0.000000e+00> : vector<8x2048xf32>
    %176 = tpu.matmul %174, %175, %cst_74 {dimension_numbers = #tpu.dot_dimension_numbers<[1], [0], [0], [1], [0, 0, 1, 1], [], []>} : vector<8x512xbf16>, vector<512x2048xbf16>, vector<8x2048xf32> -> vector<8x2048xf32>
    %177 = arith.addf %173, %176 : vector<8x2048xf32>
    %178 = vector.extract_strided_slice %177 {offsets = [0, 0], sizes = [8, 512], strides = [1, 1]} : vector<8x2048xf32> to vector<8x512xf32>
    %cst_75 = arith.constant 5.000000e-01 : f32
    %179 = vector.broadcast %cst_75 : f32 to vector<8x512xf32>
    %180 = arith.mulf %179, %178 : vector<8x512xf32>
    %181 = math.tanh %180 : vector<8x512xf32>
    %cst_76 = arith.constant 5.000000e-01 : f32
    %182 = vector.broadcast %cst_76 : f32 to vector<8x512xf32>
    %183 = arith.mulf %182, %181 : vector<8x512xf32>
    %cst_77 = arith.constant 5.000000e-01 : f32
    %184 = vector.broadcast %cst_77 : f32 to vector<8x512xf32>
    %185 = arith.addf %183, %184 : vector<8x512xf32>
    %186 = vector.extract_strided_slice %177 {offsets = [0, 512], sizes = [8, 512], strides = [1, 1]} : vector<8x2048xf32> to vector<8x512xf32>
    %cst_78 = arith.constant 5.000000e-01 : f32
    %187 = vector.broadcast %cst_78 : f32 to vector<8x512xf32>
    %188 = arith.mulf %187, %186 : vector<8x512xf32>
    %189 = math.tanh %188 : vector<8x512xf32>
    %cst_79 = arith.constant 5.000000e-01 : f32
    %190 = vector.broadcast %cst_79 : f32 to vector<8x512xf32>
    %191 = arith.mulf %190, %189 : vector<8x512xf32>
    %cst_80 = arith.constant 5.000000e-01 : f32
    %192 = vector.broadcast %cst_80 : f32 to vector<8x512xf32>
    %193 = arith.addf %191, %192 : vector<8x512xf32>
    %194 = vector.extract_strided_slice %177 {offsets = [0, 1024], sizes = [8, 512], strides = [1, 1]} : vector<8x2048xf32> to vector<8x512xf32>
    %195 = math.tanh %194 : vector<8x512xf32>
    %196 = vector.extract_strided_slice %177 {offsets = [0, 1536], sizes = [8, 512], strides = [1, 1]} : vector<8x2048xf32> to vector<8x512xf32>
    %cst_81 = arith.constant 5.000000e-01 : f32
    %197 = vector.broadcast %cst_81 : f32 to vector<8x512xf32>
    %198 = arith.mulf %197, %196 : vector<8x512xf32>
    %199 = math.tanh %198 : vector<8x512xf32>
    %cst_82 = arith.constant 5.000000e-01 : f32
    %200 = vector.broadcast %cst_82 : f32 to vector<8x512xf32>
    %201 = arith.mulf %200, %199 : vector<8x512xf32>
    %cst_83 = arith.constant 5.000000e-01 : f32
    %202 = vector.broadcast %cst_83 : f32 to vector<8x512xf32>
    %203 = arith.addf %201, %202 : vector<8x512xf32>
    %204 = arith.mulf %193, %168 : vector<8x512xf32>
    %205 = arith.mulf %185, %195 : vector<8x512xf32>
    %206 = arith.addf %204, %205 : vector<8x512xf32>
    %207 = math.tanh %206 : vector<8x512xf32>
    %208 = arith.mulf %203, %207 : vector<8x512xf32>
    %c5_i32 = arith.constant 5 : i32
    %209 = arith.index_cast %c5_i32 : i32 to index
    %c0_84 = arith.constant 0 : index
    %c0_85 = arith.constant 0 : index
    %210 = vector.load %arg14[%209, %c0_84, %c0_85] : memref<8x8x2048xf32, #tpu.memory_space<vmem>>, vector<1x8x2048xf32>
    %211 = vector.shape_cast %210 : vector<1x8x2048xf32> to vector<8x2048xf32>
    %212 = arith.truncf %208 : vector<8x512xf32> to vector<8x512xbf16>
    %c0_86 = arith.constant 0 : index
    %c0_87 = arith.constant 0 : index
    %213 = vector.load %arg11[%c0_86, %c0_87] : memref<512x2048xbf16, #tpu.memory_space<vmem>>, vector<512x2048xbf16>
    %cst_88 = arith.constant dense<0.000000e+00> : vector<8x2048xf32>
    %214 = tpu.matmul %212, %213, %cst_88 {dimension_numbers = #tpu.dot_dimension_numbers<[1], [0], [0], [1], [0, 0, 1, 1], [], []>} : vector<8x512xbf16>, vector<512x2048xbf16>, vector<8x2048xf32> -> vector<8x2048xf32>
    %215 = arith.addf %211, %214 : vector<8x2048xf32>
    %216 = vector.extract_strided_slice %215 {offsets = [0, 0], sizes = [8, 512], strides = [1, 1]} : vector<8x2048xf32> to vector<8x512xf32>
    %cst_89 = arith.constant 5.000000e-01 : f32
    %217 = vector.broadcast %cst_89 : f32 to vector<8x512xf32>
    %218 = arith.mulf %217, %216 : vector<8x512xf32>
    %219 = math.tanh %218 : vector<8x512xf32>
    %cst_90 = arith.constant 5.000000e-01 : f32
    %220 = vector.broadcast %cst_90 : f32 to vector<8x512xf32>
    %221 = arith.mulf %220, %219 : vector<8x512xf32>
    %cst_91 = arith.constant 5.000000e-01 : f32
    %222 = vector.broadcast %cst_91 : f32 to vector<8x512xf32>
    %223 = arith.addf %221, %222 : vector<8x512xf32>
    %224 = vector.extract_strided_slice %215 {offsets = [0, 512], sizes = [8, 512], strides = [1, 1]} : vector<8x2048xf32> to vector<8x512xf32>
    %cst_92 = arith.constant 5.000000e-01 : f32
    %225 = vector.broadcast %cst_92 : f32 to vector<8x512xf32>
    %226 = arith.mulf %225, %224 : vector<8x512xf32>
    %227 = math.tanh %226 : vector<8x512xf32>
    %cst_93 = arith.constant 5.000000e-01 : f32
    %228 = vector.broadcast %cst_93 : f32 to vector<8x512xf32>
    %229 = arith.mulf %228, %227 : vector<8x512xf32>
    %cst_94 = arith.constant 5.000000e-01 : f32
    %230 = vector.broadcast %cst_94 : f32 to vector<8x512xf32>
    %231 = arith.addf %229, %230 : vector<8x512xf32>
    %232 = vector.extract_strided_slice %215 {offsets = [0, 1024], sizes = [8, 512], strides = [1, 1]} : vector<8x2048xf32> to vector<8x512xf32>
    %233 = math.tanh %232 : vector<8x512xf32>
    %234 = vector.extract_strided_slice %215 {offsets = [0, 1536], sizes = [8, 512], strides = [1, 1]} : vector<8x2048xf32> to vector<8x512xf32>
    %cst_95 = arith.constant 5.000000e-01 : f32
    %235 = vector.broadcast %cst_95 : f32 to vector<8x512xf32>
    %236 = arith.mulf %235, %234 : vector<8x512xf32>
    %237 = math.tanh %236 : vector<8x512xf32>
    %cst_96 = arith.constant 5.000000e-01 : f32
    %238 = vector.broadcast %cst_96 : f32 to vector<8x512xf32>
    %239 = arith.mulf %238, %237 : vector<8x512xf32>
    %cst_97 = arith.constant 5.000000e-01 : f32
    %240 = vector.broadcast %cst_97 : f32 to vector<8x512xf32>
    %241 = arith.addf %239, %240 : vector<8x512xf32>
    %242 = arith.mulf %231, %206 : vector<8x512xf32>
    %243 = arith.mulf %223, %233 : vector<8x512xf32>
    %244 = arith.addf %242, %243 : vector<8x512xf32>
    %245 = math.tanh %244 : vector<8x512xf32>
    %246 = arith.mulf %241, %245 : vector<8x512xf32>
    %c6_i32 = arith.constant 6 : i32
    %247 = arith.index_cast %c6_i32 : i32 to index
    %c0_98 = arith.constant 0 : index
    %c0_99 = arith.constant 0 : index
    %248 = vector.load %arg14[%247, %c0_98, %c0_99] : memref<8x8x2048xf32, #tpu.memory_space<vmem>>, vector<1x8x2048xf32>
    %249 = vector.shape_cast %248 : vector<1x8x2048xf32> to vector<8x2048xf32>
    %250 = arith.truncf %246 : vector<8x512xf32> to vector<8x512xbf16>
    %c0_100 = arith.constant 0 : index
    %c0_101 = arith.constant 0 : index
    %251 = vector.load %arg11[%c0_100, %c0_101] : memref<512x2048xbf16, #tpu.memory_space<vmem>>, vector<512x2048xbf16>
    %cst_102 = arith.constant dense<0.000000e+00> : vector<8x2048xf32>
    %252 = tpu.matmul %250, %251, %cst_102 {dimension_numbers = #tpu.dot_dimension_numbers<[1], [0], [0], [1], [0, 0, 1, 1], [], []>} : vector<8x512xbf16>, vector<512x2048xbf16>, vector<8x2048xf32> -> vector<8x2048xf32>
    %253 = arith.addf %249, %252 : vector<8x2048xf32>
    %254 = vector.extract_strided_slice %253 {offsets = [0, 0], sizes = [8, 512], strides = [1, 1]} : vector<8x2048xf32> to vector<8x512xf32>
    %cst_103 = arith.constant 5.000000e-01 : f32
    %255 = vector.broadcast %cst_103 : f32 to vector<8x512xf32>
    %256 = arith.mulf %255, %254 : vector<8x512xf32>
    %257 = math.tanh %256 : vector<8x512xf32>
    %cst_104 = arith.constant 5.000000e-01 : f32
    %258 = vector.broadcast %cst_104 : f32 to vector<8x512xf32>
    %259 = arith.mulf %258, %257 : vector<8x512xf32>
    %cst_105 = arith.constant 5.000000e-01 : f32
    %260 = vector.broadcast %cst_105 : f32 to vector<8x512xf32>
    %261 = arith.addf %259, %260 : vector<8x512xf32>
    %262 = vector.extract_strided_slice %253 {offsets = [0, 512], sizes = [8, 512], strides = [1, 1]} : vector<8x2048xf32> to vector<8x512xf32>
    %cst_106 = arith.constant 5.000000e-01 : f32
    %263 = vector.broadcast %cst_106 : f32 to vector<8x512xf32>
    %264 = arith.mulf %263, %262 : vector<8x512xf32>
    %265 = math.tanh %264 : vector<8x512xf32>
    %cst_107 = arith.constant 5.000000e-01 : f32
    %266 = vector.broadcast %cst_107 : f32 to vector<8x512xf32>
    %267 = arith.mulf %266, %265 : vector<8x512xf32>
    %cst_108 = arith.constant 5.000000e-01 : f32
    %268 = vector.broadcast %cst_108 : f32 to vector<8x512xf32>
    %269 = arith.addf %267, %268 : vector<8x512xf32>
    %270 = vector.extract_strided_slice %253 {offsets = [0, 1024], sizes = [8, 512], strides = [1, 1]} : vector<8x2048xf32> to vector<8x512xf32>
    %271 = math.tanh %270 : vector<8x512xf32>
    %272 = vector.extract_strided_slice %253 {offsets = [0, 1536], sizes = [8, 512], strides = [1, 1]} : vector<8x2048xf32> to vector<8x512xf32>
    %cst_109 = arith.constant 5.000000e-01 : f32
    %273 = vector.broadcast %cst_109 : f32 to vector<8x512xf32>
    %274 = arith.mulf %273, %272 : vector<8x512xf32>
    %275 = math.tanh %274 : vector<8x512xf32>
    %cst_110 = arith.constant 5.000000e-01 : f32
    %276 = vector.broadcast %cst_110 : f32 to vector<8x512xf32>
    %277 = arith.mulf %276, %275 : vector<8x512xf32>
    %cst_111 = arith.constant 5.000000e-01 : f32
    %278 = vector.broadcast %cst_111 : f32 to vector<8x512xf32>
    %279 = arith.addf %277, %278 : vector<8x512xf32>
    %280 = arith.mulf %269, %244 : vector<8x512xf32>
    %281 = arith.mulf %261, %271 : vector<8x512xf32>
    %282 = arith.addf %280, %281 : vector<8x512xf32>
    %283 = math.tanh %282 : vector<8x512xf32>
    %284 = arith.mulf %279, %283 : vector<8x512xf32>
    %c7_i32 = arith.constant 7 : i32
    %285 = arith.index_cast %c7_i32 : i32 to index
    %c0_112 = arith.constant 0 : index
    %c0_113 = arith.constant 0 : index
    %286 = vector.load %arg14[%285, %c0_112, %c0_113] : memref<8x8x2048xf32, #tpu.memory_space<vmem>>, vector<1x8x2048xf32>
    %287 = vector.shape_cast %286 : vector<1x8x2048xf32> to vector<8x2048xf32>
    %288 = arith.truncf %284 : vector<8x512xf32> to vector<8x512xbf16>
    %c0_114 = arith.constant 0 : index
    %c0_115 = arith.constant 0 : index
    %289 = vector.load %arg11[%c0_114, %c0_115] : memref<512x2048xbf16, #tpu.memory_space<vmem>>, vector<512x2048xbf16>
    %cst_116 = arith.constant dense<0.000000e+00> : vector<8x2048xf32>
    %290 = tpu.matmul %288, %289, %cst_116 {dimension_numbers = #tpu.dot_dimension_numbers<[1], [0], [0], [1], [0, 0, 1, 1], [], []>} : vector<8x512xbf16>, vector<512x2048xbf16>, vector<8x2048xf32> -> vector<8x2048xf32>
    %291 = arith.addf %287, %290 : vector<8x2048xf32>
    %292 = vector.extract_strided_slice %291 {offsets = [0, 0], sizes = [8, 512], strides = [1, 1]} : vector<8x2048xf32> to vector<8x512xf32>
    %cst_117 = arith.constant 5.000000e-01 : f32
    %293 = vector.broadcast %cst_117 : f32 to vector<8x512xf32>
    %294 = arith.mulf %293, %292 : vector<8x512xf32>
    %295 = math.tanh %294 : vector<8x512xf32>
    %cst_118 = arith.constant 5.000000e-01 : f32
    %296 = vector.broadcast %cst_118 : f32 to vector<8x512xf32>
    %297 = arith.mulf %296, %295 : vector<8x512xf32>
    %cst_119 = arith.constant 5.000000e-01 : f32
    %298 = vector.broadcast %cst_119 : f32 to vector<8x512xf32>
    %299 = arith.addf %297, %298 : vector<8x512xf32>
    %300 = vector.extract_strided_slice %291 {offsets = [0, 512], sizes = [8, 512], strides = [1, 1]} : vector<8x2048xf32> to vector<8x512xf32>
    %cst_120 = arith.constant 5.000000e-01 : f32
    %301 = vector.broadcast %cst_120 : f32 to vector<8x512xf32>
    %302 = arith.mulf %301, %300 : vector<8x512xf32>
    %303 = math.tanh %302 : vector<8x512xf32>
    %cst_121 = arith.constant 5.000000e-01 : f32
    %304 = vector.broadcast %cst_121 : f32 to vector<8x512xf32>
    %305 = arith.mulf %304, %303 : vector<8x512xf32>
    %cst_122 = arith.constant 5.000000e-01 : f32
    %306 = vector.broadcast %cst_122 : f32 to vector<8x512xf32>
    %307 = arith.addf %305, %306 : vector<8x512xf32>
    %308 = vector.extract_strided_slice %291 {offsets = [0, 1024], sizes = [8, 512], strides = [1, 1]} : vector<8x2048xf32> to vector<8x512xf32>
    %309 = math.tanh %308 : vector<8x512xf32>
    %310 = vector.extract_strided_slice %291 {offsets = [0, 1536], sizes = [8, 512], strides = [1, 1]} : vector<8x2048xf32> to vector<8x512xf32>
    %cst_123 = arith.constant 5.000000e-01 : f32
    %311 = vector.broadcast %cst_123 : f32 to vector<8x512xf32>
    %312 = arith.mulf %311, %310 : vector<8x512xf32>
    %313 = math.tanh %312 : vector<8x512xf32>
    %cst_124 = arith.constant 5.000000e-01 : f32
    %314 = vector.broadcast %cst_124 : f32 to vector<8x512xf32>
    %315 = arith.mulf %314, %313 : vector<8x512xf32>
    %cst_125 = arith.constant 5.000000e-01 : f32
    %316 = vector.broadcast %cst_125 : f32 to vector<8x512xf32>
    %317 = arith.addf %315, %316 : vector<8x512xf32>
    %318 = arith.mulf %307, %282 : vector<8x512xf32>
    %319 = arith.mulf %299, %309 : vector<8x512xf32>
    %320 = arith.addf %318, %319 : vector<8x512xf32>
    %321 = math.tanh %320 : vector<8x512xf32>
    %322 = arith.mulf %317, %321 : vector<8x512xf32>
    %c8_i32 = arith.constant 8 : i32
    %c1_i32_126 = arith.constant 1 : i32
    %323 = tpu.memref_slice %arg15[%c1_i32_126] : memref<3x!tpu.dma_semaphore, #tpu.memory_space<semaphore_mem>> -> memref<1x!tpu.dma_semaphore, #tpu.memory_space<semaphore_mem>>
    %324 = tpu.memref_squeeze %323 : memref<1x!tpu.dma_semaphore, #tpu.memory_space<semaphore_mem>> -> memref<!tpu.dma_semaphore, #tpu.memory_space<semaphore_mem>>
    tpu.wait_dma2 semaphore(%324 : memref<!tpu.dma_semaphore, #tpu.memory_space<semaphore_mem>>) src(%arg5 : memref<512x768xbf16, #tpu.memory_space<any>>) dst(%arg12 : memref<512x768xbf16, #tpu.memory_space<vmem>>)
    %c2_i32_127 = arith.constant 2 : i32
    %325 = tpu.memref_slice %arg15[%c2_i32_127] : memref<3x!tpu.dma_semaphore, #tpu.memory_space<semaphore_mem>> -> memref<1x!tpu.dma_semaphore, #tpu.memory_space<semaphore_mem>>
    %326 = tpu.memref_squeeze %325 : memref<1x!tpu.dma_semaphore, #tpu.memory_space<semaphore_mem>> -> memref<!tpu.dma_semaphore, #tpu.memory_space<semaphore_mem>>
    tpu.wait_dma2 semaphore(%326 : memref<!tpu.dma_semaphore, #tpu.memory_space<semaphore_mem>>) src(%arg6 : memref<4x768xbf16, #tpu.memory_space<any>>) dst(%arg13 : memref<4x768xbf16, #tpu.memory_space<vmem>>)
    %327 = arith.truncf %322 : vector<8x512xf32> to vector<8x512xbf16>
    %c0_128 = arith.constant 0 : index
    %c0_129 = arith.constant 0 : index
    %328 = vector.load %arg12[%c0_128, %c0_129] : memref<512x768xbf16, #tpu.memory_space<vmem>>, vector<512x768xbf16>
    %cst_130 = arith.constant dense<0.000000e+00> : vector<8x768xf32>
    %329 = tpu.matmul %327, %328, %cst_130 {dimension_numbers = #tpu.dot_dimension_numbers<[1], [0], [0], [1], [0, 0, 1, 1], [], []>} : vector<8x512xbf16>, vector<512x768xbf16>, vector<8x768xf32> -> vector<8x768xf32>
    %c0_131 = arith.constant 0 : index
    %c0_132 = arith.constant 0 : index
    %330 = vector.load %arg1[%c0_131, %c0_132] : memref<8x4xf32, #tpu.memory_space<vmem>>, vector<8x4xf32>
    %331 = arith.truncf %330 : vector<8x4xf32> to vector<8x4xbf16>
    %c0_133 = arith.constant 0 : index
    %c0_134 = arith.constant 0 : index
    %332 = vector.load %arg13[%c0_133, %c0_134] : memref<4x768xbf16, #tpu.memory_space<vmem>>, vector<4x768xbf16>
    %cst_135 = arith.constant dense<0.000000e+00> : vector<8x768xf32>
    %333 = tpu.matmul %331, %332, %cst_135 {dimension_numbers = #tpu.dot_dimension_numbers<[1], [0], [0], [1], [0, 0, 1, 1], [], []>} : vector<8x4xbf16>, vector<4x768xbf16>, vector<8x768xf32> -> vector<8x768xf32>
    %334 = arith.addf %329, %333 : vector<8x768xf32>
    %c0_136 = arith.constant 0 : index
    %c0_137 = arith.constant 0 : index
    %335 = vector.load %arg7[%c0_136, %c0_137] : memref<1x768xf32, #tpu.memory_space<vmem>>, vector<1x768xf32>
    %336 = vector.broadcast %335 : vector<1x768xf32> to vector<8x768xf32>
    %337 = arith.addf %334, %336 : vector<8x768xf32>
    %cst_138 = arith.constant 0.000000e+00 : f32
    %338 = vector.broadcast %cst_138 : f32 to vector<8x768xf32>
    %339 = arith.maximumf %337, %338 : vector<8x768xf32>
    %340 = arith.truncf %339 : vector<8x768xf32> to vector<8x768xbf16>
    %c0_139 = arith.constant 0 : index
    %c0_140 = arith.constant 0 : index
    %341 = vector.load %arg8[%c0_139, %c0_140] : memref<768x128xbf16, #tpu.memory_space<vmem>>, vector<768x128xbf16>
    %cst_141 = arith.constant dense<0.000000e+00> : vector<8x128xf32>
    %342 = tpu.matmul %340, %341, %cst_141 {dimension_numbers = #tpu.dot_dimension_numbers<[1], [0], [0], [1], [0, 0, 1, 1], [], []>} : vector<8x768xbf16>, vector<768x128xbf16>, vector<8x128xf32> -> vector<8x128xf32>
    %c0_142 = arith.constant 0 : index
    %c0_143 = arith.constant 0 : index
    %343 = vector.load %arg9[%c0_142, %c0_143] : memref<1x128xf32, #tpu.memory_space<vmem>>, vector<1x128xf32>
    %344 = vector.broadcast %343 : vector<1x128xf32> to vector<8x128xf32>
    %345 = arith.addf %342, %344 : vector<8x128xf32>
    %c0_144 = arith.constant 0 : index
    %c0_145 = arith.constant 0 : index
    %346 = vector.load %arg10[%c0_144, %c0_145] : memref<8x128xf32, #tpu.memory_space<vmem>>, vector<8x128xf32>
    tpu.vector_store %arg10[%c0_144, %c0_145], %345 {strides = array<i32>} : memref<8x128xf32, #tpu.memory_space<vmem>>, vector<8x128xf32>,
    return
  }
}

</mosaic_0001>

<llo_original>
// kernel: critic_forward.1
$region0: #{critic_forward.1}
  #allocation0 [shape = 'u32[]', space=smem, size = 0x4, offset = 0x4, fixed_abs, tag = 'smem constant byte address 0x4 - core index']
  #allocation1 [shape = 'u32[144,128]{1,0:T(1,128)}', space=vmem, size = 0x12000, scoped, tag = 'internal scratch']
  #allocation2 [shape = 'bf16[512,2048]{1,0:T(16,128)(2,1)}', space=vmem, size = 0x200000, scoped, tag = 'scratch operand']
  #allocation3 [shape = 'bf16[512,768]{1,0:T(16,128)(2,1)}', space=vmem, size = 0xc0000, scoped, tag = 'scratch operand']
  #allocation4 [shape = 'bf16[4,768]{1,0:T(4,128)(2,1)}', space=vmem, size = 0x1800, scoped, tag = 'scratch operand']
  #allocation5 [shape = 'f32[8,8,2048]{2,1,0:T(8,128)}', space=vmem, size = 0x80000, scoped, tag = 'scratch operand']
  #allocation6 [shape = 's32[3]{0}', space=sflag, size = 0xc, scoped, tag = 'scratch operand']
  #allocation15 [shape = 's32[]', space=sflag, size = 0x4, offset = 0, fixed_abs, tag = 'sflag constant byte address 0x0 - dummy sync flag']
  #allocation17 [shape = 's32[]', space=sflag, size = 0x4, offset = 0, fixed_abs, tag = 'sflag constant byte address 0x0 - dummy sync flag']
  #allocation19 [shape = 's32[]', space=sflag, size = 0x4, offset = 0, fixed_abs, tag = 'sflag constant byte address 0x0 - dummy sync flag']
  #allocation20 [shape = 's32[]', space=sflag, size = 0x4, offset = 0, fixed_abs, tag = 'sflag constant byte address 0x0 - dummy sync flag']
  #allocation21 [shape = 'u32[]', space=smem, size = 0x4, offset = 0x44, fixed_abs, tag = 'smem constant byte address 0x44 - assertion arg 0']
  #allocation22 [shape = 'u32[]', space=smem, size = 0x4, offset = 0x48, fixed_abs, tag = 'smem constant byte address 0x48 - assertion arg 1']
  %s0 = inlined_call_operand.vmem [shape: f32[64,8], index: 0, kind: input, shape index: {}]
  %s1 = inlined_call_operand.vmem [shape: f32[8,4], index: 1, kind: input, shape index: {}]
  %s2 = inlined_call_operand.hbm [shape: bf16[8,2048], index: 2, kind: input, shape index: {}]
  %s3 = inlined_call_operand.hbm [shape: f32[1,2048], index: 3, kind: input, shape index: {}]
  %s4 = inlined_call_operand.hbm [shape: bf16[512,2048], index: 4, kind: input, shape index: {}]
  %s5 = inlined_call_operand.hbm [shape: bf16[512,768], index: 5, kind: input, shape index: {}]
  %s6 = inlined_call_operand.hbm [shape: bf16[4,768], index: 6, kind: input, shape index: {}]
  %s7 = inlined_call_operand.hbm [shape: f32[1,768], index: 7, kind: input, shape index: {}]
  %s8 = inlined_call_operand.hbm [shape: bf16[768,128], index: 8, kind: input, shape index: {}]
  %s9 = inlined_call_operand.hbm [shape: f32[1,128], index: 9, kind: input, shape index: {}]
  %s10 = inlined_call_operand.vmem [shape: f32[8,128], index: 10, kind: output, shape index: {}]
  %s11 = sld [smem:[#allocation0]]
  $region62: #{critic_forward.1} parent=0
    _
  %s13 = ssub.s32 1, %s11
  %s14 = scalar_select 0, %s13, %s11
  $region1: #{critic_forward.1} parent=0
    #allocation7 [shape = 'u8[32768]{0}', space=vmem, size = 0x8000, scoped, tag = 'input window, operand 2, single buffered']
    #allocation8 [shape = 's32[1]{0}', space=sflag, size = 0x4, scoped, tag = 'scoped memory for critic_forward.1']
    #allocation9 [shape = 'u8[8192]{0}', space=vmem, size = 0x2000, scoped, tag = 'input window, operand 3, single buffered']
    #allocation10 [shape = 's32[1]{0}', space=sflag, size = 0x4, scoped, tag = 'scoped memory for critic_forward.1']
    #allocation11 [shape = 'u8[3072]{0}', space=vmem, size = 0xc00, scoped, tag = 'input window, operand 7, single buffered']
    #allocation12 [shape = 'u8[196608]{0}', space=vmem, size = 0x30000, scoped, tag = 'input window, operand 8, single buffered']
    #allocation13 [shape = 's32[1]{0}', space=sflag, size = 0x4, scoped, tag = 'scoped memory for critic_forward.1']
    #allocation14 [shape = 'u8[512]{0}', space=vmem, size = 0x400, scoped, tag = 'input window, operand 9, single buffered']
    #allocation16 [shape = 'u32[9]{0}', space=smem, size = 0x24, scoped, tag = 'DMA stride descriptor']
    #allocation18 [shape = 'u32[9]{0}', space=smem, size = 0x24, scoped, tag = 'DMA stride descriptor']
    %15 = vsyncpa [#allocation8], 0
    %16 = vsyncpa [#allocation10], 0
    %17 = vsyncpa [#allocation13], 0
    // Predicated region
    $region2: #{critic_forward.1} parent=1 // pred_check
      _
    $region3: #{critic_forward.1} parent=1 // pred_check_branch
      %19 = sbr.rel (0) target = $region5
    $region4: #{critic_forward.1} parent=1 // pred_region
      _
    $region5: #{critic_forward.1} parent=1 // pred_fallthru
      _
    // Predicated region
    $region6: #{critic_forward.1} parent=1 // pred_check
      _
    $region7: #{critic_forward.1} parent=1 // pred_check_branch
      %21 = sbr.rel (0) target = $region9
    $region8: #{critic_forward.1} parent=1 // pred_region
      _
    $region9: #{critic_forward.1} parent=1 // pred_fallthru
      _
    // Predicated region
    $region10: #{critic_forward.1} parent=1 // pred_check
      _
    $region11: #{critic_forward.1} parent=1 // pred_check_branch
      %23 = sbr.rel (0) target = $region13
    $region12: #{critic_forward.1} parent=1 // pred_region
      %s25 = ssub.s32 1024, 1024
      %26 = vsyncadd [#allocation8], %s25
      %s28 = sshll.u32 [#allocation7], 4
      %s29 = int_to_ptr.vmem [resolvable:$true] %s28
      %31 = dma.hbm_to_vmem [thread:$0]  %s2, 1024, %s29, [#allocation8]
    $region13: #{critic_forward.1} parent=1 // pred_fallthru
      _
    // Predicated region
    $region14: #{critic_forward.1} parent=1 // pred_check
      _
    $region15: #{critic_forward.1} parent=1 // pred_check_branch
      %33 = sbr.rel (0) target = $region17
    $region16: #{critic_forward.1} parent=1 // pred_region
      %s35 = ssub.s32 256, 256
      %36 = vsyncadd [#allocation10], %s35
      %s38 = sshll.u32 [#allocation9], 4
      %s39 = int_to_ptr.vmem [resolvable:$true] %s38
      %41 = dma.hbm_to_vmem [thread:$0]  %s3, 256, %s39, [#allocation10]
    $region17: #{critic_forward.1} parent=1 // pred_fallthru
      _
    // Predicated region
    $region18: #{critic_forward.1} parent=1 // pred_check
      _
    $region19: #{critic_forward.1} parent=1 // pred_check_branch
      %43 = sbr.rel (0) target = $region21
    $region20: #{critic_forward.1} parent=1 // pred_region
      %s45 = ssub.s32 96, 96
      %46 = vsyncadd [#allocation10], %s45
      %s48 = sshll.u32 [#allocation11], 4
      %s49 = int_to_ptr.vmem [resolvable:$true] %s48
      %51 = dma.hbm_to_vmem [thread:$0]  %s7, 96, %s49, [#allocation10]
    $region21: #{critic_forward.1} parent=1 // pred_fallthru
      _
    // Predicated region
    $region22: #{critic_forward.1} parent=1 // pred_check
      _
    $region23: #{critic_forward.1} parent=1 // pred_check_branch
      %53 = sbr.rel (0) target = $region25
    $region24: #{critic_forward.1} parent=1 // pred_region
      %s55 = ssub.s32 6144, 6144
      %56 = vsyncadd [#allocation13], %s55
      %s57 = sshll.u32 [#allocation12], 4
      %s58 = int_to_ptr.vmem [resolvable:$true] %s57
      %63 = dma.hbm_to_vmem [thread:$0]  %s8, 6144, %s58, [#allocation13], 64, 64, 4
    $region25: #{critic_forward.1} parent=1 // pred_fallthru
      _
    // Predicated region
    $region26: #{critic_forward.1} parent=1 // pred_check
      _
    $region27: #{critic_forward.1} parent=1 // pred_check_branch
      %65 = sbr.rel (0) target = $region29
    $region28: #{critic_forward.1} parent=1 // pred_region
      %s67 = ssub.s32 16, 16
      %68 = vsyncadd [#allocation13], %s67
      %s70 = sshll.u32 [#allocation14], 4
      %s71 = int_to_ptr.vmem [resolvable:$true] %s70
      %73 = dma.hbm_to_vmem [thread:$0]  %s9, 16, %s71, [#allocation13]
    $region29: #{critic_forward.1} parent=1 // pred_fallthru
      _
    // Predicated region
    $region30: #{critic_forward.1} parent=1 // pred_check
      _
    $region31: #{critic_forward.1} parent=1 // pred_check_branch
      %75 = sbr.rel (0) target = $region33
    $region32: #{critic_forward.1} parent=1 // pred_region
      %76 = dma.done [#allocation8], 1024
    $region33: #{critic_forward.1} parent=1 // pred_fallthru
      _
    // Predicated region
    $region34: #{critic_forward.1} parent=1 // pred_check
      _
    $region35: #{critic_forward.1} parent=1 // pred_check_branch
      %78 = sbr.rel (0) target = $region37
    $region36: #{critic_forward.1} parent=1 // pred_region
      %79 = dma.done [#allocation10], 256
    $region37: #{critic_forward.1} parent=1 // pred_fallthru
      _
    // Predicated region
    $region38: #{critic_forward.1} parent=1 // pred_check
      _
    $region39: #{critic_forward.1} parent=1 // pred_check_branch
      %81 = sbr.rel (0) target = $region41
    $region40: #{critic_forward.1} parent=1 // pred_region
      %82 = dma.done [#allocation10], 96
    $region41: #{critic_forward.1} parent=1 // pred_fallthru
      _
    // Predicated region
    $region42: #{critic_forward.1} parent=1 // pred_check
      _
    $region43: #{critic_forward.1} parent=1 // pred_check_branch
      %84 = sbr.rel (0) target = $region45
    $region44: #{critic_forward.1} parent=1 // pred_region
      %85 = dma.done [#allocation13], 6144
    $region45: #{critic_forward.1} parent=1 // pred_fallthru
      _
    // Predicated region
    $region46: #{critic_forward.1} parent=1 // pred_check
      _
    $region47: #{critic_forward.1} parent=1 // pred_check_branch
      %87 = sbr.rel (0) target = $region49
    $region48: #{critic_forward.1} parent=1 // pred_region
      %88 = dma.done [#allocation13], 16
    $region49: #{critic_forward.1} parent=1 // pred_fallthru
      _
    %s91 = sshll.u32 1, 14
    %s92 = sxor.u32 4294967295, %s91
    %s94 = sld [smem:[#allocation0]]
    %s95 = sadd.s32 2, %s94
    %s97 = sshll.u32 7, 26
    %s98 = sxor.u32 4294967295, %s97
    %s99 = sand.u32 0, %s98
    %s100 = sshll.u32 %s95, 26
    %s101 = sor.u32 %s99, %s100
    %s102 = sshll.u32 [#allocation2], 4
    %s103 = int_to_ptr.vmem [resolvable:$true] %s102
    %106 = sst [smem:[#allocation16]] 2048
    %s107 = scalar_lea.smem [#allocation16], 1
    %108 = sst [smem:[%s107]] 2048
    %s109 = scalar_lea.smem [#allocation16], 2
    %110 = sst [smem:[%s109]] 16
    %s111 = scalar_lea.smem [#allocation16], 3
    %112 = sst [smem:[%s111]] 64
    %s113 = scalar_lea.smem [#allocation16], 4
    %114 = sst [smem:[%s113]] 128
    %s115 = scalar_lea.smem [#allocation16], 5
    %116 = sst [smem:[%s115]] 2
    %s117 = scalar_lea.smem [#allocation16], 6
    %118 = sst [smem:[%s117]] 1024
    %s119 = scalar_lea.smem [#allocation16], 7
    %120 = sst [smem:[%s119]] 64
    %s121 = scalar_lea.smem [#allocation16], 8
    %122 = sst [smem:[%s121]] 4
    %124 = dma.general %s4, 65536, %s103, [#allocation6], [#allocation15], [#allocation16], %s101, 0
    %s125 = scalar_lea.sflag [#allocation6], 1
    %s127 = sshll.u32 1, 14
    %s128 = sxor.u32 4294967295, %s127
    %s130 = sadd.s32 2, %s94
    %s132 = sshll.u32 7, 26
    %s133 = sxor.u32 4294967295, %s132
    %s134 = sand.u32 0, %s133
    %s135 = sshll.u32 %s130, 26
    %s136 = sor.u32 %s134, %s135
    %s137 = sshll.u32 [#allocation3], 4
    %s138 = int_to_ptr.vmem [resolvable:$true] %s137
    %141 = sst [smem:[#allocation18]] 768
    %s142 = scalar_lea.smem [#allocation18], 1
    %143 = sst [smem:[%s142]] 768
    %s144 = scalar_lea.smem [#allocation18], 2
    %145 = sst [smem:[%s144]] 6
    %s146 = scalar_lea.smem [#allocation18], 3
    %147 = sst [smem:[%s146]] 64
    %s148 = scalar_lea.smem [#allocation18], 4
    %149 = sst [smem:[%s148]] 128
    %s150 = scalar_lea.smem [#allocation18], 5
    %151 = sst [smem:[%s150]] 2
    %s152 = scalar_lea.smem [#allocation18], 6
    %153 = sst [smem:[%s152]] 384
    %s154 = scalar_lea.smem [#allocation18], 7
    %155 = sst [smem:[%s154]] 64
    %s156 = scalar_lea.smem [#allocation18], 8
    %157 = sst [smem:[%s156]] 4
    %159 = dma.general %s5, 24576, %s138, %s125, [#allocation17], [#allocation18], %s136, 0
    %s160 = scalar_lea.sflag [#allocation6], 2
    // Predicated region
    $region50: #{critic_forward.1} parent=1 // pred_check
      _
    $region51: #{critic_forward.1} parent=1 // pred_check_branch
      %162 = sbr.rel target = $region53
    $region52: #{critic_forward.1} parent=1 // pred_region
      %163 = sst [smem:[#allocation21]] [#allocation20]
      %164 = sst [smem:[#allocation22]] [#allocation19]
    $region53: #{critic_forward.1} parent=1 // pred_fallthru
      _
    %166 = shalt.err (0)
    %s168 = sshll.u32 [#allocation4], 4
    %s169 = int_to_ptr.vmem [resolvable:$true] %s168
    %171 = dma.hbm_to_vmem [thread:$0]  %s6, 192, %s169, %s160
    %v172 = vld [vmem:[%s0] sm:$0xff]
    %v173 = vld [vmem:[%s0 + $0x8] sm:$0xff]
    %v174 = vld [vmem:[%s0 + $0x10] sm:$0xff]
    %v175 = vld [vmem:[%s0 + $0x18] sm:$0xff]
    %v176 = vld [vmem:[%s0 + $0x20] sm:$0xff]
    %v177 = vld [vmem:[%s0 + $0x28] sm:$0xff]
    %v178 = vld [vmem:[%s0 + $0x30] sm:$0xff]
    %v179 = vld [vmem:[%s0 + $0x38] sm:$0xff]
    %v180 = vpack.c.bf16 %v173, %v172
    %v181 = vpack.c.bf16 %v175, %v174
    %v182 = vpack.c.bf16 %v177, %v176
    %v183 = vpack.c.bf16 %v179, %v178
    %v184 = vld [vmem:[#allocation7] sm:$0xff]
    %v185 = vld [vmem:[#allocation7 + $0x8] sm:$0xff]
    %v186 = vld [vmem:[#allocation7 + $0x10] sm:$0xff]
    %v187 = vld [vmem:[#allocation7 + $0x18] sm:$0xff]
    %v188 = vld [vmem:[#allocation7 + $0x20] sm:$0xff]
    %v189 = vld [vmem:[#allocation7 + $0x28] sm:$0xff]
    %v190 = vld [vmem:[#allocation7 + $0x30] sm:$0xff]
    %v191 = vld [vmem:[#allocation7 + $0x38] sm:$0xff]
    %v192 = vld [vmem:[#allocation9] sm:$0xff]
    %v193 = vld [vmem:[#allocation9 + $0x8] sm:$0xff]
    %v196 = vlaneseq
    %v197 = vshrl.u32 %v196, 7
    %v198 = vsub.s32 0, %v197
    %v199 = vrot.slane %v192, %v198
    %v200 = vlaneseq
    %v201 = vshrl.u32 %v200, 7
    %v202 = vsub.s32 1, %v201
    %v203 = vrot.slane %v192, %v202
    %v204 = vlaneseq
    %v205 = vshrl.u32 %v204, 7
    %v206 = vsub.s32 2, %v205
    %v207 = vrot.slane %v192, %v206
    %v208 = vlaneseq
    %v209 = vshrl.u32 %v208, 7
    %v210 = vsub.s32 3, %v209
    %v211 = vrot.slane %v192, %v210
    %v212 = vlaneseq
    %v213 = vshrl.u32 %v212, 7
    %v214 = vsub.s32 4, %v213
    %v215 = vrot.slane %v192, %v214
    %v216 = vlaneseq
    %v217 = vshrl.u32 %v216, 7
    %v218 = vsub.s32 5, %v217
    %v219 = vrot.slane %v192, %v218
    %v220 = vlaneseq
    %v221 = vshrl.u32 %v220, 7
    %v222 = vsub.s32 6, %v221
    %v223 = vrot.slane %v192, %v222
    %v224 = vlaneseq
    %v225 = vshrl.u32 %v224, 7
    %v226 = vsub.s32 7, %v225
    %v227 = vrot.slane %v192, %v226
    %v228 = vlaneseq
    %v229 = vshrl.u32 %v228, 7
    %v230 = vsub.s32 0, %v229
    %v231 = vrot.slane %v193, %v230
    %v232 = vlaneseq
    %v233 = vshrl.u32 %v232, 7
    %v234 = vsub.s32 1, %v233
    %v235 = vrot.slane %v193, %v234
    %v236 = vlaneseq
    %v237 = vshrl.u32 %v236, 7
    %v238 = vsub.s32 2, %v237
    %v239 = vrot.slane %v193, %v238
    %v240 = vlaneseq
    %v241 = vshrl.u32 %v240, 7
    %v242 = vsub.s32 3, %v241
    %v243 = vrot.slane %v193, %v242
    %v244 = vlaneseq
    %v245 = vshrl.u32 %v244, 7
    %v246 = vsub.s32 4, %v245
    %v247 = vrot.slane %v193, %v246
    %v248 = vlaneseq
    %v249 = vshrl.u32 %v248, 7
    %v250 = vsub.s32 5, %v249
    %v251 = vrot.slane %v193, %v250
    %v252 = vlaneseq
    %v253 = vshrl.u32 %v252, 7
    %v254 = vsub.s32 6, %v253
    %v255 = vrot.slane %v193, %v254
    %v256 = vlaneseq
    %v257 = vshrl.u32 %v256, 7
    %v258 = vsub.s32 7, %v257
    %v259 = vrot.slane %v193, %v258
    %v284 = vunpack.c.l.b16 %v184
    %v285 = vunpack.c.h.b16 %v184
    %v286 = vunpack.c.l.b16 %v185
    %v287 = vunpack.c.h.b16 %v185
    %v288 = vunpack.c.l.b16 %v186
    %v289 = vunpack.c.h.b16 %v186
    %v290 = vunpack.c.l.b16 %v187
    %v291 = vunpack.c.h.b16 %v187
    %v292 = vunpack.c.l.b16 %v188
    %v293 = vunpack.c.h.b16 %v188
    %v294 = vunpack.c.l.b16 %v189
    %v295 = vunpack.c.h.b16 %v189
    %v296 = vunpack.c.l.b16 %v190
    %v297 = vunpack.c.h.b16 %v190
    %v298 = vunpack.c.l.b16 %v191
    %v299 = vunpack.c.h.b16 %v191
    %v300 = vpack.c.b16 %v284, %v284
    %v301 = vpack.c.b16 %v285, %v285
    %v302 = vpack.c.b16 %v286, %v286
    %v303 = vpack.c.b16 %v287, %v287
    %v304 = vpack.c.b16 %v288, %v288
    %v305 = vpack.c.b16 %v289, %v289
    %v306 = vpack.c.b16 %v290, %v290
    %v307 = vpack.c.b16 %v291, %v291
    %v308 = vpack.c.b16 %v292, %v292
    %v309 = vpack.c.b16 %v293, %v293
    %v310 = vpack.c.b16 %v294, %v294
    %v311 = vpack.c.b16 %v295, %v295
    %v312 = vpack.c.b16 %v296, %v296
    %v313 = vpack.c.b16 %v297, %v297
    %v314 = vpack.c.b16 %v298, %v298
    %v315 = vpack.c.b16 %v299, %v299
    %vm316 = vcmask 64512
    %v318 = vsel %vm316, %v180, 0
    %v321 = vsel %vm316, %v181, 0
    %v324 = vsel %vm316, %v182, 0
    %v327 = vsel %vm316, %v183, 0
    %vm329 = vcmask 1043456
    %v331 = vsel %vm329, %v300, 0
    %v334 = vsel %vm329, %v301, 0
    %v337 = vsel %vm329, %v302, 0
    %v340 = vsel %vm329, %v303, 0
    %v343 = vsel %vm329, %v304, 0
    %v346 = vsel %vm329, %v305, 0
    %v349 = vsel %vm329, %v306, 0
    %v352 = vsel %vm329, %v307, 0
    %v355 = vsel %vm329, %v308, 0
    %v358 = vsel %vm329, %v309, 0
    %v361 = vsel %vm329, %v310, 0
    %v364 = vsel %vm329, %v311, 0
    %v367 = vsel %vm329, %v312, 0
    %v370 = vsel %vm329, %v313, 0
    %v373 = vsel %vm329, %v314, 0
    %v376 = vsel %vm329, %v315, 0
    %378 = vmatprep.subr.bf16.mxu0 %v334
    %379 = vmatpush1.bf16.msra.mxu0 %v331
    %380 = vmatprep.subr.bf16.mxu0 0
    %381 = vmatpush1.bf16.msra.mxu0 0
    %382 = vmatprep.subr.bf16.mxu0 0
    %383 = vmatpush1.bf16.msra.mxu0 0
    %384 = vmatprep.subr.bf16.mxu0 0
    %385 = vmatpush1.bf16.msra.mxu0 0
    %386 = vmatprep.subr.bf16.mxu0 0
    %387 = vmatpush1.bf16.msra.mxu0 0
    %388 = vmatprep.subr.bf16.mxu0 0
    %389 = vmatpush1.bf16.msra.mxu0 0
    %390 = vmatprep.subr.bf16.mxu0 0
    %391 = vmatpush1.bf16.msra.mxu0 0
    %392 = vmatprep.subr.bf16.mxu0 0
    %393 = vmatpush1.bf16.msra.mxu0 0
    %394 = vmatprep.subr.bf16.mxu0 0
    %395 = vmatpush1.bf16.msra.mxu0 0
    %396 = vmatprep.subr.bf16.mxu0 0
    %397 = vmatpush1.bf16.msra.mxu0 0
    %398 = vmatprep.subr.bf16.mxu0 0
    %399 = vmatpush1.bf16.msra.mxu0 0
    %400 = vmatprep.subr.bf16.mxu0 0
    %401 = vmatpush1.bf16.msra.mxu0 0
    %402 = vmatprep.subr.bf16.mxu0 0
    %403 = vmatpush1.bf16.msra.mxu0 0
    %404 = vmatprep.subr.bf16.mxu0 0
    %405 = vmatpush1.bf16.msra.mxu0 0
    %406 = vmatprep.subr.bf16.mxu0 0
    %407 = vmatpush1.bf16.msra.mxu0 0
    %408 = vmatprep.subr.bf16.mxu0 0
    %409 = vmatpush1.bf16.msra.mxu0 0
    %410 = vmatprep.mubr.bf16.mxu0 0
    %411 = vmatmul.mubr.bf16.gmra.mrb[0].mxu0 %v318
    %v412 = vpop.f32.mrb[0].mxu0
    %v413 = vadd.f32 %v199, %v412
    %v414 = vpop.f32.mrb[0].mxu0
    %v415 = vadd.f32 %v203, %v414
    %v416 = vpop.f32.mrb[0].mxu0
    %v417 = vadd.f32 %v199, %v416
    %v418 = vpop.f32.mrb[0].mxu0
    %v419 = vadd.f32 %v203, %v418
    %420 = vmatprep.mubr.bf16.mxu0 0
    %421 = vmatmul.mubr.bf16.gmra.mrb[0].mxu0 %v321
    %v422 = vpop.f32.mrb[0].mxu0
    %v423 = vadd.f32 %v199, %v422
    %v424 = vpop.f32.mrb[0].mxu0
    %v425 = vadd.f32 %v203, %v424
    %v426 = vpop.f32.mrb[0].mxu0
    %v427 = vadd.f32 %v199, %v426
    %v428 = vpop.f32.mrb[0].mxu0
    %v429 = vadd.f32 %v203, %v428
    %430 = vmatprep.mubr.bf16.mxu0 0
    %431 = vmatmul.mubr.bf16.gmra.mrb[0].mxu0 %v324
    %v432 = vpop.f32.mrb[0].mxu0
    %v433 = vadd.f32 %v199, %v432
    %v434 = vpop.f32.mrb[0].mxu0
    %v435 = vadd.f32 %v203, %v434
    %v436 = vpop.f32.mrb[0].mxu0
    %v437 = vadd.f32 %v199, %v436
    %v438 = vpop.f32.mrb[0].mxu0
    %v439 = vadd.f32 %v203, %v438
    %440 = vmatprep.mubr.bf16.mxu0 0
    %441 = vmatmul.mubr.bf16.gmra.mrb[0].mxu0 %v327
    %v442 = vpop.f32.mrb[0].mxu0
    %v443 = vadd.f32 %v199, %v442
    %v444 = vpop.f32.mrb[0].mxu0
    %v445 = vadd.f32 %v203, %v444
    %v446 = vpop.f32.mrb[0].mxu0
    %v447 = vadd.f32 %v199, %v446
    %v448 = vpop.f32.mrb[0].mxu0
    %v449 = vadd.f32 %v203, %v448
    %450 = vdwg.mxu0
    %451 = vmatprep.subr.bf16.mxu0 %v340
    %452 = vmatpush1.bf16.msra.mxu0 %v337
    %453 = vmatprep.subr.bf16.mxu0 0
    %454 = vmatpush1.bf16.msra.mxu0 0
    %455 = vmatprep.subr.bf16.mxu0 0
    %456 = vmatpush1.bf16.msra.mxu0 0
    %457 = vmatprep.subr.bf16.mxu0 0
    %458 = vmatpush1.bf16.msra.mxu0 0
    %459 = vmatprep.subr.bf16.mxu0 0
    %460 = vmatpush1.bf16.msra.mxu0 0
    %461 = vmatprep.subr.bf16.mxu0 0
    %462 = vmatpush1.bf16.msra.mxu0 0
    %463 = vmatprep.subr.bf16.mxu0 0
    %464 = vmatpush1.bf16.msra.mxu0 0
    %465 = vmatprep.subr.bf16.mxu0 0
    %466 = vmatpush1.bf16.msra.mxu0 0
    %467 = vmatprep.subr.bf16.mxu0 0
    %468 = vmatpush1.bf16.msra.mxu0 0
    %469 = vmatprep.subr.bf16.mxu0 0
    %470 = vmatpush1.bf16.msra.mxu0 0
    %471 = vmatprep.subr.bf16.mxu0 0
    %472 = vmatpush1.bf16.msra.mxu0 0
    %473 = vmatprep.subr.bf16.mxu0 0
    %474 = vmatpush1.bf16.msra.mxu0 0
    %475 = vmatprep.subr.bf16.mxu0 0
    %476 = vmatpush1.bf16.msra.mxu0 0
    %477 = vmatprep.subr.bf16.mxu0 0
    %478 = vmatpush1.bf16.msra.mxu0 0
    %479 = vmatprep.subr.bf16.mxu0 0
    %480 = vmatpush1.bf16.msra.mxu0 0
    %481 = vmatprep.subr.bf16.mxu0 0
    %482 = vmatpush1.bf16.msra.mxu0 0
    %483 = vmatprep.mubr.bf16.mxu0 0
    %484 = vmatmul.mubr.bf16.gmra.mrb[0].mxu0 %v318
    %v485 = vpop.f32.mrb[0].mxu0
    %v486 = vadd.f32 %v207, %v485
    %v487 = vpop.f32.mrb[0].mxu0
    %v488 = vadd.f32 %v211, %v487
    %v489 = vpop.f32.mrb[0].mxu0
    %v490 = vadd.f32 %v207, %v489
    %v491 = vpop.f32.mrb[0].mxu0
    %v492 = vadd.f32 %v211, %v491
    %493 = vmatprep.mubr.bf16.mxu0 0
    %494 = vmatmul.mubr.bf16.gmra.mrb[0].mxu0 %v321
    %v495 = vpop.f32.mrb[0].mxu0
    %v496 = vadd.f32 %v207, %v495
    %v497 = vpop.f32.mrb[0].mxu0
    %v498 = vadd.f32 %v211, %v497
    %v499 = vpop.f32.mrb[0].mxu0
    %v500 = vadd.f32 %v207, %v499
    %v501 = vpop.f32.mrb[0].mxu0
    %v502 = vadd.f32 %v211, %v501
    %503 = vmatprep.mubr.bf16.mxu0 0
    %504 = vmatmul.mubr.bf16.gmra.mrb[0].mxu0 %v324
    %v505 = vpop.f32.mrb[0].mxu0
    %v506 = vadd.f32 %v207, %v505
    %v507 = vpop.f32.mrb[0].mxu0
    %v508 = vadd.f32 %v211, %v507
    %v509 = vpop.f32.mrb[0].mxu0
    %v510 = vadd.f32 %v207, %v509
    %v511 = vpop.f32.mrb[0].mxu0
    %v512 = vadd.f32 %v211, %v511
    %513 = vmatprep.mubr.bf16.mxu0 0
    %514 = vmatmul.mubr.bf16.gmra.mrb[0].mxu0 %v327
    %v515 = vpop.f32.mrb[0].mxu0
    %v516 = vadd.f32 %v207, %v515
    %v517 = vpop.f32.mrb[0].mxu0
    %v518 = vadd.f32 %v211, %v517
    %v519 = vpop.f32.mrb[0].mxu0
    %v520 = vadd.f32 %v207, %v519
    %v521 = vpop.f32.mrb[0].mxu0
    %v522 = vadd.f32 %v211, %v521
    %523 = vdwg.mxu0
    %524 = vmatprep.subr.bf16.mxu0 %v346
    %525 = vmatpush1.bf16.msra.mxu0 %v343
    %526 = vmatprep.subr.bf16.mxu0 0
    %527 = vmatpush1.bf16.msra.mxu0 0
    %528 = vmatprep.subr.bf16.mxu0 0
    %529 = vmatpush1.bf16.msra.mxu0 0
    %530 = vmatprep.subr.bf16.mxu0 0
    %531 = vmatpush1.bf16.msra.mxu0 0
    %532 = vmatprep.subr.bf16.mxu0 0
    %533 = vmatpush1.bf16.msra.mxu0 0
    %534 = vmatprep.subr.bf16.mxu0 0
    %535 = vmatpush1.bf16.msra.mxu0 0
    %536 = vmatprep.subr.bf16.mxu0 0
    %537 = vmatpush1.bf16.msra.mxu0 0
    %538 = vmatprep.subr.bf16.mxu0 0
    %539 = vmatpush1.bf16.msra.mxu0 0
    %540 = vmatprep.subr.bf16.mxu0 0
    %541 = vmatpush1.bf16.msra.mxu0 0
    %542 = vmatprep.subr.bf16.mxu0 0
    %543 = vmatpush1.bf16.msra.mxu0 0
    %544 = vmatprep.subr.bf16.mxu0 0
    %545 = vmatpush1.bf16.msra.mxu0 0
    %546 = vmatprep.subr.bf16.mxu0 0
    %547 = vmatpush1.bf16.msra.mxu0 0
    %548 = vmatprep.subr.bf16.mxu0 0
    %549 = vmatpush1.bf16.msra.mxu0 0
    %550 = vmatprep.subr.bf16.mxu0 0
    %551 = vmatpush1.bf16.msra.mxu0 0
    %552 = vmatprep.subr.bf16.mxu0 0
    %553 = vmatpush1.bf16.msra.mxu0 0
    %554 = vmatprep.subr.bf16.mxu0 0
    %555 = vmatpush1.bf16.msra.mxu0 0
    %556 = vmatprep.mubr.bf16.mxu0 0
    %557 = vmatmul.mubr.bf16.gmra.mrb[0].mxu0 %v318
    %v558 = vpop.f32.mrb[0].mxu0
    %v559 = vadd.f32 %v215, %v558
    %v560 = vpop.f32.mrb[0].mxu0
    %v561 = vadd.f32 %v219, %v560
    %v562 = vpop.f32.mrb[0].mxu0
    %v563 = vadd.f32 %v215, %v562
    %v564 = vpop.f32.mrb[0].mxu0
    %v565 = vadd.f32 %v219, %v564
    %566 = vmatprep.mubr.bf16.mxu0 0
    %567 = vmatmul.mubr.bf16.gmra.mrb[0].mxu0 %v321
    %v568 = vpop.f32.mrb[0].mxu0
    %v569 = vadd.f32 %v215, %v568
    %v570 = vpop.f32.mrb[0].mxu0
    %v571 = vadd.f32 %v219, %v570
    %v572 = vpop.f32.mrb[0].mxu0
    %v573 = vadd.f32 %v215, %v572
    %v574 = vpop.f32.mrb[0].mxu0
    %v575 = vadd.f32 %v219, %v574
    %576 = vmatprep.mubr.bf16.mxu0 0
    %577 = vmatmul.mubr.bf16.gmra.mrb[0].mxu0 %v324
    %v578 = vpop.f32.mrb[0].mxu0
    %v579 = vadd.f32 %v215, %v578
    %v580 = vpop.f32.mrb[0].mxu0
    %v581 = vadd.f32 %v219, %v580
    %v582 = vpop.f32.mrb[0].mxu0
    %v583 = vadd.f32 %v215, %v582
    %v584 = vpop.f32.mrb[0].mxu0
    %v585 = vadd.f32 %v219, %v584
    %586 = vmatprep.mubr.bf16.mxu0 0
    %587 = vmatmul.mubr.bf16.gmra.mrb[0].mxu0 %v327
    %v588 = vpop.f32.mrb[0].mxu0
    %v589 = vadd.f32 %v215, %v588
    %v590 = vpop.f32.mrb[0].mxu0
    %v591 = vadd.f32 %v219, %v590
    %v592 = vpop.f32.mrb[0].mxu0
    %v593 = vadd.f32 %v215, %v592
    %v594 = vpop.f32.mrb[0].mxu0
    %v595 = vadd.f32 %v219, %v594
    %596 = vdwg.mxu0
    %597 = vmatprep.subr.bf16.mxu0 %v352
    %598 = vmatpush1.bf16.msra.mxu0 %v349
    %599 = vmatprep.subr.bf16.mxu0 0
    %600 = vmatpush1.bf16.msra.mxu0 0
    %601 = vmatprep.subr.bf16.mxu0 0
    %602 = vmatpush1.bf16.msra.mxu0 0
    %603 = vmatprep.subr.bf16.mxu0 0
    %604 = vmatpush1.bf16.msra.mxu0 0
    %605 = vmatprep.subr.bf16.mxu0 0
    %606 = vmatpush1.bf16.msra.mxu0 0
    %607 = vmatprep.subr.bf16.mxu0 0
    %608 = vmatpush1.bf16.msra.mxu0 0
    %609 = vmatprep.subr.bf16.mxu0 0
    %610 = vmatpush1.bf16.msra.mxu0 0
    %611 = vmatprep.subr.bf16.mxu0 0
    %612 = vmatpush1.bf16.msra.mxu0 0
    %613 = vmatprep.subr.bf16.mxu0 0
    %614 = vmatpush1.bf16.msra.mxu0 0
    %615 = vmatprep.subr.bf16.mxu0 0
    %616 = vmatpush1.bf16.msra.mxu0 0
    %617 = vmatprep.subr.bf16.mxu0 0
    %618 = vmatpush1.bf16.msra.mxu0 0
    %619 = vmatprep.subr.bf16.mxu0 0
    %620 = vmatpush1.bf16.msra.mxu0 0
    %621 = vmatprep.subr.bf16.mxu0 0
    %622 = vmatpush1.bf16.msra.mxu0 0
    %623 = vmatprep.subr.bf16.mxu0 0
    %624 = vmatpush1.bf16.msra.mxu0 0
    %625 = vmatprep.subr.bf16.mxu0 0
    %626 = vmatpush1.bf16.msra.mxu0 0
    %627 = vmatprep.subr.bf16.mxu0 0
    %628 = vmatpush1.bf16.msra.mxu0 0
    %629 = vmatprep.mubr.bf16.mxu0 0
    %630 = vmatmul.mubr.bf16.gmra.mrb[0].mxu0 %v318
    %v631 = vpop.f32.mrb[0].mxu0
    %v632 = vadd.f32 %v223, %v631
    %v633 = vpop.f32.mrb[0].mxu0
    %v634 = vadd.f32 %v227, %v633
    %v635 = vpop.f32.mrb[0].mxu0
    %v636 = vadd.f32 %v223, %v635
    %v637 = vpop.f32.mrb[0].mxu0
    %v638 = vadd.f32 %v227, %v637
    %639 = vmatprep.mubr.bf16.mxu0 0
    %640 = vmatmul.mubr.bf16.gmra.mrb[0].mxu0 %v321
    %v641 = vpop.f32.mrb[0].mxu0
    %v642 = vadd.f32 %v223, %v641
    %v643 = vpop.f32.mrb[0].mxu0
    %v644 = vadd.f32 %v227, %v643
    %v645 = vpop.f32.mrb[0].mxu0
    %v646 = vadd.f32 %v223, %v645
    %v647 = vpop.f32.mrb[0].mxu0
    %v648 = vadd.f32 %v227, %v647
    %649 = vmatprep.mubr.bf16.mxu0 0
    %650 = vmatmul.mubr.bf16.gmra.mrb[0].mxu0 %v324
    %v651 = vpop.f32.mrb[0].mxu0
    %v652 = vadd.f32 %v223, %v651
    %v653 = vpop.f32.mrb[0].mxu0
    %v654 = vadd.f32 %v227, %v653
    %v655 = vpop.f32.mrb[0].mxu0
    %v656 = vadd.f32 %v223, %v655
    %v657 = vpop.f32.mrb[0].mxu0
    %v658 = vadd.f32 %v227, %v657
    %659 = vmatprep.mubr.bf16.mxu0 0
    %660 = vmatmul.mubr.bf16.gmra.mrb[0].mxu0 %v327
    %v661 = vpop.f32.mrb[0].mxu0
    %v662 = vadd.f32 %v223, %v661
    %v663 = vpop.f32.mrb[0].mxu0
    %v664 = vadd.f32 %v227, %v663
    %v665 = vpop.f32.mrb[0].mxu0
    %v666 = vadd.f32 %v223, %v665
    %v667 = vpop.f32.mrb[0].mxu0
    %v668 = vadd.f32 %v227, %v667
    %669 = vdwg.mxu0
    %670 = vmatprep.subr.bf16.mxu0 %v358
    %671 = vmatpush1.bf16.msra.mxu0 %v355
    %672 = vmatprep.subr.bf16.mxu0 0
    %673 = vmatpush1.bf16.msra.mxu0 0
    %674 = vmatprep.subr.bf16.mxu0 0
    %675 = vmatpush1.bf16.msra.mxu0 0
    %676 = vmatprep.subr.bf16.mxu0 0
    %677 = vmatpush1.bf16.msra.mxu0 0
    %678 = vmatprep.subr.bf16.mxu0 0
    %679 = vmatpush1.bf16.msra.mxu0 0
    %680 = vmatprep.subr.bf16.mxu0 0
    %681 = vmatpush1.bf16.msra.mxu0 0
    %682 = vmatprep.subr.bf16.mxu0 0
    %683 = vmatpush1.bf16.msra.mxu0 0
    %684 = vmatprep.subr.bf16.mxu0 0
    %685 = vmatpush1.bf16.msra.mxu0 0
    %686 = vmatprep.subr.bf16.mxu0 0
    %687 = vmatpush1.bf16.msra.mxu0 0
    %688 = vmatprep.subr.bf16.mxu0 0
    %689 = vmatpush1.bf16.msra.mxu0 0
    %690 = vmatprep.subr.bf16.mxu0 0
    %691 = vmatpush1.bf16.msra.mxu0 0
    %692 = vmatprep.subr.bf16.mxu0 0
    %693 = vmatpush1.bf16.msra.mxu0 0
    %694 = vmatprep.subr.bf16.mxu0 0
    %695 = vmatpush1.bf16.msra.mxu0 0
    %696 = vmatprep.subr.bf16.mxu0 0
    %697 = vmatpush1.bf16.msra.mxu0 0
    %698 = vmatprep.subr.bf16.mxu0 0
    %699 = vmatpush1.bf16.msra.mxu0 0
    %700 = vmatprep.subr.bf16.mxu0 0
    %701 = vmatpush1.bf16.msra.mxu0 0
    %702 = vmatprep.mubr.bf16.mxu0 0
    %703 = vmatmul.mubr.bf16.gmra.mrb[0].mxu0 %v318
    %v704 = vpop.f32.mrb[0].mxu0
    %v705 = vadd.f32 %v231, %v704
    %v706 = vpop.f32.mrb[0].mxu0
    %v707 = vadd.f32 %v235, %v706
    %v708 = vpop.f32.mrb[0].mxu0
    %v709 = vadd.f32 %v231, %v708
    %v710 = vpop.f32.mrb[0].mxu0
    %v711 = vadd.f32 %v235, %v710
    %712 = vmatprep.mubr.bf16.mxu0 0
    %713 = vmatmul.mubr.bf16.gmra.mrb[0].mxu0 %v321
    %v714 = vpop.f32.mrb[0].mxu0
    %v715 = vadd.f32 %v231, %v714
    %v716 = vpop.f32.mrb[0].mxu0
    %v717 = vadd.f32 %v235, %v716
    %v718 = vpop.f32.mrb[0].mxu0
    %v719 = vadd.f32 %v231, %v718
    %v720 = vpop.f32.mrb[0].mxu0
    %v721 = vadd.f32 %v235, %v720
    %722 = vmatprep.mubr.bf16.mxu0 0
    %723 = vmatmul.mubr.bf16.gmra.mrb[0].mxu0 %v324
    %v724 = vpop.f32.mrb[0].mxu0
    %v725 = vadd.f32 %v231, %v724
    %v726 = vpop.f32.mrb[0].mxu0
    %v727 = vadd.f32 %v235, %v726
    %v728 = vpop.f32.mrb[0].mxu0
    %v729 = vadd.f32 %v231, %v728
    %v730 = vpop.f32.mrb[0].mxu0
    %v731 = vadd.f32 %v235, %v730
    %732 = vmatprep.mubr.bf16.mxu0 0
    %733 = vmatmul.mubr.bf16.gmra.mrb[0].mxu0 %v327
    %v734 = vpop.f32.mrb[0].mxu0
    %v735 = vadd.f32 %v231, %v734
    %v736 = vpop.f32.mrb[0].mxu0
    %v737 = vadd.f32 %v235, %v736
    %v738 = vpop.f32.mrb[0].mxu0
    %v739 = vadd.f32 %v231, %v738
    %v740 = vpop.f32.mrb[0].mxu0
    %v741 = vadd.f32 %v235, %v740
    %742 = vdwg.mxu0
    %743 = vmatprep.subr.bf16.mxu0 %v364
    %744 = vmatpush1.bf16.msra.mxu0 %v361
    %745 = vmatprep.subr.bf16.mxu0 0
    %746 = vmatpush1.bf16.msra.mxu0 0
    %747 = vmatprep.subr.bf16.mxu0 0
    %748 = vmatpush1.bf16.msra.mxu0 0
    %749 = vmatprep.subr.bf16.mxu0 0
    %750 = vmatpush1.bf16.msra.mxu0 0
    %751 = vmatprep.subr.bf16.mxu0 0
    %752 = vmatpush1.bf16.msra.mxu0 0
    %753 = vmatprep.subr.bf16.mxu0 0
    %754 = vmatpush1.bf16.msra.mxu0 0
    %755 = vmatprep.subr.bf16.mxu0 0
    %756 = vmatpush1.bf16.msra.mxu0 0
    %757 = vmatprep.subr.bf16.mxu0 0
    %758 = vmatpush1.bf16.msra.mxu0 0
    %759 = vmatprep.subr.bf16.mxu0 0
    %760 = vmatpush1.bf16.msra.mxu0 0
    %761 = vmatprep.subr.bf16.mxu0 0
    %762 = vmatpush1.bf16.msra.mxu0 0
    %763 = vmatprep.subr.bf16.mxu0 0
    %764 = vmatpush1.bf16.msra.mxu0 0
    %765 = vmatprep.subr.bf16.mxu0 0
    %766 = vmatpush1.bf16.msra.mxu0 0
    %767 = vmatprep.subr.bf16.mxu0 0
    %768 = vmatpush1.bf16.msra.mxu0 0
    %769 = vmatprep.subr.bf16.mxu0 0
    %770 = vmatpush1.bf16.msra.mxu0 0
    %771 = vmatprep.subr.bf16.mxu0 0
    %772 = vmatpush1.bf16.msra.mxu0 0
    %773 = vmatprep.subr.bf16.mxu0 0
    %774 = vmatpush1.bf16.msra.mxu0 0
    %775 = vmatprep.mubr.bf16.mxu0 0
    %776 = vmatmul.mubr.bf16.gmra.mrb[0].mxu0 %v318
    %v777 = vpop.f32.mrb[0].mxu0
    %v778 = vadd.f32 %v239, %v777
    %v779 = vpop.f32.mrb[0].mxu0
    %v780 = vadd.f32 %v243, %v779
    %v781 = vpop.f32.mrb[0].mxu0
    %v782 = vadd.f32 %v239, %v781
    %v783 = vpop.f32.mrb[0].mxu0
    %v784 = vadd.f32 %v243, %v783
    %785 = vmatprep.mubr.bf16.mxu0 0
    %786 = vmatmul.mubr.bf16.gmra.mrb[0].mxu0 %v321
    %v787 = vpop.f32.mrb[0].mxu0
    %v788 = vadd.f32 %v239, %v787
    %v789 = vpop.f32.mrb[0].mxu0
    %v790 = vadd.f32 %v243, %v789
    %v791 = vpop.f32.mrb[0].mxu0
    %v792 = vadd.f32 %v239, %v791
    %v793 = vpop.f32.mrb[0].mxu0
    %v794 = vadd.f32 %v243, %v793
    %795 = vmatprep.mubr.bf16.mxu0 0
    %796 = vmatmul.mubr.bf16.gmra.mrb[0].mxu0 %v324
    %v797 = vpop.f32.mrb[0].mxu0
    %v798 = vadd.f32 %v239, %v797
    %v799 = vpop.f32.mrb[0].mxu0
    %v800 = vadd.f32 %v243, %v799
    %v801 = vpop.f32.mrb[0].mxu0
    %v802 = vadd.f32 %v239, %v801
    %v803 = vpop.f32.mrb[0].mxu0
    %v804 = vadd.f32 %v243, %v803
    %805 = vmatprep.mubr.bf16.mxu0 0
    %806 = vmatmul.mubr.bf16.gmra.mrb[0].mxu0 %v327
    %v807 = vpop.f32.mrb[0].mxu0
    %v808 = vadd.f32 %v239, %v807
    %v809 = vpop.f32.mrb[0].mxu0
    %v810 = vadd.f32 %v243, %v809
    %v811 = vpop.f32.mrb[0].mxu0
    %v812 = vadd.f32 %v239, %v811
    %v813 = vpop.f32.mrb[0].mxu0
    %v814 = vadd.f32 %v243, %v813
    %815 = vdwg.mxu0
    %816 = vmatprep.subr.bf16.mxu0 %v370
    %817 = vmatpush1.bf16.msra.mxu0 %v367
    %818 = vmatprep.subr.bf16.mxu0 0
    %819 = vmatpush1.bf16.msra.mxu0 0
    %820 = vmatprep.subr.bf16.mxu0 0
    %821 = vmatpush1.bf16.msra.mxu0 0
    %822 = vmatprep.subr.bf16.mxu0 0
    %823 = vmatpush1.bf16.msra.mxu0 0
    %824 = vmatprep.subr.bf16.mxu0 0
    %825 = vmatpush1.bf16.msra.mxu0 0
    %826 = vmatprep.subr.bf16.mxu0 0
    %827 = vmatpush1.bf16.msra.mxu0 0
    %828 = vmatprep.subr.bf16.mxu0 0
    %829 = vmatpush1.bf16.msra.mxu0 0
    %830 = vmatprep.subr.bf16.mxu0 0
    %831 = vmatpush1.bf16.msra.mxu0 0
    %832 = vmatprep.subr.bf16.mxu0 0
    %833 = vmatpush1.bf16.msra.mxu0 0
    %834 = vmatprep.subr.bf16.mxu0 0
    %835 = vmatpush1.bf16.msra.mxu0 0
    %836 = vmatprep.subr.bf16.mxu0 0
    %837 = vmatpush1.bf16.msra.mxu0 0
    %838 = vmatprep.subr.bf16.mxu0 0
    %839 = vmatpush1.bf16.msra.mxu0 0
    %840 = vmatprep.subr.bf16.mxu0 0
    %841 = vmatpush1.bf16.msra.mxu0 0
    %842 = vmatprep.subr.bf16.mxu0 0
    %843 = vmatpush1.bf16.msra.mxu0 0
    %844 = vmatprep.subr.bf16.mxu0 0
    %845 = vmatpush1.bf16.msra.mxu0 0
    %846 = vmatprep.subr.bf16.mxu0 0
    %847 = vmatpush1.bf16.msra.mxu0 0
    %848 = vmatprep.mubr.bf16.mxu0 0
    %849 = vmatmul.mubr.bf16.gmra.mrb[0].mxu0 %v318
    %v850 = vpop.f32.mrb[0].mxu0
    %v851 = vadd.f32 %v247, %v850
    %v852 = vpop.f32.mrb[0].mxu0
    %v853 = vadd.f32 %v251, %v852
    %v854 = vpop.f32.mrb[0].mxu0
    %v855 = vadd.f32 %v247, %v854
    %v856 = vpop.f32.mrb[0].mxu0
    %v857 = vadd.f32 %v251, %v856
    %858 = vmatprep.mubr.bf16.mxu0 0
    %859 = vmatmul.mubr.bf16.gmra.mrb[0].mxu0 %v321
    %v860 = vpop.f32.mrb[0].mxu0
    %v861 = vadd.f32 %v247, %v860
    %v862 = vpop.f32.mrb[0].mxu0
    %v863 = vadd.f32 %v251, %v862
    %v864 = vpop.f32.mrb[0].mxu0
    %v865 = vadd.f32 %v247, %v864
    %v866 = vpop.f32.mrb[0].mxu0
    %v867 = vadd.f32 %v251, %v866
    %868 = vmatprep.mubr.bf16.mxu0 0
    %869 = vmatmul.mubr.bf16.gmra.mrb[0].mxu0 %v324
    %v870 = vpop.f32.mrb[0].mxu0
    %v871 = vadd.f32 %v247, %v870
    %v872 = vpop.f32.mrb[0].mxu0
    %v873 = vadd.f32 %v251, %v872
    %v874 = vpop.f32.mrb[0].mxu0
    %v875 = vadd.f32 %v247, %v874
    %v876 = vpop.f32.mrb[0].mxu0
    %v877 = vadd.f32 %v251, %v876
    %878 = vmatprep.mubr.bf16.mxu0 0
    %879 = vmatmul.mubr.bf16.gmra.mrb[0].mxu0 %v327
    %v880 = vpop.f32.mrb[0].mxu0
    %v881 = vadd.f32 %v247, %v880
    %v882 = vpop.f32.mrb[0].mxu0
    %v883 = vadd.f32 %v251, %v882
    %v884 = vpop.f32.mrb[0].mxu0
    %v885 = vadd.f32 %v247, %v884
    %v886 = vpop.f32.mrb[0].mxu0
    %v887 = vadd.f32 %v251, %v886
    %888 = vdwg.mxu0
    %889 = vmatprep.subr.bf16.mxu0 %v376
    %890 = vmatpush1.bf16.msra.mxu0 %v373
    %891 = vmatprep.subr.bf16.mxu0 0
    %892 = vmatpush1.bf16.msra.mxu0 0
    %893 = vmatprep.subr.bf16.mxu0 0
    %894 = vmatpush1.bf16.msra.mxu0 0
    %895 = vmatprep.subr.bf16.mxu0 0
    %896 = vmatpush1.bf16.msra.mxu0 0
    %897 = vmatprep.subr.bf16.mxu0 0
    %898 = vmatpush1.bf16.msra.mxu0 0
    %899 = vmatprep.subr.bf16.mxu0 0
    %900 = vmatpush1.bf16.msra.mxu0 0
    %901 = vmatprep.subr.bf16.mxu0 0
    %902 = vmatpush1.bf16.msra.mxu0 0
    %903 = vmatprep.subr.bf16.mxu0 0
    %904 = vmatpush1.bf16.msra.mxu0 0
    %905 = vmatprep.subr.bf16.mxu0 0
    %906 = vmatpush1.bf16.msra.mxu0 0
    %907 = vmatprep.subr.bf16.mxu0 0
    %908 = vmatpush1.bf16.msra.mxu0 0
    %909 = vmatprep.subr.bf16.mxu0 0
    %910 = vmatpush1.bf16.msra.mxu0 0
    %911 = vmatprep.subr.bf16.mxu0 0
    %912 = vmatpush1.bf16.msra.mxu0 0
    %913 = vmatprep.subr.bf16.mxu0 0
    %914 = vmatpush1.bf16.msra.mxu0 0
    %915 = vmatprep.subr.bf16.mxu0 0
    %916 = vmatpush1.bf16.msra.mxu0 0
    %917 = vmatprep.subr.bf16.mxu0 0
    %918 = vmatpush1.bf16.msra.mxu0 0
    %919 = vmatprep.subr.bf16.mxu0 0
    %920 = vmatpush1.bf16.msra.mxu0 0
    %921 = vmatprep.mubr.bf16.mxu0 0
    %922 = vmatmul.mubr.bf16.gmra.mrb[0].mxu0 %v318
    %v923 = vpop.f32.mrb[0].mxu0
    %v924 = vadd.f32 %v255, %v923
    %v925 = vpop.f32.mrb[0].mxu0
    %v926 = vadd.f32 %v259, %v925
    %v927 = vpop.f32.mrb[0].mxu0
    %v928 = vadd.f32 %v255, %v927
    %v929 = vpop.f32.mrb[0].mxu0
    %v930 = vadd.f32 %v259, %v929
    %931 = vmatprep.mubr.bf16.mxu0 0
    %932 = vmatmul.mubr.bf16.gmra.mrb[0].mxu0 %v321
    %v933 = vpop.f32.mrb[0].mxu0
    %v934 = vadd.f32 %v255, %v933
    %v935 = vpop.f32.mrb[0].mxu0
    %v936 = vadd.f32 %v259, %v935
    %v937 = vpop.f32.mrb[0].mxu0
    %v938 = vadd.f32 %v255, %v937
    %v939 = vpop.f32.mrb[0].mxu0
    %v940 = vadd.f32 %v259, %v939
    %941 = vmatprep.mubr.bf16.mxu0 0
    %942 = vmatmul.mubr.bf16.gmra.mrb[0].mxu0 %v324
    %v943 = vpop.f32.mrb[0].mxu0
    %v944 = vadd.f32 %v255, %v943
    %v945 = vpop.f32.mrb[0].mxu0
    %v946 = vadd.f32 %v259, %v945
    %v947 = vpop.f32.mrb[0].mxu0
    %v948 = vadd.f32 %v255, %v947
    %v949 = vpop.f32.mrb[0].mxu0
    %v950 = vadd.f32 %v259, %v949
    %951 = vmatprep.mubr.bf16.mxu0 0
    %952 = vmatmul.mubr.bf16.gmra.mrb[0].mxu0 %v327
    %v953 = vpop.f32.mrb[0].mxu0
    %v954 = vadd.f32 %v255, %v953
    %v955 = vpop.f32.mrb[0].mxu0
    %v956 = vadd.f32 %v259, %v955
    %v957 = vpop.f32.mrb[0].mxu0
    %v958 = vadd.f32 %v255, %v957
    %v959 = vpop.f32.mrb[0].mxu0
    %v960 = vadd.f32 %v259, %v959
    %961 = vdwg.mxu0
    %962 = vst [vmem:[#allocation5] sm:$0xff] %v413
    %963 = vst [vmem:[#allocation5 + $0x8] sm:$0xff] %v415
    %964 = vst [vmem:[#allocation5 + $0x10] sm:$0xff] %v486
    %965 = vst [vmem:[#allocation5 + $0x18] sm:$0xff] %v488
    %966 = vst [vmem:[#allocation5 + $0x20] sm:$0xff] %v559
    %967 = vst [vmem:[#allocation5 + $0x28] sm:$0xff] %v561
    %968 = vst [vmem:[#allocation5 + $0x30] sm:$0xff] %v632
    %969 = vst [vmem:[#allocation5 + $0x38] sm:$0xff] %v634
    %970 = vst [vmem:[#allocation5 + $0x40] sm:$0xff] %v705
    %971 = vst [vmem:[#allocation5 + $0x48] sm:$0xff] %v707
    %972 = vst [vmem:[#allocation5 + $0x50] sm:$0xff] %v778
    %973 = vst [vmem:[#allocation5 + $0x58] sm:$0xff] %v780
    %974 = vst [vmem:[#allocation5 + $0x60] sm:$0xff] %v851
    %975 = vst [vmem:[#allocation5 + $0x68] sm:$0xff] %v853
    %976 = vst [vmem:[#allocation5 + $0x70] sm:$0xff] %v924
    %977 = vst [vmem:[#allocation5 + $0x78] sm:$0xff] %v926
    %978 = vst [vmem:[#allocation5 + $0x80] sm:$0xff] %v417
    %979 = vst [vmem:[#allocation5 + $0x88] sm:$0xff] %v419
    %980 = vst [vmem:[#allocation5 + $0x90] sm:$0xff] %v490
    %981 = vst [vmem:[#allocation5 + $0x98] sm:$0xff] %v492
    %982 = vst [vmem:[#allocation5 + $0xa0] sm:$0xff] %v563
    %983 = vst [vmem:[#allocation5 + $0xa8] sm:$0xff] %v565
    %984 = vst [vmem:[#allocation5 + $0xb0] sm:$0xff] %v636
    %985 = vst [vmem:[#allocation5 + $0xb8] sm:$0xff] %v638
    %986 = vst [vmem:[#allocation5 + $0xc0] sm:$0xff] %v709
    %987 = vst [vmem:[#allocation5 + $0xc8] sm:$0xff] %v711
    %988 = vst [vmem:[#allocation5 + $0xd0] sm:$0xff] %v782
    %989 = vst [vmem:[#allocation5 + $0xd8] sm:$0xff] %v784
    %990 = vst [vmem:[#allocation5 + $0xe0] sm:$0xff] %v855
    %991 = vst [vmem:[#allocation5 + $0xe8] sm:$0xff] %v857
    %992 = vst [vmem:[#allocation5 + $0xf0] sm:$0xff] %v928
    %993 = vst [vmem:[#allocation5 + $0xf8] sm:$0xff] %v930
    %994 = vst [vmem:[#allocation5 + $0x100] sm:$0xff] %v423
    %995 = vst [vmem:[#allocation5 + $0x108] sm:$0xff] %v425
    %996 = vst [vmem:[#allocation5 + $0x110] sm:$0xff] %v496
    %997 = vst [vmem:[#allocation5 + $0x118] sm:$0xff] %v498
    %998 = vst [vmem:[#allocation5 + $0x120] sm:$0xff] %v569
    %999 = vst [vmem:[#allocation5 + $0x128] sm:$0xff] %v571
    %1000 = vst [vmem:[#allocation5 + $0x130] sm:$0xff] %v642
    %1001 = vst [vmem:[#allocation5 + $0x138] sm:$0xff] %v644
    %1002 = vst [vmem:[#allocation5 + $0x140] sm:$0xff] %v715
    %1003 = vst [vmem:[#allocation5 + $0x148] sm:$0xff] %v717
    %1004 = vst [vmem:[#allocation5 + $0x150] sm:$0xff] %v788
    %1005 = vst [vmem:[#allocation5 + $0x158] sm:$0xff] %v790
    %1006 = vst [vmem:[#allocation5 + $0x160] sm:$0xff] %v861
    %1007 = vst [vmem:[#allocation5 + $0x168] sm:$0xff] %v863
    %1008 = vst [vmem:[#allocation5 + $0x170] sm:$0xff] %v934
    %1009 = vst [vmem:[#allocation5 + $0x178] sm:$0xff] %v936
    %1010 = vst [vmem:[#allocation5 + $0x180] sm:$0xff] %v427
    %1011 = vst [vmem:[#allocation5 + $0x188] sm:$0xff] %v429
    %1012 = vst [vmem:[#allocation5 + $0x190] sm:$0xff] %v500
    %1013 = vst [vmem:[#allocation5 + $0x198] sm:$0xff] %v502
    %1014 = vst [vmem:[#allocation5 + $0x1a0] sm:$0xff] %v573
    %1015 = vst [vmem:[#allocation5 + $0x1a8] sm:$0xff] %v575
    %1016 = vst [vmem:[#allocation5 + $0x1b0] sm:$0xff] %v646
    %1017 = vst [vmem:[#allocation5 + $0x1b8] sm:$0xff] %v648
    %1018 = vst [vmem:[#allocation5 + $0x1c0] sm:$0xff] %v719
    %1019 = vst [vmem:[#allocation5 + $0x1c8] sm:$0xff] %v721
    %1020 = vst [vmem:[#allocation5 + $0x1d0] sm:$0xff] %v792
    %1021 = vst [vmem:[#allocation5 + $0x1d8] sm:$0xff] %v794
    %1022 = vst [vmem:[#allocation5 + $0x1e0] sm:$0xff] %v865
    %1023 = vst [vmem:[#allocation5 + $0x1e8] sm:$0xff] %v867
    %1024 = vst [vmem:[#allocation5 + $0x1f0] sm:$0xff] %v938
    %1025 = vst [vmem:[#allocation5 + $0x1f8] sm:$0xff] %v940
    %1026 = vst [vmem:[#allocation5 + $0x200] sm:$0xff] %v433
    %1027 = vst [vmem:[#allocation5 + $0x208] sm:$0xff] %v435
    %1028 = vst [vmem:[#allocation5 + $0x210] sm:$0xff] %v506
    %1029 = vst [vmem:[#allocation5 + $0x218] sm:$0xff] %v508
    %1030 = vst [vmem:[#allocation5 + $0x220] sm:$0xff] %v579
    %1031 = vst [vmem:[#allocation5 + $0x228] sm:$0xff] %v581
    %1032 = vst [vmem:[#allocation5 + $0x230] sm:$0xff] %v652
    %1033 = vst [vmem:[#allocation5 + $0x238] sm:$0xff] %v654
    %1034 = vst [vmem:[#allocation5 + $0x240] sm:$0xff] %v725
    %1035 = vst [vmem:[#allocation5 + $0x248] sm:$0xff] %v727
    %1036 = vst [vmem:[#allocation5 + $0x250] sm:$0xff] %v798
    %1037 = vst [vmem:[#allocation5 + $0x258] sm:$0xff] %v800
    %1038 = vst [vmem:[#allocation5 + $0x260] sm:$0xff] %v871
    %1039 = vst [vmem:[#allocation5 + $0x268] sm:$0xff] %v873
    %1040 = vst [vmem:[#allocation5 + $0x270] sm:$0xff] %v944
    %1041 = vst [vmem:[#allocation5 + $0x278] sm:$0xff] %v946
    %1042 = vst [vmem:[#allocation5 + $0x280] sm:$0xff] %v437
    %1043 = vst [vmem:[#allocation5 + $0x288] sm:$0xff] %v439
    %1044 = vst [vmem:[#allocation5 + $0x290] sm:$0xff] %v510
    %1045 = vst [vmem:[#allocation5 + $0x298] sm:$0xff] %v512
    %1046 = vst [vmem:[#allocation5 + $0x2a0] sm:$0xff] %v583
    %1047 = vst [vmem:[#allocation5 + $0x2a8] sm:$0xff] %v585
    %1048 = vst [vmem:[#allocation5 + $0x2b0] sm:$0xff] %v656
    %1049 = vst [vmem:[#allocation5 + $0x2b8] sm:$0xff] %v658
    %1050 = vst [vmem:[#allocation5 + $0x2c0] sm:$0xff] %v729
    %1051 = vst [vmem:[#allocation5 + $0x2c8] sm:$0xff] %v731
    %1052 = vst [vmem:[#allocation5 + $0x2d0] sm:$0xff] %v802
    %1053 = vst [vmem:[#allocation5 + $0x2d8] sm:$0xff] %v804
    %1054 = vst [vmem:[#allocation5 + $0x2e0] sm:$0xff] %v875
    %1055 = vst [vmem:[#allocation5 + $0x2e8] sm:$0xff] %v877
    %1056 = vst [vmem:[#allocation5 + $0x2f0] sm:$0xff] %v948
    %1057 = vst [vmem:[#allocation5 + $0x2f8] sm:$0xff] %v950
    %1058 = vst [vmem:[#allocation5 + $0x300] sm:$0xff] %v443
    %1059 = vst [vmem:[#allocation5 + $0x308] sm:$0xff] %v445
    %1060 = vst [vmem:[#allocation5 + $0x310] sm:$0xff] %v516
    %1061 = vst [vmem:[#allocation5 + $0x318] sm:$0xff] %v518
    %1062 = vst [vmem:[#allocation5 + $0x320] sm:$0xff] %v589
    %1063 = vst [vmem:[#allocation5 + $0x328] sm:$0xff] %v591
    %1064 = vst [vmem:[#allocation5 + $0x330] sm:$0xff] %v662
    %1065 = vst [vmem:[#allocation5 + $0x338] sm:$0xff] %v664
    %1066 = vst [vmem:[#allocation5 + $0x340] sm:$0xff] %v735
    %1067 = vst [vmem:[#allocation5 + $0x348] sm:$0xff] %v737
    %1068 = vst [vmem:[#allocation5 + $0x350] sm:$0xff] %v808
    %1069 = vst [vmem:[#allocation5 + $0x358] sm:$0xff] %v810
    %1070 = vst [vmem:[#allocation5 + $0x360] sm:$0xff] %v881
    %1071 = vst [vmem:[#allocation5 + $0x368] sm:$0xff] %v883
    %1072 = vst [vmem:[#allocation5 + $0x370] sm:$0xff] %v954
    %1073 = vst [vmem:[#allocation5 + $0x378] sm:$0xff] %v956
    %1074 = vst [vmem:[#allocation5 + $0x380] sm:$0xff] %v447
    %1075 = vst [vmem:[#allocation5 + $0x388] sm:$0xff] %v449
    %1076 = vst [vmem:[#allocation5 + $0x390] sm:$0xff] %v520
    %1077 = vst [vmem:[#allocation5 + $0x398] sm:$0xff] %v522
    %1078 = vst [vmem:[#allocation5 + $0x3a0] sm:$0xff] %v593
    %1079 = vst [vmem:[#allocation5 + $0x3a8] sm:$0xff] %v595
    %1080 = vst [vmem:[#allocation5 + $0x3b0] sm:$0xff] %v666
    %1081 = vst [vmem:[#allocation5 + $0x3b8] sm:$0xff] %v668
    %1082 = vst [vmem:[#allocation5 + $0x3c0] sm:$0xff] %v739
    %1083 = vst [vmem:[#allocation5 + $0x3c8] sm:$0xff] %v741
    %1084 = vst [vmem:[#allocation5 + $0x3d0] sm:$0xff] %v812
    %1085 = vst [vmem:[#allocation5 + $0x3d8] sm:$0xff] %v814
    %1086 = vst [vmem:[#allocation5 + $0x3e0] sm:$0xff] %v885
    %1087 = vst [vmem:[#allocation5 + $0x3e8] sm:$0xff] %v887
    %1088 = vst [vmem:[#allocation5 + $0x3f0] sm:$0xff] %v958
    %1089 = vst [vmem:[#allocation5 + $0x3f8] sm:$0xff] %v960
    %s1090 = smul.u32 4, 64
    %s1091 = smul.u32 %s1090, 16
    %s1092 = sshll.u32 %s1091, 4
    %1093 = dma.done [#allocation6], %s1092
    %v1094 = vld [vmem:[#allocation5] sm:$0xff]
    %v1095 = vld [vmem:[#allocation5 + $0x8] sm:$0xff]
    %v1096 = vld [vmem:[#allocation5 + $0x10] sm:$0xff]
    %v1097 = vld [vmem:[#allocation5 + $0x18] sm:$0xff]
    %v1098 = vld [vmem:[#allocation5 + $0x20] sm:$0xff]
    %v1099 = vld [vmem:[#allocation5 + $0x28] sm:$0xff]
    %v1100 = vld [vmem:[#allocation5 + $0x30] sm:$0xff]
    %v1101 = vld [vmem:[#allocation5 + $0x38] sm:$0xff]
    %v1102 = vld [vmem:[#allocation5 + $0x40] sm:$0xff]
    %v1103 = vld [vmem:[#allocation5 + $0x48] sm:$0xff]
    %v1104 = vld [vmem:[#allocation5 + $0x50] sm:$0xff]
    %v1105 = vld [vmem:[#allocation5 + $0x58] sm:$0xff]
    %v1106 = vld [vmem:[#allocation5 + $0x60] sm:$0xff]
    %v1107 = vld [vmem:[#allocation5 + $0x68] sm:$0xff]
    %v1108 = vld [vmem:[#allocation5 + $0x70] sm:$0xff]
    %v1109 = vld [vmem:[#allocation5 + $0x78] sm:$0xff]
    %v1110 = vld [vmem:[#allocation2] sm:$0xff]
    %v1111 = vld [vmem:[#allocation2 + $0x8] sm:$0xff]
    %v1112 = vld [vmem:[#allocation2 + $0x10] sm:$0xff]
    %v1113 = vld [vmem:[#allocation2 + $0x18] sm:$0xff]
    %v1114 = vld [vmem:[#allocation2 + $0x20] sm:$0xff]
    %v1115 = vld [vmem:[#allocation2 + $0x28] sm:$0xff]
    %v1116 = vld [vmem:[#allocation2 + $0x30] sm:$0xff]
    %v1117 = vld [vmem:[#allocation2 + $0x38] sm:$0xff]
    %v1118 = vld [vmem:[#allocation2 + $0x40] sm:$0xff]
    %v1119 = vld [vmem:[#allocation2 + $0x48] sm:$0xff]
    %v1120 = vld [vmem:[#allocation2 + $0x50] sm:$0xff]
    %v1121 = vld [vmem:[#allocation2 + $0x58] sm:$0xff]
    %v1122 = vld [vmem:[#allocation2 + $0x60] sm:$0xff]
    %v1123 = vld [vmem:[#allocation2 + $0x68] sm:$0xff]
    %v1124 = vld [vmem:[#allocation2 + $0x70] sm:$0xff]
    %v1125 = vld [vmem:[#allocation2 + $0x78] sm:$0xff]
    %v1126 = vld [vmem:[#allocation2 + $0x80] sm:$0xff]
    %v1127 = vld [vmem:[#allocation2 + $0x88] sm:$0xff]
    %v1128 = vld [vmem:[#allocation2 + $0x90] sm:$0xff]
    %v1129 = vld [vmem:[#allocation2 + $0x98] sm:$0xff]
    %v1130 = vld [vmem:[#allocation2 + $0xa0] sm:$0xff]
    %v1131 = vld [vmem:[#allocation2 + $0xa8] sm:$0xff]
    %v1132 = vld [vmem:[#allocation2 + $0xb0] sm:$0xff]
    %v1133 = vld [vmem:[#allocation2 + $0xb8] sm:$0xff]
    %v1134 = vld [vmem:[#allocation2 + $0xc0] sm:$0xff]
    %v1135 = vld [vmem:[#allocation2 + $0xc8] sm:$0xff]
    %v1136 = vld [vmem:[#allocation2 + $0xd0] sm:$0xff]
    %v1137 = vld [vmem:[#allocation2 + $0xd8] sm:$0xff]
    %v1138 = vld [vmem:[#allocation2 + $0xe0] sm:$0xff]
    %v1139 = vld [vmem:[#allocation2 + $0xe8] sm:$0xff]
    %v1140 = vld [vmem:[#allocation2 + $0xf0] sm:$0xff]
    %v1141 = vld [vmem:[#allocation2 + $0xf8] sm:$0xff]
    %v1142 = vld [vmem:[#allocation2 + $0x100] sm:$0xff]
    %v1143 = vld [vmem:[#allocation2 + $0x108] sm:$0xff]
    %v1144 = vld [vmem:[#allocation2 + $0x110] sm:$0xff]
    %v1145 = vld [vmem:[#allocation2 + $0x118] sm:$0xff]
    %v1146 = vld [vmem:[#allocation2 + $0x120] sm:$0xff]
    %v1147 = vld [vmem:[#allocation2 + $0x128] sm:$0xff]
    %v1148 = vld [vmem:[#allocation2 + $0x130] sm:$0xff]
    %v1149 = vld [vmem:[#allocation2 + $0x138] sm:$0xff]
    %v1150 = vld [vmem:[#allocation2 + $0x140] sm:$0xff]
    %v1151 = vld [vmem:[#allocation2 + $0x148] sm:$0xff]
    %v1152 = vld [vmem:[#allocation2 + $0x150] sm:$0xff]
    %v1153 = vld [vmem:[#allocation2 + $0x158] sm:$0xff]
    %v1154 = vld [vmem:[#allocation2 + $0x160] sm:$0xff]
    %v1155 = vld [vmem:[#allocation2 + $0x168] sm:$0xff]
    %v1156 = vld [vmem:[#allocation2 + $0x170] sm:$0xff]
    %v1157 = vld [vmem:[#allocation2 + $0x178] sm:$0xff]
    %v1158 = vld [vmem:[#allocation2 + $0x180] sm:$0xff]
    %v1159 = vld [vmem:[#allocation2 + $0x188] sm:$0xff]
    %v1160 = vld [vmem:[#allocation2 + $0x190] sm:$0xff]
    %v1161 = vld [vmem:[#allocation2 + $0x198] sm:$0xff]
    %v1162 = vld [vmem:[#allocation2 + $0x1a0] sm:$0xff]
    %v1163 = vld [vmem:[#allocation2 + $0x1a8] sm:$0xff]
    %v1164 = vld [vmem:[#allocation2 + $0x1b0] sm:$0xff]
    %v1165 = vld [vmem:[#allocation2 + $0x1b8] sm:$0xff]
    %v1166 = vld [vmem:[#allocation2 + $0x1c0] sm:$0xff]
    %v1167 = vld [vmem:[#allocation2 + $0x1c8] sm:$0xff]
    %v1168 = vld [vmem:[#allocation2 + $0x1d0] sm:$0xff]
    %v1169 = vld [vmem:[#allocation2 + $0x1d8] sm:$0xff]
    %v1170 = vld [vmem:[#allocation2 + $0x1e0] sm:$0xff]
    %v1171 = vld [vmem:[#allocation2 + $0x1e8] sm:$0xff]
    %v1172 = vld [vmem:[#allocation2 + $0x1f0] sm:$0xff]
    %v1173 = vld [vmem:[#allocation2 + $0x1f8] sm:$0xff]
    %v1174 = vld [vmem:[#allocation2 + $0x200] sm:$0xff]
    %v1175 = vld [vmem:[#allocation2 + $0x208] sm:$0xff]
    %v1176 = vld [vmem:[#allocation2 + $0x210] sm:$0xff]
    %v1177 = vld [vmem:[#allocation2 + $0x218] sm:$0xff]
    %v1178 = vld [vmem:[#allocation2 + $0x220] sm:$0xff]
    %v1179 = vld [vmem:[#allocation2 + $0x228] sm:$0xff]
    %v1180 = vld [vmem:[#allocation2 + $0x230] sm:$0xff]
    %v1181 = vld [vmem:[#allocation2 + $0x238] sm:$0xff]
    %v1182 = vld [vmem:[#allocation2 + $0x240] sm:$0xff]
    %v1183 = vld [vmem:[#allocation2 + $0x248] sm:$0xff]
    %v1184 = vld [vmem:[#allocation2 + $0x250] sm:$0xff]
    %v1185 = vld [vmem:[#allocation2 + $0x258] sm:$0xff]
    %v1186 = vld [vmem:[#allocation2 + $0x260] sm:$0xff]
    %v1187 = vld [vmem:[#allocation2 + $0x268] sm:$0xff]
    %v1188 = vld [vmem:[#allocation2 + $0x270] sm:$0xff]
    %v1189 = vld [vmem:[#allocation2 + $0x278] sm:$0xff]
    %v1190 = vld [vmem:[#allocation2 + $0x280] sm:$0xff]
    %v1191 = vld [vmem:[#allocation2 + $0x288] sm:$0xff]
    %v1192 = vld [vmem:[#allocation2 + $0x290] sm:$0xff]
    %v1193 = vld [vmem:[#allocation2 + $0x298] sm:$0xff]
    %v1194 = vld [vmem:[#allocation2 + $0x2a0] sm:$0xff]
    %v1195 = vld [vmem:[#allocation2 + $0x2a8] sm:$0xff]
    %v1196 = vld [vmem:[#allocation2 + $0x2b0] sm:$0xff]
    %v1197 = vld [vmem:[#allocation2 + $0x2b8] sm:$0xff]
    %v1198 = vld [vmem:[#allocation2 + $0x2c0] sm:$0xff]
    %v1199 = vld [vmem:[#allocation2 + $0x2c8] sm:$0xff]
    %v1200 = vld [vmem:[#allocation2 + $0x2d0] sm:$0xff]
    %v1201 = vld [vmem:[#allocation2 + $0x2d8] sm:$0xff]
    %v1202 = vld [vmem:[#allocation2 + $0x2e0] sm:$0xff]
    %v1203 = vld [vmem:[#allocation2 + $0x2e8] sm:$0xff]
    %v1204 = vld [vmem:[#allocation2 + $0x2f0] sm:$0xff]
    %v1205 = vld [vmem:[#allocation2 + $0x2f8] sm:$0xff]
    %v1206 = vld [vmem:[#allocation2 + $0x300] sm:$0xff]
    %v1207 = vld [vmem:[#allocation2 + $0x308] sm:$0xff]
    %v1208 = vld [vmem:[#allocation2 + $0x310] sm:$0xff]
    %v1209 = vld [vmem:[#allocation2 + $0x318] sm:$0xff]
    %v1210 = vld [vmem:[#allocation2 + $0x320] sm:$0xff]
    %v1211 = vld [vmem:[#allocation2 + $0x328] sm:$0xff]
    %v1212 = vld [vmem:[#allocation2 + $0x330] sm:$0xff]
    %v1213 = vld [vmem:[#allocation2 + $0x338] sm:$0xff]
    %v1214 = vld [vmem:[#allocation2 + $0x340] sm:$0xff]
    %v1215 = vld [vmem:[#allocation2 + $0x348] sm:$0xff]
    %v1216 = vld [vmem:[#allocation2 + $0x350] sm:$0xff]
    %v1217 = vld [vmem:[#allocation2 + $0x358] sm:$0xff]
    %v1218 = vld [vmem:[#allocation2 + $0x360] sm:$0xff]
    %v1219 = vld [vmem:[#allocation2 + $0x368] sm:$0xff]
    %v1220 = vld [vmem:[#allocation2 + $0x370] sm:$0xff]
    %v1221 = vld [vmem:[#allocation2 + $0x378] sm:$0xff]
    %v1222 = vld [vmem:[#allocation2 + $0x380] sm:$0xff]
    %v1223 = vld [vmem:[#allocation2 + $0x388] sm:$0xff]
    %v1224 = vld [vmem:[#allocation2 + $0x390] sm:$0xff]
    %v1225 = vld [vmem:[#allocation2 + $0x398] sm:$0xff]
    %v1226 = vld [vmem:[#allocation2 + $0x3a0] sm:$0xff]
    %v1227 = vld [vmem:[#allocation2 + $0x3a8] sm:$0xff]
    %v1228 = vld [vmem:[#allocation2 + $0x3b0] sm:$0xff]
    %v1229 = vld [vmem:[#allocation2 + $0x3b8] sm:$0xff]
    %v1230 = vld [vmem:[#allocation2 + $0x3c0] sm:$0xff]
    %v1231 = vld [vmem:[#allocation2 + $0x3c8] sm:$0xff]
    %v1232 = vld [vmem:[#allocation2 + $0x3d0] sm:$0xff]
    %v1233 = vld [vmem:[#allocation2 + $0x3d8] sm:$0xff]
    %v1234 = vld [vmem:[#allocation2 + $0x3e0] sm:$0xff]
    %v1235 = vld [vmem:[#allocation2 + $0x3e8] sm:$0xff]
    %v1236 = vld [vmem:[#allocation2 + $0x3f0] sm:$0xff]
    %v1237 = vld [vmem:[#allocation2 + $0x3f8] sm:$0xff]
    %v1238 = vld [vmem:[#allocation2 + $0x400] sm:$0xff]
    %v1239 = vld [vmem:[#allocation2 + $0x408] sm:$0xff]
    %v1240 = vld [vmem:[#allocation2 + $0x410] sm:$0xff]
    %v1241 = vld [vmem:[#allocation2 + $0x418] sm:$0xff]
    %v1242 = vld [vmem:[#allocation2 + $0x420] sm:$0xff]
    %v1243 = vld [vmem:[#allocation2 + $0x428] sm:$0xff]
    %v1244 = vld [vmem:[#allocation2 + $0x430] sm:$0xff]
    %v1245 = vld [vmem:[#allocation2 + $0x438] sm:$0xff]
    %v1246 = vld [vmem:[#allocation2 + $0x440] sm:$0xff]
    %v1247 = vld [vmem:[#allocation2 + $0x448] sm:$0xff]
    %v1248 = vld [vmem:[#allocation2 + $0x450] sm:$0xff]
    %v1249 = vld [vmem:[#allocation2 + $0x458] sm:$0xff]
    %v1250 = vld [vmem:[#allocation2 + $0x460] sm:$0xff]
    %v1251 = vld [vmem:[#allocation2 + $0x468] sm:$0xff]
    %v1252 = vld [vmem:[#allocation2 + $0x470] sm:$0xff]
    %v1253 = vld [vmem:[#allocation2 + $0x478] sm:$0xff]
    %v1254 = vld [vmem:[#allocation2 + $0x480] sm:$0xff]
    %v1255 = vld [vmem:[#allocation2 + $0x488] sm:$0xff]
    %v1256 = vld [vmem:[#allocation2 + $0x490] sm:$0xff]
    %v1257 = vld [vmem:[#allocation2 + $0x498] sm:$0xff]
    %v1258 = vld [vmem:[#allocation2 + $0x4a0] sm:$0xff]
    %v1259 = vld [vmem:[#allocation2 + $0x4a8] sm:$0xff]
    %v1260 = vld [vmem:[#allocation2 + $0x4b0] sm:$0xff]
    %v1261 = vld [vmem:[#allocation2 + $0x4b8] sm:$0xff]
    %v1262 = vld [vmem:[#allocation2 + $0x4c0] sm:$0xff]
    %v1263 = vld [vmem:[#allocation2 + $0x4c8] sm:$0xff]
    %v1264 = vld [vmem:[#allocation2 + $0x4d0] sm:$0xff]
    %v1265 = vld [vmem:[#allocation2 + $0x4d8] sm:$0xff]
    %v1266 = vld [vmem:[#allocation2 + $0x4e0] sm:$0xff]
    %v1267 = vld [vmem:[#allocation2 + $0x4e8] sm:$0xff]
    %v1268 = vld [vmem:[#allocation2 + $0x4f0] sm:$0xff]
    %v1269 = vld [vmem:[#allocation2 + $0x4f8] sm:$0xff]
    %v1270 = vld [vmem:[#allocation2 + $0x500] sm:$0xff]
    %v1271 = vld [vmem:[#allocation2 + $0x508] sm:$0xff]
    %v1272 = vld [vmem:[#allocation2 + $0x510] sm:$0xff]
    %v1273 = vld [vmem:[#allocation2 + $0x518] sm:$0xff]
    %v1274 = vld [vmem:[#allocation2 + $0x520] sm:$0xff]
    %v1275 = vld [vmem:[#allocation2 + $0x528] sm:$0xff]
    %v1276 = vld [vmem:[#allocation2 + $0x530] sm:$0xff]
    %v1277 = vld [vmem:[#allocation2 + $0x538] sm:$0xff]
    %v1278 = vld [vmem:[#allocation2 + $0x540] sm:$0xff]
    %v1279 = vld [vmem:[#allocation2 + $0x548] sm:$0xff]
    %v1280 = vld [vmem:[#allocation2 + $0x550] sm:$0xff]
    %v1281 = vld [vmem:[#allocation2 + $0x558] sm:$0xff]
    %v1282 = vld [vmem:[#allocation2 + $0x560] sm:$0xff]
    %v1283 = vld [vmem:[#allocation2 + $0x568] sm:$0xff]
    %v1284 = vld [vmem:[#allocation2 + $0x570] sm:$0xff]
    %v1285 = vld [vmem:[#allocation2 + $0x578] sm:$0xff]
    %v1286 = vld [vmem:[#allocation2 + $0x580] sm:$0xff]
    %v1287 = vld [vmem:[#allocation2 + $0x588] sm:$0xff]
    %v1288 = vld [vmem:[#allocation2 + $0x590] sm:$0xff]
    %v1289 = vld [vmem:[#allocation2 + $0x598] sm:$0xff]
    %v1290 = vld [vmem:[#allocation2 + $0x5a0] sm:$0xff]
    %v1291 = vld [vmem:[#allocation2 + $0x5a8] sm:$0xff]
    %v1292 = vld [vmem:[#allocation2 + $0x5b0] sm:$0xff]
    %v1293 = vld [vmem:[#allocation2 + $0x5b8] sm:$0xff]
    %v1294 = vld [vmem:[#allocation2 + $0x5c0] sm:$0xff]
    %v1295 = vld [vmem:[#allocation2 + $0x5c8] sm:$0xff]
    %v1296 = vld [vmem:[#allocation2 + $0x5d0] sm:$0xff]
    %v1297 = vld [vmem:[#allocation2 + $0x5d8] sm:$0xff]
    %v1298 = vld [vmem:[#allocation2 + $0x5e0] sm:$0xff]
    %v1299 = vld [vmem:[#allocation2 + $0x5e8] sm:$0xff]
    %v1300 = vld [vmem:[#allocation2 + $0x5f0] sm:$0xff]
    %v1301 = vld [vmem:[#allocation2 + $0x5f8] sm:$0xff]
    %v1302 = vld [vmem:[#allocation2 + $0x600] sm:$0xff]
    %v1303 = vld [vmem:[#allocation2 + $0x608] sm:$0xff]
    %v1304 = vld [vmem:[#allocation2 + $0x610] sm:$0xff]
    %v1305 = vld [vmem:[#allocation2 + $0x618] sm:$0xff]
    %v1306 = vld [vmem:[#allocation2 + $0x620] sm:$0xff]
    %v1307 = vld [vmem:[#allocation2 + $0x628] sm:$0xff]
    %v1308 = vld [vmem:[#allocation2 + $0x630] sm:$0xff]
    %v1309 = vld [vmem:[#allocation2 + $0x638] sm:$0xff]
    %v1310 = vld [vmem:[#allocation2 + $0x640] sm:$0xff]
    %v1311 = vld [vmem:[#allocation2 + $0x648] sm:$0xff]
    %v1312 = vld [vmem:[#allocation2 + $0x650] sm:$0xff]
    %v1313 = vld [vmem:[#allocation2 + $0x658] sm:$0xff]
    %v1314 = vld [vmem:[#allocation2 + $0x660] sm:$0xff]
    %v1315 = vld [vmem:[#allocation2 + $0x668] sm:$0xff]
    %v1316 = vld [vmem:[#allocation2 + $0x670] sm:$0xff]
    %v1317 = vld [vmem:[#allocation2 + $0x678] sm:$0xff]
    %v1318 = vld [vmem:[#allocation2 + $0x680] sm:$0xff]
    %v1319 = vld [vmem:[#allocation2 + $0x688] sm:$0xff]
    %v1320 = vld [vmem:[#allocation2 + $0x690] sm:$0xff]
    %v1321 = vld [vmem:[#allocation2 + $0x698] sm:$0xff]
    %v1322 = vld [vmem:[#allocation2 + $0x6a0] sm:$0xff]
    %v1323 = vld [vmem:[#allocation2 + $0x6a8] sm:$0xff]
    %v1324 = vld [vmem:[#allocation2 + $0x6b0] sm:$0xff]
    %v1325 = vld [vmem:[#allocation2 + $0x6b8] sm:$0xff]
    %v1326 = vld [vmem:[#allocation2 + $0x6c0] sm:$0xff]
    %v1327 = vld [vmem:[#allocation2 + $0x6c8] sm:$0xff]
    %v1328 = vld [vmem:[#allocation2 + $0x6d0] sm:$0xff]
    %v1329 = vld [vmem:[#allocation2 + $0x6d8] sm:$0xff]
    %v1330 = vld [vmem:[#allocation2 + $0x6e0] sm:$0xff]
    %v1331 = vld [vmem:[#allocation2 + $0x6e8] sm:$0xff]
    %v1332 = vld [vmem:[#allocation2 + $0x6f0] sm:$0xff]
    %v1333 = vld [vmem:[#allocation2 + $0x6f8] sm:$0xff]
    %v1334 = vld [vmem:[#allocation2 + $0x700] sm:$0xff]
    %v1335 = vld [vmem:[#allocation2 + $0x708] sm:$0xff]
    %v1336 = vld [vmem:[#allocation2 + $0x710] sm:$0xff]
    %v1337 = vld [vmem:[#allocation2 + $0x718] sm:$0xff]
    %v1338 = vld [vmem:[#allocation2 + $0x720] sm:$0xff]
    %v1339 = vld [vmem:[#allocation2 + $0x728] sm:$0xff]
    %v1340 = vld [vmem:[#allocation2 + $0x730] sm:$0xff]
    %v1341 = vld [vmem:[#allocation2 + $0x738] sm:$0xff]
    %v1342 = vld [vmem:[#allocation2 + $0x740] sm:$0xff]
    %v1343 = vld [vmem:[#allocation2 + $0x748] sm:$0xff]
    %v1344 = vld [vmem:[#allocation2 + $0x750] sm:$0xff]
    %v1345 = vld [vmem:[#allocation2 + $0x758] sm:$0xff]
    %v1346 = vld [vmem:[#allocation2 + $0x760] sm:$0xff]
    %v1347 = vld [vmem:[#allocation2 + $0x768] sm:$0xff]
    %v1348 = vld [vmem:[#allocation2 + $0x770] sm:$0xff]
    %v1349 = vld [vmem:[#allocation2 + $0x778] sm:$0xff]
    %v1350 = vld [vmem:[#allocation2 + $0x780] sm:$0xff]
    %v1351 = vld [vmem:[#allocation2 + $0x788] sm:$0xff]
    %v1352 = vld [vmem:[#allocation2 + $0x790] sm:$0xff]
    %v1353 = vld [vmem:[#allocation2 + $0x798] sm:$0xff]
    %v1354 = vld [vmem:[#allocation2 + $0x7a0] sm:$0xff]
    %v1355 = vld [vmem:[#allocation2 + $0x7a8] sm:$0xff]
    %v1356 = vld [vmem:[#allocation2 + $0x7b0] sm:$0xff]
    %v1357 = vld [vmem:[#allocation2 + $0x7b8] sm:$0xff]
    %v1358 = vld [vmem:[#allocation2 + $0x7c0] sm:$0xff]
    %v1359 = vld [vmem:[#allocation2 + $0x7c8] sm:$0xff]
    %v1360 = vld [vmem:[#allocation2 + $0x7d0] sm:$0xff]
    %v1361 = vld [vmem:[#allocation2 + $0x7d8] sm:$0xff]
    %v1362 = vld [vmem:[#allocation2 + $0x7e0] sm:$0xff]
    %v1363 = vld [vmem:[#allocation2 + $0x7e8] sm:$0xff]
    %v1364 = vld [vmem:[#allocation2 + $0x7f0] sm:$0xff]
    %v1365 = vld [vmem:[#allocation2 + $0x7f8] sm:$0xff]
    %v1366 = vld [vmem:[#allocation2 + $0x800] sm:$0xff]
    %v1367 = vld [vmem:[#allocation2 + $0x808] sm:$0xff]
    %v1368 = vld [vmem:[#allocation2 + $0x810] sm:$0xff]
    %v1369 = vld [vmem:[#allocation2 + $0x818] sm:$0xff]
    %v1370 = vld [vmem:[#allocation2 + $0x820] sm:$0xff]
    %v1371 = vld [vmem:[#allocation2 + $0x828] sm:$0xff]
    %v1372 = vld [vmem:[#allocation2 + $0x830] sm:$0xff]
    %v1373 = vld [vmem:[#allocation2 + $0x838] sm:$0xff]
    %v1374 = vld [vmem:[#allocation2 + $0x840] sm:$0xff]
    %v1375 = vld [vmem:[#allocation2 + $0x848] sm:$0xff]
    %v1376 = vld [vmem:[#allocation2 + $0x850] sm:$0xff]
    %v1377 = vld [vmem:[#allocation2 + $0x858] sm:$0xff]
    %v1378 = vld [vmem:[#allocation2 + $0x860] sm:$0xff]
    %v1379 = vld [vmem:[#allocation2 + $0x868] sm:$0xff]
    %v1380 = vld [vmem:[#allocation2 + $0x870] sm:$0xff]
    %v1381 = vld [vmem:[#allocation2 + $0x878] sm:$0xff]
    %v1382 = vld [vmem:[#allocation2 + $0x880] sm:$0xff]
    %v1383 = vld [vmem:[#allocation2 + $0x888] sm:$0xff]
    %v1384 = vld [vmem:[#allocation2 + $0x890] sm:$0xff]
    %v1385 = vld [vmem:[#allocation2 + $0x898] sm:$0xff]
    %v1386 = vld [vmem:[#allocation2 + $0x8a0] sm:$0xff]
    %v1387 = vld [vmem:[#allocation2 + $0x8a8] sm:$0xff]
    %v1388 = vld [vmem:[#allocation2 + $0x8b0] sm:$0xff]
    %v1389 = vld [vmem:[#allocation2 + $0x8b8] sm:$0xff]
    %v1390 = vld [vmem:[#allocation2 + $0x8c0] sm:$0xff]
    %v1391 = vld [vmem:[#allocation2 + $0x8c8] sm:$0xff]
    %v1392 = vld [vmem:[#allocation2 + $0x8d0] sm:$0xff]
    %v1393 = vld [vmem:[#allocation2 + $0x8d8] sm:$0xff]
    %v1394 = vld [vmem:[#allocation2 + $0x8e0] sm:$0xff]
    %v1395 = vld [vmem:[#allocation2 + $0x8e8] sm:$0xff]
    %v1396 = vld [vmem:[#allocation2 + $0x8f0] sm:$0xff]
    %v1397 = vld [vmem:[#allocation2 + $0x8f8] sm:$0xff]
    %v1398 = vld [vmem:[#allocation2 + $0x900] sm:$0xff]
    %v1399 = vld [vmem:[#allocation2 + $0x908] sm:$0xff]
    %v1400 = vld [vmem:[#allocation2 + $0x910] sm:$0xff]
    %v1401 = vld [vmem:[#allocation2 + $0x918] sm:$0xff]
    %v1402 = vld [vmem:[#allocation2 + $0x920] sm:$0xff]
    %v1403 = vld [vmem:[#allocation2 + $0x928] sm:$0xff]
    %v1404 = vld [vmem:[#allocation2 + $0x930] sm:$0xff]
    %v1405 = vld [vmem:[#allocation2 + $0x938] sm:$0xff]
    %v1406 = vld [vmem:[#allocation2 + $0x940] sm:$0xff]
    %v1407 = vld [vmem:[#allocation2 + $0x948] sm:$0xff]
    %v1408 = vld [vmem:[#allocation2 + $0x950] sm:$0xff]
    %v1409 = vld [vmem:[#allocation2 + $0x958] sm:$0xff]
    %v1410 = vld [vmem:[#allocation2 + $0x960] sm:$0xff]
    %v1411 = vld [vmem:[#allocation2 + $0x968] sm:$0xff]
    %v1412 = vld [vmem:[#allocation2 + $0x970] sm:$0xff]
    %v1413 = vld [vmem:[#allocation2 + $0x978] sm:$0xff]
    %v1414 = vld [vmem:[#allocation2 + $0x980] sm:$0xff]
    %v1415 = vld [vmem:[#allocation2 + $0x988] sm:$0xff]
    %v1416 = vld [vmem:[#allocation2 + $0x990] sm:$0xff]
    %v1417 = vld [vmem:[#allocation2 + $0x998] sm:$0xff]
    %v1418 = vld [vmem:[#allocation2 + $0x9a0] sm:$0xff]
    %v1419 = vld [vmem:[#allocation2 + $0x9a8] sm:$0xff]
    %v1420 = vld [vmem:[#allocation2 + $0x9b0] sm:$0xff]
    %v1421 = vld [vmem:[#allocation2 + $0x9b8] sm:$0xff]
    %v1422 = vld [vmem:[#allocation2 + $0x9c0] sm:$0xff]
    %v1423 = vld [vmem:[#allocation2 + $0x9c8] sm:$0xff]
    %v1424 = vld [vmem:[#allocation2 + $0x9d0] sm:$0xff]
    %v1425 = vld [vmem:[#allocation2 + $0x9d8] sm:$0xff]
    %v1426 = vld [vmem:[#allocation2 + $0x9e0] sm:$0xff]
    %v1427 = vld [vmem:[#allocation2 + $0x9e8] sm:$0xff]
    %v1428 = vld [vmem:[#allocation2 + $0x9f0] sm:$0xff]
    %v1429 = vld [vmem:[#allocation2 + $0x9f8] sm:$0xff]
    %v1430 = vld [vmem:[#allocation2 + $0xa00] sm:$0xff]
    %v1431 = vld [vmem:[#allocation2 + $0xa08] sm:$0xff]
    %v1432 = vld [vmem:[#allocation2 + $0xa10] sm:$0xff]
    %v1433 = vld [vmem:[#allocation2 + $0xa18] sm:$0xff]
    %v1434 = vld [vmem:[#allocation2 + $0xa20] sm:$0xff]
    %v1435 = vld [vmem:[#allocation2 + $0xa28] sm:$0xff]
    %v1436 = vld [vmem:[#allocation2 + $0xa30] sm:$0xff]
    %v1437 = vld [vmem:[#allocation2 + $0xa38] sm:$0xff]
    %v1438 = vld [vmem:[#allocation2 + $0xa40] sm:$0xff]
    %v1439 = vld [vmem:[#allocation2 + $0xa48] sm:$0xff]
    %v1440 = vld [vmem:[#allocation2 + $0xa50] sm:$0xff]
    %v1441 = vld [vmem:[#allocation2 + $0xa58] sm:$0xff]
    %v1442 = vld [vmem:[#allocation2 + $0xa60] sm:$0xff]
    %v1443 = vld [vmem:[#allocation2 + $0xa68] sm:$0xff]
    %v1444 = vld [vmem:[#allocation2 + $0xa70] sm:$0xff]
    %v1445 = vld [vmem:[#allocation2 + $0xa78] sm:$0xff]
    %v1446 = vld [vmem:[#allocation2 + $0xa80] sm:$0xff]
    %v1447 = vld [vmem:[#allocation2 + $0xa88] sm:$0xff]
    %v1448 = vld [vmem:[#allocation2 + $0xa90] sm:$0xff]
    %v1449 = vld [vmem:[#allocation2 + $0xa98] sm:$0xff]
    %v1450 = vld [vmem:[#allocation2 + $0xaa0] sm:$0xff]
    %v1451 = vld [vmem:[#allocation2 + $0xaa8] sm:$0xff]
    %v1452 = vld [vmem:[#allocation2 + $0xab0] sm:$0xff]
    %v1453 = vld [vmem:[#allocation2 + $0xab8] sm:$0xff]
    %v1454 = vld [vmem:[#allocation2 + $0xac0] sm:$0xff]
    %v1455 = vld [vmem:[#allocation2 + $0xac8] sm:$0xff]
    %v1456 = vld [vmem:[#allocation2 + $0xad0] sm:$0xff]
    %v1457 = vld [vmem:[#allocation2 + $0xad8] sm:$0xff]
    %v1458 = vld [vmem:[#allocation2 + $0xae0] sm:$0xff]
    %v1459 = vld [vmem:[#allocation2 + $0xae8] sm:$0xff]
    %v1460 = vld [vmem:[#allocation2 + $0xaf0] sm:$0xff]
    %v1461 = vld [vmem:[#allocation2 + $0xaf8] sm:$0xff]
    %v1462 = vld [vmem:[#allocation2 + $0xb00] sm:$0xff]
    %v1463 = vld [vmem:[#allocation2 + $0xb08] sm:$0xff]
    %v1464 = vld [vmem:[#allocation2 + $0xb10] sm:$0xff]
    %v1465 = vld [vmem:[#allocation2 + $0xb18] sm:$0xff]
    %v1466 = vld [vmem:[#allocation2 + $0xb20] sm:$0xff]
    %v1467 = vld [vmem:[#allocation2 + $0xb28] sm:$0xff]
    %v1468 = vld [vmem:[#allocation2 + $0xb30] sm:$0xff]
    %v1469 = vld [vmem:[#allocation2 + $0xb38] sm:$0xff]
    %v1470 = vld [vmem:[#allocation2 + $0xb40] sm:$0xff]
    %v1471 = vld [vmem:[#allocation2 + $0xb48] sm:$0xff]
    %v1472 = vld [vmem:[#allocation2 + $0xb50] sm:$0xff]
    %v1473 = vld [vmem:[#allocation2 + $0xb58] sm:$0xff]
    %v1474 = vld [vmem:[#allocation2 + $0xb60] sm:$0xff]
    %v1475 = vld [vmem:[#allocation2 + $0xb68] sm:$0xff]
    %v1476 = vld [vmem:[#allocation2 + $0xb70] sm:$0xff]
    %v1477 = vld [vmem:[#allocation2 + $0xb78] sm:$0xff]
    %v1478 = vld [vmem:[#allocation2 + $0xb80] sm:$0xff]
    %v1479 = vld [vmem:[#allocation2 + $0xb88] sm:$0xff]
    %v1480 = vld [vmem:[#allocation2 + $0xb90] sm:$0xff]
    %v1481 = vld [vmem:[#allocation2 + $0xb98] sm:$0xff]
    %v1482 = vld [vmem:[#allocation2 + $0xba0] sm:$0xff]
    %v1483 = vld [vmem:[#allocation2 + $0xba8] sm:$0xff]
    %v1484 = vld [vmem:[#allocation2 + $0xbb0] sm:$0xff]
    %v1485 = vld [vmem:[#allocation2 + $0xbb8] sm:$0xff]
    %v1486 = vld [vmem:[#allocation2 + $0xbc0] sm:$0xff]
    %v1487 = vld [vmem:[#allocation2 + $0xbc8] sm:$0xff]
    %v1488 = vld [vmem:[#allocation2 + $0xbd0] sm:$0xff]
    %v1489 = vld [vmem:[#allocation2 + $0xbd8] sm:$0xff]
    %v1490 = vld [vmem:[#allocation2 + $0xbe0] sm:$0xff]
    %v1491 = vld [vmem:[#allocation2 + $0xbe8] sm:$0xff]
    %v1492 = vld [vmem:[#allocation2 + $0xbf0] sm:$0xff]
    %v1493 = vld [vmem:[#allocation2 + $0xbf8] sm:$0xff]
    %v1494 = vld [vmem:[#allocation2 + $0xc00] sm:$0xff]
    %v1495 = vld [vmem:[#allocation2 + $0xc08] sm:$0xff]
    %v1496 = vld [vmem:[#allocation2 + $0xc10] sm:$0xff]
    %v1497 = vld [vmem:[#allocation2 + $0xc18] sm:$0xff]
    %v1498 = vld [vmem:[#allocation2 + $0xc20] sm:$0xff]
    %v1499 = vld [vmem:[#allocation2 + $0xc28] sm:$0xff]
    %v1500 = vld [vmem:[#allocation2 + $0xc30] sm:$0xff]
    %v1501 = vld [vmem:[#allocation2 + $0xc38] sm:$0xff]
    %v1502 = vld [vmem:[#allocation2 + $0xc40] sm:$0xff]
    %v1503 = vld [vmem:[#allocation2 + $0xc48] sm:$0xff]
    %v1504 = vld [vmem:[#allocation2 + $0xc50] sm:$0xff]
    %v1505 = vld [vmem:[#allocation2 + $0xc58] sm:$0xff]
    %v1506 = vld [vmem:[#allocation2 + $0xc60] sm:$0xff]
    %v1507 = vld [vmem:[#allocation2 + $0xc68] sm:$0xff]
    %v1508 = vld [vmem:[#allocation2 + $0xc70] sm:$0xff]
    %v1509 = vld [vmem:[#allocation2 + $0xc78] sm:$0xff]
    %v1510 = vld [vmem:[#allocation2 + $0xc80] sm:$0xff]
    %v1511 = vld [vmem:[#allocation2 + $0xc88] sm:$0xff]
    %v1512 = vld [vmem:[#allocation2 + $0xc90] sm:$0xff]
    %v1513 = vld [vmem:[#allocation2 + $0xc98] sm:$0xff]
    %v1514 = vld [vmem:[#allocation2 + $0xca0] sm:$0xff]
    %v1515 = vld [vmem:[#allocation2 + $0xca8] sm:$0xff]
    %v1516 = vld [vmem:[#allocation2 + $0xcb0] sm:$0xff]
    %v1517 = vld [vmem:[#allocation2 + $0xcb8] sm:$0xff]
    %v1518 = vld [vmem:[#allocation2 + $0xcc0] sm:$0xff]
    %v1519 = vld [vmem:[#allocation2 + $0xcc8] sm:$0xff]
    %v1520 = vld [vmem:[#allocation2 + $0xcd0] sm:$0xff]
    %v1521 = vld [vmem:[#allocation2 + $0xcd8] sm:$0xff]
    %v1522 = vld [vmem:[#allocation2 + $0xce0] sm:$0xff]
    %v1523 = vld [vmem:[#allocation2 + $0xce8] sm:$0xff]
    %v1524 = vld [vmem:[#allocation2 + $0xcf0] sm:$0xff]
    %v1525 = vld [vmem:[#allocation2 + $0xcf8] sm:$0xff]
    %v1526 = vld [vmem:[#allocation2 + $0xd00] sm:$0xff]
    %v1527 = vld [vmem:[#allocation2 + $0xd08] sm:$0xff]
    %v1528 = vld [vmem:[#allocation2 + $0xd10] sm:$0xff]
    %v1529 = vld [vmem:[#allocation2 + $0xd18] sm:$0xff]
    %v1530 = vld [vmem:[#allocation2 + $0xd20] sm:$0xff]
    %v1531 = vld [vmem:[#allocation2 + $0xd28] sm:$0xff]
    %v1532 = vld [vmem:[#allocation2 + $0xd30] sm:$0xff]
    %v1533 = vld [vmem:[#allocation2 + $0xd38] sm:$0xff]
    %v1534 = vld [vmem:[#allocation2 + $0xd40] sm:$0xff]
    %v1535 = vld [vmem:[#allocation2 + $0xd48] sm:$0xff]
    %v1536 = vld [vmem:[#allocation2 + $0xd50] sm:$0xff]
    %v1537 = vld [vmem:[#allocation2 + $0xd58] sm:$0xff]
    %v1538 = vld [vmem:[#allocation2 + $0xd60] sm:$0xff]
    %v1539 = vld [vmem:[#allocation2 + $0xd68] sm:$0xff]
    %v1540 = vld [vmem:[#allocation2 + $0xd70] sm:$0xff]
    %v1541 = vld [vmem:[#allocation2 + $0xd78] sm:$0xff]
    %v1542 = vld [vmem:[#allocation2 + $0xd80] sm:$0xff]
    %v1543 = vld [vmem:[#allocation2 + $0xd88] sm:$0xff]
    %v1544 = vld [vmem:[#allocation2 + $0xd90] sm:$0xff]
    %v1545 = vld [vmem:[#allocation2 + $0xd98] sm:$0xff]
    %v1546 = vld [vmem:[#allocation2 + $0xda0] sm:$0xff]
    %v1547 = vld [vmem:[#allocation2 + $0xda8] sm:$0xff]
    %v1548 = vld [vmem:[#allocation2 + $0xdb0] sm:$0xff]
    %v1549 = vld [vmem:[#allocation2 + $0xdb8] sm:$0xff]
    %v1550 = vld [vmem:[#allocation2 + $0xdc0] sm:$0xff]
    %v1551 = vld [vmem:[#allocation2 + $0xdc8] sm:$0xff]
    %v1552 = vld [vmem:[#allocation2 + $0xdd0] sm:$0xff]
    %v1553 = vld [vmem:[#allocation2 + $0xdd8] sm:$0xff]
    %v1554 = vld [vmem:[#allocation2 + $0xde0] sm:$0xff]
    %v1555 = vld [vmem:[#allocation2 + $0xde8] sm:$0xff]
    %v1556 = vld [vmem:[#allocation2 + $0xdf0] sm:$0xff]
    %v1557 = vld [vmem:[#allocation2 + $0xdf8] sm:$0xff]
    %v1558 = vld [vmem:[#allocation2 + $0xe00] sm:$0xff]
    %v1559 = vld [vmem:[#allocation2 + $0xe08] sm:$0xff]
    %v1560 = vld [vmem:[#allocation2 + $0xe10] sm:$0xff]
    %v1561 = vld [vmem:[#allocation2 + $0xe18] sm:$0xff]
    %v1562 = vld [vmem:[#allocation2 + $0xe20] sm:$0xff]
    %v1563 = vld [vmem:[#allocation2 + $0xe28] sm:$0xff]
    %v1564 = vld [vmem:[#allocation2 + $0xe30] sm:$0xff]
    %v1565 = vld [vmem:[#allocation2 + $0xe38] sm:$0xff]
    %v1566 = vld [vmem:[#allocation2 + $0xe40] sm:$0xff]
    %v1567 = vld [vmem:[#allocation2 + $0xe48] sm:$0xff]
    %v1568 = vld [vmem:[#allocation2 + $0xe50] sm:$0xff]
    %v1569 = vld [vmem:[#allocation2 + $0xe58] sm:$0xff]
    %v1570 = vld [vmem:[#allocation2 + $0xe60] sm:$0xff]
    %v1571 = vld [vmem:[#allocation2 + $0xe68] sm:$0xff]
    %v1572 = vld [vmem:[#allocation2 + $0xe70] sm:$0xff]
    %v1573 = vld [vmem:[#allocation2 + $0xe78] sm:$0xff]
    %v1574 = vld [vmem:[#allocation2 + $0xe80] sm:$0xff]
    %v1575 = vld [vmem:[#allocation2 + $0xe88] sm:$0xff]
    %v1576 = vld [vmem:[#allocation2 + $0xe90] sm:$0xff]
    %v1577 = vld [vmem:[#allocation2 + $0xe98] sm:$0xff]
    %v1578 = vld [vmem:[#allocation2 + $0xea0] sm:$0xff]
    %v1579 = vld [vmem:[#allocation2 + $0xea8] sm:$0xff]
    %v1580 = vld [vmem:[#allocation2 + $0xeb0] sm:$0xff]
    %v1581 = vld [vmem:[#allocation2 + $0xeb8] sm:$0xff]
    %v1582 = vld [vmem:[#allocation2 + $0xec0] sm:$0xff]
    %v1583 = vld [vmem:[#allocation2 + $0xec8] sm:$0xff]
    %v1584 = vld [vmem:[#allocation2 + $0xed0] sm:$0xff]
    %v1585 = vld [vmem:[#allocation2 + $0xed8] sm:$0xff]
    %v1586 = vld [vmem:[#allocation2 + $0xee0] sm:$0xff]
    %v1587 = vld [vmem:[#allocation2 + $0xee8] sm:$0xff]
    %v1588 = vld [vmem:[#allocation2 + $0xef0] sm:$0xff]
    %v1589 = vld [vmem:[#allocation2 + $0xef8] sm:$0xff]
    %v1590 = vld [vmem:[#allocation2 + $0xf00] sm:$0xff]
    %v1591 = vld [vmem:[#allocation2 + $0xf08] sm:$0xff]
    %v1592 = vld [vmem:[#allocation2 + $0xf10] sm:$0xff]
    %v1593 = vld [vmem:[#allocation2 + $0xf18] sm:$0xff]
    %v1594 = vld [vmem:[#allocation2 + $0xf20] sm:$0xff]
    %v1595 = vld [vmem:[#allocation2 + $0xf28] sm:$0xff]
    %v1596 = vld [vmem:[#allocation2 + $0xf30] sm:$0xff]
    %v1597 = vld [vmem:[#allocation2 + $0xf38] sm:$0xff]
    %v1598 = vld [vmem:[#allocation2 + $0xf40] sm:$0xff]
    %v1599 = vld [vmem:[#allocation2 + $0xf48] sm:$0xff]
    %v1600 = vld [vmem:[#allocation2 + $0xf50] sm:$0xff]
    %v1601 = vld [vmem:[#allocation2 + $0xf58] sm:$0xff]
    %v1602 = vld [vmem:[#allocation2 + $0xf60] sm:$0xff]
    %v1603 = vld [vmem:[#allocation2 + $0xf68] sm:$0xff]
    %v1604 = vld [vmem:[#allocation2 + $0xf70] sm:$0xff]
    %v1605 = vld [vmem:[#allocation2 + $0xf78] sm:$0xff]
    %v1606 = vld [vmem:[#allocation2 + $0xf80] sm:$0xff]
    %v1607 = vld [vmem:[#allocation2 + $0xf88] sm:$0xff]
    %v1608 = vld [vmem:[#allocation2 + $0xf90] sm:$0xff]
    %v1609 = vld [vmem:[#allocation2 + $0xf98] sm:$0xff]
    %v1610 = vld [vmem:[#allocation2 + $0xfa0] sm:$0xff]
    %v1611 = vld [vmem:[#allocation2 + $0xfa8] sm:$0xff]
    %v1612 = vld [vmem:[#allocation2 + $0xfb0] sm:$0xff]
    %v1613 = vld [vmem:[#allocation2 + $0xfb8] sm:$0xff]
    %v1614 = vld [vmem:[#allocation2 + $0xfc0] sm:$0xff]
    %v1615 = vld [vmem:[#allocation2 + $0xfc8] sm:$0xff]
    %v1616 = vld [vmem:[#allocation2 + $0xfd0] sm:$0xff]
    %v1617 = vld [vmem:[#allocation2 + $0xfd8] sm:$0xff]
    %v1618 = vld [vmem:[#allocation2 + $0xfe0] sm:$0xff]
    %v1619 = vld [vmem:[#allocation2 + $0xfe8] sm:$0xff]
    %v1620 = vld [vmem:[#allocation2 + $0xff0] sm:$0xff]
    %v1621 = vld [vmem:[#allocation2 + $0xff8] sm:$0xff]
    %1622 = vmatprep.subr.bf16.mxu0 %v1111
    %1623 = vmatpush1.bf16.msra.mxu0 %v1110
    %1624 = vmatprep.subr.bf16.mxu0 %v1127
    %1625 = vmatpush1.bf16.msra.mxu0 %v1126
    %1626 = vmatprep.subr.bf16.mxu0 %v1143
    %1627 = vmatpush1.bf16.msra.mxu0 %v1142
    %1628 = vmatprep.subr.bf16.mxu0 %v1159
    %1629 = vmatpush1.bf16.msra.mxu0 %v1158
    %1630 = vmatprep.subr.bf16.mxu0 %v1175
    %1631 = vmatpush1.bf16.msra.mxu0 %v1174
    %1632 = vmatprep.subr.bf16.mxu0 %v1191
    %1633 = vmatpush1.bf16.msra.mxu0 %v1190
    %1634 = vmatprep.subr.bf16.mxu0 %v1207
    %1635 = vmatpush1.bf16.msra.mxu0 %v1206
    %1636 = vmatprep.subr.bf16.mxu0 %v1223
    %1637 = vmatpush1.bf16.msra.mxu0 %v1222
    %1638 = vmatprep.subr.bf16.mxu0 %v1239
    %1639 = vmatpush1.bf16.msra.mxu0 %v1238
    %1640 = vmatprep.subr.bf16.mxu0 %v1255
    %1641 = vmatpush1.bf16.msra.mxu0 %v1254
    %1642 = vmatprep.subr.bf16.mxu0 %v1271
    %1643 = vmatpush1.bf16.msra.mxu0 %v1270
    %1644 = vmatprep.subr.bf16.mxu0 %v1287
    %1645 = vmatpush1.bf16.msra.mxu0 %v1286
    %1646 = vmatprep.subr.bf16.mxu0 %v1303
    %1647 = vmatpush1.bf16.msra.mxu0 %v1302
    %1648 = vmatprep.subr.bf16.mxu0 %v1319
    %1649 = vmatpush1.bf16.msra.mxu0 %v1318
    %1650 = vmatprep.subr.bf16.mxu0 %v1335
    %1651 = vmatpush1.bf16.msra.mxu0 %v1334
    %1652 = vmatprep.subr.bf16.mxu0 %v1351
    %1653 = vmatpush1.bf16.msra.mxu0 %v1350
    %1654 = vmatprep.mubr.bf16.mxu0 0
    %1655 = vmatmul.mubr.bf16.gmra.mrb[0].mxu0 0
    %v1656 = vpop.f32.mrb[0].mxu0
    %v1657 = vadd.f32 0.0, %v1656
    %v1658 = vpop.f32.mrb[0].mxu0
    %v1659 = vadd.f32 0.0, %v1658
    %v1660 = vpop.f32.mrb[0].mxu0
    %v1661 = vpop.f32.mrb[0].mxu0
    %1662 = vdwg.mxu0
    %1663 = vmatprep.subr.bf16.mxu0 %v1367
    %1664 = vmatpush1.bf16.msra.mxu0 %v1366
    %1665 = vmatprep.subr.bf16.mxu0 %v1383
    %1666 = vmatpush1.bf16.msra.mxu0 %v1382
    %1667 = vmatprep.subr.bf16.mxu0 %v1399
    %1668 = vmatpush1.bf16.msra.mxu0 %v1398
    %1669 = vmatprep.subr.bf16.mxu0 %v1415
    %1670 = vmatpush1.bf16.msra.mxu0 %v1414
    %1671 = vmatprep.subr.bf16.mxu0 %v1431
    %1672 = vmatpush1.bf16.msra.mxu0 %v1430
    %1673 = vmatprep.subr.bf16.mxu0 %v1447
    %1674 = vmatpush1.bf16.msra.mxu0 %v1446
    %1675 = vmatprep.subr.bf16.mxu0 %v1463
    %1676 = vmatpush1.bf16.msra.mxu0 %v1462
    %1677 = vmatprep.subr.bf16.mxu0 %v1479
    %1678 = vmatpush1.bf16.msra.mxu0 %v1478
    %1679 = vmatprep.subr.bf16.mxu0 %v1495
    %1680 = vmatpush1.bf16.msra.mxu0 %v1494
    %1681 = vmatprep.subr.bf16.mxu0 %v1511
    %1682 = vmatpush1.bf16.msra.mxu0 %v1510
    %1683 = vmatprep.subr.bf16.mxu0 %v1527
    %1684 = vmatpush1.bf16.msra.mxu0 %v1526
    %1685 = vmatprep.subr.bf16.mxu0 %v1543
    %1686 = vmatpush1.bf16.msra.mxu0 %v1542
    %1687 = vmatprep.subr.bf16.mxu0 %v1559
    %1688 = vmatpush1.bf16.msra.mxu0 %v1558
    %1689 = vmatprep.subr.bf16.mxu0 %v1575
    %1690 = vmatpush1.bf16.msra.mxu0 %v1574
    %1691 = vmatprep.subr.bf16.mxu0 %v1591
    %1692 = vmatpush1.bf16.msra.mxu0 %v1590
    %1693 = vmatprep.subr.bf16.mxu0 %v1607
    %1694 = vmatpush1.bf16.msra.mxu0 %v1606
    %1695 = vmatprep.mubr.bf16.mxu0 0
    %1696 = vmatmul.mubr.bf16.gmra.mrb[0].mxu0 0
    %v1697 = vpop.f32.mrb[0].mxu0
    %v1698 = vadd.f32 %v1657, %v1697
    %v1699 = vpop.f32.mrb[0].mxu0
    %v1700 = vadd.f32 %v1659, %v1699
    %v1701 = vpop.f32.mrb[0].mxu0
    %v1702 = vpop.f32.mrb[0].mxu0
    %1703 = vdwg.mxu0
    %1704 = vmatprep.subr.bf16.mxu0 %v1113
    %1705 = vmatpush1.bf16.msra.mxu0 %v1112
    %1706 = vmatprep.subr.bf16.mxu0 %v1129
    %1707 = vmatpush1.bf16.msra.mxu0 %v1128
    %1708 = vmatprep.subr.bf16.mxu0 %v1145
    %1709 = vmatpush1.bf16.msra.mxu0 %v1144
    %1710 = vmatprep.subr.bf16.mxu0 %v1161
    %1711 = vmatpush1.bf16.msra.mxu0 %v1160
    %1712 = vmatprep.subr.bf16.mxu0 %v1177
    %1713 = vmatpush1.bf16.msra.mxu0 %v1176
    %1714 = vmatprep.subr.bf16.mxu0 %v1193
    %1715 = vmatpush1.bf16.msra.mxu0 %v1192
    %1716 = vmatprep.subr.bf16.mxu0 %v1209
    %1717 = vmatpush1.bf16.msra.mxu0 %v1208
    %1718 = vmatprep.subr.bf16.mxu0 %v1225
    %1719 = vmatpush1.bf16.msra.mxu0 %v1224
    %1720 = vmatprep.subr.bf16.mxu0 %v1241
    %1721 = vmatpush1.bf16.msra.mxu0 %v1240
    %1722 = vmatprep.subr.bf16.mxu0 %v1257
    %1723 = vmatpush1.bf16.msra.mxu0 %v1256
    %1724 = vmatprep.subr.bf16.mxu0 %v1273
    %1725 = vmatpush1.bf16.msra.mxu0 %v1272
    %1726 = vmatprep.subr.bf16.mxu0 %v1289
    %1727 = vmatpush1.bf16.msra.mxu0 %v1288
    %1728 = vmatprep.subr.bf16.mxu0 %v1305
    %1729 = vmatpush1.bf16.msra.mxu0 %v1304
    %1730 = vmatprep.subr.bf16.mxu0 %v1321
    %1731 = vmatpush1.bf16.msra.mxu0 %v1320
    %1732 = vmatprep.subr.bf16.mxu0 %v1337
    %1733 = vmatpush1.bf16.msra.mxu0 %v1336
    %1734 = vmatprep.subr.bf16.mxu0 %v1353
    %1735 = vmatpush1.bf16.msra.mxu0 %v1352
    %1736 = vmatprep.mubr.bf16.mxu0 0
    %1737 = vmatmul.mubr.bf16.gmra.mrb[0].mxu0 0
    %v1738 = vpop.f32.mrb[0].mxu0
    %v1739 = vadd.f32 0.0, %v1738
    %v1740 = vpop.f32.mrb[0].mxu0
    %v1741 = vadd.f32 0.0, %v1740
    %v1742 = vpop.f32.mrb[0].mxu0
    %v1743 = vpop.f32.mrb[0].mxu0
    %1744 = vdwg.mxu0
    %1745 = vmatprep.subr.bf16.mxu0 %v1369
    %1746 = vmatpush1.bf16.msra.mxu0 %v1368
    %1747 = vmatprep.subr.bf16.mxu0 %v1385
    %1748 = vmatpush1.bf16.msra.mxu0 %v1384
    %1749 = vmatprep.subr.bf16.mxu0 %v1401
    %1750 = vmatpush1.bf16.msra.mxu0 %v1400
    %1751 = vmatprep.subr.bf16.mxu0 %v1417
    %1752 = vmatpush1.bf16.msra.mxu0 %v1416
    %1753 = vmatprep.subr.bf16.mxu0 %v1433
    %1754 = vmatpush1.bf16.msra.mxu0 %v1432
    %1755 = vmatprep.subr.bf16.mxu0 %v1449
    %1756 = vmatpush1.bf16.msra.mxu0 %v1448
    %1757 = vmatprep.subr.bf16.mxu0 %v1465
    %1758 = vmatpush1.bf16.msra.mxu0 %v1464
    %1759 = vmatprep.subr.bf16.mxu0 %v1481
    %1760 = vmatpush1.bf16.msra.mxu0 %v1480
    %1761 = vmatprep.subr.bf16.mxu0 %v1497
    %1762 = vmatpush1.bf16.msra.mxu0 %v1496
    %1763 = vmatprep.subr.bf16.mxu0 %v1513
    %1764 = vmatpush1.bf16.msra.mxu0 %v1512
    %1765 = vmatprep.subr.bf16.mxu0 %v1529
    %1766 = vmatpush1.bf16.msra.mxu0 %v1528
    %1767 = vmatprep.subr.bf16.mxu0 %v1545
    %1768 = vmatpush1.bf16.msra.mxu0 %v1544
    %1769 = vmatprep.subr.bf16.mxu0 %v1561
    %1770 = vmatpush1.bf16.msra.mxu0 %v1560
    %1771 = vmatprep.subr.bf16.mxu0 %v1577
    %1772 = vmatpush1.bf16.msra.mxu0 %v1576
    %1773 = vmatprep.subr.bf16.mxu0 %v1593
    %1774 = vmatpush1.bf16.msra.mxu0 %v1592
    %1775 = vmatprep.subr.bf16.mxu0 %v1609
    %1776 = vmatpush1.bf16.msra.mxu0 %v1608
    %1777 = vmatprep.mubr.bf16.mxu0 0
    %1778 = vmatmul.mubr.bf16.gmra.mrb[0].mxu0 0
    %v1779 = vpop.f32.mrb[0].mxu0
    %v1780 = vadd.f32 %v1739, %v1779
    %v1781 = vpop.f32.mrb[0].mxu0
    %v1782 = vadd.f32 %v1741, %v1781
    %v1783 = vpop.f32.mrb[0].mxu0
    %v1784 = vpop.f32.mrb[0].mxu0
    %1785 = vdwg.mxu0
    %1786 = vmatprep.subr.bf16.mxu0 %v1115
    %1787 = vmatpush1.bf16.msra.mxu0 %v1114
    %1788 = vmatprep.subr.bf16.mxu0 %v1131
    %1789 = vmatpush1.bf16.msra.mxu0 %v1130
    %1790 = vmatprep.subr.bf16.mxu0 %v1147
    %1791 = vmatpush1.bf16.msra.mxu0 %v1146
    %1792 = vmatprep.subr.bf16.mxu0 %v1163
    %1793 = vmatpush1.bf16.msra.mxu0 %v1162
    %1794 = vmatprep.subr.bf16.mxu0 %v1179
    %1795 = vmatpush1.bf16.msra.mxu0 %v1178
    %1796 = vmatprep.subr.bf16.mxu0 %v1195
    %1797 = vmatpush1.bf16.msra.mxu0 %v1194
    %1798 = vmatprep.subr.bf16.mxu0 %v1211
    %1799 = vmatpush1.bf16.msra.mxu0 %v1210
    %1800 = vmatprep.subr.bf16.mxu0 %v1227
    %1801 = vmatpush1.bf16.msra.mxu0 %v1226
    %1802 = vmatprep.subr.bf16.mxu0 %v1243
    %1803 = vmatpush1.bf16.msra.mxu0 %v1242
    %1804 = vmatprep.subr.bf16.mxu0 %v1259
    %1805 = vmatpush1.bf16.msra.mxu0 %v1258
    %1806 = vmatprep.subr.bf16.mxu0 %v1275
    %1807 = vmatpush1.bf16.msra.mxu0 %v1274
    %1808 = vmatprep.subr.bf16.mxu0 %v1291
    %1809 = vmatpush1.bf16.msra.mxu0 %v1290
    %1810 = vmatprep.subr.bf16.mxu0 %v1307
    %1811 = vmatpush1.bf16.msra.mxu0 %v1306
    %1812 = vmatprep.subr.bf16.mxu0 %v1323
    %1813 = vmatpush1.bf16.msra.mxu0 %v1322
    %1814 = vmatprep.subr.bf16.mxu0 %v1339
    %1815 = vmatpush1.bf16.msra.mxu0 %v1338
    %1816 = vmatprep.subr.bf16.mxu0 %v1355
    %1817 = vmatpush1.bf16.msra.mxu0 %v1354
    %1818 = vmatprep.mubr.bf16.mxu0 0
    %1819 = vmatmul.mubr.bf16.gmra.mrb[0].mxu0 0
    %v1820 = vpop.f32.mrb[0].mxu0
    %v1821 = vadd.f32 0.0, %v1820
    %v1822 = vpop.f32.mrb[0].mxu0
    %v1823 = vadd.f32 0.0, %v1822
    %v1824 = vpop.f32.mrb[0].mxu0
    %v1825 = vpop.f32.mrb[0].mxu0
    %1826 = vdwg.mxu0
    %1827 = vmatprep.subr.bf16.mxu0 %v1371
    %1828 = vmatpush1.bf16.msra.mxu0 %v1370
    %1829 = vmatprep.subr.bf16.mxu0 %v1387
    %1830 = vmatpush1.bf16.msra.mxu0 %v1386
    %1831 = vmatprep.subr.bf16.mxu0 %v1403
    %1832 = vmatpush1.bf16.msra.mxu0 %v1402
    %1833 = vmatprep.subr.bf16.mxu0 %v1419
    %1834 = vmatpush1.bf16.msra.mxu0 %v1418
    %1835 = vmatprep.subr.bf16.mxu0 %v1435
    %1836 = vmatpush1.bf16.msra.mxu0 %v1434
    %1837 = vmatprep.subr.bf16.mxu0 %v1451
    %1838 = vmatpush1.bf16.msra.mxu0 %v1450
    %1839 = vmatprep.subr.bf16.mxu0 %v1467
    %1840 = vmatpush1.bf16.msra.mxu0 %v1466
    %1841 = vmatprep.subr.bf16.mxu0 %v1483
    %1842 = vmatpush1.bf16.msra.mxu0 %v1482
    %1843 = vmatprep.subr.bf16.mxu0 %v1499
    %1844 = vmatpush1.bf16.msra.mxu0 %v1498
    %1845 = vmatprep.subr.bf16.mxu0 %v1515
    %1846 = vmatpush1.bf16.msra.mxu0 %v1514
    %1847 = vmatprep.subr.bf16.mxu0 %v1531
    %1848 = vmatpush1.bf16.msra.mxu0 %v1530
    %1849 = vmatprep.subr.bf16.mxu0 %v1547
    %1850 = vmatpush1.bf16.msra.mxu0 %v1546
    %1851 = vmatprep.subr.bf16.mxu0 %v1563
    %1852 = vmatpush1.bf16.msra.mxu0 %v1562
    %1853 = vmatprep.subr.bf16.mxu0 %v1579
    %1854 = vmatpush1.bf16.msra.mxu0 %v1578
    %1855 = vmatprep.subr.bf16.mxu0 %v1595
    %1856 = vmatpush1.bf16.msra.mxu0 %v1594
    %1857 = vmatprep.subr.bf16.mxu0 %v1611
    %1858 = vmatpush1.bf16.msra.mxu0 %v1610
    %1859 = vmatprep.mubr.bf16.mxu0 0
    %1860 = vmatmul.mubr.bf16.gmra.mrb[0].mxu0 0
    %v1861 = vpop.f32.mrb[0].mxu0
    %v1862 = vadd.f32 %v1821, %v1861
    %v1863 = vpop.f32.mrb[0].mxu0
    %v1864 = vadd.f32 %v1823, %v1863
    %v1865 = vpop.f32.mrb[0].mxu0
    %v1866 = vpop.f32.mrb[0].mxu0
    %1867 = vdwg.mxu0
    %1868 = vmatprep.subr.bf16.mxu0 %v1117
    %1869 = vmatpush1.bf16.msra.mxu0 %v1116
    %1870 = vmatprep.subr.bf16.mxu0 %v1133
    %1871 = vmatpush1.bf16.msra.mxu0 %v1132
    %1872 = vmatprep.subr.bf16.mxu0 %v1149
    %1873 = vmatpush1.bf16.msra.mxu0 %v1148
    %1874 = vmatprep.subr.bf16.mxu0 %v1165
    %1875 = vmatpush1.bf16.msra.mxu0 %v1164
    %1876 = vmatprep.subr.bf16.mxu0 %v1181
    %1877 = vmatpush1.bf16.msra.mxu0 %v1180
    %1878 = vmatprep.subr.bf16.mxu0 %v1197
    %1879 = vmatpush1.bf16.msra.mxu0 %v1196
    %1880 = vmatprep.subr.bf16.mxu0 %v1213
    %1881 = vmatpush1.bf16.msra.mxu0 %v1212
    %1882 = vmatprep.subr.bf16.mxu0 %v1229
    %1883 = vmatpush1.bf16.msra.mxu0 %v1228
    %1884 = vmatprep.subr.bf16.mxu0 %v1245
    %1885 = vmatpush1.bf16.msra.mxu0 %v1244
    %1886 = vmatprep.subr.bf16.mxu0 %v1261
    %1887 = vmatpush1.bf16.msra.mxu0 %v1260
    %1888 = vmatprep.subr.bf16.mxu0 %v1277
    %1889 = vmatpush1.bf16.msra.mxu0 %v1276
    %1890 = vmatprep.subr.bf16.mxu0 %v1293
    %1891 = vmatpush1.bf16.msra.mxu0 %v1292
    %1892 = vmatprep.subr.bf16.mxu0 %v1309
    %1893 = vmatpush1.bf16.msra.mxu0 %v1308
    %1894 = vmatprep.subr.bf16.mxu0 %v1325
    %1895 = vmatpush1.bf16.msra.mxu0 %v1324
    %1896 = vmatprep.subr.bf16.mxu0 %v1341
    %1897 = vmatpush1.bf16.msra.mxu0 %v1340
    %1898 = vmatprep.subr.bf16.mxu0 %v1357
    %1899 = vmatpush1.bf16.msra.mxu0 %v1356
    %1900 = vmatprep.mubr.bf16.mxu0 0
    %1901 = vmatmul.mubr.bf16.gmra.mrb[0].mxu0 0
    %v1902 = vpop.f32.mrb[0].mxu0
    %v1903 = vadd.f32 0.0, %v1902
    %v1904 = vpop.f32.mrb[0].mxu0
    %v1905 = vadd.f32 0.0, %v1904
    %v1906 = vpop.f32.mrb[0].mxu0
    %v1907 = vpop.f32.mrb[0].mxu0
    %1908 = vdwg.mxu0
    %1909 = vmatprep.subr.bf16.mxu0 %v1373
    %1910 = vmatpush1.bf16.msra.mxu0 %v1372
    %1911 = vmatprep.subr.bf16.mxu0 %v1389
    %1912 = vmatpush1.bf16.msra.mxu0 %v1388
    %1913 = vmatprep.subr.bf16.mxu0 %v1405
    %1914 = vmatpush1.bf16.msra.mxu0 %v1404
    %1915 = vmatprep.subr.bf16.mxu0 %v1421
    %1916 = vmatpush1.bf16.msra.mxu0 %v1420
    %1917 = vmatprep.subr.bf16.mxu0 %v1437
    %1918 = vmatpush1.bf16.msra.mxu0 %v1436
    %1919 = vmatprep.subr.bf16.mxu0 %v1453
    %1920 = vmatpush1.bf16.msra.mxu0 %v1452
    %1921 = vmatprep.subr.bf16.mxu0 %v1469
    %1922 = vmatpush1.bf16.msra.mxu0 %v1468
    %1923 = vmatprep.subr.bf16.mxu0 %v1485
    %1924 = vmatpush1.bf16.msra.mxu0 %v1484
    %1925 = vmatprep.subr.bf16.mxu0 %v1501
    %1926 = vmatpush1.bf16.msra.mxu0 %v1500
    %1927 = vmatprep.subr.bf16.mxu0 %v1517
    %1928 = vmatpush1.bf16.msra.mxu0 %v1516
    %1929 = vmatprep.subr.bf16.mxu0 %v1533
    %1930 = vmatpush1.bf16.msra.mxu0 %v1532
    %1931 = vmatprep.subr.bf16.mxu0 %v1549
    %1932 = vmatpush1.bf16.msra.mxu0 %v1548
    %1933 = vmatprep.subr.bf16.mxu0 %v1565
    %1934 = vmatpush1.bf16.msra.mxu0 %v1564
    %1935 = vmatprep.subr.bf16.mxu0 %v1581
    %1936 = vmatpush1.bf16.msra.mxu0 %v1580
    %1937 = vmatprep.subr.bf16.mxu0 %v1597
    %1938 = vmatpush1.bf16.msra.mxu0 %v1596
    %1939 = vmatprep.subr.bf16.mxu0 %v1613
    %1940 = vmatpush1.bf16.msra.mxu0 %v1612
    %1941 = vmatprep.mubr.bf16.mxu0 0
    %1942 = vmatmul.mubr.bf16.gmra.mrb[0].mxu0 0
    %v1943 = vpop.f32.mrb[0].mxu0
    %v1944 = vadd.f32 %v1903, %v1943
    %v1945 = vpop.f32.mrb[0].mxu0
    %v1946 = vadd.f32 %v1905, %v1945
    %v1947 = vpop.f32.mrb[0].mxu0
    %v1948 = vpop.f32.mrb[0].mxu0
    %1949 = vdwg.mxu0
    %1950 = vmatprep.subr.bf16.mxu0 %v1119
    %1951 = vmatpush1.bf16.msra.mxu0 %v1118
    %1952 = vmatprep.subr.bf16.mxu0 %v1135
    %1953 = vmatpush1.bf16.msra.mxu0 %v1134
    %1954 = vmatprep.subr.bf16.mxu0 %v1151
    %1955 = vmatpush1.bf16.msra.mxu0 %v1150
    %1956 = vmatprep.subr.bf16.mxu0 %v1167
    %1957 = vmatpush1.bf16.msra.mxu0 %v1166
    %1958 = vmatprep.subr.bf16.mxu0 %v1183
    %1959 = vmatpush1.bf16.msra.mxu0 %v1182
    %1960 = vmatprep.subr.bf16.mxu0 %v1199
    %1961 = vmatpush1.bf16.msra.mxu0 %v1198
    %1962 = vmatprep.subr.bf16.mxu0 %v1215
    %1963 = vmatpush1.bf16.msra.mxu0 %v1214
    %1964 = vmatprep.subr.bf16.mxu0 %v1231
    %1965 = vmatpush1.bf16.msra.mxu0 %v1230
    %1966 = vmatprep.subr.bf16.mxu0 %v1247
    %1967 = vmatpush1.bf16.msra.mxu0 %v1246
    %1968 = vmatprep.subr.bf16.mxu0 %v1263
    %1969 = vmatpush1.bf16.msra.mxu0 %v1262
    %1970 = vmatprep.subr.bf16.mxu0 %v1279
    %1971 = vmatpush1.bf16.msra.mxu0 %v1278
    %1972 = vmatprep.subr.bf16.mxu0 %v1295
    %1973 = vmatpush1.bf16.msra.mxu0 %v1294
    %1974 = vmatprep.subr.bf16.mxu0 %v1311
    %1975 = vmatpush1.bf16.msra.mxu0 %v1310
    %1976 = vmatprep.subr.bf16.mxu0 %v1327
    %1977 = vmatpush1.bf16.msra.mxu0 %v1326
    %1978 = vmatprep.subr.bf16.mxu0 %v1343
    %1979 = vmatpush1.bf16.msra.mxu0 %v1342
    %1980 = vmatprep.subr.bf16.mxu0 %v1359
    %1981 = vmatpush1.bf16.msra.mxu0 %v1358
    %1982 = vmatprep.mubr.bf16.mxu0 0
    %1983 = vmatmul.mubr.bf16.gmra.mrb[0].mxu0 0
    %v1984 = vpop.f32.mrb[0].mxu0
    %v1985 = vadd.f32 0.0, %v1984
    %v1986 = vpop.f32.mrb[0].mxu0
    %v1987 = vadd.f32 0.0, %v1986
    %v1988 = vpop.f32.mrb[0].mxu0
    %v1989 = vpop.f32.mrb[0].mxu0
    %1990 = vdwg.mxu0
    %1991 = vmatprep.subr.bf16.mxu0 %v1375
    %1992 = vmatpush1.bf16.msra.mxu0 %v1374
    %1993 = vmatprep.subr.bf16.mxu0 %v1391
    %1994 = vmatpush1.bf16.msra.mxu0 %v1390
    %1995 = vmatprep.subr.bf16.mxu0 %v1407
    %1996 = vmatpush1.bf16.msra.mxu0 %v1406
    %1997 = vmatprep.subr.bf16.mxu0 %v1423
    %1998 = vmatpush1.bf16.msra.mxu0 %v1422
    %1999 = vmatprep.subr.bf16.mxu0 %v1439
    %2000 = vmatpush1.bf16.msra.mxu0 %v1438
    %2001 = vmatprep.subr.bf16.mxu0 %v1455
    %2002 = vmatpush1.bf16.msra.mxu0 %v1454
    %2003 = vmatprep.subr.bf16.mxu0 %v1471
    %2004 = vmatpush1.bf16.msra.mxu0 %v1470
    %2005 = vmatprep.subr.bf16.mxu0 %v1487
    %2006 = vmatpush1.bf16.msra.mxu0 %v1486
    %2007 = vmatprep.subr.bf16.mxu0 %v1503
    %2008 = vmatpush1.bf16.msra.mxu0 %v1502
    %2009 = vmatprep.subr.bf16.mxu0 %v1519
    %2010 = vmatpush1.bf16.msra.mxu0 %v1518
    %2011 = vmatprep.subr.bf16.mxu0 %v1535
    %2012 = vmatpush1.bf16.msra.mxu0 %v1534
    %2013 = vmatprep.subr.bf16.mxu0 %v1551
    %2014 = vmatpush1.bf16.msra.mxu0 %v1550
    %2015 = vmatprep.subr.bf16.mxu0 %v1567
    %2016 = vmatpush1.bf16.msra.mxu0 %v1566
    %2017 = vmatprep.subr.bf16.mxu0 %v1583
    %2018 = vmatpush1.bf16.msra.mxu0 %v1582
    %2019 = vmatprep.subr.bf16.mxu0 %v1599
    %2020 = vmatpush1.bf16.msra.mxu0 %v1598
    %2021 = vmatprep.subr.bf16.mxu0 %v1615
    %2022 = vmatpush1.bf16.msra.mxu0 %v1614
    %2023 = vmatprep.mubr.bf16.mxu0 0
    %2024 = vmatmul.mubr.bf16.gmra.mrb[0].mxu0 0
    %v2025 = vpop.f32.mrb[0].mxu0
    %v2026 = vadd.f32 %v1985, %v2025
    %v2027 = vpop.f32.mrb[0].mxu0
    %v2028 = vadd.f32 %v1987, %v2027
    %v2029 = vpop.f32.mrb[0].mxu0
    %v2030 = vpop.f32.mrb[0].mxu0
    %2031 = vdwg.mxu0
    %2032 = vmatprep.subr.bf16.mxu0 %v1121
    %2033 = vmatpush1.bf16.msra.mxu0 %v1120
    %2034 = vmatprep.subr.bf16.mxu0 %v1137
    %2035 = vmatpush1.bf16.msra.mxu0 %v1136
    %2036 = vmatprep.subr.bf16.mxu0 %v1153
    %2037 = vmatpush1.bf16.msra.mxu0 %v1152
    %2038 = vmatprep.subr.bf16.mxu0 %v1169
    %2039 = vmatpush1.bf16.msra.mxu0 %v1168
    %2040 = vmatprep.subr.bf16.mxu0 %v1185
    %2041 = vmatpush1.bf16.msra.mxu0 %v1184
    %2042 = vmatprep.subr.bf16.mxu0 %v1201
    %2043 = vmatpush1.bf16.msra.mxu0 %v1200
    %2044 = vmatprep.subr.bf16.mxu0 %v1217
    %2045 = vmatpush1.bf16.msra.mxu0 %v1216
    %2046 = vmatprep.subr.bf16.mxu0 %v1233
    %2047 = vmatpush1.bf16.msra.mxu0 %v1232
    %2048 = vmatprep.subr.bf16.mxu0 %v1249
    %2049 = vmatpush1.bf16.msra.mxu0 %v1248
    %2050 = vmatprep.subr.bf16.mxu0 %v1265
    %2051 = vmatpush1.bf16.msra.mxu0 %v1264
    %2052 = vmatprep.subr.bf16.mxu0 %v1281
    %2053 = vmatpush1.bf16.msra.mxu0 %v1280
    %2054 = vmatprep.subr.bf16.mxu0 %v1297
    %2055 = vmatpush1.bf16.msra.mxu0 %v1296
    %2056 = vmatprep.subr.bf16.mxu0 %v1313
    %2057 = vmatpush1.bf16.msra.mxu0 %v1312
    %2058 = vmatprep.subr.bf16.mxu0 %v1329
    %2059 = vmatpush1.bf16.msra.mxu0 %v1328
    %2060 = vmatprep.subr.bf16.mxu0 %v1345
    %2061 = vmatpush1.bf16.msra.mxu0 %v1344
    %2062 = vmatprep.subr.bf16.mxu0 %v1361
    %2063 = vmatpush1.bf16.msra.mxu0 %v1360
    %2064 = vmatprep.mubr.bf16.mxu0 0
    %2065 = vmatmul.mubr.bf16.gmra.mrb[0].mxu0 0
    %v2066 = vpop.f32.mrb[0].mxu0
    %v2067 = vadd.f32 0.0, %v2066
    %v2068 = vpop.f32.mrb[0].mxu0
    %v2069 = vadd.f32 0.0, %v2068
    %v2070 = vpop.f32.mrb[0].mxu0
    %v2071 = vpop.f32.mrb[0].mxu0
    %2072 = vdwg.mxu0
    %2073 = vmatprep.subr.bf16.mxu0 %v1377
    %2074 = vmatpush1.bf16.msra.mxu0 %v1376
    %2075 = vmatprep.subr.bf16.mxu0 %v1393
    %2076 = vmatpush1.bf16.msra.mxu0 %v1392
    %2077 = vmatprep.subr.bf16.mxu0 %v1409
    %2078 = vmatpush1.bf16.msra.mxu0 %v1408
    %2079 = vmatprep.subr.bf16.mxu0 %v1425
    %2080 = vmatpush1.bf16.msra.mxu0 %v1424
    %2081 = vmatprep.subr.bf16.mxu0 %v1441
    %2082 = vmatpush1.bf16.msra.mxu0 %v1440
    %2083 = vmatprep.subr.bf16.mxu0 %v1457
    %2084 = vmatpush1.bf16.msra.mxu0 %v1456
    %2085 = vmatprep.subr.bf16.mxu0 %v1473
    %2086 = vmatpush1.bf16.msra.mxu0 %v1472
    %2087 = vmatprep.subr.bf16.mxu0 %v1489
    %2088 = vmatpush1.bf16.msra.mxu0 %v1488
    %2089 = vmatprep.subr.bf16.mxu0 %v1505
    %2090 = vmatpush1.bf16.msra.mxu0 %v1504
    %2091 = vmatprep.subr.bf16.mxu0 %v1521
    %2092 = vmatpush1.bf16.msra.mxu0 %v1520
    %2093 = vmatprep.subr.bf16.mxu0 %v1537
    %2094 = vmatpush1.bf16.msra.mxu0 %v1536
    %2095 = vmatprep.subr.bf16.mxu0 %v1553
    %2096 = vmatpush1.bf16.msra.mxu0 %v1552
    %2097 = vmatprep.subr.bf16.mxu0 %v1569
    %2098 = vmatpush1.bf16.msra.mxu0 %v1568
    %2099 = vmatprep.subr.bf16.mxu0 %v1585
    %2100 = vmatpush1.bf16.msra.mxu0 %v1584
    %2101 = vmatprep.subr.bf16.mxu0 %v1601
    %2102 = vmatpush1.bf16.msra.mxu0 %v1600
    %2103 = vmatprep.subr.bf16.mxu0 %v1617
    %2104 = vmatpush1.bf16.msra.mxu0 %v1616
    %2105 = vmatprep.mubr.bf16.mxu0 0
    %2106 = vmatmul.mubr.bf16.gmra.mrb[0].mxu0 0
    %v2107 = vpop.f32.mrb[0].mxu0
    %v2108 = vadd.f32 %v2067, %v2107
    %v2109 = vpop.f32.mrb[0].mxu0
    %v2110 = vadd.f32 %v2069, %v2109
    %v2111 = vpop.f32.mrb[0].mxu0
    %v2112 = vpop.f32.mrb[0].mxu0
    %2113 = vdwg.mxu0
    %2114 = vmatprep.subr.bf16.mxu0 %v1123
    %2115 = vmatpush1.bf16.msra.mxu0 %v1122
    %2116 = vmatprep.subr.bf16.mxu0 %v1139
    %2117 = vmatpush1.bf16.msra.mxu0 %v1138
    %2118 = vmatprep.subr.bf16.mxu0 %v1155
    %2119 = vmatpush1.bf16.msra.mxu0 %v1154
    %2120 = vmatprep.subr.bf16.mxu0 %v1171
    %2121 = vmatpush1.bf16.msra.mxu0 %v1170
    %2122 = vmatprep.subr.bf16.mxu0 %v1187
    %2123 = vmatpush1.bf16.msra.mxu0 %v1186
    %2124 = vmatprep.subr.bf16.mxu0 %v1203
    %2125 = vmatpush1.bf16.msra.mxu0 %v1202
    %2126 = vmatprep.subr.bf16.mxu0 %v1219
    %2127 = vmatpush1.bf16.msra.mxu0 %v1218
    %2128 = vmatprep.subr.bf16.mxu0 %v1235
    %2129 = vmatpush1.bf16.msra.mxu0 %v1234
    %2130 = vmatprep.subr.bf16.mxu0 %v1251
    %2131 = vmatpush1.bf16.msra.mxu0 %v1250
    %2132 = vmatprep.subr.bf16.mxu0 %v1267
    %2133 = vmatpush1.bf16.msra.mxu0 %v1266
    %2134 = vmatprep.subr.bf16.mxu0 %v1283
    %2135 = vmatpush1.bf16.msra.mxu0 %v1282
    %2136 = vmatprep.subr.bf16.mxu0 %v1299
    %2137 = vmatpush1.bf16.msra.mxu0 %v1298
    %2138 = vmatprep.subr.bf16.mxu0 %v1315
    %2139 = vmatpush1.bf16.msra.mxu0 %v1314
    %2140 = vmatprep.subr.bf16.mxu0 %v1331
    %2141 = vmatpush1.bf16.msra.mxu0 %v1330
    %2142 = vmatprep.subr.bf16.mxu0 %v1347
    %2143 = vmatpush1.bf16.msra.mxu0 %v1346
    %2144 = vmatprep.subr.bf16.mxu0 %v1363
    %2145 = vmatpush1.bf16.msra.mxu0 %v1362
    %2146 = vmatprep.mubr.bf16.mxu0 0
    %2147 = vmatmul.mubr.bf16.gmra.mrb[0].mxu0 0
    %v2148 = vpop.f32.mrb[0].mxu0
    %v2149 = vadd.f32 0.0, %v2148
    %v2150 = vpop.f32.mrb[0].mxu0
    %v2151 = vadd.f32 0.0, %v2150
    %v2152 = vpop.f32.mrb[0].mxu0
    %v2153 = vpop.f32.mrb[0].mxu0
    %2154 = vdwg.mxu0
    %2155 = vmatprep.subr.bf16.mxu0 %v1379
    %2156 = vmatpush1.bf16.msra.mxu0 %v1378
    %2157 = vmatprep.subr.bf16.mxu0 %v1395
    %2158 = vmatpush1.bf16.msra.mxu0 %v1394
    %2159 = vmatprep.subr.bf16.mxu0 %v1411
    %2160 = vmatpush1.bf16.msra.mxu0 %v1410
    %2161 = vmatprep.subr.bf16.mxu0 %v1427
    %2162 = vmatpush1.bf16.msra.mxu0 %v1426
    %2163 = vmatprep.subr.bf16.mxu0 %v1443
    %2164 = vmatpush1.bf16.msra.mxu0 %v1442
    %2165 = vmatprep.subr.bf16.mxu0 %v1459
    %2166 = vmatpush1.bf16.msra.mxu0 %v1458
    %2167 = vmatprep.subr.bf16.mxu0 %v1475
    %2168 = vmatpush1.bf16.msra.mxu0 %v1474
    %2169 = vmatprep.subr.bf16.mxu0 %v1491
    %2170 = vmatpush1.bf16.msra.mxu0 %v1490
    %2171 = vmatprep.subr.bf16.mxu0 %v1507
    %2172 = vmatpush1.bf16.msra.mxu0 %v1506
    %2173 = vmatprep.subr.bf16.mxu0 %v1523
    %2174 = vmatpush1.bf16.msra.mxu0 %v1522
    %2175 = vmatprep.subr.bf16.mxu0 %v1539
    %2176 = vmatpush1.bf16.msra.mxu0 %v1538
    %2177 = vmatprep.subr.bf16.mxu0 %v1555
    %2178 = vmatpush1.bf16.msra.mxu0 %v1554
    %2179 = vmatprep.subr.bf16.mxu0 %v1571
    %2180 = vmatpush1.bf16.msra.mxu0 %v1570
    %2181 = vmatprep.subr.bf16.mxu0 %v1587
    %2182 = vmatpush1.bf16.msra.mxu0 %v1586
    %2183 = vmatprep.subr.bf16.mxu0 %v1603
    %2184 = vmatpush1.bf16.msra.mxu0 %v1602
    %2185 = vmatprep.subr.bf16.mxu0 %v1619
    %2186 = vmatpush1.bf16.msra.mxu0 %v1618
    %2187 = vmatprep.mubr.bf16.mxu0 0
    %2188 = vmatmul.mubr.bf16.gmra.mrb[0].mxu0 0
    %v2189 = vpop.f32.mrb[0].mxu0
    %v2190 = vadd.f32 %v2149, %v2189
    %v2191 = vpop.f32.mrb[0].mxu0
    %v2192 = vadd.f32 %v2151, %v2191
    %v2193 = vpop.f32.mrb[0].mxu0
    %v2194 = vpop.f32.mrb[0].mxu0
    %2195 = vdwg.mxu0
    %2196 = vmatprep.subr.bf16.mxu0 %v1125
    %2197 = vmatpush1.bf16.msra.mxu0 %v1124
    %2198 = vmatprep.subr.bf16.mxu0 %v1141
    %2199 = vmatpush1.bf16.msra.mxu0 %v1140
    %2200 = vmatprep.subr.bf16.mxu0 %v1157
    %2201 = vmatpush1.bf16.msra.mxu0 %v1156
    %2202 = vmatprep.subr.bf16.mxu0 %v1173
    %2203 = vmatpush1.bf16.msra.mxu0 %v1172
    %2204 = vmatprep.subr.bf16.mxu0 %v1189
    %2205 = vmatpush1.bf16.msra.mxu0 %v1188
    %2206 = vmatprep.subr.bf16.mxu0 %v1205
    %2207 = vmatpush1.bf16.msra.mxu0 %v1204
    %2208 = vmatprep.subr.bf16.mxu0 %v1221
    %2209 = vmatpush1.bf16.msra.mxu0 %v1220
    %2210 = vmatprep.subr.bf16.mxu0 %v1237
    %2211 = vmatpush1.bf16.msra.mxu0 %v1236
    %2212 = vmatprep.subr.bf16.mxu0 %v1253
    %2213 = vmatpush1.bf16.msra.mxu0 %v1252
    %2214 = vmatprep.subr.bf16.mxu0 %v1269
    %2215 = vmatpush1.bf16.msra.mxu0 %v1268
    %2216 = vmatprep.subr.bf16.mxu0 %v1285
    %2217 = vmatpush1.bf16.msra.mxu0 %v1284
    %2218 = vmatprep.subr.bf16.mxu0 %v1301
    %2219 = vmatpush1.bf16.msra.mxu0 %v1300
    %2220 = vmatprep.subr.bf16.mxu0 %v1317
    %2221 = vmatpush1.bf16.msra.mxu0 %v1316
    %2222 = vmatprep.subr.bf16.mxu0 %v1333
    %2223 = vmatpush1.bf16.msra.mxu0 %v1332
    %2224 = vmatprep.subr.bf16.mxu0 %v1349
    %2225 = vmatpush1.bf16.msra.mxu0 %v1348
    %2226 = vmatprep.subr.bf16.mxu0 %v1365
    %2227 = vmatpush1.bf16.msra.mxu0 %v1364
    %2228 = vmatprep.mubr.bf16.mxu0 0
    %2229 = vmatmul.mubr.bf16.gmra.mrb[0].mxu0 0
    %v2230 = vpop.f32.mrb[0].mxu0
    %v2231 = vadd.f32 0.0, %v2230
    %v2232 = vpop.f32.mrb[0].mxu0
    %v2233 = vadd.f32 0.0, %v2232
    %v2234 = vpop.f32.mrb[0].mxu0
    %v2235 = vpop.f32.mrb[0].mxu0
    %2236 = vdwg.mxu0
    %2237 = vmatprep.subr.bf16.mxu0 %v1381
    %2238 = vmatpush1.bf16.msra.mxu0 %v1380
    %2239 = vmatprep.subr.bf16.mxu0 %v1397
    %2240 = vmatpush1.bf16.msra.mxu0 %v1396
    %2241 = vmatprep.subr.bf16.mxu0 %v1413
    %2242 = vmatpush1.bf16.msra.mxu0 %v1412
    %2243 = vmatprep.subr.bf16.mxu0 %v1429
    %2244 = vmatpush1.bf16.msra.mxu0 %v1428
    %2245 = vmatprep.subr.bf16.mxu0 %v1445
    %2246 = vmatpush1.bf16.msra.mxu0 %v1444
    %2247 = vmatprep.subr.bf16.mxu0 %v1461
    %2248 = vmatpush1.bf16.msra.mxu0 %v1460
    %2249 = vmatprep.subr.bf16.mxu0 %v1477
    %2250 = vmatpush1.bf16.msra.mxu0 %v1476
    %2251 = vmatprep.subr.bf16.mxu0 %v1493
    %2252 = vmatpush1.bf16.msra.mxu0 %v1492
    %2253 = vmatprep.subr.bf16.mxu0 %v1509
    %2254 = vmatpush1.bf16.msra.mxu0 %v1508
    %2255 = vmatprep.subr.bf16.mxu0 %v1525
    %2256 = vmatpush1.bf16.msra.mxu0 %v1524
    %2257 = vmatprep.subr.bf16.mxu0 %v1541
    %2258 = vmatpush1.bf16.msra.mxu0 %v1540
    %2259 = vmatprep.subr.bf16.mxu0 %v1557
    %2260 = vmatpush1.bf16.msra.mxu0 %v1556
    %2261 = vmatprep.subr.bf16.mxu0 %v1573
    %2262 = vmatpush1.bf16.msra.mxu0 %v1572
    %2263 = vmatprep.subr.bf16.mxu0 %v1589
    %2264 = vmatpush1.bf16.msra.mxu0 %v1588
    %2265 = vmatprep.subr.bf16.mxu0 %v1605
    %2266 = vmatpush1.bf16.msra.mxu0 %v1604
    %2267 = vmatprep.subr.bf16.mxu0 %v1621
    %2268 = vmatpush1.bf16.msra.mxu0 %v1620
    %2269 = vmatprep.mubr.bf16.mxu0 0
    %2270 = vmatmul.mubr.bf16.gmra.mrb[0].mxu0 0
    %v2271 = vpop.f32.mrb[0].mxu0
    %v2272 = vadd.f32 %v2231, %v2271
    %v2273 = vpop.f32.mrb[0].mxu0
    %v2274 = vadd.f32 %v2233, %v2273
    %v2275 = vpop.f32.mrb[0].mxu0
    %v2276 = vpop.f32.mrb[0].mxu0
    %2277 = vdwg.mxu0
    %v2278 = vadd.f32 %v1094, %v1698
    %v2279 = vadd.f32 %v1095, %v1700
    %v2280 = vadd.f32 %v1096, %v1780
    %v2281 = vadd.f32 %v1097, %v1782
    %v2282 = vadd.f32 %v1098, %v1862
    %v2283 = vadd.f32 %v1099, %v1864
    %v2284 = vadd.f32 %v1100, %v1944
    %v2285 = vadd.f32 %v1101, %v1946
    %v2286 = vadd.f32 %v1102, %v2026
    %v2287 = vadd.f32 %v1103, %v2028
    %v2288 = vadd.f32 %v1104, %v2108
    %v2289 = vadd.f32 %v1105, %v2110
    %v2290 = vadd.f32 %v1106, %v2190
    %v2291 = vadd.f32 %v1107, %v2192
    %v2292 = vadd.f32 %v1108, %v2272
    %v2293 = vadd.f32 %v1109, %v2274
    %v2294 = vmul.f32 %v2278, 0.5
    %v2295 = vmul.f32 %v2279, 0.5
    %v2296 = vmul.f32 %v2280, 0.5
    %v2297 = vmul.f32 %v2281, 0.5
    %v2298 = vtanh.pop %v2294
    %v2299 = vtanh.pop %v2295
    %v2300 = vtanh.pop %v2296
    %v2301 = vtanh.pop %v2297
    %v2302 = vmul.f32 %v2298, 0.5
    %v2303 = vmul.f32 %v2299, 0.5
    %v2304 = vmul.f32 %v2300, 0.5
    %v2305 = vmul.f32 %v2301, 0.5
    %v2306 = vadd.f32 %v2302, 0.5
    %v2307 = vadd.f32 %v2303, 0.5
    %v2308 = vadd.f32 %v2304, 0.5
    %v2309 = vadd.f32 %v2305, 0.5
    %v2310 = vmul.f32 %v2282, 0.5
    %v2311 = vmul.f32 %v2283, 0.5
    %v2312 = vmul.f32 %v2284, 0.5
    %v2313 = vmul.f32 %v2285, 0.5
    %v2314 = vtanh.pop %v2310
    %v2315 = vtanh.pop %v2311
    %v2316 = vtanh.pop %v2312
    %v2317 = vtanh.pop %v2313
    %v2318 = vmul.f32 %v2314, 0.5
    %v2319 = vmul.f32 %v2315, 0.5
    %v2320 = vmul.f32 %v2316, 0.5
    %v2321 = vmul.f32 %v2317, 0.5
    %v2322 = vadd.f32 %v2318, 0.5
    %v2323 = vadd.f32 %v2319, 0.5
    %v2324 = vadd.f32 %v2320, 0.5
    %v2325 = vadd.f32 %v2321, 0.5
    %v2326 = vtanh.pop %v2286
    %v2327 = vtanh.pop %v2287
    %v2328 = vtanh.pop %v2288
    %v2329 = vtanh.pop %v2289
    %v2330 = vmul.f32 %v2290, 0.5
    %v2331 = vmul.f32 %v2291, 0.5
    %v2332 = vmul.f32 %v2292, 0.5
    %v2333 = vmul.f32 %v2293, 0.5
    %v2334 = vtanh.pop %v2330
    %v2335 = vtanh.pop %v2331
    %v2336 = vtanh.pop %v2332
    %v2337 = vtanh.pop %v2333
    %v2338 = vmul.f32 %v2334, 0.5
    %v2339 = vmul.f32 %v2335, 0.5
    %v2340 = vmul.f32 %v2336, 0.5
    %v2341 = vmul.f32 %v2337, 0.5
    %v2342 = vadd.f32 %v2338, 0.5
    %v2343 = vadd.f32 %v2339, 0.5
    %v2344 = vadd.f32 %v2340, 0.5
    %v2345 = vadd.f32 %v2341, 0.5
    %v2346 = vmul.f32 %v2322, 0.0
    %v2347 = vmul.f32 %v2323, 0.0
    %v2348 = vmul.f32 %v2324, 0.0
    %v2349 = vmul.f32 %v2325, 0.0
    %v2350 = vmul.f32 %v2306, %v2326
    %v2351 = vmul.f32 %v2307, %v2327
    %v2352 = vmul.f32 %v2308, %v2328
    %v2353 = vmul.f32 %v2309, %v2329
    %v2354 = vadd.f32 %v2346, %v2350
    %v2355 = vadd.f32 %v2347, %v2351
    %v2356 = vadd.f32 %v2348, %v2352
    %v2357 = vadd.f32 %v2349, %v2353
    %v2358 = vtanh.pop %v2354
    %v2359 = vtanh.pop %v2355
    %v2360 = vtanh.pop %v2356
    %v2361 = vtanh.pop %v2357
    %v2362 = vmul.f32 %v2342, %v2358
    %v2363 = vmul.f32 %v2343, %v2359
    %v2364 = vmul.f32 %v2344, %v2360
    %v2365 = vmul.f32 %v2345, %v2361
    %s2366 = scalar_lea.vmem [#allocation5], 128
    %v2367 = vld [vmem:[%s2366] sm:$0xff]
    %v2368 = vld [vmem:[%s2366 + $0x8] sm:$0xff]
    %v2369 = vld [vmem:[%s2366 + $0x10] sm:$0xff]
    %v2370 = vld [vmem:[%s2366 + $0x18] sm:$0xff]
    %v2371 = vld [vmem:[%s2366 + $0x20] sm:$0xff]
    %v2372 = vld [vmem:[%s2366 + $0x28] sm:$0xff]
    %v2373 = vld [vmem:[%s2366 + $0x30] sm:$0xff]
    %v2374 = vld [vmem:[%s2366 + $0x38] sm:$0xff]
    %v2375 = vld [vmem:[%s2366 + $0x40] sm:$0xff]
    %v2376 = vld [vmem:[%s2366 + $0x48] sm:$0xff]
    %v2377 = vld [vmem:[%s2366 + $0x50] sm:$0xff]
    %v2378 = vld [vmem:[%s2366 + $0x58] sm:$0xff]
    %v2379 = vld [vmem:[%s2366 + $0x60] sm:$0xff]
    %v2380 = vld [vmem:[%s2366 + $0x68] sm:$0xff]
    %v2381 = vld [vmem:[%s2366 + $0x70] sm:$0xff]
    %v2382 = vld [vmem:[%s2366 + $0x78] sm:$0xff]
    %v2383 = vpack.c.bf16 %v2362, %v2362
    %v2384 = vpack.c.bf16 %v2363, %v2363
    %v2385 = vpack.c.bf16 %v2364, %v2364
    %v2386 = vpack.c.bf16 %v2365, %v2365
    %2387 = vmatprep.subr.bf16.mxu0 %v1111
    %2388 = vmatpush1.bf16.msra.mxu0 %v1110
    %2389 = vmatprep.subr.bf16.mxu0 %v1127
    %2390 = vmatpush1.bf16.msra.mxu0 %v1126
    %2391 = vmatprep.subr.bf16.mxu0 %v1143
    %2392 = vmatpush1.bf16.msra.mxu0 %v1142
    %2393 = vmatprep.subr.bf16.mxu0 %v1159
    %2394 = vmatpush1.bf16.msra.mxu0 %v1158
    %2395 = vmatprep.subr.bf16.mxu0 %v1175
    %2396 = vmatpush1.bf16.msra.mxu0 %v1174
    %2397 = vmatprep.subr.bf16.mxu0 %v1191
    %2398 = vmatpush1.bf16.msra.mxu0 %v1190
    %2399 = vmatprep.subr.bf16.mxu0 %v1207
    %2400 = vmatpush1.bf16.msra.mxu0 %v1206
    %2401 = vmatprep.subr.bf16.mxu0 %v1223
    %2402 = vmatpush1.bf16.msra.mxu0 %v1222
    %2403 = vmatprep.subr.bf16.mxu0 %v1239
    %2404 = vmatpush1.bf16.msra.mxu0 %v1238
    %2405 = vmatprep.subr.bf16.mxu0 %v1255
    %2406 = vmatpush1.bf16.msra.mxu0 %v1254
    %2407 = vmatprep.subr.bf16.mxu0 %v1271
    %2408 = vmatpush1.bf16.msra.mxu0 %v1270
    %2409 = vmatprep.subr.bf16.mxu0 %v1287
    %2410 = vmatpush1.bf16.msra.mxu0 %v1286
    %2411 = vmatprep.subr.bf16.mxu0 %v1303
    %2412 = vmatpush1.bf16.msra.mxu0 %v1302
    %2413 = vmatprep.subr.bf16.mxu0 %v1319
    %2414 = vmatpush1.bf16.msra.mxu0 %v1318
    %2415 = vmatprep.subr.bf16.mxu0 %v1335
    %2416 = vmatpush1.bf16.msra.mxu0 %v1334
    %2417 = vmatprep.subr.bf16.mxu0 %v1351
    %2418 = vmatpush1.bf16.msra.mxu0 %v1350
    %2419 = vmatprep.mubr.bf16.mxu0 %v2384
    %2420 = vmatmul.mubr.bf16.gmra.mrb[0].mxu0 %v2383
    %v2421 = vpop.f32.mrb[0].mxu0
    %v2422 = vadd.f32 0.0, %v2421
    %v2423 = vpop.f32.mrb[0].mxu0
    %v2424 = vadd.f32 0.0, %v2423
    %v2425 = vpop.f32.mrb[0].mxu0
    %v2426 = vpop.f32.mrb[0].mxu0
    %2427 = vdwg.mxu0
    %2428 = vmatprep.subr.bf16.mxu0 %v1367
    %2429 = vmatpush1.bf16.msra.mxu0 %v1366
    %2430 = vmatprep.subr.bf16.mxu0 %v1383
    %2431 = vmatpush1.bf16.msra.mxu0 %v1382
    %2432 = vmatprep.subr.bf16.mxu0 %v1399
    %2433 = vmatpush1.bf16.msra.mxu0 %v1398
    %2434 = vmatprep.subr.bf16.mxu0 %v1415
    %2435 = vmatpush1.bf16.msra.mxu0 %v1414
    %2436 = vmatprep.subr.bf16.mxu0 %v1431
    %2437 = vmatpush1.bf16.msra.mxu0 %v1430
    %2438 = vmatprep.subr.bf16.mxu0 %v1447
    %2439 = vmatpush1.bf16.msra.mxu0 %v1446
    %2440 = vmatprep.subr.bf16.mxu0 %v1463
    %2441 = vmatpush1.bf16.msra.mxu0 %v1462
    %2442 = vmatprep.subr.bf16.mxu0 %v1479
    %2443 = vmatpush1.bf16.msra.mxu0 %v1478
    %2444 = vmatprep.subr.bf16.mxu0 %v1495
    %2445 = vmatpush1.bf16.msra.mxu0 %v1494
    %2446 = vmatprep.subr.bf16.mxu0 %v1511
    %2447 = vmatpush1.bf16.msra.mxu0 %v1510
    %2448 = vmatprep.subr.bf16.mxu0 %v1527
    %2449 = vmatpush1.bf16.msra.mxu0 %v1526
    %2450 = vmatprep.subr.bf16.mxu0 %v1543
    %2451 = vmatpush1.bf16.msra.mxu0 %v1542
    %2452 = vmatprep.subr.bf16.mxu0 %v1559
    %2453 = vmatpush1.bf16.msra.mxu0 %v1558
    %2454 = vmatprep.subr.bf16.mxu0 %v1575
    %2455 = vmatpush1.bf16.msra.mxu0 %v1574
    %2456 = vmatprep.subr.bf16.mxu0 %v1591
    %2457 = vmatpush1.bf16.msra.mxu0 %v1590
    %2458 = vmatprep.subr.bf16.mxu0 %v1607
    %2459 = vmatpush1.bf16.msra.mxu0 %v1606
    %2460 = vmatprep.mubr.bf16.mxu0 %v2386
    %2461 = vmatmul.mubr.bf16.gmra.mrb[0].mxu0 %v2385
    %v2462 = vpop.f32.mrb[0].mxu0
    %v2463 = vadd.f32 %v2422, %v2462
    %v2464 = vpop.f32.mrb[0].mxu0
    %v2465 = vadd.f32 %v2424, %v2464
    %v2466 = vpop.f32.mrb[0].mxu0
    %v2467 = vpop.f32.mrb[0].mxu0
    %2468 = vdwg.mxu0
    %2469 = vmatprep.subr.bf16.mxu0 %v1113
    %2470 = vmatpush1.bf16.msra.mxu0 %v1112
    %2471 = vmatprep.subr.bf16.mxu0 %v1129
    %2472 = vmatpush1.bf16.msra.mxu0 %v1128
    %2473 = vmatprep.subr.bf16.mxu0 %v1145
    %2474 = vmatpush1.bf16.msra.mxu0 %v1144
    %2475 = vmatprep.subr.bf16.mxu0 %v1161
    %2476 = vmatpush1.bf16.msra.mxu0 %v1160
    %2477 = vmatprep.subr.bf16.mxu0 %v1177
    %2478 = vmatpush1.bf16.msra.mxu0 %v1176
    %2479 = vmatprep.subr.bf16.mxu0 %v1193
    %2480 = vmatpush1.bf16.msra.mxu0 %v1192
    %2481 = vmatprep.subr.bf16.mxu0 %v1209
    %2482 = vmatpush1.bf16.msra.mxu0 %v1208
    %2483 = vmatprep.subr.bf16.mxu0 %v1225
    %2484 = vmatpush1.bf16.msra.mxu0 %v1224
    %2485 = vmatprep.subr.bf16.mxu0 %v1241
    %2486 = vmatpush1.bf16.msra.mxu0 %v1240
    %2487 = vmatprep.subr.bf16.mxu0 %v1257
    %2488 = vmatpush1.bf16.msra.mxu0 %v1256
    %2489 = vmatprep.subr.bf16.mxu0 %v1273
    %2490 = vmatpush1.bf16.msra.mxu0 %v1272
    %2491 = vmatprep.subr.bf16.mxu0 %v1289
    %2492 = vmatpush1.bf16.msra.mxu0 %v1288
    %2493 = vmatprep.subr.bf16.mxu0 %v1305
    %2494 = vmatpush1.bf16.msra.mxu0 %v1304
    %2495 = vmatprep.subr.bf16.mxu0 %v1321
    %2496 = vmatpush1.bf16.msra.mxu0 %v1320
    %2497 = vmatprep.subr.bf16.mxu0 %v1337
    %2498 = vmatpush1.bf16.msra.mxu0 %v1336
    %2499 = vmatprep.subr.bf16.mxu0 %v1353
    %2500 = vmatpush1.bf16.msra.mxu0 %v1352
    %2501 = vmatprep.mubr.bf16.mxu0 %v2384
    %2502 = vmatmul.mubr.bf16.gmra.mrb[0].mxu0 %v2383
    %v2503 = vpop.f32.mrb[0].mxu0
    %v2504 = vadd.f32 0.0, %v2503
    %v2505 = vpop.f32.mrb[0].mxu0
    %v2506 = vadd.f32 0.0, %v2505
    %v2507 = vpop.f32.mrb[0].mxu0
    %v2508 = vpop.f32.mrb[0].mxu0
    %2509 = vdwg.mxu0
    %2510 = vmatprep.subr.bf16.mxu0 %v1369
    %2511 = vmatpush1.bf16.msra.mxu0 %v1368
    %2512 = vmatprep.subr.bf16.mxu0 %v1385
    %2513 = vmatpush1.bf16.msra.mxu0 %v1384
    %2514 = vmatprep.subr.bf16.mxu0 %v1401
    %2515 = vmatpush1.bf16.msra.mxu0 %v1400
    %2516 = vmatprep.subr.bf16.mxu0 %v1417
    %2517 = vmatpush1.bf16.msra.mxu0 %v1416
    %2518 = vmatprep.subr.bf16.mxu0 %v1433
    %2519 = vmatpush1.bf16.msra.mxu0 %v1432
    %2520 = vmatprep.subr.bf16.mxu0 %v1449
    %2521 = vmatpush1.bf16.msra.mxu0 %v1448
    %2522 = vmatprep.subr.bf16.mxu0 %v1465
    %2523 = vmatpush1.bf16.msra.mxu0 %v1464
    %2524 = vmatprep.subr.bf16.mxu0 %v1481
    %2525 = vmatpush1.bf16.msra.mxu0 %v1480
    %2526 = vmatprep.subr.bf16.mxu0 %v1497
    %2527 = vmatpush1.bf16.msra.mxu0 %v1496
    %2528 = vmatprep.subr.bf16.mxu0 %v1513
    %2529 = vmatpush1.bf16.msra.mxu0 %v1512
    %2530 = vmatprep.subr.bf16.mxu0 %v1529
    %2531 = vmatpush1.bf16.msra.mxu0 %v1528
    %2532 = vmatprep.subr.bf16.mxu0 %v1545
    %2533 = vmatpush1.bf16.msra.mxu0 %v1544
    %2534 = vmatprep.subr.bf16.mxu0 %v1561
    %2535 = vmatpush1.bf16.msra.mxu0 %v1560
    %2536 = vmatprep.subr.bf16.mxu0 %v1577
    %2537 = vmatpush1.bf16.msra.mxu0 %v1576
    %2538 = vmatprep.subr.bf16.mxu0 %v1593
    %2539 = vmatpush1.bf16.msra.mxu0 %v1592
    %2540 = vmatprep.subr.bf16.mxu0 %v1609
    %2541 = vmatpush1.bf16.msra.mxu0 %v1608
    %2542 = vmatprep.mubr.bf16.mxu0 %v2386
    %2543 = vmatmul.mubr.bf16.gmra.mrb[0].mxu0 %v2385
    %v2544 = vpop.f32.mrb[0].mxu0
    %v2545 = vadd.f32 %v2504, %v2544
    %v2546 = vpop.f32.mrb[0].mxu0
    %v2547 = vadd.f32 %v2506, %v2546
    %v2548 = vpop.f32.mrb[0].mxu0
    %v2549 = vpop.f32.mrb[0].mxu0
    %2550 = vdwg.mxu0
    %2551 = vmatprep.subr.bf16.mxu0 %v1115
    %2552 = vmatpush1.bf16.msra.mxu0 %v1114
    %2553 = vmatprep.subr.bf16.mxu0 %v1131
    %2554 = vmatpush1.bf16.msra.mxu0 %v1130
    %2555 = vmatprep.subr.bf16.mxu0 %v1147
    %2556 = vmatpush1.bf16.msra.mxu0 %v1146
    %2557 = vmatprep.subr.bf16.mxu0 %v1163
    %2558 = vmatpush1.bf16.msra.mxu0 %v1162
    %2559 = vmatprep.subr.bf16.mxu0 %v1179
    %2560 = vmatpush1.bf16.msra.mxu0 %v1178
    %2561 = vmatprep.subr.bf16.mxu0 %v1195
    %2562 = vmatpush1.bf16.msra.mxu0 %v1194
    %2563 = vmatprep.subr.bf16.mxu0 %v1211
    %2564 = vmatpush1.bf16.msra.mxu0 %v1210
    %2565 = vmatprep.subr.bf16.mxu0 %v1227
    %2566 = vmatpush1.bf16.msra.mxu0 %v1226
    %2567 = vmatprep.subr.bf16.mxu0 %v1243
    %2568 = vmatpush1.bf16.msra.mxu0 %v1242
    %2569 = vmatprep.subr.bf16.mxu0 %v1259
    %2570 = vmatpush1.bf16.msra.mxu0 %v1258
    %2571 = vmatprep.subr.bf16.mxu0 %v1275
    %2572 = vmatpush1.bf16.msra.mxu0 %v1274
    %2573 = vmatprep.subr.bf16.mxu0 %v1291
    %2574 = vmatpush1.bf16.msra.mxu0 %v1290
    %2575 = vmatprep.subr.bf16.mxu0 %v1307
    %2576 = vmatpush1.bf16.msra.mxu0 %v1306
    %2577 = vmatprep.subr.bf16.mxu0 %v1323
    %2578 = vmatpush1.bf16.msra.mxu0 %v1322
    %2579 = vmatprep.subr.bf16.mxu0 %v1339
    %2580 = vmatpush1.bf16.msra.mxu0 %v1338
    %2581 = vmatprep.subr.bf16.mxu0 %v1355
    %2582 = vmatpush1.bf16.msra.mxu0 %v1354
    %2583 = vmatprep.mubr.bf16.mxu0 %v2384
    %2584 = vmatmul.mubr.bf16.gmra.mrb[0].mxu0 %v2383
    %v2585 = vpop.f32.mrb[0].mxu0
    %v2586 = vadd.f32 0.0, %v2585
    %v2587 = vpop.f32.mrb[0].mxu0
    %v2588 = vadd.f32 0.0, %v2587
    %v2589 = vpop.f32.mrb[0].mxu0
    %v2590 = vpop.f32.mrb[0].mxu0
    %2591 = vdwg.mxu0
    %2592 = vmatprep.subr.bf16.mxu0 %v1371
    %2593 = vmatpush1.bf16.msra.mxu0 %v1370
    %2594 = vmatprep.subr.bf16.mxu0 %v1387
    %2595 = vmatpush1.bf16.msra.mxu0 %v1386
    %2596 = vmatprep.subr.bf16.mxu0 %v1403
    %2597 = vmatpush1.bf16.msra.mxu0 %v1402
    %2598 = vmatprep.subr.bf16.mxu0 %v1419
    %2599 = vmatpush1.bf16.msra.mxu0 %v1418
    %2600 = vmatprep.subr.bf16.mxu0 %v1435
    %2601 = vmatpush1.bf16.msra.mxu0 %v1434
    %2602 = vmatprep.subr.bf16.mxu0 %v1451
    %2603 = vmatpush1.bf16.msra.mxu0 %v1450
    %2604 = vmatprep.subr.bf16.mxu0 %v1467
    %2605 = vmatpush1.bf16.msra.mxu0 %v1466
    %2606 = vmatprep.subr.bf16.mxu0 %v1483
    %2607 = vmatpush1.bf16.msra.mxu0 %v1482
    %2608 = vmatprep.subr.bf16.mxu0 %v1499
    %2609 = vmatpush1.bf16.msra.mxu0 %v1498
    %2610 = vmatprep.subr.bf16.mxu0 %v1515
    %2611 = vmatpush1.bf16.msra.mxu0 %v1514
    %2612 = vmatprep.subr.bf16.mxu0 %v1531
    %2613 = vmatpush1.bf16.msra.mxu0 %v1530
    %2614 = vmatprep.subr.bf16.mxu0 %v1547
    %2615 = vmatpush1.bf16.msra.mxu0 %v1546
    %2616 = vmatprep.subr.bf16.mxu0 %v1563
    %2617 = vmatpush1.bf16.msra.mxu0 %v1562
    %2618 = vmatprep.subr.bf16.mxu0 %v1579
    %2619 = vmatpush1.bf16.msra.mxu0 %v1578
    %2620 = vmatprep.subr.bf16.mxu0 %v1595
    %2621 = vmatpush1.bf16.msra.mxu0 %v1594
    %2622 = vmatprep.subr.bf16.mxu0 %v1611
    %2623 = vmatpush1.bf16.msra.mxu0 %v1610
    %2624 = vmatprep.mubr.bf16.mxu0 %v2386
    %2625 = vmatmul.mubr.bf16.gmra.mrb[0].mxu0 %v2385
    %v2626 = vpop.f32.mrb[0].mxu0
    %v2627 = vadd.f32 %v2586, %v2626
    %v2628 = vpop.f32.mrb[0].mxu0
    %v2629 = vadd.f32 %v2588, %v2628
    %v2630 = vpop.f32.mrb[0].mxu0
    %v2631 = vpop.f32.mrb[0].mxu0
    %2632 = vdwg.mxu0
    %2633 = vmatprep.subr.bf16.mxu0 %v1117
    %2634 = vmatpush1.bf16.msra.mxu0 %v1116
    %2635 = vmatprep.subr.bf16.mxu0 %v1133
    %2636 = vmatpush1.bf16.msra.mxu0 %v1132
    %2637 = vmatprep.subr.bf16.mxu0 %v1149
    %2638 = vmatpush1.bf16.msra.mxu0 %v1148
    %2639 = vmatprep.subr.bf16.mxu0 %v1165
    %2640 = vmatpush1.bf16.msra.mxu0 %v1164
    %2641 = vmatprep.subr.bf16.mxu0 %v1181
    %2642 = vmatpush1.bf16.msra.mxu0 %v1180
    %2643 = vmatprep.subr.bf16.mxu0 %v1197
    %2644 = vmatpush1.bf16.msra.mxu0 %v1196
    %2645 = vmatprep.subr.bf16.mxu0 %v1213
    %2646 = vmatpush1.bf16.msra.mxu0 %v1212
    %2647 = vmatprep.subr.bf16.mxu0 %v1229
    %2648 = vmatpush1.bf16.msra.mxu0 %v1228
    %2649 = vmatprep.subr.bf16.mxu0 %v1245
    %2650 = vmatpush1.bf16.msra.mxu0 %v1244
    %2651 = vmatprep.subr.bf16.mxu0 %v1261
    %2652 = vmatpush1.bf16.msra.mxu0 %v1260
    %2653 = vmatprep.subr.bf16.mxu0 %v1277
    %2654 = vmatpush1.bf16.msra.mxu0 %v1276
    %2655 = vmatprep.subr.bf16.mxu0 %v1293
    %2656 = vmatpush1.bf16.msra.mxu0 %v1292
    %2657 = vmatprep.subr.bf16.mxu0 %v1309
    %2658 = vmatpush1.bf16.msra.mxu0 %v1308
    %2659 = vmatprep.subr.bf16.mxu0 %v1325
    %2660 = vmatpush1.bf16.msra.mxu0 %v1324
    %2661 = vmatprep.subr.bf16.mxu0 %v1341
    %2662 = vmatpush1.bf16.msra.mxu0 %v1340
    %2663 = vmatprep.subr.bf16.mxu0 %v1357
    %2664 = vmatpush1.bf16.msra.mxu0 %v1356
    %2665 = vmatprep.mubr.bf16.mxu0 %v2384
    %2666 = vmatmul.mubr.bf16.gmra.mrb[0].mxu0 %v2383
    %v2667 = vpop.f32.mrb[0].mxu0
    %v2668 = vadd.f32 0.0, %v2667
    %v2669 = vpop.f32.mrb[0].mxu0
    %v2670 = vadd.f32 0.0, %v2669
    %v2671 = vpop.f32.mrb[0].mxu0
    %v2672 = vpop.f32.mrb[0].mxu0
    %2673 = vdwg.mxu0
    %2674 = vmatprep.subr.bf16.mxu0 %v1373
    %2675 = vmatpush1.bf16.msra.mxu0 %v1372
    %2676 = vmatprep.subr.bf16.mxu0 %v1389
    %2677 = vmatpush1.bf16.msra.mxu0 %v1388
    %2678 = vmatprep.subr.bf16.mxu0 %v1405
    %2679 = vmatpush1.bf16.msra.mxu0 %v1404
    %2680 = vmatprep.subr.bf16.mxu0 %v1421
    %2681 = vmatpush1.bf16.msra.mxu0 %v1420
    %2682 = vmatprep.subr.bf16.mxu0 %v1437
    %2683 = vmatpush1.bf16.msra.mxu0 %v1436
    %2684 = vmatprep.subr.bf16.mxu0 %v1453
    %2685 = vmatpush1.bf16.msra.mxu0 %v1452
    %2686 = vmatprep.subr.bf16.mxu0 %v1469
    %2687 = vmatpush1.bf16.msra.mxu0 %v1468
    %2688 = vmatprep.subr.bf16.mxu0 %v1485
    %2689 = vmatpush1.bf16.msra.mxu0 %v1484
    %2690 = vmatprep.subr.bf16.mxu0 %v1501
    %2691 = vmatpush1.bf16.msra.mxu0 %v1500
    %2692 = vmatprep.subr.bf16.mxu0 %v1517
    %2693 = vmatpush1.bf16.msra.mxu0 %v1516
    %2694 = vmatprep.subr.bf16.mxu0 %v1533
    %2695 = vmatpush1.bf16.msra.mxu0 %v1532
    %2696 = vmatprep.subr.bf16.mxu0 %v1549
    %2697 = vmatpush1.bf16.msra.mxu0 %v1548
    %2698 = vmatprep.subr.bf16.mxu0 %v1565
    %2699 = vmatpush1.bf16.msra.mxu0 %v1564
    %2700 = vmatprep.subr.bf16.mxu0 %v1581
    %2701 = vmatpush1.bf16.msra.mxu0 %v1580
    %2702 = vmatprep.subr.bf16.mxu0 %v1597
    %2703 = vmatpush1.bf16.msra.mxu0 %v1596
    %2704 = vmatprep.subr.bf16.mxu0 %v1613
    %2705 = vmatpush1.bf16.msra.mxu0 %v1612
    %2706 = vmatprep.mubr.bf16.mxu0 %v2386
    %2707 = vmatmul.mubr.bf16.gmra.mrb[0].mxu0 %v2385
    %v2708 = vpop.f32.mrb[0].mxu0
    %v2709 = vadd.f32 %v2668, %v2708
    %v2710 = vpop.f32.mrb[0].mxu0
    %v2711 = vadd.f32 %v2670, %v2710
    %v2712 = vpop.f32.mrb[0].mxu0
    %v2713 = vpop.f32.mrb[0].mxu0
    %2714 = vdwg.mxu0
    %2715 = vmatprep.subr.bf16.mxu0 %v1119
    %2716 = vmatpush1.bf16.msra.mxu0 %v1118
    %2717 = vmatprep.subr.bf16.mxu0 %v1135
    %2718 = vmatpush1.bf16.msra.mxu0 %v1134
    %2719 = vmatprep.subr.bf16.mxu0 %v1151
    %2720 = vmatpush1.bf16.msra.mxu0 %v1150
    %2721 = vmatprep.subr.bf16.mxu0 %v1167
    %2722 = vmatpush1.bf16.msra.mxu0 %v1166
    %2723 = vmatprep.subr.bf16.mxu0 %v1183
    %2724 = vmatpush1.bf16.msra.mxu0 %v1182
    %2725 = vmatprep.subr.bf16.mxu0 %v1199
    %2726 = vmatpush1.bf16.msra.mxu0 %v1198
    %2727 = vmatprep.subr.bf16.mxu0 %v1215
    %2728 = vmatpush1.bf16.msra.mxu0 %v1214
    %2729 = vmatprep.subr.bf16.mxu0 %v1231
    %2730 = vmatpush1.bf16.msra.mxu0 %v1230
    %2731 = vmatprep.subr.bf16.mxu0 %v1247
    %2732 = vmatpush1.bf16.msra.mxu0 %v1246
    %2733 = vmatprep.subr.bf16.mxu0 %v1263
    %2734 = vmatpush1.bf16.msra.mxu0 %v1262
    %2735 = vmatprep.subr.bf16.mxu0 %v1279
    %2736 = vmatpush1.bf16.msra.mxu0 %v1278
    %2737 = vmatprep.subr.bf16.mxu0 %v1295
    %2738 = vmatpush1.bf16.msra.mxu0 %v1294
    %2739 = vmatprep.subr.bf16.mxu0 %v1311
    %2740 = vmatpush1.bf16.msra.mxu0 %v1310
    %2741 = vmatprep.subr.bf16.mxu0 %v1327
    %2742 = vmatpush1.bf16.msra.mxu0 %v1326
    %2743 = vmatprep.subr.bf16.mxu0 %v1343
    %2744 = vmatpush1.bf16.msra.mxu0 %v1342
    %2745 = vmatprep.subr.bf16.mxu0 %v1359
    %2746 = vmatpush1.bf16.msra.mxu0 %v1358
    %2747 = vmatprep.mubr.bf16.mxu0 %v2384
    %2748 = vmatmul.mubr.bf16.gmra.mrb[0].mxu0 %v2383
    %v2749 = vpop.f32.mrb[0].mxu0
    %v2750 = vadd.f32 0.0, %v2749
    %v2751 = vpop.f32.mrb[0].mxu0
    %v2752 = vadd.f32 0.0, %v2751
    %v2753 = vpop.f32.mrb[0].mxu0
    %v2754 = vpop.f32.mrb[0].mxu0
    %2755 = vdwg.mxu0
    %2756 = vmatprep.subr.bf16.mxu0 %v1375
    %2757 = vmatpush1.bf16.msra.mxu0 %v1374
    %2758 = vmatprep.subr.bf16.mxu0 %v1391
    %2759 = vmatpush1.bf16.msra.mxu0 %v1390
    %2760 = vmatprep.subr.bf16.mxu0 %v1407
    %2761 = vmatpush1.bf16.msra.mxu0 %v1406
    %2762 = vmatprep.subr.bf16.mxu0 %v1423
    %2763 = vmatpush1.bf16.msra.mxu0 %v1422
    %2764 = vmatprep.subr.bf16.mxu0 %v1439
    %2765 = vmatpush1.bf16.msra.mxu0 %v1438
    %2766 = vmatprep.subr.bf16.mxu0 %v1455
    %2767 = vmatpush1.bf16.msra.mxu0 %v1454
    %2768 = vmatprep.subr.bf16.mxu0 %v1471
    %2769 = vmatpush1.bf16.msra.mxu0 %v1470
    %2770 = vmatprep.subr.bf16.mxu0 %v1487
    %2771 = vmatpush1.bf16.msra.mxu0 %v1486
    %2772 = vmatprep.subr.bf16.mxu0 %v1503
    %2773 = vmatpush1.bf16.msra.mxu0 %v1502
    %2774 = vmatprep.subr.bf16.mxu0 %v1519
    %2775 = vmatpush1.bf16.msra.mxu0 %v1518
    %2776 = vmatprep.subr.bf16.mxu0 %v1535
    %2777 = vmatpush1.bf16.msra.mxu0 %v1534
    %2778 = vmatprep.subr.bf16.mxu0 %v1551
    %2779 = vmatpush1.bf16.msra.mxu0 %v1550
    %2780 = vmatprep.subr.bf16.mxu0 %v1567
    %2781 = vmatpush1.bf16.msra.mxu0 %v1566
    %2782 = vmatprep.subr.bf16.mxu0 %v1583
    %2783 = vmatpush1.bf16.msra.mxu0 %v1582
    %2784 = vmatprep.subr.bf16.mxu0 %v1599
    %2785 = vmatpush1.bf16.msra.mxu0 %v1598
    %2786 = vmatprep.subr.bf16.mxu0 %v1615
    %2787 = vmatpush1.bf16.msra.mxu0 %v1614
    %2788 = vmatprep.mubr.bf16.mxu0 %v2386
    %2789 = vmatmul.mubr.bf16.gmra.mrb[0].mxu0 %v2385
    %v2790 = vpop.f32.mrb[0].mxu0
    %v2791 = vadd.f32 %v2750, %v2790
    %v2792 = vpop.f32.mrb[0].mxu0
    %v2793 = vadd.f32 %v2752, %v2792
    %v2794 = vpop.f32.mrb[0].mxu0
    %v2795 = vpop.f32.mrb[0].mxu0
    %2796 = vdwg.mxu0
    %2797 = vmatprep.subr.bf16.mxu0 %v1121
    %2798 = vmatpush1.bf16.msra.mxu0 %v1120
    %2799 = vmatprep.subr.bf16.mxu0 %v1137
    %2800 = vmatpush1.bf16.msra.mxu0 %v1136
    %2801 = vmatprep.subr.bf16.mxu0 %v1153
    %2802 = vmatpush1.bf16.msra.mxu0 %v1152
    %2803 = vmatprep.subr.bf16.mxu0 %v1169
    %2804 = vmatpush1.bf16.msra.mxu0 %v1168
    %2805 = vmatprep.subr.bf16.mxu0 %v1185
    %2806 = vmatpush1.bf16.msra.mxu0 %v1184
    %2807 = vmatprep.subr.bf16.mxu0 %v1201
    %2808 = vmatpush1.bf16.msra.mxu0 %v1200
    %2809 = vmatprep.subr.bf16.mxu0 %v1217
    %2810 = vmatpush1.bf16.msra.mxu0 %v1216
    %2811 = vmatprep.subr.bf16.mxu0 %v1233
    %2812 = vmatpush1.bf16.msra.mxu0 %v1232
    %2813 = vmatprep.subr.bf16.mxu0 %v1249
    %2814 = vmatpush1.bf16.msra.mxu0 %v1248
    %2815 = vmatprep.subr.bf16.mxu0 %v1265
    %2816 = vmatpush1.bf16.msra.mxu0 %v1264
    %2817 = vmatprep.subr.bf16.mxu0 %v1281
    %2818 = vmatpush1.bf16.msra.mxu0 %v1280
    %2819 = vmatprep.subr.bf16.mxu0 %v1297
    %2820 = vmatpush1.bf16.msra.mxu0 %v1296
    %2821 = vmatprep.subr.bf16.mxu0 %v1313
    %2822 = vmatpush1.bf16.msra.mxu0 %v1312
    %2823 = vmatprep.subr.bf16.mxu0 %v1329
    %2824 = vmatpush1.bf16.msra.mxu0 %v1328
    %2825 = vmatprep.subr.bf16.mxu0 %v1345
    %2826 = vmatpush1.bf16.msra.mxu0 %v1344
    %2827 = vmatprep.subr.bf16.mxu0 %v1361
    %2828 = vmatpush1.bf16.msra.mxu0 %v1360
    %2829 = vmatprep.mubr.bf16.mxu0 %v2384
    %2830 = vmatmul.mubr.bf16.gmra.mrb[0].mxu0 %v2383
    %v2831 = vpop.f32.mrb[0].mxu0
    %v2832 = vadd.f32 0.0, %v2831
    %v2833 = vpop.f32.mrb[0].mxu0
    %v2834 = vadd.f32 0.0, %v2833
    %v2835 = vpop.f32.mrb[0].mxu0
    %v2836 = vpop.f32.mrb[0].mxu0
    %2837 = vdwg.mxu0
    %2838 = vmatprep.subr.bf16.mxu0 %v1377
    %2839 = vmatpush1.bf16.msra.mxu0 %v1376
    %2840 = vmatprep.subr.bf16.mxu0 %v1393
    %2841 = vmatpush1.bf16.msra.mxu0 %v1392
    %2842 = vmatprep.subr.bf16.mxu0 %v1409
    %2843 = vmatpush1.bf16.msra.mxu0 %v1408
    %2844 = vmatprep.subr.bf16.mxu0 %v1425
    %2845 = vmatpush1.bf16.msra.mxu0 %v1424
    %2846 = vmatprep.subr.bf16.mxu0 %v1441
    %2847 = vmatpush1.bf16.msra.mxu0 %v1440
    %2848 = vmatprep.subr.bf16.mxu0 %v1457
    %2849 = vmatpush1.bf16.msra.mxu0 %v1456
    %2850 = vmatprep.subr.bf16.mxu0 %v1473
    %2851 = vmatpush1.bf16.msra.mxu0 %v1472
    %2852 = vmatprep.subr.bf16.mxu0 %v1489
    %2853 = vmatpush1.bf16.msra.mxu0 %v1488
    %2854 = vmatprep.subr.bf16.mxu0 %v1505
    %2855 = vmatpush1.bf16.msra.mxu0 %v1504
    %2856 = vmatprep.subr.bf16.mxu0 %v1521
    %2857 = vmatpush1.bf16.msra.mxu0 %v1520
    %2858 = vmatprep.subr.bf16.mxu0 %v1537
    %2859 = vmatpush1.bf16.msra.mxu0 %v1536
    %2860 = vmatprep.subr.bf16.mxu0 %v1553
    %2861 = vmatpush1.bf16.msra.mxu0 %v1552
    %2862 = vmatprep.subr.bf16.mxu0 %v1569
    %2863 = vmatpush1.bf16.msra.mxu0 %v1568
    %2864 = vmatprep.subr.bf16.mxu0 %v1585
    %2865 = vmatpush1.bf16.msra.mxu0 %v1584
    %2866 = vmatprep.subr.bf16.mxu0 %v1601
    %2867 = vmatpush1.bf16.msra.mxu0 %v1600
    %2868 = vmatprep.subr.bf16.mxu0 %v1617
    %2869 = vmatpush1.bf16.msra.mxu0 %v1616
    %2870 = vmatprep.mubr.bf16.mxu0 %v2386
    %2871 = vmatmul.mubr.bf16.gmra.mrb[0].mxu0 %v2385
    %v2872 = vpop.f32.mrb[0].mxu0
    %v2873 = vadd.f32 %v2832, %v2872
    %v2874 = vpop.f32.mrb[0].mxu0
    %v2875 = vadd.f32 %v2834, %v2874
    %v2876 = vpop.f32.mrb[0].mxu0
    %v2877 = vpop.f32.mrb[0].mxu0
    %2878 = vdwg.mxu0
    %2879 = vmatprep.subr.bf16.mxu0 %v1123
    %2880 = vmatpush1.bf16.msra.mxu0 %v1122
    %2881 = vmatprep.subr.bf16.mxu0 %v1139
    %2882 = vmatpush1.bf16.msra.mxu0 %v1138
    %2883 = vmatprep.subr.bf16.mxu0 %v1155
    %2884 = vmatpush1.bf16.msra.mxu0 %v1154
    %2885 = vmatprep.subr.bf16.mxu0 %v1171
    %2886 = vmatpush1.bf16.msra.mxu0 %v1170
    %2887 = vmatprep.subr.bf16.mxu0 %v1187
    %2888 = vmatpush1.bf16.msra.mxu0 %v1186
    %2889 = vmatprep.subr.bf16.mxu0 %v1203
    %2890 = vmatpush1.bf16.msra.mxu0 %v1202
    %2891 = vmatprep.subr.bf16.mxu0 %v1219
    %2892 = vmatpush1.bf16.msra.mxu0 %v1218
    %2893 = vmatprep.subr.bf16.mxu0 %v1235
    %2894 = vmatpush1.bf16.msra.mxu0 %v1234
    %2895 = vmatprep.subr.bf16.mxu0 %v1251
    %2896 = vmatpush1.bf16.msra.mxu0 %v1250
    %2897 = vmatprep.subr.bf16.mxu0 %v1267
    %2898 = vmatpush1.bf16.msra.mxu0 %v1266
    %2899 = vmatprep.subr.bf16.mxu0 %v1283
    %2900 = vmatpush1.bf16.msra.mxu0 %v1282
    %2901 = vmatprep.subr.bf16.mxu0 %v1299
    %2902 = vmatpush1.bf16.msra.mxu0 %v1298
    %2903 = vmatprep.subr.bf16.mxu0 %v1315
    %2904 = vmatpush1.bf16.msra.mxu0 %v1314
    %2905 = vmatprep.subr.bf16.mxu0 %v1331
    %2906 = vmatpush1.bf16.msra.mxu0 %v1330
    %2907 = vmatprep.subr.bf16.mxu0 %v1347
    %2908 = vmatpush1.bf16.msra.mxu0 %v1346
    %2909 = vmatprep.subr.bf16.mxu0 %v1363
    %2910 = vmatpush1.bf16.msra.mxu0 %v1362
    %2911 = vmatprep.mubr.bf16.mxu0 %v2384
    %2912 = vmatmul.mubr.bf16.gmra.mrb[0].mxu0 %v2383
    %v2913 = vpop.f32.mrb[0].mxu0
    %v2914 = vadd.f32 0.0, %v2913
    %v2915 = vpop.f32.mrb[0].mxu0
    %v2916 = vadd.f32 0.0, %v2915
    %v2917 = vpop.f32.mrb[0].mxu0
    %v2918 = vpop.f32.mrb[0].mxu0
    %2919 = vdwg.mxu0
    %2920 = vmatprep.subr.bf16.mxu0 %v1379
    %2921 = vmatpush1.bf16.msra.mxu0 %v1378
    %2922 = vmatprep.subr.bf16.mxu0 %v1395
    %2923 = vmatpush1.bf16.msra.mxu0 %v1394
    %2924 = vmatprep.subr.bf16.mxu0 %v1411
    %2925 = vmatpush1.bf16.msra.mxu0 %v1410
    %2926 = vmatprep.subr.bf16.mxu0 %v1427
    %2927 = vmatpush1.bf16.msra.mxu0 %v1426
    %2928 = vmatprep.subr.bf16.mxu0 %v1443
    %2929 = vmatpush1.bf16.msra.mxu0 %v1442
    %2930 = vmatprep.subr.bf16.mxu0 %v1459
    %2931 = vmatpush1.bf16.msra.mxu0 %v1458
    %2932 = vmatprep.subr.bf16.mxu0 %v1475
    %2933 = vmatpush1.bf16.msra.mxu0 %v1474
    %2934 = vmatprep.subr.bf16.mxu0 %v1491
    %2935 = vmatpush1.bf16.msra.mxu0 %v1490
    %2936 = vmatprep.subr.bf16.mxu0 %v1507
    %2937 = vmatpush1.bf16.msra.mxu0 %v1506
    %2938 = vmatprep.subr.bf16.mxu0 %v1523
    %2939 = vmatpush1.bf16.msra.mxu0 %v1522
    %2940 = vmatprep.subr.bf16.mxu0 %v1539
    %2941 = vmatpush1.bf16.msra.mxu0 %v1538
    %2942 = vmatprep.subr.bf16.mxu0 %v1555
    %2943 = vmatpush1.bf16.msra.mxu0 %v1554
    %2944 = vmatprep.subr.bf16.mxu0 %v1571
    %2945 = vmatpush1.bf16.msra.mxu0 %v1570
    %2946 = vmatprep.subr.bf16.mxu0 %v1587
    %2947 = vmatpush1.bf16.msra.mxu0 %v1586
    %2948 = vmatprep.subr.bf16.mxu0 %v1603
    %2949 = vmatpush1.bf16.msra.mxu0 %v1602
    %2950 = vmatprep.subr.bf16.mxu0 %v1619
    %2951 = vmatpush1.bf16.msra.mxu0 %v1618
    %2952 = vmatprep.mubr.bf16.mxu0 %v2386
    %2953 = vmatmul.mubr.bf16.gmra.mrb[0].mxu0 %v2385
    %v2954 = vpop.f32.mrb[0].mxu0
    %v2955 = vadd.f32 %v2914, %v2954
    %v2956 = vpop.f32.mrb[0].mxu0
    %v2957 = vadd.f32 %v2916, %v2956
    %v2958 = vpop.f32.mrb[0].mxu0
    %v2959 = vpop.f32.mrb[0].mxu0
    %2960 = vdwg.mxu0
    %2961 = vmatprep.subr.bf16.mxu0 %v1125
    %2962 = vmatpush1.bf16.msra.mxu0 %v1124
    %2963 = vmatprep.subr.bf16.mxu0 %v1141
    %2964 = vmatpush1.bf16.msra.mxu0 %v1140
    %2965 = vmatprep.subr.bf16.mxu0 %v1157
    %2966 = vmatpush1.bf16.msra.mxu0 %v1156
    %2967 = vmatprep.subr.bf16.mxu0 %v1173
    %2968 = vmatpush1.bf16.msra.mxu0 %v1172
    %2969 = vmatprep.subr.bf16.mxu0 %v1189
    %2970 = vmatpush1.bf16.msra.mxu0 %v1188
    %2971 = vmatprep.subr.bf16.mxu0 %v1205
    %2972 = vmatpush1.bf16.msra.mxu0 %v1204
    %2973 = vmatprep.subr.bf16.mxu0 %v1221
    %2974 = vmatpush1.bf16.msra.mxu0 %v1220
    %2975 = vmatprep.subr.bf16.mxu0 %v1237
    %2976 = vmatpush1.bf16.msra.mxu0 %v1236
    %2977 = vmatprep.subr.bf16.mxu0 %v1253
    %2978 = vmatpush1.bf16.msra.mxu0 %v1252
    %2979 = vmatprep.subr.bf16.mxu0 %v1269
    %2980 = vmatpush1.bf16.msra.mxu0 %v1268
    %2981 = vmatprep.subr.bf16.mxu0 %v1285
    %2982 = vmatpush1.bf16.msra.mxu0 %v1284
    %2983 = vmatprep.subr.bf16.mxu0 %v1301
    %2984 = vmatpush1.bf16.msra.mxu0 %v1300
    %2985 = vmatprep.subr.bf16.mxu0 %v1317
    %2986 = vmatpush1.bf16.msra.mxu0 %v1316
    %2987 = vmatprep.subr.bf16.mxu0 %v1333
    %2988 = vmatpush1.bf16.msra.mxu0 %v1332
    %2989 = vmatprep.subr.bf16.mxu0 %v1349
    %2990 = vmatpush1.bf16.msra.mxu0 %v1348
    %2991 = vmatprep.subr.bf16.mxu0 %v1365
    %2992 = vmatpush1.bf16.msra.mxu0 %v1364
    %2993 = vmatprep.mubr.bf16.mxu0 %v2384
    %2994 = vmatmul.mubr.bf16.gmra.mrb[0].mxu0 %v2383
    %v2995 = vpop.f32.mrb[0].mxu0
    %v2996 = vadd.f32 0.0, %v2995
    %v2997 = vpop.f32.mrb[0].mxu0
    %v2998 = vadd.f32 0.0, %v2997
    %v2999 = vpop.f32.mrb[0].mxu0
    %v3000 = vpop.f32.mrb[0].mxu0
    %3001 = vdwg.mxu0
    %3002 = vmatprep.subr.bf16.mxu0 %v1381
    %3003 = vmatpush1.bf16.msra.mxu0 %v1380
    %3004 = vmatprep.subr.bf16.mxu0 %v1397
    %3005 = vmatpush1.bf16.msra.mxu0 %v1396
    %3006 = vmatprep.subr.bf16.mxu0 %v1413
    %3007 = vmatpush1.bf16.msra.mxu0 %v1412
    %3008 = vmatprep.subr.bf16.mxu0 %v1429
    %3009 = vmatpush1.bf16.msra.mxu0 %v1428
    %3010 = vmatprep.subr.bf16.mxu0 %v1445
    %3011 = vmatpush1.bf16.msra.mxu0 %v1444
    %3012 = vmatprep.subr.bf16.mxu0 %v1461
    %3013 = vmatpush1.bf16.msra.mxu0 %v1460
    %3014 = vmatprep.subr.bf16.mxu0 %v1477
    %3015 = vmatpush1.bf16.msra.mxu0 %v1476
    %3016 = vmatprep.subr.bf16.mxu0 %v1493
    %3017 = vmatpush1.bf16.msra.mxu0 %v1492
    %3018 = vmatprep.subr.bf16.mxu0 %v1509
    %3019 = vmatpush1.bf16.msra.mxu0 %v1508
    %3020 = vmatprep.subr.bf16.mxu0 %v1525
    %3021 = vmatpush1.bf16.msra.mxu0 %v1524
    %3022 = vmatprep.subr.bf16.mxu0 %v1541
    %3023 = vmatpush1.bf16.msra.mxu0 %v1540
    %3024 = vmatprep.subr.bf16.mxu0 %v1557
    %3025 = vmatpush1.bf16.msra.mxu0 %v1556
    %3026 = vmatprep.subr.bf16.mxu0 %v1573
    %3027 = vmatpush1.bf16.msra.mxu0 %v1572
    %3028 = vmatprep.subr.bf16.mxu0 %v1589
    %3029 = vmatpush1.bf16.msra.mxu0 %v1588
    %3030 = vmatprep.subr.bf16.mxu0 %v1605
    %3031 = vmatpush1.bf16.msra.mxu0 %v1604
    %3032 = vmatprep.subr.bf16.mxu0 %v1621
    %3033 = vmatpush1.bf16.msra.mxu0 %v1620
    %3034 = vmatprep.mubr.bf16.mxu0 %v2386
    %3035 = vmatmul.mubr.bf16.gmra.mrb[0].mxu0 %v2385
    %v3036 = vpop.f32.mrb[0].mxu0
    %v3037 = vadd.f32 %v2996, %v3036
    %v3038 = vpop.f32.mrb[0].mxu0
    %v3039 = vadd.f32 %v2998, %v3038
    %v3040 = vpop.f32.mrb[0].mxu0
    %v3041 = vpop.f32.mrb[0].mxu0
    %3042 = vdwg.mxu0
    %v3043 = vadd.f32 %v2367, %v2463
    %v3044 = vadd.f32 %v2368, %v2465
    %v3045 = vadd.f32 %v2369, %v2545
    %v3046 = vadd.f32 %v2370, %v2547
    %v3047 = vadd.f32 %v2371, %v2627
    %v3048 = vadd.f32 %v2372, %v2629
    %v3049 = vadd.f32 %v2373, %v2709
    %v3050 = vadd.f32 %v2374, %v2711
    %v3051 = vadd.f32 %v2375, %v2791
    %v3052 = vadd.f32 %v2376, %v2793
    %v3053 = vadd.f32 %v2377, %v2873
    %v3054 = vadd.f32 %v2378, %v2875
    %v3055 = vadd.f32 %v2379, %v2955
    %v3056 = vadd.f32 %v2380, %v2957
    %v3057 = vadd.f32 %v2381, %v3037
    %v3058 = vadd.f32 %v2382, %v3039
    %v3059 = vmul.f32 %v3043, 0.5
    %v3060 = vmul.f32 %v3044, 0.5
    %v3061 = vmul.f32 %v3045, 0.5
    %v3062 = vmul.f32 %v3046, 0.5
    %v3063 = vtanh.pop %v3059
    %v3064 = vtanh.pop %v3060
    %v3065 = vtanh.pop %v3061
    %v3066 = vtanh.pop %v3062
    %v3067 = vmul.f32 %v3063, 0.5
    %v3068 = vmul.f32 %v3064, 0.5
    %v3069 = vmul.f32 %v3065, 0.5
    %v3070 = vmul.f32 %v3066, 0.5
    %v3071 = vadd.f32 %v3067, 0.5
    %v3072 = vadd.f32 %v3068, 0.5
    %v3073 = vadd.f32 %v3069, 0.5
    %v3074 = vadd.f32 %v3070, 0.5
    %v3075 = vmul.f32 %v3047, 0.5
    %v3076 = vmul.f32 %v3048, 0.5
    %v3077 = vmul.f32 %v3049, 0.5
    %v3078 = vmul.f32 %v3050, 0.5
    %v3079 = vtanh.pop %v3075
    %v3080 = vtanh.pop %v3076
    %v3081 = vtanh.pop %v3077
    %v3082 = vtanh.pop %v3078
    %v3083 = vmul.f32 %v3079, 0.5
    %v3084 = vmul.f32 %v3080, 0.5
    %v3085 = vmul.f32 %v3081, 0.5
    %v3086 = vmul.f32 %v3082, 0.5
    %v3087 = vadd.f32 %v3083, 0.5
    %v3088 = vadd.f32 %v3084, 0.5
    %v3089 = vadd.f32 %v3085, 0.5
    %v3090 = vadd.f32 %v3086, 0.5
    %v3091 = vtanh.pop %v3051
    %v3092 = vtanh.pop %v3052
    %v3093 = vtanh.pop %v3053
    %v3094 = vtanh.pop %v3054
    %v3095 = vmul.f32 %v3055, 0.5
    %v3096 = vmul.f32 %v3056, 0.5
    %v3097 = vmul.f32 %v3057, 0.5
    %v3098 = vmul.f32 %v3058, 0.5
    %v3099 = vtanh.pop %v3095
    %v3100 = vtanh.pop %v3096
    %v3101 = vtanh.pop %v3097
    %v3102 = vtanh.pop %v3098
    %v3103 = vmul.f32 %v3099, 0.5
    %v3104 = vmul.f32 %v3100, 0.5
    %v3105 = vmul.f32 %v3101, 0.5
    %v3106 = vmul.f32 %v3102, 0.5
    %v3107 = vadd.f32 %v3103, 0.5
    %v3108 = vadd.f32 %v3104, 0.5
    %v3109 = vadd.f32 %v3105, 0.5
    %v3110 = vadd.f32 %v3106, 0.5
    %v3111 = vmul.f32 %v3087, %v2354
    %v3112 = vmul.f32 %v3088, %v2355
    %v3113 = vmul.f32 %v3089, %v2356
    %v3114 = vmul.f32 %v3090, %v2357
    %v3115 = vmul.f32 %v3071, %v3091
    %v3116 = vmul.f32 %v3072, %v3092
    %v3117 = vmul.f32 %v3073, %v3093
    %v3118 = vmul.f32 %v3074, %v3094
    %v3119 = vadd.f32 %v3111, %v3115
    %v3120 = vadd.f32 %v3112, %v3116
    %v3121 = vadd.f32 %v3113, %v3117
    %v3122 = vadd.f32 %v3114, %v3118
    %v3123 = vtanh.pop %v3119
    %v3124 = vtanh.pop %v3120
    %v3125 = vtanh.pop %v3121
    %v3126 = vtanh.pop %v3122
    %v3127 = vmul.f32 %v3107, %v3123
    %v3128 = vmul.f32 %v3108, %v3124
    %v3129 = vmul.f32 %v3109, %v3125
    %v3130 = vmul.f32 %v3110, %v3126
    %s3131 = scalar_lea.vmem [#allocation5], 256
    %v3132 = vld [vmem:[%s3131] sm:$0xff]
    %v3133 = vld [vmem:[%s3131 + $0x8] sm:$0xff]
    %v3134 = vld [vmem:[%s3131 + $0x10] sm:$0xff]
    %v3135 = vld [vmem:[%s3131 + $0x18] sm:$0xff]
    %v3136 = vld [vmem:[%s3131 + $0x20] sm:$0xff]
    %v3137 = vld [vmem:[%s3131 + $0x28] sm:$0xff]
    %v3138 = vld [vmem:[%s3131 + $0x30] sm:$0xff]
    %v3139 = vld [vmem:[%s3131 + $0x38] sm:$0xff]
    %v3140 = vld [vmem:[%s3131 + $0x40] sm:$0xff]
    %v3141 = vld [vmem:[%s3131 + $0x48] sm:$0xff]
    %v3142 = vld [vmem:[%s3131 + $0x50] sm:$0xff]
    %v3143 = vld [vmem:[%s3131 + $0x58] sm:$0xff]
    %v3144 = vld [vmem:[%s3131 + $0x60] sm:$0xff]
    %v3145 = vld [vmem:[%s3131 + $0x68] sm:$0xff]
    %v3146 = vld [vmem:[%s3131 + $0x70] sm:$0xff]
    %v3147 = vld [vmem:[%s3131 + $0x78] sm:$0xff]
    %v3148 = vpack.c.bf16 %v3127, %v3127
    %v3149 = vpack.c.bf16 %v3128, %v3128
    %v3150 = vpack.c.bf16 %v3129, %v3129
    %v3151 = vpack.c.bf16 %v3130, %v3130
    %3152 = vmatprep.subr.bf16.mxu0 %v1111
    %3153 = vmatpush1.bf16.msra.mxu0 %v1110
    %3154 = vmatprep.subr.bf16.mxu0 %v1127
    %3155 = vmatpush1.bf16.msra.mxu0 %v1126
    %3156 = vmatprep.subr.bf16.mxu0 %v1143
    %3157 = vmatpush1.bf16.msra.mxu0 %v1142
    %3158 = vmatprep.subr.bf16.mxu0 %v1159
    %3159 = vmatpush1.bf16.msra.mxu0 %v1158
    %3160 = vmatprep.subr.bf16.mxu0 %v1175
    %3161 = vmatpush1.bf16.msra.mxu0 %v1174
    %3162 = vmatprep.subr.bf16.mxu0 %v1191
    %3163 = vmatpush1.bf16.msra.mxu0 %v1190
    %3164 = vmatprep.subr.bf16.mxu0 %v1207
    %3165 = vmatpush1.bf16.msra.mxu0 %v1206
    %3166 = vmatprep.subr.bf16.mxu0 %v1223
    %3167 = vmatpush1.bf16.msra.mxu0 %v1222
    %3168 = vmatprep.subr.bf16.mxu0 %v1239
    %3169 = vmatpush1.bf16.msra.mxu0 %v1238
    %3170 = vmatprep.subr.bf16.mxu0 %v1255
    %3171 = vmatpush1.bf16.msra.mxu0 %v1254
    %3172 = vmatprep.subr.bf16.mxu0 %v1271
    %3173 = vmatpush1.bf16.msra.mxu0 %v1270
    %3174 = vmatprep.subr.bf16.mxu0 %v1287
    %3175 = vmatpush1.bf16.msra.mxu0 %v1286
    %3176 = vmatprep.subr.bf16.mxu0 %v1303
    %3177 = vmatpush1.bf16.msra.mxu0 %v1302
    %3178 = vmatprep.subr.bf16.mxu0 %v1319
    %3179 = vmatpush1.bf16.msra.mxu0 %v1318
    %3180 = vmatprep.subr.bf16.mxu0 %v1335
    %3181 = vmatpush1.bf16.msra.mxu0 %v1334
    %3182 = vmatprep.subr.bf16.mxu0 %v1351
    %3183 = vmatpush1.bf16.msra.mxu0 %v1350
    %3184 = vmatprep.mubr.bf16.mxu0 %v3149
    %3185 = vmatmul.mubr.bf16.gmra.mrb[0].mxu0 %v3148
    %v3186 = vpop.f32.mrb[0].mxu0
    %v3187 = vadd.f32 0.0, %v3186
    %v3188 = vpop.f32.mrb[0].mxu0
    %v3189 = vadd.f32 0.0, %v3188
    %v3190 = vpop.f32.mrb[0].mxu0
    %v3191 = vpop.f32.mrb[0].mxu0
    %3192 = vdwg.mxu0
    %3193 = vmatprep.subr.bf16.mxu0 %v1367
    %3194 = vmatpush1.bf16.msra.mxu0 %v1366
    %3195 = vmatprep.subr.bf16.mxu0 %v1383
    %3196 = vmatpush1.bf16.msra.mxu0 %v1382
    %3197 = vmatprep.subr.bf16.mxu0 %v1399
    %3198 = vmatpush1.bf16.msra.mxu0 %v1398
    %3199 = vmatprep.subr.bf16.mxu0 %v1415
    %3200 = vmatpush1.bf16.msra.mxu0 %v1414
    %3201 = vmatprep.subr.bf16.mxu0 %v1431
    %3202 = vmatpush1.bf16.msra.mxu0 %v1430
    %3203 = vmatprep.subr.bf16.mxu0 %v1447
    %3204 = vmatpush1.bf16.msra.mxu0 %v1446
    %3205 = vmatprep.subr.bf16.mxu0 %v1463
    %3206 = vmatpush1.bf16.msra.mxu0 %v1462
    %3207 = vmatprep.subr.bf16.mxu0 %v1479
    %3208 = vmatpush1.bf16.msra.mxu0 %v1478
    %3209 = vmatprep.subr.bf16.mxu0 %v1495
    %3210 = vmatpush1.bf16.msra.mxu0 %v1494
    %3211 = vmatprep.subr.bf16.mxu0 %v1511
    %3212 = vmatpush1.bf16.msra.mxu0 %v1510
    %3213 = vmatprep.subr.bf16.mxu0 %v1527
    %3214 = vmatpush1.bf16.msra.mxu0 %v1526
    %3215 = vmatprep.subr.bf16.mxu0 %v1543
    %3216 = vmatpush1.bf16.msra.mxu0 %v1542
    %3217 = vmatprep.subr.bf16.mxu0 %v1559
    %3218 = vmatpush1.bf16.msra.mxu0 %v1558
    %3219 = vmatprep.subr.bf16.mxu0 %v1575
    %3220 = vmatpush1.bf16.msra.mxu0 %v1574
    %3221 = vmatprep.subr.bf16.mxu0 %v1591
    %3222 = vmatpush1.bf16.msra.mxu0 %v1590
    %3223 = vmatprep.subr.bf16.mxu0 %v1607
    %3224 = vmatpush1.bf16.msra.mxu0 %v1606
    %3225 = vmatprep.mubr.bf16.mxu0 %v3151
    %3226 = vmatmul.mubr.bf16.gmra.mrb[0].mxu0 %v3150
    %v3227 = vpop.f32.mrb[0].mxu0
    %v3228 = vadd.f32 %v3187, %v3227
    %v3229 = vpop.f32.mrb[0].mxu0
    %v3230 = vadd.f32 %v3189, %v3229
    %v3231 = vpop.f32.mrb[0].mxu0
    %v3232 = vpop.f32.mrb[0].mxu0
    %3233 = vdwg.mxu0
    %3234 = vmatprep.subr.bf16.mxu0 %v1113
    %3235 = vmatpush1.bf16.msra.mxu0 %v1112
    %3236 = vmatprep.subr.bf16.mxu0 %v1129
    %3237 = vmatpush1.bf16.msra.mxu0 %v1128
    %3238 = vmatprep.subr.bf16.mxu0 %v1145
    %3239 = vmatpush1.bf16.msra.mxu0 %v1144
    %3240 = vmatprep.subr.bf16.mxu0 %v1161
    %3241 = vmatpush1.bf16.msra.mxu0 %v1160
    %3242 = vmatprep.subr.bf16.mxu0 %v1177
    %3243 = vmatpush1.bf16.msra.mxu0 %v1176
    %3244 = vmatprep.subr.bf16.mxu0 %v1193
    %3245 = vmatpush1.bf16.msra.mxu0 %v1192
    %3246 = vmatprep.subr.bf16.mxu0 %v1209
    %3247 = vmatpush1.bf16.msra.mxu0 %v1208
    %3248 = vmatprep.subr.bf16.mxu0 %v1225
    %3249 = vmatpush1.bf16.msra.mxu0 %v1224
    %3250 = vmatprep.subr.bf16.mxu0 %v1241
    %3251 = vmatpush1.bf16.msra.mxu0 %v1240
    %3252 = vmatprep.subr.bf16.mxu0 %v1257
    %3253 = vmatpush1.bf16.msra.mxu0 %v1256
    %3254 = vmatprep.subr.bf16.mxu0 %v1273
    %3255 = vmatpush1.bf16.msra.mxu0 %v1272
    %3256 = vmatprep.subr.bf16.mxu0 %v1289
    %3257 = vmatpush1.bf16.msra.mxu0 %v1288
    %3258 = vmatprep.subr.bf16.mxu0 %v1305
    %3259 = vmatpush1.bf16.msra.mxu0 %v1304
    %3260 = vmatprep.subr.bf16.mxu0 %v1321
    %3261 = vmatpush1.bf16.msra.mxu0 %v1320
    %3262 = vmatprep.subr.bf16.mxu0 %v1337
    %3263 = vmatpush1.bf16.msra.mxu0 %v1336
    %3264 = vmatprep.subr.bf16.mxu0 %v1353
    %3265 = vmatpush1.bf16.msra.mxu0 %v1352
    %3266 = vmatprep.mubr.bf16.mxu0 %v3149
    %3267 = vmatmul.mubr.bf16.gmra.mrb[0].mxu0 %v3148
    %v3268 = vpop.f32.mrb[0].mxu0
    %v3269 = vadd.f32 0.0, %v3268
    %v3270 = vpop.f32.mrb[0].mxu0
    %v3271 = vadd.f32 0.0, %v3270
    %v3272 = vpop.f32.mrb[0].mxu0
    %v3273 = vpop.f32.mrb[0].mxu0
    %3274 = vdwg.mxu0
    %3275 = vmatprep.subr.bf16.mxu0 %v1369
    %3276 = vmatpush1.bf16.msra.mxu0 %v1368
    %3277 = vmatprep.subr.bf16.mxu0 %v1385
    %3278 = vmatpush1.bf16.msra.mxu0 %v1384
    %3279 = vmatprep.subr.bf16.mxu0 %v1401
    %3280 = vmatpush1.bf16.msra.mxu0 %v1400
    %3281 = vmatprep.subr.bf16.mxu0 %v1417
    %3282 = vmatpush1.bf16.msra.mxu0 %v1416
    %3283 = vmatprep.subr.bf16.mxu0 %v1433
    %3284 = vmatpush1.bf16.msra.mxu0 %v1432
    %3285 = vmatprep.subr.bf16.mxu0 %v1449
    %3286 = vmatpush1.bf16.msra.mxu0 %v1448
    %3287 = vmatprep.subr.bf16.mxu0 %v1465
    %3288 = vmatpush1.bf16.msra.mxu0 %v1464
    %3289 = vmatprep.subr.bf16.mxu0 %v1481
    %3290 = vmatpush1.bf16.msra.mxu0 %v1480
    %3291 = vmatprep.subr.bf16.mxu0 %v1497
    %3292 = vmatpush1.bf16.msra.mxu0 %v1496
    %3293 = vmatprep.subr.bf16.mxu0 %v1513
    %3294 = vmatpush1.bf16.msra.mxu0 %v1512
    %3295 = vmatprep.subr.bf16.mxu0 %v1529
    %3296 = vmatpush1.bf16.msra.mxu0 %v1528
    %3297 = vmatprep.subr.bf16.mxu0 %v1545
    %3298 = vmatpush1.bf16.msra.mxu0 %v1544
    %3299 = vmatprep.subr.bf16.mxu0 %v1561
    %3300 = vmatpush1.bf16.msra.mxu0 %v1560
    %3301 = vmatprep.subr.bf16.mxu0 %v1577
    %3302 = vmatpush1.bf16.msra.mxu0 %v1576
    %3303 = vmatprep.subr.bf16.mxu0 %v1593
    %3304 = vmatpush1.bf16.msra.mxu0 %v1592
    %3305 = vmatprep.subr.bf16.mxu0 %v1609
    %3306 = vmatpush1.bf16.msra.mxu0 %v1608
    %3307 = vmatprep.mubr.bf16.mxu0 %v3151
    %3308 = vmatmul.mubr.bf16.gmra.mrb[0].mxu0 %v3150
    %v3309 = vpop.f32.mrb[0].mxu0
    %v3310 = vadd.f32 %v3269, %v3309
    %v3311 = vpop.f32.mrb[0].mxu0
    %v3312 = vadd.f32 %v3271, %v3311
    %v3313 = vpop.f32.mrb[0].mxu0
    %v3314 = vpop.f32.mrb[0].mxu0
    %3315 = vdwg.mxu0
    %3316 = vmatprep.subr.bf16.mxu0 %v1115
    %3317 = vmatpush1.bf16.msra.mxu0 %v1114
    %3318 = vmatprep.subr.bf16.mxu0 %v1131
    %3319 = vmatpush1.bf16.msra.mxu0 %v1130
    %3320 = vmatprep.subr.bf16.mxu0 %v1147
    %3321 = vmatpush1.bf16.msra.mxu0 %v1146
    %3322 = vmatprep.subr.bf16.mxu0 %v1163
    %3323 = vmatpush1.bf16.msra.mxu0 %v1162
    %3324 = vmatprep.subr.bf16.mxu0 %v1179
    %3325 = vmatpush1.bf16.msra.mxu0 %v1178
    %3326 = vmatprep.subr.bf16.mxu0 %v1195
    %3327 = vmatpush1.bf16.msra.mxu0 %v1194
    %3328 = vmatprep.subr.bf16.mxu0 %v1211
    %3329 = vmatpush1.bf16.msra.mxu0 %v1210
    %3330 = vmatprep.subr.bf16.mxu0 %v1227
    %3331 = vmatpush1.bf16.msra.mxu0 %v1226
    %3332 = vmatprep.subr.bf16.mxu0 %v1243
    %3333 = vmatpush1.bf16.msra.mxu0 %v1242
    %3334 = vmatprep.subr.bf16.mxu0 %v1259
    %3335 = vmatpush1.bf16.msra.mxu0 %v1258
    %3336 = vmatprep.subr.bf16.mxu0 %v1275
    %3337 = vmatpush1.bf16.msra.mxu0 %v1274
    %3338 = vmatprep.subr.bf16.mxu0 %v1291
    %3339 = vmatpush1.bf16.msra.mxu0 %v1290
    %3340 = vmatprep.subr.bf16.mxu0 %v1307
    %3341 = vmatpush1.bf16.msra.mxu0 %v1306
    %3342 = vmatprep.subr.bf16.mxu0 %v1323
    %3343 = vmatpush1.bf16.msra.mxu0 %v1322
    %3344 = vmatprep.subr.bf16.mxu0 %v1339
    %3345 = vmatpush1.bf16.msra.mxu0 %v1338
    %3346 = vmatprep.subr.bf16.mxu0 %v1355
    %3347 = vmatpush1.bf16.msra.mxu0 %v1354
    %3348 = vmatprep.mubr.bf16.mxu0 %v3149
    %3349 = vmatmul.mubr.bf16.gmra.mrb[0].mxu0 %v3148
    %v3350 = vpop.f32.mrb[0].mxu0
    %v3351 = vadd.f32 0.0, %v3350
    %v3352 = vpop.f32.mrb[0].mxu0
    %v3353 = vadd.f32 0.0, %v3352
    %v3354 = vpop.f32.mrb[0].mxu0
    %v3355 = vpop.f32.mrb[0].mxu0
    %3356 = vdwg.mxu0
    %3357 = vmatprep.subr.bf16.mxu0 %v1371
    %3358 = vmatpush1.bf16.msra.mxu0 %v1370
    %3359 = vmatprep.subr.bf16.mxu0 %v1387
    %3360 = vmatpush1.bf16.msra.mxu0 %v1386
    %3361 = vmatprep.subr.bf16.mxu0 %v1403
    %3362 = vmatpush1.bf16.msra.mxu0 %v1402
    %3363 = vmatprep.subr.bf16.mxu0 %v1419
    %3364 = vmatpush1.bf16.msra.mxu0 %v1418
    %3365 = vmatprep.subr.bf16.mxu0 %v1435
    %3366 = vmatpush1.bf16.msra.mxu0 %v1434
    %3367 = vmatprep.subr.bf16.mxu0 %v1451
    %3368 = vmatpush1.bf16.msra.mxu0 %v1450
    %3369 = vmatprep.subr.bf16.mxu0 %v1467
    %3370 = vmatpush1.bf16.msra.mxu0 %v1466
    %3371 = vmatprep.subr.bf16.mxu0 %v1483
    %3372 = vmatpush1.bf16.msra.mxu0 %v1482
    %3373 = vmatprep.subr.bf16.mxu0 %v1499
    %3374 = vmatpush1.bf16.msra.mxu0 %v1498
    %3375 = vmatprep.subr.bf16.mxu0 %v1515
    %3376 = vmatpush1.bf16.msra.mxu0 %v1514
    %3377 = vmatprep.subr.bf16.mxu0 %v1531
    %3378 = vmatpush1.bf16.msra.mxu0 %v1530
    %3379 = vmatprep.subr.bf16.mxu0 %v1547
    %3380 = vmatpush1.bf16.msra.mxu0 %v1546
    %3381 = vmatprep.subr.bf16.mxu0 %v1563
    %3382 = vmatpush1.bf16.msra.mxu0 %v1562
    %3383 = vmatprep.subr.bf16.mxu0 %v1579
    %3384 = vmatpush1.bf16.msra.mxu0 %v1578
    %3385 = vmatprep.subr.bf16.mxu0 %v1595
    %3386 = vmatpush1.bf16.msra.mxu0 %v1594
    %3387 = vmatprep.subr.bf16.mxu0 %v1611
    %3388 = vmatpush1.bf16.msra.mxu0 %v1610
    %3389 = vmatprep.mubr.bf16.mxu0 %v3151
    %3390 = vmatmul.mubr.bf16.gmra.mrb[0].mxu0 %v3150
    %v3391 = vpop.f32.mrb[0].mxu0
    %v3392 = vadd.f32 %v3351, %v3391
    %v3393 = vpop.f32.mrb[0].mxu0
    %v3394 = vadd.f32 %v3353, %v3393
    %v3395 = vpop.f32.mrb[0].mxu0
    %v3396 = vpop.f32.mrb[0].mxu0
    %3397 = vdwg.mxu0
    %3398 = vmatprep.subr.bf16.mxu0 %v1117
    %3399 = vmatpush1.bf16.msra.mxu0 %v1116
    %3400 = vmatprep.subr.bf16.mxu0 %v1133
    %3401 = vmatpush1.bf16.msra.mxu0 %v1132
    %3402 = vmatprep.subr.bf16.mxu0 %v1149
    %3403 = vmatpush1.bf16.msra.mxu0 %v1148
    %3404 = vmatprep.subr.bf16.mxu0 %v1165
    %3405 = vmatpush1.bf16.msra.mxu0 %v1164
    %3406 = vmatprep.subr.bf16.mxu0 %v1181
    %3407 = vmatpush1.bf16.msra.mxu0 %v1180
    %3408 = vmatprep.subr.bf16.mxu0 %v1197
    %3409 = vmatpush1.bf16.msra.mxu0 %v1196
    %3410 = vmatprep.subr.bf16.mxu0 %v1213
    %3411 = vmatpush1.bf16.msra.mxu0 %v1212
    %3412 = vmatprep.subr.bf16.mxu0 %v1229
    %3413 = vmatpush1.bf16.msra.mxu0 %v1228
    %3414 = vmatprep.subr.bf16.mxu0 %v1245
    %3415 = vmatpush1.bf16.msra.mxu0 %v1244
    %3416 = vmatprep.subr.bf16.mxu0 %v1261
    %3417 = vmatpush1.bf16.msra.mxu0 %v1260
    %3418 = vmatprep.subr.bf16.mxu0 %v1277
    %3419 = vmatpush1.bf16.msra.mxu0 %v1276
    %3420 = vmatprep.subr.bf16.mxu0 %v1293
    %3421 = vmatpush1.bf16.msra.mxu0 %v1292
    %3422 = vmatprep.subr.bf16.mxu0 %v1309
    %3423 = vmatpush1.bf16.msra.mxu0 %v1308
    %3424 = vmatprep.subr.bf16.mxu0 %v1325
    %3425 = vmatpush1.bf16.msra.mxu0 %v1324
    %3426 = vmatprep.subr.bf16.mxu0 %v1341
    %3427 = vmatpush1.bf16.msra.mxu0 %v1340
    %3428 = vmatprep.subr.bf16.mxu0 %v1357
    %3429 = vmatpush1.bf16.msra.mxu0 %v1356
    %3430 = vmatprep.mubr.bf16.mxu0 %v3149
    %3431 = vmatmul.mubr.bf16.gmra.mrb[0].mxu0 %v3148
    %v3432 = vpop.f32.mrb[0].mxu0
    %v3433 = vadd.f32 0.0, %v3432
    %v3434 = vpop.f32.mrb[0].mxu0
    %v3435 = vadd.f32 0.0, %v3434
    %v3436 = vpop.f32.mrb[0].mxu0
    %v3437 = vpop.f32.mrb[0].mxu0
    %3438 = vdwg.mxu0
    %3439 = vmatprep.subr.bf16.mxu0 %v1373
    %3440 = vmatpush1.bf16.msra.mxu0 %v1372
    %3441 = vmatprep.subr.bf16.mxu0 %v1389
    %3442 = vmatpush1.bf16.msra.mxu0 %v1388
    %3443 = vmatprep.subr.bf16.mxu0 %v1405
    %3444 = vmatpush1.bf16.msra.mxu0 %v1404
    %3445 = vmatprep.subr.bf16.mxu0 %v1421
    %3446 = vmatpush1.bf16.msra.mxu0 %v1420
    %3447 = vmatprep.subr.bf16.mxu0 %v1437
    %3448 = vmatpush1.bf16.msra.mxu0 %v1436
    %3449 = vmatprep.subr.bf16.mxu0 %v1453
    %3450 = vmatpush1.bf16.msra.mxu0 %v1452
    %3451 = vmatprep.subr.bf16.mxu0 %v1469
    %3452 = vmatpush1.bf16.msra.mxu0 %v1468
    %3453 = vmatprep.subr.bf16.mxu0 %v1485
    %3454 = vmatpush1.bf16.msra.mxu0 %v1484
    %3455 = vmatprep.subr.bf16.mxu0 %v1501
    %3456 = vmatpush1.bf16.msra.mxu0 %v1500
    %3457 = vmatprep.subr.bf16.mxu0 %v1517
    %3458 = vmatpush1.bf16.msra.mxu0 %v1516
    %3459 = vmatprep.subr.bf16.mxu0 %v1533
    %3460 = vmatpush1.bf16.msra.mxu0 %v1532
    %3461 = vmatprep.subr.bf16.mxu0 %v1549
    %3462 = vmatpush1.bf16.msra.mxu0 %v1548
    %3463 = vmatprep.subr.bf16.mxu0 %v1565
    %3464 = vmatpush1.bf16.msra.mxu0 %v1564
    %3465 = vmatprep.subr.bf16.mxu0 %v1581
    %3466 = vmatpush1.bf16.msra.mxu0 %v1580
    %3467 = vmatprep.subr.bf16.mxu0 %v1597
    %3468 = vmatpush1.bf16.msra.mxu0 %v1596
    %3469 = vmatprep.subr.bf16.mxu0 %v1613
    %3470 = vmatpush1.bf16.msra.mxu0 %v1612
    %3471 = vmatprep.mubr.bf16.mxu0 %v3151
    %3472 = vmatmul.mubr.bf16.gmra.mrb[0].mxu0 %v3150
    %v3473 = vpop.f32.mrb[0].mxu0
    %v3474 = vadd.f32 %v3433, %v3473
    %v3475 = vpop.f32.mrb[0].mxu0
    %v3476 = vadd.f32 %v3435, %v3475
    %v3477 = vpop.f32.mrb[0].mxu0
    %v3478 = vpop.f32.mrb[0].mxu0
    %3479 = vdwg.mxu0
    %3480 = vmatprep.subr.bf16.mxu0 %v1119
    %3481 = vmatpush1.bf16.msra.mxu0 %v1118
    %3482 = vmatprep.subr.bf16.mxu0 %v1135
    %3483 = vmatpush1.bf16.msra.mxu0 %v1134
    %3484 = vmatprep.subr.bf16.mxu0 %v1151
    %3485 = vmatpush1.bf16.msra.mxu0 %v1150
    %3486 = vmatprep.subr.bf16.mxu0 %v1167
    %3487 = vmatpush1.bf16.msra.mxu0 %v1166
    %3488 = vmatprep.subr.bf16.mxu0 %v1183
    %3489 = vmatpush1.bf16.msra.mxu0 %v1182
    %3490 = vmatprep.subr.bf16.mxu0 %v1199
    %3491 = vmatpush1.bf16.msra.mxu0 %v1198
    %3492 = vmatprep.subr.bf16.mxu0 %v1215
    %3493 = vmatpush1.bf16.msra.mxu0 %v1214
    %3494 = vmatprep.subr.bf16.mxu0 %v1231
    %3495 = vmatpush1.bf16.msra.mxu0 %v1230
    %3496 = vmatprep.subr.bf16.mxu0 %v1247
    %3497 = vmatpush1.bf16.msra.mxu0 %v1246
    %3498 = vmatprep.subr.bf16.mxu0 %v1263
    %3499 = vmatpush1.bf16.msra.mxu0 %v1262
    %3500 = vmatprep.subr.bf16.mxu0 %v1279
    %3501 = vmatpush1.bf16.msra.mxu0 %v1278
    %3502 = vmatprep.subr.bf16.mxu0 %v1295
    %3503 = vmatpush1.bf16.msra.mxu0 %v1294
    %3504 = vmatprep.subr.bf16.mxu0 %v1311
    %3505 = vmatpush1.bf16.msra.mxu0 %v1310
    %3506 = vmatprep.subr.bf16.mxu0 %v1327
    %3507 = vmatpush1.bf16.msra.mxu0 %v1326
    %3508 = vmatprep.subr.bf16.mxu0 %v1343
    %3509 = vmatpush1.bf16.msra.mxu0 %v1342
    %3510 = vmatprep.subr.bf16.mxu0 %v1359
    %3511 = vmatpush1.bf16.msra.mxu0 %v1358
    %3512 = vmatprep.mubr.bf16.mxu0 %v3149
    %3513 = vmatmul.mubr.bf16.gmra.mrb[0].mxu0 %v3148
    %v3514 = vpop.f32.mrb[0].mxu0
    %v3515 = vadd.f32 0.0, %v3514
    %v3516 = vpop.f32.mrb[0].mxu0
    %v3517 = vadd.f32 0.0, %v3516
    %v3518 = vpop.f32.mrb[0].mxu0
    %v3519 = vpop.f32.mrb[0].mxu0
    %3520 = vdwg.mxu0
    %3521 = vmatprep.subr.bf16.mxu0 %v1375
    %3522 = vmatpush1.bf16.msra.mxu0 %v1374
    %3523 = vmatprep.subr.bf16.mxu0 %v1391
    %3524 = vmatpush1.bf16.msra.mxu0 %v1390
    %3525 = vmatprep.subr.bf16.mxu0 %v1407
    %3526 = vmatpush1.bf16.msra.mxu0 %v1406
    %3527 = vmatprep.subr.bf16.mxu0 %v1423
    %3528 = vmatpush1.bf16.msra.mxu0 %v1422
    %3529 = vmatprep.subr.bf16.mxu0 %v1439
    %3530 = vmatpush1.bf16.msra.mxu0 %v1438
    %3531 = vmatprep.subr.bf16.mxu0 %v1455
    %3532 = vmatpush1.bf16.msra.mxu0 %v1454
    %3533 = vmatprep.subr.bf16.mxu0 %v1471
    %3534 = vmatpush1.bf16.msra.mxu0 %v1470
    %3535 = vmatprep.subr.bf16.mxu0 %v1487
    %3536 = vmatpush1.bf16.msra.mxu0 %v1486
    %3537 = vmatprep.subr.bf16.mxu0 %v1503
    %3538 = vmatpush1.bf16.msra.mxu0 %v1502
    %3539 = vmatprep.subr.bf16.mxu0 %v1519
    %3540 = vmatpush1.bf16.msra.mxu0 %v1518
    %3541 = vmatprep.subr.bf16.mxu0 %v1535
    %3542 = vmatpush1.bf16.msra.mxu0 %v1534
    %3543 = vmatprep.subr.bf16.mxu0 %v1551
    %3544 = vmatpush1.bf16.msra.mxu0 %v1550
    %3545 = vmatprep.subr.bf16.mxu0 %v1567
    %3546 = vmatpush1.bf16.msra.mxu0 %v1566
    %3547 = vmatprep.subr.bf16.mxu0 %v1583
    %3548 = vmatpush1.bf16.msra.mxu0 %v1582
    %3549 = vmatprep.subr.bf16.mxu0 %v1599
    %3550 = vmatpush1.bf16.msra.mxu0 %v1598
    %3551 = vmatprep.subr.bf16.mxu0 %v1615
    %3552 = vmatpush1.bf16.msra.mxu0 %v1614
    %3553 = vmatprep.mubr.bf16.mxu0 %v3151
    %3554 = vmatmul.mubr.bf16.gmra.mrb[0].mxu0 %v3150
    %v3555 = vpop.f32.mrb[0].mxu0
    %v3556 = vadd.f32 %v3515, %v3555
    %v3557 = vpop.f32.mrb[0].mxu0
    %v3558 = vadd.f32 %v3517, %v3557
    %v3559 = vpop.f32.mrb[0].mxu0
    %v3560 = vpop.f32.mrb[0].mxu0
    %3561 = vdwg.mxu0
    %3562 = vmatprep.subr.bf16.mxu0 %v1121
    %3563 = vmatpush1.bf16.msra.mxu0 %v1120
    %3564 = vmatprep.subr.bf16.mxu0 %v1137
    %3565 = vmatpush1.bf16.msra.mxu0 %v1136
    %3566 = vmatprep.subr.bf16.mxu0 %v1153
    %3567 = vmatpush1.bf16.msra.mxu0 %v1152
    %3568 = vmatprep.subr.bf16.mxu0 %v1169
    %3569 = vmatpush1.bf16.msra.mxu0 %v1168
    %3570 = vmatprep.subr.bf16.mxu0 %v1185
    %3571 = vmatpush1.bf16.msra.mxu0 %v1184
    %3572 = vmatprep.subr.bf16.mxu0 %v1201
    %3573 = vmatpush1.bf16.msra.mxu0 %v1200
    %3574 = vmatprep.subr.bf16.mxu0 %v1217
    %3575 = vmatpush1.bf16.msra.mxu0 %v1216
    %3576 = vmatprep.subr.bf16.mxu0 %v1233
    %3577 = vmatpush1.bf16.msra.mxu0 %v1232
    %3578 = vmatprep.subr.bf16.mxu0 %v1249
    %3579 = vmatpush1.bf16.msra.mxu0 %v1248
    %3580 = vmatprep.subr.bf16.mxu0 %v1265
    %3581 = vmatpush1.bf16.msra.mxu0 %v1264
    %3582 = vmatprep.subr.bf16.mxu0 %v1281
    %3583 = vmatpush1.bf16.msra.mxu0 %v1280
    %3584 = vmatprep.subr.bf16.mxu0 %v1297
    %3585 = vmatpush1.bf16.msra.mxu0 %v1296
    %3586 = vmatprep.subr.bf16.mxu0 %v1313
    %3587 = vmatpush1.bf16.msra.mxu0 %v1312
    %3588 = vmatprep.subr.bf16.mxu0 %v1329
    %3589 = vmatpush1.bf16.msra.mxu0 %v1328
    %3590 = vmatprep.subr.bf16.mxu0 %v1345
    %3591 = vmatpush1.bf16.msra.mxu0 %v1344
    %3592 = vmatprep.subr.bf16.mxu0 %v1361
    %3593 = vmatpush1.bf16.msra.mxu0 %v1360
    %3594 = vmatprep.mubr.bf16.mxu0 %v3149
    %3595 = vmatmul.mubr.bf16.gmra.mrb[0].mxu0 %v3148
    %v3596 = vpop.f32.mrb[0].mxu0
    %v3597 = vadd.f32 0.0, %v3596
    %v3598 = vpop.f32.mrb[0].mxu0
    %v3599 = vadd.f32 0.0, %v3598
    %v3600 = vpop.f32.mrb[0].mxu0
    %v3601 = vpop.f32.mrb[0].mxu0
    %3602 = vdwg.mxu0
    %3603 = vmatprep.subr.bf16.mxu0 %v1377
    %3604 = vmatpush1.bf16.msra.mxu0 %v1376
    %3605 = vmatprep.subr.bf16.mxu0 %v1393
    %3606 = vmatpush1.bf16.msra.mxu0 %v1392
    %3607 = vmatprep.subr.bf16.mxu0 %v1409
    %3608 = vmatpush1.bf16.msra.mxu0 %v1408
    %3609 = vmatprep.subr.bf16.mxu0 %v1425
    %3610 = vmatpush1.bf16.msra.mxu0 %v1424
    %3611 = vmatprep.subr.bf16.mxu0 %v1441
    %3612 = vmatpush1.bf16.msra.mxu0 %v1440
    %3613 = vmatprep.subr.bf16.mxu0 %v1457
    %3614 = vmatpush1.bf16.msra.mxu0 %v1456
    %3615 = vmatprep.subr.bf16.mxu0 %v1473
    %3616 = vmatpush1.bf16.msra.mxu0 %v1472
    %3617 = vmatprep.subr.bf16.mxu0 %v1489
    %3618 = vmatpush1.bf16.msra.mxu0 %v1488
    %3619 = vmatprep.subr.bf16.mxu0 %v1505
    %3620 = vmatpush1.bf16.msra.mxu0 %v1504
    %3621 = vmatprep.subr.bf16.mxu0 %v1521
    %3622 = vmatpush1.bf16.msra.mxu0 %v1520
    %3623 = vmatprep.subr.bf16.mxu0 %v1537
    %3624 = vmatpush1.bf16.msra.mxu0 %v1536
    %3625 = vmatprep.subr.bf16.mxu0 %v1553
    %3626 = vmatpush1.bf16.msra.mxu0 %v1552
    %3627 = vmatprep.subr.bf16.mxu0 %v1569
    %3628 = vmatpush1.bf16.msra.mxu0 %v1568
    %3629 = vmatprep.subr.bf16.mxu0 %v1585
    %3630 = vmatpush1.bf16.msra.mxu0 %v1584
    %3631 = vmatprep.subr.bf16.mxu0 %v1601
    %3632 = vmatpush1.bf16.msra.mxu0 %v1600
    %3633 = vmatprep.subr.bf16.mxu0 %v1617
    %3634 = vmatpush1.bf16.msra.mxu0 %v1616
    %3635 = vmatprep.mubr.bf16.mxu0 %v3151
    %3636 = vmatmul.mubr.bf16.gmra.mrb[0].mxu0 %v3150
    %v3637 = vpop.f32.mrb[0].mxu0
    %v3638 = vadd.f32 %v3597, %v3637
    %v3639 = vpop.f32.mrb[0].mxu0
    %v3640 = vadd.f32 %v3599, %v3639
    %v3641 = vpop.f32.mrb[0].mxu0
    %v3642 = vpop.f32.mrb[0].mxu0
    %3643 = vdwg.mxu0
    %3644 = vmatprep.subr.bf16.mxu0 %v1123
    %3645 = vmatpush1.bf16.msra.mxu0 %v1122
    %3646 = vmatprep.subr.bf16.mxu0 %v1139
    %3647 = vmatpush1.bf16.msra.mxu0 %v1138
    %3648 = vmatprep.subr.bf16.mxu0 %v1155
    %3649 = vmatpush1.bf16.msra.mxu0 %v1154
    %3650 = vmatprep.subr.bf16.mxu0 %v1171
    %3651 = vmatpush1.bf16.msra.mxu0 %v1170
    %3652 = vmatprep.subr.bf16.mxu0 %v1187
    %3653 = vmatpush1.bf16.msra.mxu0 %v1186
    %3654 = vmatprep.subr.bf16.mxu0 %v1203
    %3655 = vmatpush1.bf16.msra.mxu0 %v1202
    %3656 = vmatprep.subr.bf16.mxu0 %v1219
    %3657 = vmatpush1.bf16.msra.mxu0 %v1218
    %3658 = vmatprep.subr.bf16.mxu0 %v1235
    %3659 = vmatpush1.bf16.msra.mxu0 %v1234
    %3660 = vmatprep.subr.bf16.mxu0 %v1251
    %3661 = vmatpush1.bf16.msra.mxu0 %v1250
    %3662 = vmatprep.subr.bf16.mxu0 %v1267
    %3663 = vmatpush1.bf16.msra.mxu0 %v1266
    %3664 = vmatprep.subr.bf16.mxu0 %v1283
    %3665 = vmatpush1.bf16.msra.mxu0 %v1282
    %3666 = vmatprep.subr.bf16.mxu0 %v1299
    %3667 = vmatpush1.bf16.msra.mxu0 %v1298
    %3668 = vmatprep.subr.bf16.mxu0 %v1315
    %3669 = vmatpush1.bf16.msra.mxu0 %v1314
    %3670 = vmatprep.subr.bf16.mxu0 %v1331
    %3671 = vmatpush1.bf16.msra.mxu0 %v1330
    %3672 = vmatprep.subr.bf16.mxu0 %v1347
    %3673 = vmatpush1.bf16.msra.mxu0 %v1346
    %3674 = vmatprep.subr.bf16.mxu0 %v1363
    %3675 = vmatpush1.bf16.msra.mxu0 %v1362
    %3676 = vmatprep.mubr.bf16.mxu0 %v3149
    %3677 = vmatmul.mubr.bf16.gmra.mrb[0].mxu0 %v3148
    %v3678 = vpop.f32.mrb[0].mxu0
    %v3679 = vadd.f32 0.0, %v3678
    %v3680 = vpop.f32.mrb[0].mxu0
    %v3681 = vadd.f32 0.0, %v3680
    %v3682 = vpop.f32.mrb[0].mxu0
    %v3683 = vpop.f32.mrb[0].mxu0
    %3684 = vdwg.mxu0
    %3685 = vmatprep.subr.bf16.mxu0 %v1379
    %3686 = vmatpush1.bf16.msra.mxu0 %v1378
    %3687 = vmatprep.subr.bf16.mxu0 %v1395
    %3688 = vmatpush1.bf16.msra.mxu0 %v1394
    %3689 = vmatprep.subr.bf16.mxu0 %v1411
    %3690 = vmatpush1.bf16.msra.mxu0 %v1410
    %3691 = vmatprep.subr.bf16.mxu0 %v1427
    %3692 = vmatpush1.bf16.msra.mxu0 %v1426
    %3693 = vmatprep.subr.bf16.mxu0 %v1443
    %3694 = vmatpush1.bf16.msra.mxu0 %v1442
    %3695 = vmatprep.subr.bf16.mxu0 %v1459
    %3696 = vmatpush1.bf16.msra.mxu0 %v1458
    %3697 = vmatprep.subr.bf16.mxu0 %v1475
    %3698 = vmatpush1.bf16.msra.mxu0 %v1474
    %3699 = vmatprep.subr.bf16.mxu0 %v1491
    %3700 = vmatpush1.bf16.msra.mxu0 %v1490
    %3701 = vmatprep.subr.bf16.mxu0 %v1507
    %3702 = vmatpush1.bf16.msra.mxu0 %v1506
    %3703 = vmatprep.subr.bf16.mxu0 %v1523
    %3704 = vmatpush1.bf16.msra.mxu0 %v1522
    %3705 = vmatprep.subr.bf16.mxu0 %v1539
    %3706 = vmatpush1.bf16.msra.mxu0 %v1538
    %3707 = vmatprep.subr.bf16.mxu0 %v1555
    %3708 = vmatpush1.bf16.msra.mxu0 %v1554
    %3709 = vmatprep.subr.bf16.mxu0 %v1571
    %3710 = vmatpush1.bf16.msra.mxu0 %v1570
    %3711 = vmatprep.subr.bf16.mxu0 %v1587
    %3712 = vmatpush1.bf16.msra.mxu0 %v1586
    %3713 = vmatprep.subr.bf16.mxu0 %v1603
    %3714 = vmatpush1.bf16.msra.mxu0 %v1602
    %3715 = vmatprep.subr.bf16.mxu0 %v1619
    %3716 = vmatpush1.bf16.msra.mxu0 %v1618
    %3717 = vmatprep.mubr.bf16.mxu0 %v3151
    %3718 = vmatmul.mubr.bf16.gmra.mrb[0].mxu0 %v3150
    %v3719 = vpop.f32.mrb[0].mxu0
    %v3720 = vadd.f32 %v3679, %v3719
    %v3721 = vpop.f32.mrb[0].mxu0
    %v3722 = vadd.f32 %v3681, %v3721
    %v3723 = vpop.f32.mrb[0].mxu0
    %v3724 = vpop.f32.mrb[0].mxu0
    %3725 = vdwg.mxu0
    %3726 = vmatprep.subr.bf16.mxu0 %v1125
    %3727 = vmatpush1.bf16.msra.mxu0 %v1124
    %3728 = vmatprep.subr.bf16.mxu0 %v1141
    %3729 = vmatpush1.bf16.msra.mxu0 %v1140
    %3730 = vmatprep.subr.bf16.mxu0 %v1157
    %3731 = vmatpush1.bf16.msra.mxu0 %v1156
    %3732 = vmatprep.subr.bf16.mxu0 %v1173
    %3733 = vmatpush1.bf16.msra.mxu0 %v1172
    %3734 = vmatprep.subr.bf16.mxu0 %v1189
    %3735 = vmatpush1.bf16.msra.mxu0 %v1188
    %3736 = vmatprep.subr.bf16.mxu0 %v1205
    %3737 = vmatpush1.bf16.msra.mxu0 %v1204
    %3738 = vmatprep.subr.bf16.mxu0 %v1221
    %3739 = vmatpush1.bf16.msra.mxu0 %v1220
    %3740 = vmatprep.subr.bf16.mxu0 %v1237
    %3741 = vmatpush1.bf16.msra.mxu0 %v1236
    %3742 = vmatprep.subr.bf16.mxu0 %v1253
    %3743 = vmatpush1.bf16.msra.mxu0 %v1252
    %3744 = vmatprep.subr.bf16.mxu0 %v1269
    %3745 = vmatpush1.bf16.msra.mxu0 %v1268
    %3746 = vmatprep.subr.bf16.mxu0 %v1285
    %3747 = vmatpush1.bf16.msra.mxu0 %v1284
    %3748 = vmatprep.subr.bf16.mxu0 %v1301
    %3749 = vmatpush1.bf16.msra.mxu0 %v1300
    %3750 = vmatprep.subr.bf16.mxu0 %v1317
    %3751 = vmatpush1.bf16.msra.mxu0 %v1316
    %3752 = vmatprep.subr.bf16.mxu0 %v1333
    %3753 = vmatpush1.bf16.msra.mxu0 %v1332
    %3754 = vmatprep.subr.bf16.mxu0 %v1349
    %3755 = vmatpush1.bf16.msra.mxu0 %v1348
    %3756 = vmatprep.subr.bf16.mxu0 %v1365
    %3757 = vmatpush1.bf16.msra.mxu0 %v1364
    %3758 = vmatprep.mubr.bf16.mxu0 %v3149
    %3759 = vmatmul.mubr.bf16.gmra.mrb[0].mxu0 %v3148
    %v3760 = vpop.f32.mrb[0].mxu0
    %v3761 = vadd.f32 0.0, %v3760
    %v3762 = vpop.f32.mrb[0].mxu0
    %v3763 = vadd.f32 0.0, %v3762
    %v3764 = vpop.f32.mrb[0].mxu0
    %v3765 = vpop.f32.mrb[0].mxu0
    %3766 = vdwg.mxu0
    %3767 = vmatprep.subr.bf16.mxu0 %v1381
    %3768 = vmatpush1.bf16.msra.mxu0 %v1380
    %3769 = vmatprep.subr.bf16.mxu0 %v1397
    %3770 = vmatpush1.bf16.msra.mxu0 %v1396
    %3771 = vmatprep.subr.bf16.mxu0 %v1413
    %3772 = vmatpush1.bf16.msra.mxu0 %v1412
    %3773 = vmatprep.subr.bf16.mxu0 %v1429
    %3774 = vmatpush1.bf16.msra.mxu0 %v1428
    %3775 = vmatprep.subr.bf16.mxu0 %v1445
    %3776 = vmatpush1.bf16.msra.mxu0 %v1444
    %3777 = vmatprep.subr.bf16.mxu0 %v1461
    %3778 = vmatpush1.bf16.msra.mxu0 %v1460
    %3779 = vmatprep.subr.bf16.mxu0 %v1477
    %3780 = vmatpush1.bf16.msra.mxu0 %v1476
    %3781 = vmatprep.subr.bf16.mxu0 %v1493
    %3782 = vmatpush1.bf16.msra.mxu0 %v1492
    %3783 = vmatprep.subr.bf16.mxu0 %v1509
    %3784 = vmatpush1.bf16.msra.mxu0 %v1508
    %3785 = vmatprep.subr.bf16.mxu0 %v1525
    %3786 = vmatpush1.bf16.msra.mxu0 %v1524
    %3787 = vmatprep.subr.bf16.mxu0 %v1541
    %3788 = vmatpush1.bf16.msra.mxu0 %v1540
    %3789 = vmatprep.subr.bf16.mxu0 %v1557
    %3790 = vmatpush1.bf16.msra.mxu0 %v1556
    %3791 = vmatprep.subr.bf16.mxu0 %v1573
    %3792 = vmatpush1.bf16.msra.mxu0 %v1572
    %3793 = vmatprep.subr.bf16.mxu0 %v1589
    %3794 = vmatpush1.bf16.msra.mxu0 %v1588
    %3795 = vmatprep.subr.bf16.mxu0 %v1605
    %3796 = vmatpush1.bf16.msra.mxu0 %v1604
    %3797 = vmatprep.subr.bf16.mxu0 %v1621
    %3798 = vmatpush1.bf16.msra.mxu0 %v1620
    %3799 = vmatprep.mubr.bf16.mxu0 %v3151
    %3800 = vmatmul.mubr.bf16.gmra.mrb[0].mxu0 %v3150
    %v3801 = vpop.f32.mrb[0].mxu0
    %v3802 = vadd.f32 %v3761, %v3801
    %v3803 = vpop.f32.mrb[0].mxu0
    %v3804 = vadd.f32 %v3763, %v3803
    %v3805 = vpop.f32.mrb[0].mxu0
    %v3806 = vpop.f32.mrb[0].mxu0
    %3807 = vdwg.mxu0
    %v3808 = vadd.f32 %v3132, %v3228
    %v3809 = vadd.f32 %v3133, %v3230
    %v3810 = vadd.f32 %v3134, %v3310
    %v3811 = vadd.f32 %v3135, %v3312
    %v3812 = vadd.f32 %v3136, %v3392
    %v3813 = vadd.f32 %v3137, %v3394
    %v3814 = vadd.f32 %v3138, %v3474
    %v3815 = vadd.f32 %v3139, %v3476
    %v3816 = vadd.f32 %v3140, %v3556
    %v3817 = vadd.f32 %v3141, %v3558
    %v3818 = vadd.f32 %v3142, %v3638
    %v3819 = vadd.f32 %v3143, %v3640
    %v3820 = vadd.f32 %v3144, %v3720
    %v3821 = vadd.f32 %v3145, %v3722
    %v3822 = vadd.f32 %v3146, %v3802
    %v3823 = vadd.f32 %v3147, %v3804
    %v3824 = vmul.f32 %v3808, 0.5
    %v3825 = vmul.f32 %v3809, 0.5
    %v3826 = vmul.f32 %v3810, 0.5
    %v3827 = vmul.f32 %v3811, 0.5
    %v3828 = vtanh.pop %v3824
    %v3829 = vtanh.pop %v3825
    %v3830 = vtanh.pop %v3826
    %v3831 = vtanh.pop %v3827
    %v3832 = vmul.f32 %v3828, 0.5
    %v3833 = vmul.f32 %v3829, 0.5
    %v3834 = vmul.f32 %v3830, 0.5
    %v3835 = vmul.f32 %v3831, 0.5
    %v3836 = vadd.f32 %v3832, 0.5
    %v3837 = vadd.f32 %v3833, 0.5
    %v3838 = vadd.f32 %v3834, 0.5
    %v3839 = vadd.f32 %v3835, 0.5
    %v3840 = vmul.f32 %v3812, 0.5
    %v3841 = vmul.f32 %v3813, 0.5
    %v3842 = vmul.f32 %v3814, 0.5
    %v3843 = vmul.f32 %v3815, 0.5
    %v3844 = vtanh.pop %v3840
    %v3845 = vtanh.pop %v3841
    %v3846 = vtanh.pop %v3842
    %v3847 = vtanh.pop %v3843
    %v3848 = vmul.f32 %v3844, 0.5
    %v3849 = vmul.f32 %v3845, 0.5
    %v3850 = vmul.f32 %v3846, 0.5
    %v3851 = vmul.f32 %v3847, 0.5
    %v3852 = vadd.f32 %v3848, 0.5
    %v3853 = vadd.f32 %v3849, 0.5
    %v3854 = vadd.f32 %v3850, 0.5
    %v3855 = vadd.f32 %v3851, 0.5
    %v3856 = vtanh.pop %v3816
    %v3857 = vtanh.pop %v3817
    %v3858 = vtanh.pop %v3818
    %v3859 = vtanh.pop %v3819
    %v3860 = vmul.f32 %v3820, 0.5
    %v3861 = vmul.f32 %v3821, 0.5
    %v3862 = vmul.f32 %v3822, 0.5
    %v3863 = vmul.f32 %v3823, 0.5
    %v3864 = vtanh.pop %v3860
    %v3865 = vtanh.pop %v3861
    %v3866 = vtanh.pop %v3862
    %v3867 = vtanh.pop %v3863
    %v3868 = vmul.f32 %v3864, 0.5
    %v3869 = vmul.f32 %v3865, 0.5
    %v3870 = vmul.f32 %v3866, 0.5
    %v3871 = vmul.f32 %v3867, 0.5
    %v3872 = vadd.f32 %v3868, 0.5
    %v3873 = vadd.f32 %v3869, 0.5
    %v3874 = vadd.f32 %v3870, 0.5
    %v3875 = vadd.f32 %v3871, 0.5
    %v3876 = vmul.f32 %v3852, %v3119
    %v3877 = vmul.f32 %v3853, %v3120
    %v3878 = vmul.f32 %v3854, %v3121
    %v3879 = vmul.f32 %v3855, %v3122
    %v3880 = vmul.f32 %v3836, %v3856
    %v3881 = vmul.f32 %v3837, %v3857
    %v3882 = vmul.f32 %v3838, %v3858
    %v3883 = vmul.f32 %v3839, %v3859
    %v3884 = vadd.f32 %v3876, %v3880
    %v3885 = vadd.f32 %v3877, %v3881
    %v3886 = vadd.f32 %v3878, %v3882
    %v3887 = vadd.f32 %v3879, %v3883
    %v3888 = vtanh.pop %v3884
    %v3889 = vtanh.pop %v3885
    %v3890 = vtanh.pop %v3886
    %v3891 = vtanh.pop %v3887
    %v3892 = vmul.f32 %v3872, %v3888
    %v3893 = vmul.f32 %v3873, %v3889
    %v3894 = vmul.f32 %v3874, %v3890
    %v3895 = vmul.f32 %v3875, %v3891
    %s3896 = scalar_lea.vmem [#allocation5], 384
    %v3897 = vld [vmem:[%s3896] sm:$0xff]
    %v3898 = vld [vmem:[%s3896 + $0x8] sm:$0xff]
    %v3899 = vld [vmem:[%s3896 + $0x10] sm:$0xff]
    %v3900 = vld [vmem:[%s3896 + $0x18] sm:$0xff]
    %v3901 = vld [vmem:[%s3896 + $0x20] sm:$0xff]
    %v3902 = vld [vmem:[%s3896 + $0x28] sm:$0xff]
    %v3903 = vld [vmem:[%s3896 + $0x30] sm:$0xff]
    %v3904 = vld [vmem:[%s3896 + $0x38] sm:$0xff]
    %v3905 = vld [vmem:[%s3896 + $0x40] sm:$0xff]
    %v3906 = vld [vmem:[%s3896 + $0x48] sm:$0xff]
    %v3907 = vld [vmem:[%s3896 + $0x50] sm:$0xff]
    %v3908 = vld [vmem:[%s3896 + $0x58] sm:$0xff]
    %v3909 = vld [vmem:[%s3896 + $0x60] sm:$0xff]
    %v3910 = vld [vmem:[%s3896 + $0x68] sm:$0xff]
    %v3911 = vld [vmem:[%s3896 + $0x70] sm:$0xff]
    %v3912 = vld [vmem:[%s3896 + $0x78] sm:$0xff]
    %v3913 = vpack.c.bf16 %v3892, %v3892
    %v3914 = vpack.c.bf16 %v3893, %v3893
    %v3915 = vpack.c.bf16 %v3894, %v3894
    %v3916 = vpack.c.bf16 %v3895, %v3895
    %3917 = vmatprep.subr.bf16.mxu0 %v1111
    %3918 = vmatpush1.bf16.msra.mxu0 %v1110
    %3919 = vmatprep.subr.bf16.mxu0 %v1127
    %3920 = vmatpush1.bf16.msra.mxu0 %v1126
    %3921 = vmatprep.subr.bf16.mxu0 %v1143
    %3922 = vmatpush1.bf16.msra.mxu0 %v1142
    %3923 = vmatprep.subr.bf16.mxu0 %v1159
    %3924 = vmatpush1.bf16.msra.mxu0 %v1158
    %3925 = vmatprep.subr.bf16.mxu0 %v1175
    %3926 = vmatpush1.bf16.msra.mxu0 %v1174
    %3927 = vmatprep.subr.bf16.mxu0 %v1191
    %3928 = vmatpush1.bf16.msra.mxu0 %v1190
    %3929 = vmatprep.subr.bf16.mxu0 %v1207
    %3930 = vmatpush1.bf16.msra.mxu0 %v1206
    %3931 = vmatprep.subr.bf16.mxu0 %v1223
    %3932 = vmatpush1.bf16.msra.mxu0 %v1222
    %3933 = vmatprep.subr.bf16.mxu0 %v1239
    %3934 = vmatpush1.bf16.msra.mxu0 %v1238
    %3935 = vmatprep.subr.bf16.mxu0 %v1255
    %3936 = vmatpush1.bf16.msra.mxu0 %v1254
    %3937 = vmatprep.subr.bf16.mxu0 %v1271
    %3938 = vmatpush1.bf16.msra.mxu0 %v1270
    %3939 = vmatprep.subr.bf16.mxu0 %v1287
    %3940 = vmatpush1.bf16.msra.mxu0 %v1286
    %3941 = vmatprep.subr.bf16.mxu0 %v1303
    %3942 = vmatpush1.bf16.msra.mxu0 %v1302
    %3943 = vmatprep.subr.bf16.mxu0 %v1319
    %3944 = vmatpush1.bf16.msra.mxu0 %v1318
    %3945 = vmatprep.subr.bf16.mxu0 %v1335
    %3946 = vmatpush1.bf16.msra.mxu0 %v1334
    %3947 = vmatprep.subr.bf16.mxu0 %v1351
    %3948 = vmatpush1.bf16.msra.mxu0 %v1350
    %3949 = vmatprep.mubr.bf16.mxu0 %v3914
    %3950 = vmatmul.mubr.bf16.gmra.mrb[0].mxu0 %v3913
    %v3951 = vpop.f32.mrb[0].mxu0
    %v3952 = vadd.f32 0.0, %v3951
    %v3953 = vpop.f32.mrb[0].mxu0
    %v3954 = vadd.f32 0.0, %v3953
    %v3955 = vpop.f32.mrb[0].mxu0
    %v3956 = vpop.f32.mrb[0].mxu0
    %3957 = vdwg.mxu0
    %3958 = vmatprep.subr.bf16.mxu0 %v1367
    %3959 = vmatpush1.bf16.msra.mxu0 %v1366
    %3960 = vmatprep.subr.bf16.mxu0 %v1383
    %3961 = vmatpush1.bf16.msra.mxu0 %v1382
    %3962 = vmatprep.subr.bf16.mxu0 %v1399
    %3963 = vmatpush1.bf16.msra.mxu0 %v1398
    %3964 = vmatprep.subr.bf16.mxu0 %v1415
    %3965 = vmatpush1.bf16.msra.mxu0 %v1414
    %3966 = vmatprep.subr.bf16.mxu0 %v1431
    %3967 = vmatpush1.bf16.msra.mxu0 %v1430
    %3968 = vmatprep.subr.bf16.mxu0 %v1447
    %3969 = vmatpush1.bf16.msra.mxu0 %v1446
    %3970 = vmatprep.subr.bf16.mxu0 %v1463
    %3971 = vmatpush1.bf16.msra.mxu0 %v1462
    %3972 = vmatprep.subr.bf16.mxu0 %v1479
    %3973 = vmatpush1.bf16.msra.mxu0 %v1478
    %3974 = vmatprep.subr.bf16.mxu0 %v1495
    %3975 = vmatpush1.bf16.msra.mxu0 %v1494
    %3976 = vmatprep.subr.bf16.mxu0 %v1511
    %3977 = vmatpush1.bf16.msra.mxu0 %v1510
    %3978 = vmatprep.subr.bf16.mxu0 %v1527
    %3979 = vmatpush1.bf16.msra.mxu0 %v1526
    %3980 = vmatprep.subr.bf16.mxu0 %v1543
    %3981 = vmatpush1.bf16.msra.mxu0 %v1542
    %3982 = vmatprep.subr.bf16.mxu0 %v1559
    %3983 = vmatpush1.bf16.msra.mxu0 %v1558
    %3984 = vmatprep.subr.bf16.mxu0 %v1575
    %3985 = vmatpush1.bf16.msra.mxu0 %v1574
    %3986 = vmatprep.subr.bf16.mxu0 %v1591
    %3987 = vmatpush1.bf16.msra.mxu0 %v1590
    %3988 = vmatprep.subr.bf16.mxu0 %v1607
    %3989 = vmatpush1.bf16.msra.mxu0 %v1606
    %3990 = vmatprep.mubr.bf16.mxu0 %v3916
    %3991 = vmatmul.mubr.bf16.gmra.mrb[0].mxu0 %v3915
    %v3992 = vpop.f32.mrb[0].mxu0
    %v3993 = vadd.f32 %v3952, %v3992
    %v3994 = vpop.f32.mrb[0].mxu0
    %v3995 = vadd.f32 %v3954, %v3994
    %v3996 = vpop.f32.mrb[0].mxu0
    %v3997 = vpop.f32.mrb[0].mxu0
    %3998 = vdwg.mxu0
    %3999 = vmatprep.subr.bf16.mxu0 %v1113
    %4000 = vmatpush1.bf16.msra.mxu0 %v1112
    %4001 = vmatprep.subr.bf16.mxu0 %v1129
    %4002 = vmatpush1.bf16.msra.mxu0 %v1128
    %4003 = vmatprep.subr.bf16.mxu0 %v1145
    %4004 = vmatpush1.bf16.msra.mxu0 %v1144
    %4005 = vmatprep.subr.bf16.mxu0 %v1161
    %4006 = vmatpush1.bf16.msra.mxu0 %v1160
    %4007 = vmatprep.subr.bf16.mxu0 %v1177
    %4008 = vmatpush1.bf16.msra.mxu0 %v1176
    %4009 = vmatprep.subr.bf16.mxu0 %v1193
    %4010 = vmatpush1.bf16.msra.mxu0 %v1192
    %4011 = vmatprep.subr.bf16.mxu0 %v1209
    %4012 = vmatpush1.bf16.msra.mxu0 %v1208
    %4013 = vmatprep.subr.bf16.mxu0 %v1225
    %4014 = vmatpush1.bf16.msra.mxu0 %v1224
    %4015 = vmatprep.subr.bf16.mxu0 %v1241
    %4016 = vmatpush1.bf16.msra.mxu0 %v1240
    %4017 = vmatprep.subr.bf16.mxu0 %v1257
    %4018 = vmatpush1.bf16.msra.mxu0 %v1256
    %4019 = vmatprep.subr.bf16.mxu0 %v1273
    %4020 = vmatpush1.bf16.msra.mxu0 %v1272
    %4021 = vmatprep.subr.bf16.mxu0 %v1289
    %4022 = vmatpush1.bf16.msra.mxu0 %v1288
    %4023 = vmatprep.subr.bf16.mxu0 %v1305
    %4024 = vmatpush1.bf16.msra.mxu0 %v1304
    %4025 = vmatprep.subr.bf16.mxu0 %v1321
    %4026 = vmatpush1.bf16.msra.mxu0 %v1320
    %4027 = vmatprep.subr.bf16.mxu0 %v1337
    %4028 = vmatpush1.bf16.msra.mxu0 %v1336
    %4029 = vmatprep.subr.bf16.mxu0 %v1353
    %4030 = vmatpush1.bf16.msra.mxu0 %v1352
    %4031 = vmatprep.mubr.bf16.mxu0 %v3914
    %4032 = vmatmul.mubr.bf16.gmra.mrb[0].mxu0 %v3913
    %v4033 = vpop.f32.mrb[0].mxu0
    %v4034 = vadd.f32 0.0, %v4033
    %v4035 = vpop.f32.mrb[0].mxu0
    %v4036 = vadd.f32 0.0, %v4035
    %v4037 = vpop.f32.mrb[0].mxu0
    %v4038 = vpop.f32.mrb[0].mxu0
    %4039 = vdwg.mxu0
    %4040 = vmatprep.subr.bf16.mxu0 %v1369
    %4041 = vmatpush1.bf16.msra.mxu0 %v1368
    %4042 = vmatprep.subr.bf16.mxu0 %v1385
    %4043 = vmatpush1.bf16.msra.mxu0 %v1384
    %4044 = vmatprep.subr.bf16.mxu0 %v1401
    %4045 = vmatpush1.bf16.msra.mxu0 %v1400
    %4046 = vmatprep.subr.bf16.mxu0 %v1417
    %4047 = vmatpush1.bf16.msra.mxu0 %v1416
    %4048 = vmatprep.subr.bf16.mxu0 %v1433
    %4049 = vmatpush1.bf16.msra.mxu0 %v1432
    %4050 = vmatprep.subr.bf16.mxu0 %v1449
    %4051 = vmatpush1.bf16.msra.mxu0 %v1448
    %4052 = vmatprep.subr.bf16.mxu0 %v1465
    %4053 = vmatpush1.bf16.msra.mxu0 %v1464
    %4054 = vmatprep.subr.bf16.mxu0 %v1481
    %4055 = vmatpush1.bf16.msra.mxu0 %v1480
    %4056 = vmatprep.subr.bf16.mxu0 %v1497
    %4057 = vmatpush1.bf16.msra.mxu0 %v1496
    %4058 = vmatprep.subr.bf16.mxu0 %v1513
    %4059 = vmatpush1.bf16.msra.mxu0 %v1512
    %4060 = vmatprep.subr.bf16.mxu0 %v1529
    %4061 = vmatpush1.bf16.msra.mxu0 %v1528
    %4062 = vmatprep.subr.bf16.mxu0 %v1545
    %4063 = vmatpush1.bf16.msra.mxu0 %v1544
    %4064 = vmatprep.subr.bf16.mxu0 %v1561
    %4065 = vmatpush1.bf16.msra.mxu0 %v1560
    %4066 = vmatprep.subr.bf16.mxu0 %v1577
    %4067 = vmatpush1.bf16.msra.mxu0 %v1576
    %4068 = vmatprep.subr.bf16.mxu0 %v1593
    %4069 = vmatpush1.bf16.msra.mxu0 %v1592
    %4070 = vmatprep.subr.bf16.mxu0 %v1609
    %4071 = vmatpush1.bf16.msra.mxu0 %v1608
    %4072 = vmatprep.mubr.bf16.mxu0 %v3916
    %4073 = vmatmul.mubr.bf16.gmra.mrb[0].mxu0 %v3915
    %v4074 = vpop.f32.mrb[0].mxu0
    %v4075 = vadd.f32 %v4034, %v4074
    %v4076 = vpop.f32.mrb[0].mxu0
    %v4077 = vadd.f32 %v4036, %v4076
    %v4078 = vpop.f32.mrb[0].mxu0
    %v4079 = vpop.f32.mrb[0].mxu0
    %4080 = vdwg.mxu0
    %4081 = vmatprep.subr.bf16.mxu0 %v1115
    %4082 = vmatpush1.bf16.msra.mxu0 %v1114
    %4083 = vmatprep.subr.bf16.mxu0 %v1131
    %4084 = vmatpush1.bf16.msra.mxu0 %v1130
    %4085 = vmatprep.subr.bf16.mxu0 %v1147
    %4086 = vmatpush1.bf16.msra.mxu0 %v1146
    %4087 = vmatprep.subr.bf16.mxu0 %v1163
    %4088 = vmatpush1.bf16.msra.mxu0 %v1162
    %4089 = vmatprep.subr.bf16.mxu0 %v1179
    %4090 = vmatpush1.bf16.msra.mxu0 %v1178
    %4091 = vmatprep.subr.bf16.mxu0 %v1195
    %4092 = vmatpush1.bf16.msra.mxu0 %v1194
    %4093 = vmatprep.subr.bf16.mxu0 %v1211
    %4094 = vmatpush1.bf16.msra.mxu0 %v1210
    %4095 = vmatprep.subr.bf16.mxu0 %v1227
    %4096 = vmatpush1.bf16.msra.mxu0 %v1226
    %4097 = vmatprep.subr.bf16.mxu0 %v1243
    %4098 = vmatpush1.bf16.msra.mxu0 %v1242
    %4099 = vmatprep.subr.bf16.mxu0 %v1259
    %4100 = vmatpush1.bf16.msra.mxu0 %v1258
    %4101 = vmatprep.subr.bf16.mxu0 %v1275
    %4102 = vmatpush1.bf16.msra.mxu0 %v1274
    %4103 = vmatprep.subr.bf16.mxu0 %v1291
    %4104 = vmatpush1.bf16.msra.mxu0 %v1290
    %4105 = vmatprep.subr.bf16.mxu0 %v1307
    %4106 = vmatpush1.bf16.msra.mxu0 %v1306
    %4107 = vmatprep.subr.bf16.mxu0 %v1323
    %4108 = vmatpush1.bf16.msra.mxu0 %v1322
    %4109 = vmatprep.subr.bf16.mxu0 %v1339
    %4110 = vmatpush1.bf16.msra.mxu0 %v1338
    %4111 = vmatprep.subr.bf16.mxu0 %v1355
    %4112 = vmatpush1.bf16.msra.mxu0 %v1354
    %4113 = vmatprep.mubr.bf16.mxu0 %v3914
    %4114 = vmatmul.mubr.bf16.gmra.mrb[0].mxu0 %v3913
    %v4115 = vpop.f32.mrb[0].mxu0
    %v4116 = vadd.f32 0.0, %v4115
    %v4117 = vpop.f32.mrb[0].mxu0
    %v4118 = vadd.f32 0.0, %v4117
    %v4119 = vpop.f32.mrb[0].mxu0
    %v4120 = vpop.f32.mrb[0].mxu0
    %4121 = vdwg.mxu0
    %4122 = vmatprep.subr.bf16.mxu0 %v1371
    %4123 = vmatpush1.bf16.msra.mxu0 %v1370
    %4124 = vmatprep.subr.bf16.mxu0 %v1387
    %4125 = vmatpush1.bf16.msra.mxu0 %v1386
    %4126 = vmatprep.subr.bf16.mxu0 %v1403
    %4127 = vmatpush1.bf16.msra.mxu0 %v1402
    %4128 = vmatprep.subr.bf16.mxu0 %v1419
    %4129 = vmatpush1.bf16.msra.mxu0 %v1418
    %4130 = vmatprep.subr.bf16.mxu0 %v1435
    %4131 = vmatpush1.bf16.msra.mxu0 %v1434
    %4132 = vmatprep.subr.bf16.mxu0 %v1451
    %4133 = vmatpush1.bf16.msra.mxu0 %v1450
    %4134 = vmatprep.subr.bf16.mxu0 %v1467
    %4135 = vmatpush1.bf16.msra.mxu0 %v1466
    %4136 = vmatprep.subr.bf16.mxu0 %v1483
    %4137 = vmatpush1.bf16.msra.mxu0 %v1482
    %4138 = vmatprep.subr.bf16.mxu0 %v1499
    %4139 = vmatpush1.bf16.msra.mxu0 %v1498
    %4140 = vmatprep.subr.bf16.mxu0 %v1515
    %4141 = vmatpush1.bf16.msra.mxu0 %v1514
    %4142 = vmatprep.subr.bf16.mxu0 %v1531
    %4143 = vmatpush1.bf16.msra.mxu0 %v1530
    %4144 = vmatprep.subr.bf16.mxu0 %v1547
    %4145 = vmatpush1.bf16.msra.mxu0 %v1546
    %4146 = vmatprep.subr.bf16.mxu0 %v1563
    %4147 = vmatpush1.bf16.msra.mxu0 %v1562
    %4148 = vmatprep.subr.bf16.mxu0 %v1579
    %4149 = vmatpush1.bf16.msra.mxu0 %v1578
    %4150 = vmatprep.subr.bf16.mxu0 %v1595
    %4151 = vmatpush1.bf16.msra.mxu0 %v1594
    %4152 = vmatprep.subr.bf16.mxu0 %v1611
    %4153 = vmatpush1.bf16.msra.mxu0 %v1610
    %4154 = vmatprep.mubr.bf16.mxu0 %v3916
    %4155 = vmatmul.mubr.bf16.gmra.mrb[0].mxu0 %v3915
    %v4156 = vpop.f32.mrb[0].mxu0
    %v4157 = vadd.f32 %v4116, %v4156
    %v4158 = vpop.f32.mrb[0].mxu0
    %v4159 = vadd.f32 %v4118, %v4158
    %v4160 = vpop.f32.mrb[0].mxu0
    %v4161 = vpop.f32.mrb[0].mxu0
    %4162 = vdwg.mxu0
    %4163 = vmatprep.subr.bf16.mxu0 %v1117
    %4164 = vmatpush1.bf16.msra.mxu0 %v1116
    %4165 = vmatprep.subr.bf16.mxu0 %v1133
    %4166 = vmatpush1.bf16.msra.mxu0 %v1132
    %4167 = vmatprep.subr.bf16.mxu0 %v1149
    %4168 = vmatpush1.bf16.msra.mxu0 %v1148
    %4169 = vmatprep.subr.bf16.mxu0 %v1165
    %4170 = vmatpush1.bf16.msra.mxu0 %v1164
    %4171 = vmatprep.subr.bf16.mxu0 %v1181
    %4172 = vmatpush1.bf16.msra.mxu0 %v1180
    %4173 = vmatprep.subr.bf16.mxu0 %v1197
    %4174 = vmatpush1.bf16.msra.mxu0 %v1196
    %4175 = vmatprep.subr.bf16.mxu0 %v1213
    %4176 = vmatpush1.bf16.msra.mxu0 %v1212
    %4177 = vmatprep.subr.bf16.mxu0 %v1229
    %4178 = vmatpush1.bf16.msra.mxu0 %v1228
    %4179 = vmatprep.subr.bf16.mxu0 %v1245
    %4180 = vmatpush1.bf16.msra.mxu0 %v1244
    %4181 = vmatprep.subr.bf16.mxu0 %v1261
    %4182 = vmatpush1.bf16.msra.mxu0 %v1260
    %4183 = vmatprep.subr.bf16.mxu0 %v1277
    %4184 = vmatpush1.bf16.msra.mxu0 %v1276
    %4185 = vmatprep.subr.bf16.mxu0 %v1293
    %4186 = vmatpush1.bf16.msra.mxu0 %v1292
    %4187 = vmatprep.subr.bf16.mxu0 %v1309
    %4188 = vmatpush1.bf16.msra.mxu0 %v1308
    %4189 = vmatprep.subr.bf16.mxu0 %v1325
    %4190 = vmatpush1.bf16.msra.mxu0 %v1324
    %4191 = vmatprep.subr.bf16.mxu0 %v1341
    %4192 = vmatpush1.bf16.msra.mxu0 %v1340
    %4193 = vmatprep.subr.bf16.mxu0 %v1357
    %4194 = vmatpush1.bf16.msra.mxu0 %v1356
    %4195 = vmatprep.mubr.bf16.mxu0 %v3914
    %4196 = vmatmul.mubr.bf16.gmra.mrb[0].mxu0 %v3913
    %v4197 = vpop.f32.mrb[0].mxu0
    %v4198 = vadd.f32 0.0, %v4197
    %v4199 = vpop.f32.mrb[0].mxu0
    %v4200 = vadd.f32 0.0, %v4199
    %v4201 = vpop.f32.mrb[0].mxu0
    %v4202 = vpop.f32.mrb[0].mxu0
    %4203 = vdwg.mxu0
    %4204 = vmatprep.subr.bf16.mxu0 %v1373
    %4205 = vmatpush1.bf16.msra.mxu0 %v1372
    %4206 = vmatprep.subr.bf16.mxu0 %v1389
    %4207 = vmatpush1.bf16.msra.mxu0 %v1388
    %4208 = vmatprep.subr.bf16.mxu0 %v1405
    %4209 = vmatpush1.bf16.msra.mxu0 %v1404
    %4210 = vmatprep.subr.bf16.mxu0 %v1421
    %4211 = vmatpush1.bf16.msra.mxu0 %v1420
    %4212 = vmatprep.subr.bf16.mxu0 %v1437
    %4213 = vmatpush1.bf16.msra.mxu0 %v1436
    %4214 = vmatprep.subr.bf16.mxu0 %v1453
    %4215 = vmatpush1.bf16.msra.mxu0 %v1452
    %4216 = vmatprep.subr.bf16.mxu0 %v1469
    %4217 = vmatpush1.bf16.msra.mxu0 %v1468
    %4218 = vmatprep.subr.bf16.mxu0 %v1485
    %4219 = vmatpush1.bf16.msra.mxu0 %v1484
    %4220 = vmatprep.subr.bf16.mxu0 %v1501
    %4221 = vmatpush1.bf16.msra.mxu0 %v1500
    %4222 = vmatprep.subr.bf16.mxu0 %v1517
    %4223 = vmatpush1.bf16.msra.mxu0 %v1516
    %4224 = vmatprep.subr.bf16.mxu0 %v1533
    %4225 = vmatpush1.bf16.msra.mxu0 %v1532
    %4226 = vmatprep.subr.bf16.mxu0 %v1549
    %4227 = vmatpush1.bf16.msra.mxu0 %v1548
    %4228 = vmatprep.subr.bf16.mxu0 %v1565
    %4229 = vmatpush1.bf16.msra.mxu0 %v1564
    %4230 = vmatprep.subr.bf16.mxu0 %v1581
    %4231 = vmatpush1.bf16.msra.mxu0 %v1580
    %4232 = vmatprep.subr.bf16.mxu0 %v1597
    %4233 = vmatpush1.bf16.msra.mxu0 %v1596
    %4234 = vmatprep.subr.bf16.mxu0 %v1613
    %4235 = vmatpush1.bf16.msra.mxu0 %v1612
    %4236 = vmatprep.mubr.bf16.mxu0 %v3916
    %4237 = vmatmul.mubr.bf16.gmra.mrb[0].mxu0 %v3915
    %v4238 = vpop.f32.mrb[0].mxu0
    %v4239 = vadd.f32 %v4198, %v4238
    %v4240 = vpop.f32.mrb[0].mxu0
    %v4241 = vadd.f32 %v4200, %v4240
    %v4242 = vpop.f32.mrb[0].mxu0
    %v4243 = vpop.f32.mrb[0].mxu0
    %4244 = vdwg.mxu0
    %4245 = vmatprep.subr.bf16.mxu0 %v1119
    %4246 = vmatpush1.bf16.msra.mxu0 %v1118
    %4247 = vmatprep.subr.bf16.mxu0 %v1135
    %4248 = vmatpush1.bf16.msra.mxu0 %v1134
    %4249 = vmatprep.subr.bf16.mxu0 %v1151
    %4250 = vmatpush1.bf16.msra.mxu0 %v1150
    %4251 = vmatprep.subr.bf16.mxu0 %v1167
    %4252 = vmatpush1.bf16.msra.mxu0 %v1166
    %4253 = vmatprep.subr.bf16.mxu0 %v1183
    %4254 = vmatpush1.bf16.msra.mxu0 %v1182
    %4255 = vmatprep.subr.bf16.mxu0 %v1199
    %4256 = vmatpush1.bf16.msra.mxu0 %v1198
    %4257 = vmatprep.subr.bf16.mxu0 %v1215
    %4258 = vmatpush1.bf16.msra.mxu0 %v1214
    %4259 = vmatprep.subr.bf16.mxu0 %v1231
    %4260 = vmatpush1.bf16.msra.mxu0 %v1230
    %4261 = vmatprep.subr.bf16.mxu0 %v1247
    %4262 = vmatpush1.bf16.msra.mxu0 %v1246
    %4263 = vmatprep.subr.bf16.mxu0 %v1263
    %4264 = vmatpush1.bf16.msra.mxu0 %v1262
    %4265 = vmatprep.subr.bf16.mxu0 %v1279
    %4266 = vmatpush1.bf16.msra.mxu0 %v1278
    %4267 = vmatprep.subr.bf16.mxu0 %v1295
    %4268 = vmatpush1.bf16.msra.mxu0 %v1294
    %4269 = vmatprep.subr.bf16.mxu0 %v1311
    %4270 = vmatpush1.bf16.msra.mxu0 %v1310
    %4271 = vmatprep.subr.bf16.mxu0 %v1327
    %4272 = vmatpush1.bf16.msra.mxu0 %v1326
    %4273 = vmatprep.subr.bf16.mxu0 %v1343
    %4274 = vmatpush1.bf16.msra.mxu0 %v1342
    %4275 = vmatprep.subr.bf16.mxu0 %v1359
    %4276 = vmatpush1.bf16.msra.mxu0 %v1358
    %4277 = vmatprep.mubr.bf16.mxu0 %v3914
    %4278 = vmatmul.mubr.bf16.gmra.mrb[0].mxu0 %v3913
    %v4279 = vpop.f32.mrb[0].mxu0
    %v4280 = vadd.f32 0.0, %v4279
    %v4281 = vpop.f32.mrb[0].mxu0
    %v4282 = vadd.f32 0.0, %v4281
    %v4283 = vpop.f32.mrb[0].mxu0
    %v4284 = vpop.f32.mrb[0].mxu0
    %4285 = vdwg.mxu0
    %4286 = vmatprep.subr.bf16.mxu0 %v1375
    %4287 = vmatpush1.bf16.msra.mxu0 %v1374
    %4288 = vmatprep.subr.bf16.mxu0 %v1391
    %4289 = vmatpush1.bf16.msra.mxu0 %v1390
    %4290 = vmatprep.subr.bf16.mxu0 %v1407
    %4291 = vmatpush1.bf16.msra.mxu0 %v1406
    %4292 = vmatprep.subr.bf16.mxu0 %v1423
    %4293 = vmatpush1.bf16.msra.mxu0 %v1422
    %4294 = vmatprep.subr.bf16.mxu0 %v1439
    %4295 = vmatpush1.bf16.msra.mxu0 %v1438
    %4296 = vmatprep.subr.bf16.mxu0 %v1455
    %4297 = vmatpush1.bf16.msra.mxu0 %v1454
    %4298 = vmatprep.subr.bf16.mxu0 %v1471
    %4299 = vmatpush1.bf16.msra.mxu0 %v1470
    %4300 = vmatprep.subr.bf16.mxu0 %v1487
    %4301 = vmatpush1.bf16.msra.mxu0 %v1486
    %4302 = vmatprep.subr.bf16.mxu0 %v1503
    %4303 = vmatpush1.bf16.msra.mxu0 %v1502
    %4304 = vmatprep.subr.bf16.mxu0 %v1519
    %4305 = vmatpush1.bf16.msra.mxu0 %v1518
    %4306 = vmatprep.subr.bf16.mxu0 %v1535
    %4307 = vmatpush1.bf16.msra.mxu0 %v1534
    %4308 = vmatprep.subr.bf16.mxu0 %v1551
    %4309 = vmatpush1.bf16.msra.mxu0 %v1550
    %4310 = vmatprep.subr.bf16.mxu0 %v1567
    %4311 = vmatpush1.bf16.msra.mxu0 %v1566
    %4312 = vmatprep.subr.bf16.mxu0 %v1583
    %4313 = vmatpush1.bf16.msra.mxu0 %v1582
    %4314 = vmatprep.subr.bf16.mxu0 %v1599
    %4315 = vmatpush1.bf16.msra.mxu0 %v1598
    %4316 = vmatprep.subr.bf16.mxu0 %v1615
    %4317 = vmatpush1.bf16.msra.mxu0 %v1614
    %4318 = vmatprep.mubr.bf16.mxu0 %v3916
    %4319 = vmatmul.mubr.bf16.gmra.mrb[0].mxu0 %v3915
    %v4320 = vpop.f32.mrb[0].mxu0
    %v4321 = vadd.f32 %v4280, %v4320
    %v4322 = vpop.f32.mrb[0].mxu0
    %v4323 = vadd.f32 %v4282, %v4322
    %v4324 = vpop.f32.mrb[0].mxu0
    %v4325 = vpop.f32.mrb[0].mxu0
    %4326 = vdwg.mxu0
    %4327 = vmatprep.subr.bf16.mxu0 %v1121
    %4328 = vmatpush1.bf16.msra.mxu0 %v1120
    %4329 = vmatprep.subr.bf16.mxu0 %v1137
    %4330 = vmatpush1.bf16.msra.mxu0 %v1136
    %4331 = vmatprep.subr.bf16.mxu0 %v1153
    %4332 = vmatpush1.bf16.msra.mxu0 %v1152
    %4333 = vmatprep.subr.bf16.mxu0 %v1169
    %4334 = vmatpush1.bf16.msra.mxu0 %v1168
    %4335 = vmatprep.subr.bf16.mxu0 %v1185
    %4336 = vmatpush1.bf16.msra.mxu0 %v1184
    %4337 = vmatprep.subr.bf16.mxu0 %v1201
    %4338 = vmatpush1.bf16.msra.mxu0 %v1200
    %4339 = vmatprep.subr.bf16.mxu0 %v1217
    %4340 = vmatpush1.bf16.msra.mxu0 %v1216
    %4341 = vmatprep.subr.bf16.mxu0 %v1233
    %4342 = vmatpush1.bf16.msra.mxu0 %v1232
    %4343 = vmatprep.subr.bf16.mxu0 %v1249
    %4344 = vmatpush1.bf16.msra.mxu0 %v1248
    %4345 = vmatprep.subr.bf16.mxu0 %v1265
    %4346 = vmatpush1.bf16.msra.mxu0 %v1264
    %4347 = vmatprep.subr.bf16.mxu0 %v1281
    %4348 = vmatpush1.bf16.msra.mxu0 %v1280
    %4349 = vmatprep.subr.bf16.mxu0 %v1297
    %4350 = vmatpush1.bf16.msra.mxu0 %v1296
    %4351 = vmatprep.subr.bf16.mxu0 %v1313
    %4352 = vmatpush1.bf16.msra.mxu0 %v1312
    %4353 = vmatprep.subr.bf16.mxu0 %v1329
    %4354 = vmatpush1.bf16.msra.mxu0 %v1328
    %4355 = vmatprep.subr.bf16.mxu0 %v1345
    %4356 = vmatpush1.bf16.msra.mxu0 %v1344
    %4357 = vmatprep.subr.bf16.mxu0 %v1361
    %4358 = vmatpush1.bf16.msra.mxu0 %v1360
    %4359 = vmatprep.mubr.bf16.mxu0 %v3914
    %4360 = vmatmul.mubr.bf16.gmra.mrb[0].mxu0 %v3913
    %v4361 = vpop.f32.mrb[0].mxu0
    %v4362 = vadd.f32 0.0, %v4361
    %v4363 = vpop.f32.mrb[0].mxu0
    %v4364 = vadd.f32 0.0, %v4363
    %v4365 = vpop.f32.mrb[0].mxu0
    %v4366 = vpop.f32.mrb[0].mxu0
    %4367 = vdwg.mxu0
    %4368 = vmatprep.subr.bf16.mxu0 %v1377
    %4369 = vmatpush1.bf16.msra.mxu0 %v1376
    %4370 = vmatprep.subr.bf16.mxu0 %v1393
    %4371 = vmatpush1.bf16.msra.mxu0 %v1392
    %4372 = vmatprep.subr.bf16.mxu0 %v1409
    %4373 = vmatpush1.bf16.msra.mxu0 %v1408
    %4374 = vmatprep.subr.bf16.mxu0 %v1425
    %4375 = vmatpush1.bf16.msra.mxu0 %v1424
    %4376 = vmatprep.subr.bf16.mxu0 %v1441
    %4377 = vmatpush1.bf16.msra.mxu0 %v1440
    %4378 = vmatprep.subr.bf16.mxu0 %v1457
    %4379 = vmatpush1.bf16.msra.mxu0 %v1456
    %4380 = vmatprep.subr.bf16.mxu0 %v1473
    %4381 = vmatpush1.bf16.msra.mxu0 %v1472
    %4382 = vmatprep.subr.bf16.mxu0 %v1489
    %4383 = vmatpush1.bf16.msra.mxu0 %v1488
    %4384 = vmatprep.subr.bf16.mxu0 %v1505
    %4385 = vmatpush1.bf16.msra.mxu0 %v1504
    %4386 = vmatprep.subr.bf16.mxu0 %v1521
    %4387 = vmatpush1.bf16.msra.mxu0 %v1520
    %4388 = vmatprep.subr.bf16.mxu0 %v1537
    %4389 = vmatpush1.bf16.msra.mxu0 %v1536
    %4390 = vmatprep.subr.bf16.mxu0 %v1553
    %4391 = vmatpush1.bf16.msra.mxu0 %v1552
    %4392 = vmatprep.subr.bf16.mxu0 %v1569
    %4393 = vmatpush1.bf16.msra.mxu0 %v1568
    %4394 = vmatprep.subr.bf16.mxu0 %v1585
    %4395 = vmatpush1.bf16.msra.mxu0 %v1584
    %4396 = vmatprep.subr.bf16.mxu0 %v1601
    %4397 = vmatpush1.bf16.msra.mxu0 %v1600
    %4398 = vmatprep.subr.bf16.mxu0 %v1617
    %4399 = vmatpush1.bf16.msra.mxu0 %v1616
    %4400 = vmatprep.mubr.bf16.mxu0 %v3916
    %4401 = vmatmul.mubr.bf16.gmra.mrb[0].mxu0 %v3915
    %v4402 = vpop.f32.mrb[0].mxu0
    %v4403 = vadd.f32 %v4362, %v4402
    %v4404 = vpop.f32.mrb[0].mxu0
    %v4405 = vadd.f32 %v4364, %v4404
    %v4406 = vpop.f32.mrb[0].mxu0
    %v4407 = vpop.f32.mrb[0].mxu0
    %4408 = vdwg.mxu0
    %4409 = vmatprep.subr.bf16.mxu0 %v1123
    %4410 = vmatpush1.bf16.msra.mxu0 %v1122
    %4411 = vmatprep.subr.bf16.mxu0 %v1139
    %4412 = vmatpush1.bf16.msra.mxu0 %v1138
    %4413 = vmatprep.subr.bf16.mxu0 %v1155
    %4414 = vmatpush1.bf16.msra.mxu0 %v1154
    %4415 = vmatprep.subr.bf16.mxu0 %v1171
    %4416 = vmatpush1.bf16.msra.mxu0 %v1170
    %4417 = vmatprep.subr.bf16.mxu0 %v1187
    %4418 = vmatpush1.bf16.msra.mxu0 %v1186
    %4419 = vmatprep.subr.bf16.mxu0 %v1203
    %4420 = vmatpush1.bf16.msra.mxu0 %v1202
    %4421 = vmatprep.subr.bf16.mxu0 %v1219
    %4422 = vmatpush1.bf16.msra.mxu0 %v1218
    %4423 = vmatprep.subr.bf16.mxu0 %v1235
    %4424 = vmatpush1.bf16.msra.mxu0 %v1234
    %4425 = vmatprep.subr.bf16.mxu0 %v1251
    %4426 = vmatpush1.bf16.msra.mxu0 %v1250
    %4427 = vmatprep.subr.bf16.mxu0 %v1267
    %4428 = vmatpush1.bf16.msra.mxu0 %v1266
    %4429 = vmatprep.subr.bf16.mxu0 %v1283
    %4430 = vmatpush1.bf16.msra.mxu0 %v1282
    %4431 = vmatprep.subr.bf16.mxu0 %v1299
    %4432 = vmatpush1.bf16.msra.mxu0 %v1298
    %4433 = vmatprep.subr.bf16.mxu0 %v1315
    %4434 = vmatpush1.bf16.msra.mxu0 %v1314
    %4435 = vmatprep.subr.bf16.mxu0 %v1331
    %4436 = vmatpush1.bf16.msra.mxu0 %v1330
    %4437 = vmatprep.subr.bf16.mxu0 %v1347
    %4438 = vmatpush1.bf16.msra.mxu0 %v1346
    %4439 = vmatprep.subr.bf16.mxu0 %v1363
    %4440 = vmatpush1.bf16.msra.mxu0 %v1362
    %4441 = vmatprep.mubr.bf16.mxu0 %v3914
    %4442 = vmatmul.mubr.bf16.gmra.mrb[0].mxu0 %v3913
    %v4443 = vpop.f32.mrb[0].mxu0
    %v4444 = vadd.f32 0.0, %v4443
    %v4445 = vpop.f32.mrb[0].mxu0
    %v4446 = vadd.f32 0.0, %v4445
    %v4447 = vpop.f32.mrb[0].mxu0
    %v4448 = vpop.f32.mrb[0].mxu0
    %4449 = vdwg.mxu0
    %4450 = vmatprep.subr.bf16.mxu0 %v1379
    %4451 = vmatpush1.bf16.msra.mxu0 %v1378
    %4452 = vmatprep.subr.bf16.mxu0 %v1395
    %4453 = vmatpush1.bf16.msra.mxu0 %v1394
    %4454 = vmatprep.subr.bf16.mxu0 %v1411
    %4455 = vmatpush1.bf16.msra.mxu0 %v1410
    %4456 = vmatprep.subr.bf16.mxu0 %v1427
    %4457 = vmatpush1.bf16.msra.mxu0 %v1426
    %4458 = vmatprep.subr.bf16.mxu0 %v1443
    %4459 = vmatpush1.bf16.msra.mxu0 %v1442
    %4460 = vmatprep.subr.bf16.mxu0 %v1459
    %4461 = vmatpush1.bf16.msra.mxu0 %v1458
    %4462 = vmatprep.subr.bf16.mxu0 %v1475
    %4463 = vmatpush1.bf16.msra.mxu0 %v1474
    %4464 = vmatprep.subr.bf16.mxu0 %v1491
    %4465 = vmatpush1.bf16.msra.mxu0 %v1490
    %4466 = vmatprep.subr.bf16.mxu0 %v1507
    %4467 = vmatpush1.bf16.msra.mxu0 %v1506
    %4468 = vmatprep.subr.bf16.mxu0 %v1523
    %4469 = vmatpush1.bf16.msra.mxu0 %v1522
    %4470 = vmatprep.subr.bf16.mxu0 %v1539
    %4471 = vmatpush1.bf16.msra.mxu0 %v1538
    %4472 = vmatprep.subr.bf16.mxu0 %v1555
    %4473 = vmatpush1.bf16.msra.mxu0 %v1554
    %4474 = vmatprep.subr.bf16.mxu0 %v1571
    %4475 = vmatpush1.bf16.msra.mxu0 %v1570
    %4476 = vmatprep.subr.bf16.mxu0 %v1587
    %4477 = vmatpush1.bf16.msra.mxu0 %v1586
    %4478 = vmatprep.subr.bf16.mxu0 %v1603
    %4479 = vmatpush1.bf16.msra.mxu0 %v1602
    %4480 = vmatprep.subr.bf16.mxu0 %v1619
    %4481 = vmatpush1.bf16.msra.mxu0 %v1618
    %4482 = vmatprep.mubr.bf16.mxu0 %v3916
    %4483 = vmatmul.mubr.bf16.gmra.mrb[0].mxu0 %v3915
    %v4484 = vpop.f32.mrb[0].mxu0
    %v4485 = vadd.f32 %v4444, %v4484
    %v4486 = vpop.f32.mrb[0].mxu0
    %v4487 = vadd.f32 %v4446, %v4486
    %v4488 = vpop.f32.mrb[0].mxu0
    %v4489 = vpop.f32.mrb[0].mxu0
    %4490 = vdwg.mxu0
    %4491 = vmatprep.subr.bf16.mxu0 %v1125
    %4492 = vmatpush1.bf16.msra.mxu0 %v1124
    %4493 = vmatprep.subr.bf16.mxu0 %v1141
    %4494 = vmatpush1.bf16.msra.mxu0 %v1140
    %4495 = vmatprep.subr.bf16.mxu0 %v1157
    %4496 = vmatpush1.bf16.msra.mxu0 %v1156
    %4497 = vmatprep.subr.bf16.mxu0 %v1173
    %4498 = vmatpush1.bf16.msra.mxu0 %v1172
    %4499 = vmatprep.subr.bf16.mxu0 %v1189
    %4500 = vmatpush1.bf16.msra.mxu0 %v1188
    %4501 = vmatprep.subr.bf16.mxu0 %v1205
    %4502 = vmatpush1.bf16.msra.mxu0 %v1204
    %4503 = vmatprep.subr.bf16.mxu0 %v1221
    %4504 = vmatpush1.bf16.msra.mxu0 %v1220
    %4505 = vmatprep.subr.bf16.mxu0 %v1237
    %4506 = vmatpush1.bf16.msra.mxu0 %v1236
    %4507 = vmatprep.subr.bf16.mxu0 %v1253
    %4508 = vmatpush1.bf16.msra.mxu0 %v1252
    %4509 = vmatprep.subr.bf16.mxu0 %v1269
    %4510 = vmatpush1.bf16.msra.mxu0 %v1268
    %4511 = vmatprep.subr.bf16.mxu0 %v1285
    %4512 = vmatpush1.bf16.msra.mxu0 %v1284
    %4513 = vmatprep.subr.bf16.mxu0 %v1301
    %4514 = vmatpush1.bf16.msra.mxu0 %v1300
    %4515 = vmatprep.subr.bf16.mxu0 %v1317
    %4516 = vmatpush1.bf16.msra.mxu0 %v1316
    %4517 = vmatprep.subr.bf16.mxu0 %v1333
    %4518 = vmatpush1.bf16.msra.mxu0 %v1332
    %4519 = vmatprep.subr.bf16.mxu0 %v1349
    %4520 = vmatpush1.bf16.msra.mxu0 %v1348
    %4521 = vmatprep.subr.bf16.mxu0 %v1365
    %4522 = vmatpush1.bf16.msra.mxu0 %v1364
    %4523 = vmatprep.mubr.bf16.mxu0 %v3914
    %4524 = vmatmul.mubr.bf16.gmra.mrb[0].mxu0 %v3913
    %v4525 = vpop.f32.mrb[0].mxu0
    %v4526 = vadd.f32 0.0, %v4525
    %v4527 = vpop.f32.mrb[0].mxu0
    %v4528 = vadd.f32 0.0, %v4527
    %v4529 = vpop.f32.mrb[0].mxu0
    %v4530 = vpop.f32.mrb[0].mxu0
    %4531 = vdwg.mxu0
    %4532 = vmatprep.subr.bf16.mxu0 %v1381
    %4533 = vmatpush1.bf16.msra.mxu0 %v1380
    %4534 = vmatprep.subr.bf16.mxu0 %v1397
    %4535 = vmatpush1.bf16.msra.mxu0 %v1396
    %4536 = vmatprep.subr.bf16.mxu0 %v1413
    %4537 = vmatpush1.bf16.msra.mxu0 %v1412
    %4538 = vmatprep.subr.bf16.mxu0 %v1429
    %4539 = vmatpush1.bf16.msra.mxu0 %v1428
    %4540 = vmatprep.subr.bf16.mxu0 %v1445
    %4541 = vmatpush1.bf16.msra.mxu0 %v1444
    %4542 = vmatprep.subr.bf16.mxu0 %v1461
    %4543 = vmatpush1.bf16.msra.mxu0 %v1460
    %4544 = vmatprep.subr.bf16.mxu0 %v1477
    %4545 = vmatpush1.bf16.msra.mxu0 %v1476
    %4546 = vmatprep.subr.bf16.mxu0 %v1493
    %4547 = vmatpush1.bf16.msra.mxu0 %v1492
    %4548 = vmatprep.subr.bf16.mxu0 %v1509
    %4549 = vmatpush1.bf16.msra.mxu0 %v1508
    %4550 = vmatprep.subr.bf16.mxu0 %v1525
    %4551 = vmatpush1.bf16.msra.mxu0 %v1524
    %4552 = vmatprep.subr.bf16.mxu0 %v1541
    %4553 = vmatpush1.bf16.msra.mxu0 %v1540
    %4554 = vmatprep.subr.bf16.mxu0 %v1557
    %4555 = vmatpush1.bf16.msra.mxu0 %v1556
    %4556 = vmatprep.subr.bf16.mxu0 %v1573
    %4557 = vmatpush1.bf16.msra.mxu0 %v1572
    %4558 = vmatprep.subr.bf16.mxu0 %v1589
    %4559 = vmatpush1.bf16.msra.mxu0 %v1588
    %4560 = vmatprep.subr.bf16.mxu0 %v1605
    %4561 = vmatpush1.bf16.msra.mxu0 %v1604
    %4562 = vmatprep.subr.bf16.mxu0 %v1621
    %4563 = vmatpush1.bf16.msra.mxu0 %v1620
    %4564 = vmatprep.mubr.bf16.mxu0 %v3916
    %4565 = vmatmul.mubr.bf16.gmra.mrb[0].mxu0 %v3915
    %v4566 = vpop.f32.mrb[0].mxu0
    %v4567 = vadd.f32 %v4526, %v4566
    %v4568 = vpop.f32.mrb[0].mxu0
    %v4569 = vadd.f32 %v4528, %v4568
    %v4570 = vpop.f32.mrb[0].mxu0
    %v4571 = vpop.f32.mrb[0].mxu0
    %4572 = vdwg.mxu0
    %v4573 = vadd.f32 %v3897, %v3993
    %v4574 = vadd.f32 %v3898, %v3995
    %v4575 = vadd.f32 %v3899, %v4075
    %v4576 = vadd.f32 %v3900, %v4077
    %v4577 = vadd.f32 %v3901, %v4157
    %v4578 = vadd.f32 %v3902, %v4159
    %v4579 = vadd.f32 %v3903, %v4239
    %v4580 = vadd.f32 %v3904, %v4241
    %v4581 = vadd.f32 %v3905, %v4321
    %v4582 = vadd.f32 %v3906, %v4323
    %v4583 = vadd.f32 %v3907, %v4403
    %v4584 = vadd.f32 %v3908, %v4405
    %v4585 = vadd.f32 %v3909, %v4485
    %v4586 = vadd.f32 %v3910, %v4487
    %v4587 = vadd.f32 %v3911, %v4567
    %v4588 = vadd.f32 %v3912, %v4569
    %v4589 = vmul.f32 %v4573, 0.5
    %v4590 = vmul.f32 %v4574, 0.5
    %v4591 = vmul.f32 %v4575, 0.5
    %v4592 = vmul.f32 %v4576, 0.5
    %v4593 = vtanh.pop %v4589
    %v4594 = vtanh.pop %v4590
    %v4595 = vtanh.pop %v4591
    %v4596 = vtanh.pop %v4592
    %v4597 = vmul.f32 %v4593, 0.5
    %v4598 = vmul.f32 %v4594, 0.5
    %v4599 = vmul.f32 %v4595, 0.5
    %v4600 = vmul.f32 %v4596, 0.5
    %v4601 = vadd.f32 %v4597, 0.5
    %v4602 = vadd.f32 %v4598, 0.5
    %v4603 = vadd.f32 %v4599, 0.5
    %v4604 = vadd.f32 %v4600, 0.5
    %v4605 = vmul.f32 %v4577, 0.5
    %v4606 = vmul.f32 %v4578, 0.5
    %v4607 = vmul.f32 %v4579, 0.5
    %v4608 = vmul.f32 %v4580, 0.5
    %v4609 = vtanh.pop %v4605
    %v4610 = vtanh.pop %v4606
    %v4611 = vtanh.pop %v4607
    %v4612 = vtanh.pop %v4608
    %v4613 = vmul.f32 %v4609, 0.5
    %v4614 = vmul.f32 %v4610, 0.5
    %v4615 = vmul.f32 %v4611, 0.5
    %v4616 = vmul.f32 %v4612, 0.5
    %v4617 = vadd.f32 %v4613, 0.5
    %v4618 = vadd.f32 %v4614, 0.5
    %v4619 = vadd.f32 %v4615, 0.5
    %v4620 = vadd.f32 %v4616, 0.5
    %v4621 = vtanh.pop %v4581
    %v4622 = vtanh.pop %v4582
    %v4623 = vtanh.pop %v4583
    %v4624 = vtanh.pop %v4584
    %v4625 = vmul.f32 %v4585, 0.5
    %v4626 = vmul.f32 %v4586, 0.5
    %v4627 = vmul.f32 %v4587, 0.5
    %v4628 = vmul.f32 %v4588, 0.5
    %v4629 = vtanh.pop %v4625
    %v4630 = vtanh.pop %v4626
    %v4631 = vtanh.pop %v4627
    %v4632 = vtanh.pop %v4628
    %v4633 = vmul.f32 %v4629, 0.5
    %v4634 = vmul.f32 %v4630, 0.5
    %v4635 = vmul.f32 %v4631, 0.5
    %v4636 = vmul.f32 %v4632, 0.5
    %v4637 = vadd.f32 %v4633, 0.5
    %v4638 = vadd.f32 %v4634, 0.5
    %v4639 = vadd.f32 %v4635, 0.5
    %v4640 = vadd.f32 %v4636, 0.5
    %v4641 = vmul.f32 %v4617, %v3884
    %v4642 = vmul.f32 %v4618, %v3885
    %v4643 = vmul.f32 %v4619, %v3886
    %v4644 = vmul.f32 %v4620, %v3887
    %v4645 = vmul.f32 %v4601, %v4621
    %v4646 = vmul.f32 %v4602, %v4622
    %v4647 = vmul.f32 %v4603, %v4623
    %v4648 = vmul.f32 %v4604, %v4624
    %v4649 = vadd.f32 %v4641, %v4645
    %v4650 = vadd.f32 %v4642, %v4646
    %v4651 = vadd.f32 %v4643, %v4647
    %v4652 = vadd.f32 %v4644, %v4648
    %v4653 = vtanh.pop %v4649
    %v4654 = vtanh.pop %v4650
    %v4655 = vtanh.pop %v4651
    %v4656 = vtanh.pop %v4652
    %v4657 = vmul.f32 %v4637, %v4653
    %v4658 = vmul.f32 %v4638, %v4654
    %v4659 = vmul.f32 %v4639, %v4655
    %v4660 = vmul.f32 %v4640, %v4656
    %s4661 = scalar_lea.vmem [#allocation5], 512
    %v4662 = vld [vmem:[%s4661] sm:$0xff]
    %v4663 = vld [vmem:[%s4661 + $0x8] sm:$0xff]
    %v4664 = vld [vmem:[%s4661 + $0x10] sm:$0xff]
    %v4665 = vld [vmem:[%s4661 + $0x18] sm:$0xff]
    %v4666 = vld [vmem:[%s4661 + $0x20] sm:$0xff]
    %v4667 = vld [vmem:[%s4661 + $0x28] sm:$0xff]
    %v4668 = vld [vmem:[%s4661 + $0x30] sm:$0xff]
    %v4669 = vld [vmem:[%s4661 + $0x38] sm:$0xff]
    %v4670 = vld [vmem:[%s4661 + $0x40] sm:$0xff]
    %v4671 = vld [vmem:[%s4661 + $0x48] sm:$0xff]
    %v4672 = vld [vmem:[%s4661 + $0x50] sm:$0xff]
    %v4673 = vld [vmem:[%s4661 + $0x58] sm:$0xff]
    %v4674 = vld [vmem:[%s4661 + $0x60] sm:$0xff]
    %v4675 = vld [vmem:[%s4661 + $0x68] sm:$0xff]
    %v4676 = vld [vmem:[%s4661 + $0x70] sm:$0xff]
    %v4677 = vld [vmem:[%s4661 + $0x78] sm:$0xff]
    %v4678 = vpack.c.bf16 %v4657, %v4657
    %v4679 = vpack.c.bf16 %v4658, %v4658
    %v4680 = vpack.c.bf16 %v4659, %v4659
    %v4681 = vpack.c.bf16 %v4660, %v4660
    %4682 = vmatprep.subr.bf16.mxu0 %v1111
    %4683 = vmatpush1.bf16.msra.mxu0 %v1110
    %4684 = vmatprep.subr.bf16.mxu0 %v1127
    %4685 = vmatpush1.bf16.msra.mxu0 %v1126
    %4686 = vmatprep.subr.bf16.mxu0 %v1143
    %4687 = vmatpush1.bf16.msra.mxu0 %v1142
    %4688 = vmatprep.subr.bf16.mxu0 %v1159
    %4689 = vmatpush1.bf16.msra.mxu0 %v1158
    %4690 = vmatprep.subr.bf16.mxu0 %v1175
    %4691 = vmatpush1.bf16.msra.mxu0 %v1174
    %4692 = vmatprep.subr.bf16.mxu0 %v1191
    %4693 = vmatpush1.bf16.msra.mxu0 %v1190
    %4694 = vmatprep.subr.bf16.mxu0 %v1207
    %4695 = vmatpush1.bf16.msra.mxu0 %v1206
    %4696 = vmatprep.subr.bf16.mxu0 %v1223
    %4697 = vmatpush1.bf16.msra.mxu0 %v1222
    %4698 = vmatprep.subr.bf16.mxu0 %v1239
    %4699 = vmatpush1.bf16.msra.mxu0 %v1238
    %4700 = vmatprep.subr.bf16.mxu0 %v1255
    %4701 = vmatpush1.bf16.msra.mxu0 %v1254
    %4702 = vmatprep.subr.bf16.mxu0 %v1271
    %4703 = vmatpush1.bf16.msra.mxu0 %v1270
    %4704 = vmatprep.subr.bf16.mxu0 %v1287
    %4705 = vmatpush1.bf16.msra.mxu0 %v1286
    %4706 = vmatprep.subr.bf16.mxu0 %v1303
    %4707 = vmatpush1.bf16.msra.mxu0 %v1302
    %4708 = vmatprep.subr.bf16.mxu0 %v1319
    %4709 = vmatpush1.bf16.msra.mxu0 %v1318
    %4710 = vmatprep.subr.bf16.mxu0 %v1335
    %4711 = vmatpush1.bf16.msra.mxu0 %v1334
    %4712 = vmatprep.subr.bf16.mxu0 %v1351
    %4713 = vmatpush1.bf16.msra.mxu0 %v1350
    %4714 = vmatprep.mubr.bf16.mxu0 %v4679
    %4715 = vmatmul.mubr.bf16.gmra.mrb[0].mxu0 %v4678
    %v4716 = vpop.f32.mrb[0].mxu0
    %v4717 = vadd.f32 0.0, %v4716
    %v4718 = vpop.f32.mrb[0].mxu0
    %v4719 = vadd.f32 0.0, %v4718
    %v4720 = vpop.f32.mrb[0].mxu0
    %v4721 = vpop.f32.mrb[0].mxu0
    %4722 = vdwg.mxu0
    %4723 = vmatprep.subr.bf16.mxu0 %v1367
    %4724 = vmatpush1.bf16.msra.mxu0 %v1366
    %4725 = vmatprep.subr.bf16.mxu0 %v1383
    %4726 = vmatpush1.bf16.msra.mxu0 %v1382
    %4727 = vmatprep.subr.bf16.mxu0 %v1399
    %4728 = vmatpush1.bf16.msra.mxu0 %v1398
    %4729 = vmatprep.subr.bf16.mxu0 %v1415
    %4730 = vmatpush1.bf16.msra.mxu0 %v1414
    %4731 = vmatprep.subr.bf16.mxu0 %v1431
    %4732 = vmatpush1.bf16.msra.mxu0 %v1430
    %4733 = vmatprep.subr.bf16.mxu0 %v1447
    %4734 = vmatpush1.bf16.msra.mxu0 %v1446
    %4735 = vmatprep.subr.bf16.mxu0 %v1463
    %4736 = vmatpush1.bf16.msra.mxu0 %v1462
    %4737 = vmatprep.subr.bf16.mxu0 %v1479
    %4738 = vmatpush1.bf16.msra.mxu0 %v1478
    %4739 = vmatprep.subr.bf16.mxu0 %v1495
    %4740 = vmatpush1.bf16.msra.mxu0 %v1494
    %4741 = vmatprep.subr.bf16.mxu0 %v1511
    %4742 = vmatpush1.bf16.msra.mxu0 %v1510
    %4743 = vmatprep.subr.bf16.mxu0 %v1527
    %4744 = vmatpush1.bf16.msra.mxu0 %v1526
    %4745 = vmatprep.subr.bf16.mxu0 %v1543
    %4746 = vmatpush1.bf16.msra.mxu0 %v1542
    %4747 = vmatprep.subr.bf16.mxu0 %v1559
    %4748 = vmatpush1.bf16.msra.mxu0 %v1558
    %4749 = vmatprep.subr.bf16.mxu0 %v1575
    %4750 = vmatpush1.bf16.msra.mxu0 %v1574
    %4751 = vmatprep.subr.bf16.mxu0 %v1591
    %4752 = vmatpush1.bf16.msra.mxu0 %v1590
    %4753 = vmatprep.subr.bf16.mxu0 %v1607
    %4754 = vmatpush1.bf16.msra.mxu0 %v1606
    %4755 = vmatprep.mubr.bf16.mxu0 %v4681
    %4756 = vmatmul.mubr.bf16.gmra.mrb[0].mxu0 %v4680
    %v4757 = vpop.f32.mrb[0].mxu0
    %v4758 = vadd.f32 %v4717, %v4757
    %v4759 = vpop.f32.mrb[0].mxu0
    %v4760 = vadd.f32 %v4719, %v4759
    %v4761 = vpop.f32.mrb[0].mxu0
    %v4762 = vpop.f32.mrb[0].mxu0
    %4763 = vdwg.mxu0
    %4764 = vmatprep.subr.bf16.mxu0 %v1113
    %4765 = vmatpush1.bf16.msra.mxu0 %v1112
    %4766 = vmatprep.subr.bf16.mxu0 %v1129
    %4767 = vmatpush1.bf16.msra.mxu0 %v1128
    %4768 = vmatprep.subr.bf16.mxu0 %v1145
    %4769 = vmatpush1.bf16.msra.mxu0 %v1144
    %4770 = vmatprep.subr.bf16.mxu0 %v1161
    %4771 = vmatpush1.bf16.msra.mxu0 %v1160
    %4772 = vmatprep.subr.bf16.mxu0 %v1177
    %4773 = vmatpush1.bf16.msra.mxu0 %v1176
    %4774 = vmatprep.subr.bf16.mxu0 %v1193
    %4775 = vmatpush1.bf16.msra.mxu0 %v1192
    %4776 = vmatprep.subr.bf16.mxu0 %v1209
    %4777 = vmatpush1.bf16.msra.mxu0 %v1208
    %4778 = vmatprep.subr.bf16.mxu0 %v1225
    %4779 = vmatpush1.bf16.msra.mxu0 %v1224
    %4780 = vmatprep.subr.bf16.mxu0 %v1241
    %4781 = vmatpush1.bf16.msra.mxu0 %v1240
    %4782 = vmatprep.subr.bf16.mxu0 %v1257
    %4783 = vmatpush1.bf16.msra.mxu0 %v1256
    %4784 = vmatprep.subr.bf16.mxu0 %v1273
    %4785 = vmatpush1.bf16.msra.mxu0 %v1272
    %4786 = vmatprep.subr.bf16.mxu0 %v1289
    %4787 = vmatpush1.bf16.msra.mxu0 %v1288
    %4788 = vmatprep.subr.bf16.mxu0 %v1305
    %4789 = vmatpush1.bf16.msra.mxu0 %v1304
    %4790 = vmatprep.subr.bf16.mxu0 %v1321
    %4791 = vmatpush1.bf16.msra.mxu0 %v1320
    %4792 = vmatprep.subr.bf16.mxu0 %v1337
    %4793 = vmatpush1.bf16.msra.mxu0 %v1336
    %4794 = vmatprep.subr.bf16.mxu0 %v1353
    %4795 = vmatpush1.bf16.msra.mxu0 %v1352
    %4796 = vmatprep.mubr.bf16.mxu0 %v4679
    %4797 = vmatmul.mubr.bf16.gmra.mrb[0].mxu0 %v4678
    %v4798 = vpop.f32.mrb[0].mxu0
    %v4799 = vadd.f32 0.0, %v4798
    %v4800 = vpop.f32.mrb[0].mxu0
    %v4801 = vadd.f32 0.0, %v4800
    %v4802 = vpop.f32.mrb[0].mxu0
    %v4803 = vpop.f32.mrb[0].mxu0
    %4804 = vdwg.mxu0
    %4805 = vmatprep.subr.bf16.mxu0 %v1369
    %4806 = vmatpush1.bf16.msra.mxu0 %v1368
    %4807 = vmatprep.subr.bf16.mxu0 %v1385
    %4808 = vmatpush1.bf16.msra.mxu0 %v1384
    %4809 = vmatprep.subr.bf16.mxu0 %v1401
    %4810 = vmatpush1.bf16.msra.mxu0 %v1400
    %4811 = vmatprep.subr.bf16.mxu0 %v1417
    %4812 = vmatpush1.bf16.msra.mxu0 %v1416
    %4813 = vmatprep.subr.bf16.mxu0 %v1433
    %4814 = vmatpush1.bf16.msra.mxu0 %v1432
    %4815 = vmatprep.subr.bf16.mxu0 %v1449
    %4816 = vmatpush1.bf16.msra.mxu0 %v1448
    %4817 = vmatprep.subr.bf16.mxu0 %v1465
    %4818 = vmatpush1.bf16.msra.mxu0 %v1464
    %4819 = vmatprep.subr.bf16.mxu0 %v1481
    %4820 = vmatpush1.bf16.msra.mxu0 %v1480
    %4821 = vmatprep.subr.bf16.mxu0 %v1497
    %4822 = vmatpush1.bf16.msra.mxu0 %v1496
    %4823 = vmatprep.subr.bf16.mxu0 %v1513
    %4824 = vmatpush1.bf16.msra.mxu0 %v1512
    %4825 = vmatprep.subr.bf16.mxu0 %v1529
    %4826 = vmatpush1.bf16.msra.mxu0 %v1528
    %4827 = vmatprep.subr.bf16.mxu0 %v1545
    %4828 = vmatpush1.bf16.msra.mxu0 %v1544
    %4829 = vmatprep.subr.bf16.mxu0 %v1561
    %4830 = vmatpush1.bf16.msra.mxu0 %v1560
    %4831 = vmatprep.subr.bf16.mxu0 %v1577
    %4832 = vmatpush1.bf16.msra.mxu0 %v1576
    %4833 = vmatprep.subr.bf16.mxu0 %v1593
    %4834 = vmatpush1.bf16.msra.mxu0 %v1592
    %4835 = vmatprep.subr.bf16.mxu0 %v1609
    %4836 = vmatpush1.bf16.msra.mxu0 %v1608
    %4837 = vmatprep.mubr.bf16.mxu0 %v4681
    %4838 = vmatmul.mubr.bf16.gmra.mrb[0].mxu0 %v4680
    %v4839 = vpop.f32.mrb[0].mxu0
    %v4840 = vadd.f32 %v4799, %v4839
    %v4841 = vpop.f32.mrb[0].mxu0
    %v4842 = vadd.f32 %v4801, %v4841
    %v4843 = vpop.f32.mrb[0].mxu0
    %v4844 = vpop.f32.mrb[0].mxu0
    %4845 = vdwg.mxu0
    %4846 = vmatprep.subr.bf16.mxu0 %v1115
    %4847 = vmatpush1.bf16.msra.mxu0 %v1114
    %4848 = vmatprep.subr.bf16.mxu0 %v1131
    %4849 = vmatpush1.bf16.msra.mxu0 %v1130
    %4850 = vmatprep.subr.bf16.mxu0 %v1147
    %4851 = vmatpush1.bf16.msra.mxu0 %v1146
    %4852 = vmatprep.subr.bf16.mxu0 %v1163
    %4853 = vmatpush1.bf16.msra.mxu0 %v1162
    %4854 = vmatprep.subr.bf16.mxu0 %v1179
    %4855 = vmatpush1.bf16.msra.mxu0 %v1178
    %4856 = vmatprep.subr.bf16.mxu0 %v1195
    %4857 = vmatpush1.bf16.msra.mxu0 %v1194
    %4858 = vmatprep.subr.bf16.mxu0 %v1211
    %4859 = vmatpush1.bf16.msra.mxu0 %v1210
    %4860 = vmatprep.subr.bf16.mxu0 %v1227
    %4861 = vmatpush1.bf16.msra.mxu0 %v1226
    %4862 = vmatprep.subr.bf16.mxu0 %v1243
    %4863 = vmatpush1.bf16.msra.mxu0 %v1242
    %4864 = vmatprep.subr.bf16.mxu0 %v1259
    %4865 = vmatpush1.bf16.msra.mxu0 %v1258
    %4866 = vmatprep.subr.bf16.mxu0 %v1275
    %4867 = vmatpush1.bf16.msra.mxu0 %v1274
    %4868 = vmatprep.subr.bf16.mxu0 %v1291
    %4869 = vmatpush1.bf16.msra.mxu0 %v1290
    %4870 = vmatprep.subr.bf16.mxu0 %v1307
    %4871 = vmatpush1.bf16.msra.mxu0 %v1306
    %4872 = vmatprep.subr.bf16.mxu0 %v1323
    %4873 = vmatpush1.bf16.msra.mxu0 %v1322
    %4874 = vmatprep.subr.bf16.mxu0 %v1339
    %4875 = vmatpush1.bf16.msra.mxu0 %v1338
    %4876 = vmatprep.subr.bf16.mxu0 %v1355
    %4877 = vmatpush1.bf16.msra.mxu0 %v1354
    %4878 = vmatprep.mubr.bf16.mxu0 %v4679
    %4879 = vmatmul.mubr.bf16.gmra.mrb[0].mxu0 %v4678
    %v4880 = vpop.f32.mrb[0].mxu0
    %v4881 = vadd.f32 0.0, %v4880
    %v4882 = vpop.f32.mrb[0].mxu0
    %v4883 = vadd.f32 0.0, %v4882
    %v4884 = vpop.f32.mrb[0].mxu0
    %v4885 = vpop.f32.mrb[0].mxu0
    %4886 = vdwg.mxu0
    %4887 = vmatprep.subr.bf16.mxu0 %v1371
    %4888 = vmatpush1.bf16.msra.mxu0 %v1370
    %4889 = vmatprep.subr.bf16.mxu0 %v1387
    %4890 = vmatpush1.bf16.msra.mxu0 %v1386
    %4891 = vmatprep.subr.bf16.mxu0 %v1403
    %4892 = vmatpush1.bf16.msra.mxu0 %v1402
    %4893 = vmatprep.subr.bf16.mxu0 %v1419
    %4894 = vmatpush1.bf16.msra.mxu0 %v1418
    %4895 = vmatprep.subr.bf16.mxu0 %v1435
    %4896 = vmatpush1.bf16.msra.mxu0 %v1434
    %4897 = vmatprep.subr.bf16.mxu0 %v1451
    %4898 = vmatpush1.bf16.msra.mxu0 %v1450
    %4899 = vmatprep.subr.bf16.mxu0 %v1467
    %4900 = vmatpush1.bf16.msra.mxu0 %v1466
    %4901 = vmatprep.subr.bf16.mxu0 %v1483
    %4902 = vmatpush1.bf16.msra.mxu0 %v1482
    %4903 = vmatprep.subr.bf16.mxu0 %v1499
    %4904 = vmatpush1.bf16.msra.mxu0 %v1498
    %4905 = vmatprep.subr.bf16.mxu0 %v1515
    %4906 = vmatpush1.bf16.msra.mxu0 %v1514
    %4907 = vmatprep.subr.bf16.mxu0 %v1531
    %4908 = vmatpush1.bf16.msra.mxu0 %v1530
    %4909 = vmatprep.subr.bf16.mxu0 %v1547
    %4910 = vmatpush1.bf16.msra.mxu0 %v1546
    %4911 = vmatprep.subr.bf16.mxu0 %v1563
    %4912 = vmatpush1.bf16.msra.mxu0 %v1562
    %4913 = vmatprep.subr.bf16.mxu0 %v1579
    %4914 = vmatpush1.bf16.msra.mxu0 %v1578
    %4915 = vmatprep.subr.bf16.mxu0 %v1595
    %4916 = vmatpush1.bf16.msra.mxu0 %v1594
    %4917 = vmatprep.subr.bf16.mxu0 %v1611
    %4918 = vmatpush1.bf16.msra.mxu0 %v1610
    %4919 = vmatprep.mubr.bf16.mxu0 %v4681
    %4920 = vmatmul.mubr.bf16.gmra.mrb[0].mxu0 %v4680
    %v4921 = vpop.f32.mrb[0].mxu0
    %v4922 = vadd.f32 %v4881, %v4921
    %v4923 = vpop.f32.mrb[0].mxu0
    %v4924 = vadd.f32 %v4883, %v4923
    %v4925 = vpop.f32.mrb[0].mxu0
    %v4926 = vpop.f32.mrb[0].mxu0
    %4927 = vdwg.mxu0
    %4928 = vmatprep.subr.bf16.mxu0 %v1117
    %4929 = vmatpush1.bf16.msra.mxu0 %v1116
    %4930 = vmatprep.subr.bf16.mxu0 %v1133
    %4931 = vmatpush1.bf16.msra.mxu0 %v1132
    %4932 = vmatprep.subr.bf16.mxu0 %v1149
    %4933 = vmatpush1.bf16.msra.mxu0 %v1148
    %4934 = vmatprep.subr.bf16.mxu0 %v1165
    %4935 = vmatpush1.bf16.msra.mxu0 %v1164
    %4936 = vmatprep.subr.bf16.mxu0 %v1181
    %4937 = vmatpush1.bf16.msra.mxu0 %v1180
    %4938 = vmatprep.subr.bf16.mxu0 %v1197
    %4939 = vmatpush1.bf16.msra.mxu0 %v1196
    %4940 = vmatprep.subr.bf16.mxu0 %v1213
    %4941 = vmatpush1.bf16.msra.mxu0 %v1212
    %4942 = vmatprep.subr.bf16.mxu0 %v1229
    %4943 = vmatpush1.bf16.msra.mxu0 %v1228
    %4944 = vmatprep.subr.bf16.mxu0 %v1245
    %4945 = vmatpush1.bf16.msra.mxu0 %v1244
    %4946 = vmatprep.subr.bf16.mxu0 %v1261
    %4947 = vmatpush1.bf16.msra.mxu0 %v1260
    %4948 = vmatprep.subr.bf16.mxu0 %v1277
    %4949 = vmatpush1.bf16.msra.mxu0 %v1276
    %4950 = vmatprep.subr.bf16.mxu0 %v1293
    %4951 = vmatpush1.bf16.msra.mxu0 %v1292
    %4952 = vmatprep.subr.bf16.mxu0 %v1309
    %4953 = vmatpush1.bf16.msra.mxu0 %v1308
    %4954 = vmatprep.subr.bf16.mxu0 %v1325
    %4955 = vmatpush1.bf16.msra.mxu0 %v1324
    %4956 = vmatprep.subr.bf16.mxu0 %v1341
    %4957 = vmatpush1.bf16.msra.mxu0 %v1340
    %4958 = vmatprep.subr.bf16.mxu0 %v1357
    %4959 = vmatpush1.bf16.msra.mxu0 %v1356
    %4960 = vmatprep.mubr.bf16.mxu0 %v4679
    %4961 = vmatmul.mubr.bf16.gmra.mrb[0].mxu0 %v4678
    %v4962 = vpop.f32.mrb[0].mxu0
    %v4963 = vadd.f32 0.0, %v4962
    %v4964 = vpop.f32.mrb[0].mxu0
    %v4965 = vadd.f32 0.0, %v4964
    %v4966 = vpop.f32.mrb[0].mxu0
    %v4967 = vpop.f32.mrb[0].mxu0
    %4968 = vdwg.mxu0
    %4969 = vmatprep.subr.bf16.mxu0 %v1373
    %4970 = vmatpush1.bf16.msra.mxu0 %v1372
    %4971 = vmatprep.subr.bf16.mxu0 %v1389
    %4972 = vmatpush1.bf16.msra.mxu0 %v1388
    %4973 = vmatprep.subr.bf16.mxu0 %v1405
    %4974 = vmatpush1.bf16.msra.mxu0 %v1404
    %4975 = vmatprep.subr.bf16.mxu0 %v1421
    %4976 = vmatpush1.bf16.msra.mxu0 %v1420
    %4977 = vmatprep.subr.bf16.mxu0 %v1437
    %4978 = vmatpush1.bf16.msra.mxu0 %v1436
    %4979 = vmatprep.subr.bf16.mxu0 %v1453
    %4980 = vmatpush1.bf16.msra.mxu0 %v1452
    %4981 = vmatprep.subr.bf16.mxu0 %v1469
    %4982 = vmatpush1.bf16.msra.mxu0 %v1468
    %4983 = vmatprep.subr.bf16.mxu0 %v1485
    %4984 = vmatpush1.bf16.msra.mxu0 %v1484
    %4985 = vmatprep.subr.bf16.mxu0 %v1501
    %4986 = vmatpush1.bf16.msra.mxu0 %v1500
    %4987 = vmatprep.subr.bf16.mxu0 %v1517
    %4988 = vmatpush1.bf16.msra.mxu0 %v1516
    %4989 = vmatprep.subr.bf16.mxu0 %v1533
    %4990 = vmatpush1.bf16.msra.mxu0 %v1532
    %4991 = vmatprep.subr.bf16.mxu0 %v1549
    %4992 = vmatpush1.bf16.msra.mxu0 %v1548
    %4993 = vmatprep.subr.bf16.mxu0 %v1565
    %4994 = vmatpush1.bf16.msra.mxu0 %v1564
    %4995 = vmatprep.subr.bf16.mxu0 %v1581
    %4996 = vmatpush1.bf16.msra.mxu0 %v1580
    %4997 = vmatprep.subr.bf16.mxu0 %v1597
    %4998 = vmatpush1.bf16.msra.mxu0 %v1596
    %4999 = vmatprep.subr.bf16.mxu0 %v1613
    %5000 = vmatpush1.bf16.msra.mxu0 %v1612
    %5001 = vmatprep.mubr.bf16.mxu0 %v4681
    %5002 = vmatmul.mubr.bf16.gmra.mrb[0].mxu0 %v4680
    %v5003 = vpop.f32.mrb[0].mxu0
    %v5004 = vadd.f32 %v4963, %v5003
    %v5005 = vpop.f32.mrb[0].mxu0
    %v5006 = vadd.f32 %v4965, %v5005
    %v5007 = vpop.f32.mrb[0].mxu0
    %v5008 = vpop.f32.mrb[0].mxu0
    %5009 = vdwg.mxu0
    %5010 = vmatprep.subr.bf16.mxu0 %v1119
    %5011 = vmatpush1.bf16.msra.mxu0 %v1118
    %5012 = vmatprep.subr.bf16.mxu0 %v1135
    %5013 = vmatpush1.bf16.msra.mxu0 %v1134
    %5014 = vmatprep.subr.bf16.mxu0 %v1151
    %5015 = vmatpush1.bf16.msra.mxu0 %v1150
    %5016 = vmatprep.subr.bf16.mxu0 %v1167
    %5017 = vmatpush1.bf16.msra.mxu0 %v1166
    %5018 = vmatprep.subr.bf16.mxu0 %v1183
    %5019 = vmatpush1.bf16.msra.mxu0 %v1182
    %5020 = vmatprep.subr.bf16.mxu0 %v1199
    %5021 = vmatpush1.bf16.msra.mxu0 %v1198
    %5022 = vmatprep.subr.bf16.mxu0 %v1215
    %5023 = vmatpush1.bf16.msra.mxu0 %v1214
    %5024 = vmatprep.subr.bf16.mxu0 %v1231
    %5025 = vmatpush1.bf16.msra.mxu0 %v1230
    %5026 = vmatprep.subr.bf16.mxu0 %v1247
    %5027 = vmatpush1.bf16.msra.mxu0 %v1246
    %5028 = vmatprep.subr.bf16.mxu0 %v1263
    %5029 = vmatpush1.bf16.msra.mxu0 %v1262
    %5030 = vmatprep.subr.bf16.mxu0 %v1279
    %5031 = vmatpush1.bf16.msra.mxu0 %v1278
    %5032 = vmatprep.subr.bf16.mxu0 %v1295
    %5033 = vmatpush1.bf16.msra.mxu0 %v1294
    %5034 = vmatprep.subr.bf16.mxu0 %v1311
    %5035 = vmatpush1.bf16.msra.mxu0 %v1310
    %5036 = vmatprep.subr.bf16.mxu0 %v1327
    %5037 = vmatpush1.bf16.msra.mxu0 %v1326
    %5038 = vmatprep.subr.bf16.mxu0 %v1343
    %5039 = vmatpush1.bf16.msra.mxu0 %v1342
    %5040 = vmatprep.subr.bf16.mxu0 %v1359
    %5041 = vmatpush1.bf16.msra.mxu0 %v1358
    %5042 = vmatprep.mubr.bf16.mxu0 %v4679
    %5043 = vmatmul.mubr.bf16.gmra.mrb[0].mxu0 %v4678
    %v5044 = vpop.f32.mrb[0].mxu0
    %v5045 = vadd.f32 0.0, %v5044
    %v5046 = vpop.f32.mrb[0].mxu0
    %v5047 = vadd.f32 0.0, %v5046
    %v5048 = vpop.f32.mrb[0].mxu0
    %v5049 = vpop.f32.mrb[0].mxu0
    %5050 = vdwg.mxu0
    %5051 = vmatprep.subr.bf16.mxu0 %v1375
    %5052 = vmatpush1.bf16.msra.mxu0 %v1374
    %5053 = vmatprep.subr.bf16.mxu0 %v1391
    %5054 = vmatpush1.bf16.msra.mxu0 %v1390
    %5055 = vmatprep.subr.bf16.mxu0 %v1407
    %5056 = vmatpush1.bf16.msra.mxu0 %v1406
    %5057 = vmatprep.subr.bf16.mxu0 %v1423
    %5058 = vmatpush1.bf16.msra.mxu0 %v1422
    %5059 = vmatprep.subr.bf16.mxu0 %v1439
    %5060 = vmatpush1.bf16.msra.mxu0 %v1438
    %5061 = vmatprep.subr.bf16.mxu0 %v1455
    %5062 = vmatpush1.bf16.msra.mxu0 %v1454
    %5063 = vmatprep.subr.bf16.mxu0 %v1471
    %5064 = vmatpush1.bf16.msra.mxu0 %v1470
    %5065 = vmatprep.subr.bf16.mxu0 %v1487
    %5066 = vmatpush1.bf16.msra.mxu0 %v1486
    %5067 = vmatprep.subr.bf16.mxu0 %v1503
    %5068 = vmatpush1.bf16.msra.mxu0 %v1502
    %5069 = vmatprep.subr.bf16.mxu0 %v1519
    %5070 = vmatpush1.bf16.msra.mxu0 %v1518
    %5071 = vmatprep.subr.bf16.mxu0 %v1535
    %5072 = vmatpush1.bf16.msra.mxu0 %v1534
    %5073 = vmatprep.subr.bf16.mxu0 %v1551
    %5074 = vmatpush1.bf16.msra.mxu0 %v1550
    %5075 = vmatprep.subr.bf16.mxu0 %v1567
    %5076 = vmatpush1.bf16.msra.mxu0 %v1566
    %5077 = vmatprep.subr.bf16.mxu0 %v1583
    %5078 = vmatpush1.bf16.msra.mxu0 %v1582
    %5079 = vmatprep.subr.bf16.mxu0 %v1599
    %5080 = vmatpush1.bf16.msra.mxu0 %v1598
    %5081 = vmatprep.subr.bf16.mxu0 %v1615
    %5082 = vmatpush1.bf16.msra.mxu0 %v1614
    %5083 = vmatprep.mubr.bf16.mxu0 %v4681
    %5084 = vmatmul.mubr.bf16.gmra.mrb[0].mxu0 %v4680
    %v5085 = vpop.f32.mrb[0].mxu0
    %v5086 = vadd.f32 %v5045, %v5085
    %v5087 = vpop.f32.mrb[0].mxu0
    %v5088 = vadd.f32 %v5047, %v5087
    %v5089 = vpop.f32.mrb[0].mxu0
    %v5090 = vpop.f32.mrb[0].mxu0
    %5091 = vdwg.mxu0
    %5092 = vmatprep.subr.bf16.mxu0 %v1121
    %5093 = vmatpush1.bf16.msra.mxu0 %v1120
    %5094 = vmatprep.subr.bf16.mxu0 %v1137
    %5095 = vmatpush1.bf16.msra.mxu0 %v1136
    %5096 = vmatprep.subr.bf16.mxu0 %v1153
    %5097 = vmatpush1.bf16.msra.mxu0 %v1152
    %5098 = vmatprep.subr.bf16.mxu0 %v1169
    %5099 = vmatpush1.bf16.msra.mxu0 %v1168
    %5100 = vmatprep.subr.bf16.mxu0 %v1185
    %5101 = vmatpush1.bf16.msra.mxu0 %v1184
    %5102 = vmatprep.subr.bf16.mxu0 %v1201
    %5103 = vmatpush1.bf16.msra.mxu0 %v1200
    %5104 = vmatprep.subr.bf16.mxu0 %v1217
    %5105 = vmatpush1.bf16.msra.mxu0 %v1216
    %5106 = vmatprep.subr.bf16.mxu0 %v1233
    %5107 = vmatpush1.bf16.msra.mxu0 %v1232
    %5108 = vmatprep.subr.bf16.mxu0 %v1249
    %5109 = vmatpush1.bf16.msra.mxu0 %v1248
    %5110 = vmatprep.subr.bf16.mxu0 %v1265
    %5111 = vmatpush1.bf16.msra.mxu0 %v1264
    %5112 = vmatprep.subr.bf16.mxu0 %v1281
    %5113 = vmatpush1.bf16.msra.mxu0 %v1280
    %5114 = vmatprep.subr.bf16.mxu0 %v1297
    %5115 = vmatpush1.bf16.msra.mxu0 %v1296
    %5116 = vmatprep.subr.bf16.mxu0 %v1313
    %5117 = vmatpush1.bf16.msra.mxu0 %v1312
    %5118 = vmatprep.subr.bf16.mxu0 %v1329
    %5119 = vmatpush1.bf16.msra.mxu0 %v1328
    %5120 = vmatprep.subr.bf16.mxu0 %v1345
    %5121 = vmatpush1.bf16.msra.mxu0 %v1344
    %5122 = vmatprep.subr.bf16.mxu0 %v1361
    %5123 = vmatpush1.bf16.msra.mxu0 %v1360
    %5124 = vmatprep.mubr.bf16.mxu0 %v4679
    %5125 = vmatmul.mubr.bf16.gmra.mrb[0].mxu0 %v4678
    %v5126 = vpop.f32.mrb[0].mxu0
    %v5127 = vadd.f32 0.0, %v5126
    %v5128 = vpop.f32.mrb[0].mxu0
    %v5129 = vadd.f32 0.0, %v5128
    %v5130 = vpop.f32.mrb[0].mxu0
    %v5131 = vpop.f32.mrb[0].mxu0
    %5132 = vdwg.mxu0
    %5133 = vmatprep.subr.bf16.mxu0 %v1377
    %5134 = vmatpush1.bf16.msra.mxu0 %v1376
    %5135 = vmatprep.subr.bf16.mxu0 %v1393
    %5136 = vmatpush1.bf16.msra.mxu0 %v1392
    %5137 = vmatprep.subr.bf16.mxu0 %v1409
    %5138 = vmatpush1.bf16.msra.mxu0 %v1408
    %5139 = vmatprep.subr.bf16.mxu0 %v1425
    %5140 = vmatpush1.bf16.msra.mxu0 %v1424
    %5141 = vmatprep.subr.bf16.mxu0 %v1441
    %5142 = vmatpush1.bf16.msra.mxu0 %v1440
    %5143 = vmatprep.subr.bf16.mxu0 %v1457
    %5144 = vmatpush1.bf16.msra.mxu0 %v1456
    %5145 = vmatprep.subr.bf16.mxu0 %v1473
    %5146 = vmatpush1.bf16.msra.mxu0 %v1472
    %5147 = vmatprep.subr.bf16.mxu0 %v1489
    %5148 = vmatpush1.bf16.msra.mxu0 %v1488
    %5149 = vmatprep.subr.bf16.mxu0 %v1505
    %5150 = vmatpush1.bf16.msra.mxu0 %v1504
    %5151 = vmatprep.subr.bf16.mxu0 %v1521
    %5152 = vmatpush1.bf16.msra.mxu0 %v1520
    %5153 = vmatprep.subr.bf16.mxu0 %v1537
    %5154 = vmatpush1.bf16.msra.mxu0 %v1536
    %5155 = vmatprep.subr.bf16.mxu0 %v1553
    %5156 = vmatpush1.bf16.msra.mxu0 %v1552
    %5157 = vmatprep.subr.bf16.mxu0 %v1569
    %5158 = vmatpush1.bf16.msra.mxu0 %v1568
    %5159 = vmatprep.subr.bf16.mxu0 %v1585
    %5160 = vmatpush1.bf16.msra.mxu0 %v1584
    %5161 = vmatprep.subr.bf16.mxu0 %v1601
    %5162 = vmatpush1.bf16.msra.mxu0 %v1600
    %5163 = vmatprep.subr.bf16.mxu0 %v1617
    %5164 = vmatpush1.bf16.msra.mxu0 %v1616
    %5165 = vmatprep.mubr.bf16.mxu0 %v4681
    %5166 = vmatmul.mubr.bf16.gmra.mrb[0].mxu0 %v4680
    %v5167 = vpop.f32.mrb[0].mxu0
    %v5168 = vadd.f32 %v5127, %v5167
    %v5169 = vpop.f32.mrb[0].mxu0
    %v5170 = vadd.f32 %v5129, %v5169
    %v5171 = vpop.f32.mrb[0].mxu0
    %v5172 = vpop.f32.mrb[0].mxu0
    %5173 = vdwg.mxu0
    %5174 = vmatprep.subr.bf16.mxu0 %v1123
    %5175 = vmatpush1.bf16.msra.mxu0 %v1122
    %5176 = vmatprep.subr.bf16.mxu0 %v1139
    %5177 = vmatpush1.bf16.msra.mxu0 %v1138
    %5178 = vmatprep.subr.bf16.mxu0 %v1155
    %5179 = vmatpush1.bf16.msra.mxu0 %v1154
    %5180 = vmatprep.subr.bf16.mxu0 %v1171
    %5181 = vmatpush1.bf16.msra.mxu0 %v1170
    %5182 = vmatprep.subr.bf16.mxu0 %v1187
    %5183 = vmatpush1.bf16.msra.mxu0 %v1186
    %5184 = vmatprep.subr.bf16.mxu0 %v1203
    %5185 = vmatpush1.bf16.msra.mxu0 %v1202
    %5186 = vmatprep.subr.bf16.mxu0 %v1219
    %5187 = vmatpush1.bf16.msra.mxu0 %v1218
    %5188 = vmatprep.subr.bf16.mxu0 %v1235
    %5189 = vmatpush1.bf16.msra.mxu0 %v1234
    %5190 = vmatprep.subr.bf16.mxu0 %v1251
    %5191 = vmatpush1.bf16.msra.mxu0 %v1250
    %5192 = vmatprep.subr.bf16.mxu0 %v1267
    %5193 = vmatpush1.bf16.msra.mxu0 %v1266
    %5194 = vmatprep.subr.bf16.mxu0 %v1283
    %5195 = vmatpush1.bf16.msra.mxu0 %v1282
    %5196 = vmatprep.subr.bf16.mxu0 %v1299
    %5197 = vmatpush1.bf16.msra.mxu0 %v1298
    %5198 = vmatprep.subr.bf16.mxu0 %v1315
    %5199 = vmatpush1.bf16.msra.mxu0 %v1314
    %5200 = vmatprep.subr.bf16.mxu0 %v1331
    %5201 = vmatpush1.bf16.msra.mxu0 %v1330
    %5202 = vmatprep.subr.bf16.mxu0 %v1347
    %5203 = vmatpush1.bf16.msra.mxu0 %v1346
    %5204 = vmatprep.subr.bf16.mxu0 %v1363
    %5205 = vmatpush1.bf16.msra.mxu0 %v1362
    %5206 = vmatprep.mubr.bf16.mxu0 %v4679
    %5207 = vmatmul.mubr.bf16.gmra.mrb[0].mxu0 %v4678
    %v5208 = vpop.f32.mrb[0].mxu0
    %v5209 = vadd.f32 0.0, %v5208
    %v5210 = vpop.f32.mrb[0].mxu0
    %v5211 = vadd.f32 0.0, %v5210
    %v5212 = vpop.f32.mrb[0].mxu0
    %v5213 = vpop.f32.mrb[0].mxu0
    %5214 = vdwg.mxu0
    %5215 = vmatprep.subr.bf16.mxu0 %v1379
    %5216 = vmatpush1.bf16.msra.mxu0 %v1378
    %5217 = vmatprep.subr.bf16.mxu0 %v1395
    %5218 = vmatpush1.bf16.msra.mxu0 %v1394
    %5219 = vmatprep.subr.bf16.mxu0 %v1411
    %5220 = vmatpush1.bf16.msra.mxu0 %v1410
    %5221 = vmatprep.subr.bf16.mxu0 %v1427
    %5222 = vmatpush1.bf16.msra.mxu0 %v1426
    %5223 = vmatprep.subr.bf16.mxu0 %v1443
    %5224 = vmatpush1.bf16.msra.mxu0 %v1442
    %5225 = vmatprep.subr.bf16.mxu0 %v1459
    %5226 = vmatpush1.bf16.msra.mxu0 %v1458
    %5227 = vmatprep.subr.bf16.mxu0 %v1475
    %5228 = vmatpush1.bf16.msra.mxu0 %v1474
    %5229 = vmatprep.subr.bf16.mxu0 %v1491
    %5230 = vmatpush1.bf16.msra.mxu0 %v1490
    %5231 = vmatprep.subr.bf16.mxu0 %v1507
    %5232 = vmatpush1.bf16.msra.mxu0 %v1506
    %5233 = vmatprep.subr.bf16.mxu0 %v1523
    %5234 = vmatpush1.bf16.msra.mxu0 %v1522
    %5235 = vmatprep.subr.bf16.mxu0 %v1539
    %5236 = vmatpush1.bf16.msra.mxu0 %v1538
    %5237 = vmatprep.subr.bf16.mxu0 %v1555
    %5238 = vmatpush1.bf16.msra.mxu0 %v1554
    %5239 = vmatprep.subr.bf16.mxu0 %v1571
    %5240 = vmatpush1.bf16.msra.mxu0 %v1570
    %5241 = vmatprep.subr.bf16.mxu0 %v1587
    %5242 = vmatpush1.bf16.msra.mxu0 %v1586
    %5243 = vmatprep.subr.bf16.mxu0 %v1603
    %5244 = vmatpush1.bf16.msra.mxu0 %v1602
    %5245 = vmatprep.subr.bf16.mxu0 %v1619
    %5246 = vmatpush1.bf16.msra.mxu0 %v1618
    %5247 = vmatprep.mubr.bf16.mxu0 %v4681
    %5248 = vmatmul.mubr.bf16.gmra.mrb[0].mxu0 %v4680
    %v5249 = vpop.f32.mrb[0].mxu0
    %v5250 = vadd.f32 %v5209, %v5249
    %v5251 = vpop.f32.mrb[0].mxu0
    %v5252 = vadd.f32 %v5211, %v5251
    %v5253 = vpop.f32.mrb[0].mxu0
    %v5254 = vpop.f32.mrb[0].mxu0
    %5255 = vdwg.mxu0
    %5256 = vmatprep.subr.bf16.mxu0 %v1125
    %5257 = vmatpush1.bf16.msra.mxu0 %v1124
    %5258 = vmatprep.subr.bf16.mxu0 %v1141
    %5259 = vmatpush1.bf16.msra.mxu0 %v1140
    %5260 = vmatprep.subr.bf16.mxu0 %v1157
    %5261 = vmatpush1.bf16.msra.mxu0 %v1156
    %5262 = vmatprep.subr.bf16.mxu0 %v1173
    %5263 = vmatpush1.bf16.msra.mxu0 %v1172
    %5264 = vmatprep.subr.bf16.mxu0 %v1189
    %5265 = vmatpush1.bf16.msra.mxu0 %v1188
    %5266 = vmatprep.subr.bf16.mxu0 %v1205
    %5267 = vmatpush1.bf16.msra.mxu0 %v1204
    %5268 = vmatprep.subr.bf16.mxu0 %v1221
    %5269 = vmatpush1.bf16.msra.mxu0 %v1220
    %5270 = vmatprep.subr.bf16.mxu0 %v1237
    %5271 = vmatpush1.bf16.msra.mxu0 %v1236
    %5272 = vmatprep.subr.bf16.mxu0 %v1253
    %5273 = vmatpush1.bf16.msra.mxu0 %v1252
    %5274 = vmatprep.subr.bf16.mxu0 %v1269
    %5275 = vmatpush1.bf16.msra.mxu0 %v1268
    %5276 = vmatprep.subr.bf16.mxu0 %v1285
    %5277 = vmatpush1.bf16.msra.mxu0 %v1284
    %5278 = vmatprep.subr.bf16.mxu0 %v1301
    %5279 = vmatpush1.bf16.msra.mxu0 %v1300
    %5280 = vmatprep.subr.bf16.mxu0 %v1317
    %5281 = vmatpush1.bf16.msra.mxu0 %v1316
    %5282 = vmatprep.subr.bf16.mxu0 %v1333
    %5283 = vmatpush1.bf16.msra.mxu0 %v1332
    %5284 = vmatprep.subr.bf16.mxu0 %v1349
    %5285 = vmatpush1.bf16.msra.mxu0 %v1348
    %5286 = vmatprep.subr.bf16.mxu0 %v1365
    %5287 = vmatpush1.bf16.msra.mxu0 %v1364
    %5288 = vmatprep.mubr.bf16.mxu0 %v4679
    %5289 = vmatmul.mubr.bf16.gmra.mrb[0].mxu0 %v4678
    %v5290 = vpop.f32.mrb[0].mxu0
    %v5291 = vadd.f32 0.0, %v5290
    %v5292 = vpop.f32.mrb[0].mxu0
    %v5293 = vadd.f32 0.0, %v5292
    %v5294 = vpop.f32.mrb[0].mxu0
    %v5295 = vpop.f32.mrb[0].mxu0
    %5296 = vdwg.mxu0
    %5297 = vmatprep.subr.bf16.mxu0 %v1381
    %5298 = vmatpush1.bf16.msra.mxu0 %v1380
    %5299 = vmatprep.subr.bf16.mxu0 %v1397
    %5300 = vmatpush1.bf16.msra.mxu0 %v1396
    %5301 = vmatprep.subr.bf16.mxu0 %v1413
    %5302 = vmatpush1.bf16.msra.mxu0 %v1412
    %5303 = vmatprep.subr.bf16.mxu0 %v1429
    %5304 = vmatpush1.bf16.msra.mxu0 %v1428
    %5305 = vmatprep.subr.bf16.mxu0 %v1445
    %5306 = vmatpush1.bf16.msra.mxu0 %v1444
    %5307 = vmatprep.subr.bf16.mxu0 %v1461
    %5308 = vmatpush1.bf16.msra.mxu0 %v1460
    %5309 = vmatprep.subr.bf16.mxu0 %v1477
    %5310 = vmatpush1.bf16.msra.mxu0 %v1476
    %5311 = vmatprep.subr.bf16.mxu0 %v1493
    %5312 = vmatpush1.bf16.msra.mxu0 %v1492
    %5313 = vmatprep.subr.bf16.mxu0 %v1509
    %5314 = vmatpush1.bf16.msra.mxu0 %v1508
    %5315 = vmatprep.subr.bf16.mxu0 %v1525
    %5316 = vmatpush1.bf16.msra.mxu0 %v1524
    %5317 = vmatprep.subr.bf16.mxu0 %v1541
    %5318 = vmatpush1.bf16.msra.mxu0 %v1540
    %5319 = vmatprep.subr.bf16.mxu0 %v1557
    %5320 = vmatpush1.bf16.msra.mxu0 %v1556
    %5321 = vmatprep.subr.bf16.mxu0 %v1573
    %5322 = vmatpush1.bf16.msra.mxu0 %v1572
    %5323 = vmatprep.subr.bf16.mxu0 %v1589
    %5324 = vmatpush1.bf16.msra.mxu0 %v1588
    %5325 = vmatprep.subr.bf16.mxu0 %v1605
    %5326 = vmatpush1.bf16.msra.mxu0 %v1604
    %5327 = vmatprep.subr.bf16.mxu0 %v1621
    %5328 = vmatpush1.bf16.msra.mxu0 %v1620
    %5329 = vmatprep.mubr.bf16.mxu0 %v4681
    %5330 = vmatmul.mubr.bf16.gmra.mrb[0].mxu0 %v4680
    %v5331 = vpop.f32.mrb[0].mxu0
    %v5332 = vadd.f32 %v5291, %v5331
    %v5333 = vpop.f32.mrb[0].mxu0
    %v5334 = vadd.f32 %v5293, %v5333
    %v5335 = vpop.f32.mrb[0].mxu0
    %v5336 = vpop.f32.mrb[0].mxu0
    %5337 = vdwg.mxu0
    %v5338 = vadd.f32 %v4662, %v4758
    %v5339 = vadd.f32 %v4663, %v4760
    %v5340 = vadd.f32 %v4664, %v4840
    %v5341 = vadd.f32 %v4665, %v4842
    %v5342 = vadd.f32 %v4666, %v4922
    %v5343 = vadd.f32 %v4667, %v4924
    %v5344 = vadd.f32 %v4668, %v5004
    %v5345 = vadd.f32 %v4669, %v5006
    %v5346 = vadd.f32 %v4670, %v5086
    %v5347 = vadd.f32 %v4671, %v5088
    %v5348 = vadd.f32 %v4672, %v5168
    %v5349 = vadd.f32 %v4673, %v5170
    %v5350 = vadd.f32 %v4674, %v5250
    %v5351 = vadd.f32 %v4675, %v5252
    %v5352 = vadd.f32 %v4676, %v5332
    %v5353 = vadd.f32 %v4677, %v5334
    %v5354 = vmul.f32 %v5338, 0.5
    %v5355 = vmul.f32 %v5339, 0.5
    %v5356 = vmul.f32 %v5340, 0.5
    %v5357 = vmul.f32 %v5341, 0.5
    %v5358 = vtanh.pop %v5354
    %v5359 = vtanh.pop %v5355
    %v5360 = vtanh.pop %v5356
    %v5361 = vtanh.pop %v5357
    %v5362 = vmul.f32 %v5358, 0.5
    %v5363 = vmul.f32 %v5359, 0.5
    %v5364 = vmul.f32 %v5360, 0.5
    %v5365 = vmul.f32 %v5361, 0.5
    %v5366 = vadd.f32 %v5362, 0.5
    %v5367 = vadd.f32 %v5363, 0.5
    %v5368 = vadd.f32 %v5364, 0.5
    %v5369 = vadd.f32 %v5365, 0.5
    %v5370 = vmul.f32 %v5342, 0.5
    %v5371 = vmul.f32 %v5343, 0.5
    %v5372 = vmul.f32 %v5344, 0.5
    %v5373 = vmul.f32 %v5345, 0.5
    %v5374 = vtanh.pop %v5370
    %v5375 = vtanh.pop %v5371
    %v5376 = vtanh.pop %v5372
    %v5377 = vtanh.pop %v5373
    %v5378 = vmul.f32 %v5374, 0.5
    %v5379 = vmul.f32 %v5375, 0.5
    %v5380 = vmul.f32 %v5376, 0.5
    %v5381 = vmul.f32 %v5377, 0.5
    %v5382 = vadd.f32 %v5378, 0.5
    %v5383 = vadd.f32 %v5379, 0.5
    %v5384 = vadd.f32 %v5380, 0.5
    %v5385 = vadd.f32 %v5381, 0.5
    %v5386 = vtanh.pop %v5346
    %v5387 = vtanh.pop %v5347
    %v5388 = vtanh.pop %v5348
    %v5389 = vtanh.pop %v5349
    %v5390 = vmul.f32 %v5350, 0.5
    %v5391 = vmul.f32 %v5351, 0.5
    %v5392 = vmul.f32 %v5352, 0.5
    %v5393 = vmul.f32 %v5353, 0.5
    %v5394 = vtanh.pop %v5390
    %v5395 = vtanh.pop %v5391
    %v5396 = vtanh.pop %v5392
    %v5397 = vtanh.pop %v5393
    %v5398 = vmul.f32 %v5394, 0.5
    %v5399 = vmul.f32 %v5395, 0.5
    %v5400 = vmul.f32 %v5396, 0.5
    %v5401 = vmul.f32 %v5397, 0.5
    %v5402 = vadd.f32 %v5398, 0.5
    %v5403 = vadd.f32 %v5399, 0.5
    %v5404 = vadd.f32 %v5400, 0.5
    %v5405 = vadd.f32 %v5401, 0.5
    %v5406 = vmul.f32 %v5382, %v4649
    %v5407 = vmul.f32 %v5383, %v4650
    %v5408 = vmul.f32 %v5384, %v4651
    %v5409 = vmul.f32 %v5385, %v4652
    %v5410 = vmul.f32 %v5366, %v5386
    %v5411 = vmul.f32 %v5367, %v5387
    %v5412 = vmul.f32 %v5368, %v5388
    %v5413 = vmul.f32 %v5369, %v5389
    %v5414 = vadd.f32 %v5406, %v5410
    %v5415 = vadd.f32 %v5407, %v5411
    %v5416 = vadd.f32 %v5408, %v5412
    %v5417 = vadd.f32 %v5409, %v5413
    %v5418 = vtanh.pop %v5414
    %v5419 = vtanh.pop %v5415
    %v5420 = vtanh.pop %v5416
    %v5421 = vtanh.pop %v5417
    %v5422 = vmul.f32 %v5402, %v5418
    %v5423 = vmul.f32 %v5403, %v5419
    %v5424 = vmul.f32 %v5404, %v5420
    %v5425 = vmul.f32 %v5405, %v5421
    %s5426 = scalar_lea.vmem [#allocation5], 640
    %v5427 = vld [vmem:[%s5426] sm:$0xff]
    %v5428 = vld [vmem:[%s5426 + $0x8] sm:$0xff]
    %v5429 = vld [vmem:[%s5426 + $0x10] sm:$0xff]
    %v5430 = vld [vmem:[%s5426 + $0x18] sm:$0xff]
    %v5431 = vld [vmem:[%s5426 + $0x20] sm:$0xff]
    %v5432 = vld [vmem:[%s5426 + $0x28] sm:$0xff]
    %v5433 = vld [vmem:[%s5426 + $0x30] sm:$0xff]
    %v5434 = vld [vmem:[%s5426 + $0x38] sm:$0xff]
    %v5435 = vld [vmem:[%s5426 + $0x40] sm:$0xff]
    %v5436 = vld [vmem:[%s5426 + $0x48] sm:$0xff]
    %v5437 = vld [vmem:[%s5426 + $0x50] sm:$0xff]
    %v5438 = vld [vmem:[%s5426 + $0x58] sm:$0xff]
    %v5439 = vld [vmem:[%s5426 + $0x60] sm:$0xff]
    %v5440 = vld [vmem:[%s5426 + $0x68] sm:$0xff]
    %v5441 = vld [vmem:[%s5426 + $0x70] sm:$0xff]
    %v5442 = vld [vmem:[%s5426 + $0x78] sm:$0xff]
    %v5443 = vpack.c.bf16 %v5422, %v5422
    %v5444 = vpack.c.bf16 %v5423, %v5423
    %v5445 = vpack.c.bf16 %v5424, %v5424
    %v5446 = vpack.c.bf16 %v5425, %v5425
    %5447 = vmatprep.subr.bf16.mxu0 %v1111
    %5448 = vmatpush1.bf16.msra.mxu0 %v1110
    %5449 = vmatprep.subr.bf16.mxu0 %v1127
    %5450 = vmatpush1.bf16.msra.mxu0 %v1126
    %5451 = vmatprep.subr.bf16.mxu0 %v1143
    %5452 = vmatpush1.bf16.msra.mxu0 %v1142
    %5453 = vmatprep.subr.bf16.mxu0 %v1159
    %5454 = vmatpush1.bf16.msra.mxu0 %v1158
    %5455 = vmatprep.subr.bf16.mxu0 %v1175
    %5456 = vmatpush1.bf16.msra.mxu0 %v1174
    %5457 = vmatprep.subr.bf16.mxu0 %v1191
    %5458 = vmatpush1.bf16.msra.mxu0 %v1190
    %5459 = vmatprep.subr.bf16.mxu0 %v1207
    %5460 = vmatpush1.bf16.msra.mxu0 %v1206
    %5461 = vmatprep.subr.bf16.mxu0 %v1223
    %5462 = vmatpush1.bf16.msra.mxu0 %v1222
    %5463 = vmatprep.subr.bf16.mxu0 %v1239
    %5464 = vmatpush1.bf16.msra.mxu0 %v1238
    %5465 = vmatprep.subr.bf16.mxu0 %v1255
    %5466 = vmatpush1.bf16.msra.mxu0 %v1254
    %5467 = vmatprep.subr.bf16.mxu0 %v1271
    %5468 = vmatpush1.bf16.msra.mxu0 %v1270
    %5469 = vmatprep.subr.bf16.mxu0 %v1287
    %5470 = vmatpush1.bf16.msra.mxu0 %v1286
    %5471 = vmatprep.subr.bf16.mxu0 %v1303
    %5472 = vmatpush1.bf16.msra.mxu0 %v1302
    %5473 = vmatprep.subr.bf16.mxu0 %v1319
    %5474 = vmatpush1.bf16.msra.mxu0 %v1318
    %5475 = vmatprep.subr.bf16.mxu0 %v1335
    %5476 = vmatpush1.bf16.msra.mxu0 %v1334
    %5477 = vmatprep.subr.bf16.mxu0 %v1351
    %5478 = vmatpush1.bf16.msra.mxu0 %v1350
    %5479 = vmatprep.mubr.bf16.mxu0 %v5444
    %5480 = vmatmul.mubr.bf16.gmra.mrb[0].mxu0 %v5443
    %v5481 = vpop.f32.mrb[0].mxu0
    %v5482 = vadd.f32 0.0, %v5481
    %v5483 = vpop.f32.mrb[0].mxu0
    %v5484 = vadd.f32 0.0, %v5483
    %v5485 = vpop.f32.mrb[0].mxu0
    %v5486 = vpop.f32.mrb[0].mxu0
    %5487 = vdwg.mxu0
    %5488 = vmatprep.subr.bf16.mxu0 %v1367
    %5489 = vmatpush1.bf16.msra.mxu0 %v1366
    %5490 = vmatprep.subr.bf16.mxu0 %v1383
    %5491 = vmatpush1.bf16.msra.mxu0 %v1382
    %5492 = vmatprep.subr.bf16.mxu0 %v1399
    %5493 = vmatpush1.bf16.msra.mxu0 %v1398
    %5494 = vmatprep.subr.bf16.mxu0 %v1415
    %5495 = vmatpush1.bf16.msra.mxu0 %v1414
    %5496 = vmatprep.subr.bf16.mxu0 %v1431
    %5497 = vmatpush1.bf16.msra.mxu0 %v1430
    %5498 = vmatprep.subr.bf16.mxu0 %v1447
    %5499 = vmatpush1.bf16.msra.mxu0 %v1446
    %5500 = vmatprep.subr.bf16.mxu0 %v1463
    %5501 = vmatpush1.bf16.msra.mxu0 %v1462
    %5502 = vmatprep.subr.bf16.mxu0 %v1479
    %5503 = vmatpush1.bf16.msra.mxu0 %v1478
    %5504 = vmatprep.subr.bf16.mxu0 %v1495
    %5505 = vmatpush1.bf16.msra.mxu0 %v1494
    %5506 = vmatprep.subr.bf16.mxu0 %v1511
    %5507 = vmatpush1.bf16.msra.mxu0 %v1510
    %5508 = vmatprep.subr.bf16.mxu0 %v1527
    %5509 = vmatpush1.bf16.msra.mxu0 %v1526
    %5510 = vmatprep.subr.bf16.mxu0 %v1543
    %5511 = vmatpush1.bf16.msra.mxu0 %v1542
    %5512 = vmatprep.subr.bf16.mxu0 %v1559
    %5513 = vmatpush1.bf16.msra.mxu0 %v1558
    %5514 = vmatprep.subr.bf16.mxu0 %v1575
    %5515 = vmatpush1.bf16.msra.mxu0 %v1574
    %5516 = vmatprep.subr.bf16.mxu0 %v1591
    %5517 = vmatpush1.bf16.msra.mxu0 %v1590
    %5518 = vmatprep.subr.bf16.mxu0 %v1607
    %5519 = vmatpush1.bf16.msra.mxu0 %v1606
    %5520 = vmatprep.mubr.bf16.mxu0 %v5446
    %5521 = vmatmul.mubr.bf16.gmra.mrb[0].mxu0 %v5445
    %v5522 = vpop.f32.mrb[0].mxu0
    %v5523 = vadd.f32 %v5482, %v5522
    %v5524 = vpop.f32.mrb[0].mxu0
    %v5525 = vadd.f32 %v5484, %v5524
    %v5526 = vpop.f32.mrb[0].mxu0
    %v5527 = vpop.f32.mrb[0].mxu0
    %5528 = vdwg.mxu0
    %5529 = vmatprep.subr.bf16.mxu0 %v1113
    %5530 = vmatpush1.bf16.msra.mxu0 %v1112
    %5531 = vmatprep.subr.bf16.mxu0 %v1129
    %5532 = vmatpush1.bf16.msra.mxu0 %v1128
    %5533 = vmatprep.subr.bf16.mxu0 %v1145
    %5534 = vmatpush1.bf16.msra.mxu0 %v1144
    %5535 = vmatprep.subr.bf16.mxu0 %v1161
    %5536 = vmatpush1.bf16.msra.mxu0 %v1160
    %5537 = vmatprep.subr.bf16.mxu0 %v1177
    %5538 = vmatpush1.bf16.msra.mxu0 %v1176
    %5539 = vmatprep.subr.bf16.mxu0 %v1193
    %5540 = vmatpush1.bf16.msra.mxu0 %v1192
    %5541 = vmatprep.subr.bf16.mxu0 %v1209
    %5542 = vmatpush1.bf16.msra.mxu0 %v1208
    %5543 = vmatprep.subr.bf16.mxu0 %v1225
    %5544 = vmatpush1.bf16.msra.mxu0 %v1224
    %5545 = vmatprep.subr.bf16.mxu0 %v1241
    %5546 = vmatpush1.bf16.msra.mxu0 %v1240
    %5547 = vmatprep.subr.bf16.mxu0 %v1257
    %5548 = vmatpush1.bf16.msra.mxu0 %v1256
    %5549 = vmatprep.subr.bf16.mxu0 %v1273
    %5550 = vmatpush1.bf16.msra.mxu0 %v1272
    %5551 = vmatprep.subr.bf16.mxu0 %v1289
    %5552 = vmatpush1.bf16.msra.mxu0 %v1288
    %5553 = vmatprep.subr.bf16.mxu0 %v1305
    %5554 = vmatpush1.bf16.msra.mxu0 %v1304
    %5555 = vmatprep.subr.bf16.mxu0 %v1321
    %5556 = vmatpush1.bf16.msra.mxu0 %v1320
    %5557 = vmatprep.subr.bf16.mxu0 %v1337
    %5558 = vmatpush1.bf16.msra.mxu0 %v1336
    %5559 = vmatprep.subr.bf16.mxu0 %v1353
    %5560 = vmatpush1.bf16.msra.mxu0 %v1352
    %5561 = vmatprep.mubr.bf16.mxu0 %v5444
    %5562 = vmatmul.mubr.bf16.gmra.mrb[0].mxu0 %v5443
    %v5563 = vpop.f32.mrb[0].mxu0
    %v5564 = vadd.f32 0.0, %v5563
    %v5565 = vpop.f32.mrb[0].mxu0
    %v5566 = vadd.f32 0.0, %v5565
    %v5567 = vpop.f32.mrb[0].mxu0
    %v5568 = vpop.f32.mrb[0].mxu0
    %5569 = vdwg.mxu0
    %5570 = vmatprep.subr.bf16.mxu0 %v1369
    %5571 = vmatpush1.bf16.msra.mxu0 %v1368
    %5572 = vmatprep.subr.bf16.mxu0 %v1385
    %5573 = vmatpush1.bf16.msra.mxu0 %v1384
    %5574 = vmatprep.subr.bf16.mxu0 %v1401
    %5575 = vmatpush1.bf16.msra.mxu0 %v1400
    %5576 = vmatprep.subr.bf16.mxu0 %v1417
    %5577 = vmatpush1.bf16.msra.mxu0 %v1416
    %5578 = vmatprep.subr.bf16.mxu0 %v1433
    %5579 = vmatpush1.bf16.msra.mxu0 %v1432
    %5580 = vmatprep.subr.bf16.mxu0 %v1449
    %5581 = vmatpush1.bf16.msra.mxu0 %v1448
    %5582 = vmatprep.subr.bf16.mxu0 %v1465
    %5583 = vmatpush1.bf16.msra.mxu0 %v1464
    %5584 = vmatprep.subr.bf16.mxu0 %v1481
    %5585 = vmatpush1.bf16.msra.mxu0 %v1480
    %5586 = vmatprep.subr.bf16.mxu0 %v1497
    %5587 = vmatpush1.bf16.msra.mxu0 %v1496
    %5588 = vmatprep.subr.bf16.mxu0 %v1513
    %5589 = vmatpush1.bf16.msra.mxu0 %v1512
    %5590 = vmatprep.subr.bf16.mxu0 %v1529
    %5591 = vmatpush1.bf16.msra.mxu0 %v1528
    %5592 = vmatprep.subr.bf16.mxu0 %v1545
    %5593 = vmatpush1.bf16.msra.mxu0 %v1544
    %5594 = vmatprep.subr.bf16.mxu0 %v1561
    %5595 = vmatpush1.bf16.msra.mxu0 %v1560
    %5596 = vmatprep.subr.bf16.mxu0 %v1577
    %5597 = vmatpush1.bf16.msra.mxu0 %v1576
    %5598 = vmatprep.subr.bf16.mxu0 %v1593
    %5599 = vmatpush1.bf16.msra.mxu0 %v1592
    %5600 = vmatprep.subr.bf16.mxu0 %v1609
    %5601 = vmatpush1.bf16.msra.mxu0 %v1608
    %5602 = vmatprep.mubr.bf16.mxu0 %v5446
    %5603 = vmatmul.mubr.bf16.gmra.mrb[0].mxu0 %v5445
    %v5604 = vpop.f32.mrb[0].mxu0
    %v5605 = vadd.f32 %v5564, %v5604
    %v5606 = vpop.f32.mrb[0].mxu0
    %v5607 = vadd.f32 %v5566, %v5606
    %v5608 = vpop.f32.mrb[0].mxu0
    %v5609 = vpop.f32.mrb[0].mxu0
    %5610 = vdwg.mxu0
    %5611 = vmatprep.subr.bf16.mxu0 %v1115
    %5612 = vmatpush1.bf16.msra.mxu0 %v1114
    %5613 = vmatprep.subr.bf16.mxu0 %v1131
    %5614 = vmatpush1.bf16.msra.mxu0 %v1130
    %5615 = vmatprep.subr.bf16.mxu0 %v1147
    %5616 = vmatpush1.bf16.msra.mxu0 %v1146
    %5617 = vmatprep.subr.bf16.mxu0 %v1163
    %5618 = vmatpush1.bf16.msra.mxu0 %v1162
    %5619 = vmatprep.subr.bf16.mxu0 %v1179
    %5620 = vmatpush1.bf16.msra.mxu0 %v1178
    %5621 = vmatprep.subr.bf16.mxu0 %v1195
    %5622 = vmatpush1.bf16.msra.mxu0 %v1194
    %5623 = vmatprep.subr.bf16.mxu0 %v1211
    %5624 = vmatpush1.bf16.msra.mxu0 %v1210
    %5625 = vmatprep.subr.bf16.mxu0 %v1227
    %5626 = vmatpush1.bf16.msra.mxu0 %v1226
    %5627 = vmatprep.subr.bf16.mxu0 %v1243
    %5628 = vmatpush1.bf16.msra.mxu0 %v1242
    %5629 = vmatprep.subr.bf16.mxu0 %v1259
    %5630 = vmatpush1.bf16.msra.mxu0 %v1258
    %5631 = vmatprep.subr.bf16.mxu0 %v1275
    %5632 = vmatpush1.bf16.msra.mxu0 %v1274
    %5633 = vmatprep.subr.bf16.mxu0 %v1291
    %5634 = vmatpush1.bf16.msra.mxu0 %v1290
    %5635 = vmatprep.subr.bf16.mxu0 %v1307
    %5636 = vmatpush1.bf16.msra.mxu0 %v1306
    %5637 = vmatprep.subr.bf16.mxu0 %v1323
    %5638 = vmatpush1.bf16.msra.mxu0 %v1322
    %5639 = vmatprep.subr.bf16.mxu0 %v1339
    %5640 = vmatpush1.bf16.msra.mxu0 %v1338
    %5641 = vmatprep.subr.bf16.mxu0 %v1355
    %5642 = vmatpush1.bf16.msra.mxu0 %v1354
    %5643 = vmatprep.mubr.bf16.mxu0 %v5444
    %5644 = vmatmul.mubr.bf16.gmra.mrb[0].mxu0 %v5443
    %v5645 = vpop.f32.mrb[0].mxu0
    %v5646 = vadd.f32 0.0, %v5645
    %v5647 = vpop.f32.mrb[0].mxu0
    %v5648 = vadd.f32 0.0, %v5647
    %v5649 = vpop.f32.mrb[0].mxu0
    %v5650 = vpop.f32.mrb[0].mxu0
    %5651 = vdwg.mxu0
    %5652 = vmatprep.subr.bf16.mxu0 %v1371
    %5653 = vmatpush1.bf16.msra.mxu0 %v1370
    %5654 = vmatprep.subr.bf16.mxu0 %v1387
    %5655 = vmatpush1.bf16.msra.mxu0 %v1386
    %5656 = vmatprep.subr.bf16.mxu0 %v1403
    %5657 = vmatpush1.bf16.msra.mxu0 %v1402
    %5658 = vmatprep.subr.bf16.mxu0 %v1419
    %5659 = vmatpush1.bf16.msra.mxu0 %v1418
    %5660 = vmatprep.subr.bf16.mxu0 %v1435
    %5661 = vmatpush1.bf16.msra.mxu0 %v1434
    %5662 = vmatprep.subr.bf16.mxu0 %v1451
    %5663 = vmatpush1.bf16.msra.mxu0 %v1450
    %5664 = vmatprep.subr.bf16.mxu0 %v1467
    %5665 = vmatpush1.bf16.msra.mxu0 %v1466
    %5666 = vmatprep.subr.bf16.mxu0 %v1483
    %5667 = vmatpush1.bf16.msra.mxu0 %v1482
    %5668 = vmatprep.subr.bf16.mxu0 %v1499
    %5669 = vmatpush1.bf16.msra.mxu0 %v1498
    %5670 = vmatprep.subr.bf16.mxu0 %v1515
    %5671 = vmatpush1.bf16.msra.mxu0 %v1514
    %5672 = vmatprep.subr.bf16.mxu0 %v1531
    %5673 = vmatpush1.bf16.msra.mxu0 %v1530
    %5674 = vmatprep.subr.bf16.mxu0 %v1547
    %5675 = vmatpush1.bf16.msra.mxu0 %v1546
    %5676 = vmatprep.subr.bf16.mxu0 %v1563
    %5677 = vmatpush1.bf16.msra.mxu0 %v1562
    %5678 = vmatprep.subr.bf16.mxu0 %v1579
    %5679 = vmatpush1.bf16.msra.mxu0 %v1578
    %5680 = vmatprep.subr.bf16.mxu0 %v1595
    %5681 = vmatpush1.bf16.msra.mxu0 %v1594
    %5682 = vmatprep.subr.bf16.mxu0 %v1611
    %5683 = vmatpush1.bf16.msra.mxu0 %v1610
    %5684 = vmatprep.mubr.bf16.mxu0 %v5446
    %5685 = vmatmul.mubr.bf16.gmra.mrb[0].mxu0 %v5445
    %v5686 = vpop.f32.mrb[0].mxu0
    %v5687 = vadd.f32 %v5646, %v5686
    %v5688 = vpop.f32.mrb[0].mxu0
    %v5689 = vadd.f32 %v5648, %v5688
    %v5690 = vpop.f32.mrb[0].mxu0
    %v5691 = vpop.f32.mrb[0].mxu0
    %5692 = vdwg.mxu0
    %5693 = vmatprep.subr.bf16.mxu0 %v1117
    %5694 = vmatpush1.bf16.msra.mxu0 %v1116
    %5695 = vmatprep.subr.bf16.mxu0 %v1133
    %5696 = vmatpush1.bf16.msra.mxu0 %v1132
    %5697 = vmatprep.subr.bf16.mxu0 %v1149
    %5698 = vmatpush1.bf16.msra.mxu0 %v1148
    %5699 = vmatprep.subr.bf16.mxu0 %v1165
    %5700 = vmatpush1.bf16.msra.mxu0 %v1164
    %5701 = vmatprep.subr.bf16.mxu0 %v1181
    %5702 = vmatpush1.bf16.msra.mxu0 %v1180
    %5703 = vmatprep.subr.bf16.mxu0 %v1197
    %5704 = vmatpush1.bf16.msra.mxu0 %v1196
    %5705 = vmatprep.subr.bf16.mxu0 %v1213
    %5706 = vmatpush1.bf16.msra.mxu0 %v1212
    %5707 = vmatprep.subr.bf16.mxu0 %v1229
    %5708 = vmatpush1.bf16.msra.mxu0 %v1228
    %5709 = vmatprep.subr.bf16.mxu0 %v1245
    %5710 = vmatpush1.bf16.msra.mxu0 %v1244
    %5711 = vmatprep.subr.bf16.mxu0 %v1261
    %5712 = vmatpush1.bf16.msra.mxu0 %v1260
    %5713 = vmatprep.subr.bf16.mxu0 %v1277
    %5714 = vmatpush1.bf16.msra.mxu0 %v1276
    %5715 = vmatprep.subr.bf16.mxu0 %v1293
    %5716 = vmatpush1.bf16.msra.mxu0 %v1292
    %5717 = vmatprep.subr.bf16.mxu0 %v1309
    %5718 = vmatpush1.bf16.msra.mxu0 %v1308
    %5719 = vmatprep.subr.bf16.mxu0 %v1325
    %5720 = vmatpush1.bf16.msra.mxu0 %v1324
    %5721 = vmatprep.subr.bf16.mxu0 %v1341
    %5722 = vmatpush1.bf16.msra.mxu0 %v1340
    %5723 = vmatprep.subr.bf16.mxu0 %v1357
    %5724 = vmatpush1.bf16.msra.mxu0 %v1356
    %5725 = vmatprep.mubr.bf16.mxu0 %v5444
    %5726 = vmatmul.mubr.bf16.gmra.mrb[0].mxu0 %v5443
    %v5727 = vpop.f32.mrb[0].mxu0
    %v5728 = vadd.f32 0.0, %v5727
    %v5729 = vpop.f32.mrb[0].mxu0
    %v5730 = vadd.f32 0.0, %v5729
    %v5731 = vpop.f32.mrb[0].mxu0
    %v5732 = vpop.f32.mrb[0].mxu0
    %5733 = vdwg.mxu0
    %5734 = vmatprep.subr.bf16.mxu0 %v1373
    %5735 = vmatpush1.bf16.msra.mxu0 %v1372
    %5736 = vmatprep.subr.bf16.mxu0 %v1389
    %5737 = vmatpush1.bf16.msra.mxu0 %v1388
    %5738 = vmatprep.subr.bf16.mxu0 %v1405
    %5739 = vmatpush1.bf16.msra.mxu0 %v1404
    %5740 = vmatprep.subr.bf16.mxu0 %v1421
    %5741 = vmatpush1.bf16.msra.mxu0 %v1420
    %5742 = vmatprep.subr.bf16.mxu0 %v1437
    %5743 = vmatpush1.bf16.msra.mxu0 %v1436
    %5744 = vmatprep.subr.bf16.mxu0 %v1453
    %5745 = vmatpush1.bf16.msra.mxu0 %v1452
    %5746 = vmatprep.subr.bf16.mxu0 %v1469
    %5747 = vmatpush1.bf16.msra.mxu0 %v1468
    %5748 = vmatprep.subr.bf16.mxu0 %v1485
    %5749 = vmatpush1.bf16.msra.mxu0 %v1484
    %5750 = vmatprep.subr.bf16.mxu0 %v1501
    %5751 = vmatpush1.bf16.msra.mxu0 %v1500
    %5752 = vmatprep.subr.bf16.mxu0 %v1517
    %5753 = vmatpush1.bf16.msra.mxu0 %v1516
    %5754 = vmatprep.subr.bf16.mxu0 %v1533
    %5755 = vmatpush1.bf16.msra.mxu0 %v1532
    %5756 = vmatprep.subr.bf16.mxu0 %v1549
    %5757 = vmatpush1.bf16.msra.mxu0 %v1548
    %5758 = vmatprep.subr.bf16.mxu0 %v1565
    %5759 = vmatpush1.bf16.msra.mxu0 %v1564
    %5760 = vmatprep.subr.bf16.mxu0 %v1581
    %5761 = vmatpush1.bf16.msra.mxu0 %v1580
    %5762 = vmatprep.subr.bf16.mxu0 %v1597
    %5763 = vmatpush1.bf16.msra.mxu0 %v1596
    %5764 = vmatprep.subr.bf16.mxu0 %v1613
    %5765 = vmatpush1.bf16.msra.mxu0 %v1612
    %5766 = vmatprep.mubr.bf16.mxu0 %v5446
    %5767 = vmatmul.mubr.bf16.gmra.mrb[0].mxu0 %v5445
    %v5768 = vpop.f32.mrb[0].mxu0
    %v5769 = vadd.f32 %v5728, %v5768
    %v5770 = vpop.f32.mrb[0].mxu0
    %v5771 = vadd.f32 %v5730, %v5770
    %v5772 = vpop.f32.mrb[0].mxu0
    %v5773 = vpop.f32.mrb[0].mxu0
    %5774 = vdwg.mxu0
    %5775 = vmatprep.subr.bf16.mxu0 %v1119
    %5776 = vmatpush1.bf16.msra.mxu0 %v1118
    %5777 = vmatprep.subr.bf16.mxu0 %v1135
    %5778 = vmatpush1.bf16.msra.mxu0 %v1134
    %5779 = vmatprep.subr.bf16.mxu0 %v1151
    %5780 = vmatpush1.bf16.msra.mxu0 %v1150
    %5781 = vmatprep.subr.bf16.mxu0 %v1167
    %5782 = vmatpush1.bf16.msra.mxu0 %v1166
    %5783 = vmatprep.subr.bf16.mxu0 %v1183
    %5784 = vmatpush1.bf16.msra.mxu0 %v1182
    %5785 = vmatprep.subr.bf16.mxu0 %v1199
    %5786 = vmatpush1.bf16.msra.mxu0 %v1198
    %5787 = vmatprep.subr.bf16.mxu0 %v1215
    %5788 = vmatpush1.bf16.msra.mxu0 %v1214
    %5789 = vmatprep.subr.bf16.mxu0 %v1231
    %5790 = vmatpush1.bf16.msra.mxu0 %v1230
    %5791 = vmatprep.subr.bf16.mxu0 %v1247
    %5792 = vmatpush1.bf16.msra.mxu0 %v1246
    %5793 = vmatprep.subr.bf16.mxu0 %v1263
    %5794 = vmatpush1.bf16.msra.mxu0 %v1262
    %5795 = vmatprep.subr.bf16.mxu0 %v1279
    %5796 = vmatpush1.bf16.msra.mxu0 %v1278
    %5797 = vmatprep.subr.bf16.mxu0 %v1295
    %5798 = vmatpush1.bf16.msra.mxu0 %v1294
    %5799 = vmatprep.subr.bf16.mxu0 %v1311
    %5800 = vmatpush1.bf16.msra.mxu0 %v1310
    %5801 = vmatprep.subr.bf16.mxu0 %v1327
    %5802 = vmatpush1.bf16.msra.mxu0 %v1326
    %5803 = vmatprep.subr.bf16.mxu0 %v1343
    %5804 = vmatpush1.bf16.msra.mxu0 %v1342
    %5805 = vmatprep.subr.bf16.mxu0 %v1359
    %5806 = vmatpush1.bf16.msra.mxu0 %v1358
    %5807 = vmatprep.mubr.bf16.mxu0 %v5444
    %5808 = vmatmul.mubr.bf16.gmra.mrb[0].mxu0 %v5443
    %v5809 = vpop.f32.mrb[0].mxu0
    %v5810 = vadd.f32 0.0, %v5809
    %v5811 = vpop.f32.mrb[0].mxu0
    %v5812 = vadd.f32 0.0, %v5811
    %v5813 = vpop.f32.mrb[0].mxu0
    %v5814 = vpop.f32.mrb[0].mxu0
    %5815 = vdwg.mxu0
    %5816 = vmatprep.subr.bf16.mxu0 %v1375
    %5817 = vmatpush1.bf16.msra.mxu0 %v1374
    %5818 = vmatprep.subr.bf16.mxu0 %v1391
    %5819 = vmatpush1.bf16.msra.mxu0 %v1390
    %5820 = vmatprep.subr.bf16.mxu0 %v1407
    %5821 = vmatpush1.bf16.msra.mxu0 %v1406
    %5822 = vmatprep.subr.bf16.mxu0 %v1423
    %5823 = vmatpush1.bf16.msra.mxu0 %v1422
    %5824 = vmatprep.subr.bf16.mxu0 %v1439
    %5825 = vmatpush1.bf16.msra.mxu0 %v1438
    %5826 = vmatprep.subr.bf16.mxu0 %v1455
    %5827 = vmatpush1.bf16.msra.mxu0 %v1454
    %5828 = vmatprep.subr.bf16.mxu0 %v1471
    %5829 = vmatpush1.bf16.msra.mxu0 %v1470
    %5830 = vmatprep.subr.bf16.mxu0 %v1487
    %5831 = vmatpush1.bf16.msra.mxu0 %v1486
    %5832 = vmatprep.subr.bf16.mxu0 %v1503
    %5833 = vmatpush1.bf16.msra.mxu0 %v1502
    %5834 = vmatprep.subr.bf16.mxu0 %v1519
    %5835 = vmatpush1.bf16.msra.mxu0 %v1518
    %5836 = vmatprep.subr.bf16.mxu0 %v1535
    %5837 = vmatpush1.bf16.msra.mxu0 %v1534
    %5838 = vmatprep.subr.bf16.mxu0 %v1551
    %5839 = vmatpush1.bf16.msra.mxu0 %v1550
    %5840 = vmatprep.subr.bf16.mxu0 %v1567
    %5841 = vmatpush1.bf16.msra.mxu0 %v1566
    %5842 = vmatprep.subr.bf16.mxu0 %v1583
    %5843 = vmatpush1.bf16.msra.mxu0 %v1582
    %5844 = vmatprep.subr.bf16.mxu0 %v1599
    %5845 = vmatpush1.bf16.msra.mxu0 %v1598
    %5846 = vmatprep.subr.bf16.mxu0 %v1615
    %5847 = vmatpush1.bf16.msra.mxu0 %v1614
    %5848 = vmatprep.mubr.bf16.mxu0 %v5446
    %5849 = vmatmul.mubr.bf16.gmra.mrb[0].mxu0 %v5445
    %v5850 = vpop.f32.mrb[0].mxu0
    %v5851 = vadd.f32 %v5810, %v5850
    %v5852 = vpop.f32.mrb[0].mxu0
    %v5853 = vadd.f32 %v5812, %v5852
    %v5854 = vpop.f32.mrb[0].mxu0
    %v5855 = vpop.f32.mrb[0].mxu0
    %5856 = vdwg.mxu0
    %5857 = vmatprep.subr.bf16.mxu0 %v1121
    %5858 = vmatpush1.bf16.msra.mxu0 %v1120
    %5859 = vmatprep.subr.bf16.mxu0 %v1137
    %5860 = vmatpush1.bf16.msra.mxu0 %v1136
    %5861 = vmatprep.subr.bf16.mxu0 %v1153
    %5862 = vmatpush1.bf16.msra.mxu0 %v1152
    %5863 = vmatprep.subr.bf16.mxu0 %v1169
    %5864 = vmatpush1.bf16.msra.mxu0 %v1168
    %5865 = vmatprep.subr.bf16.mxu0 %v1185
    %5866 = vmatpush1.bf16.msra.mxu0 %v1184
    %5867 = vmatprep.subr.bf16.mxu0 %v1201
    %5868 = vmatpush1.bf16.msra.mxu0 %v1200
    %5869 = vmatprep.subr.bf16.mxu0 %v1217
    %5870 = vmatpush1.bf16.msra.mxu0 %v1216
    %5871 = vmatprep.subr.bf16.mxu0 %v1233
    %5872 = vmatpush1.bf16.msra.mxu0 %v1232
    %5873 = vmatprep.subr.bf16.mxu0 %v1249
    %5874 = vmatpush1.bf16.msra.mxu0 %v1248
    %5875 = vmatprep.subr.bf16.mxu0 %v1265
    %5876 = vmatpush1.bf16.msra.mxu0 %v1264
    %5877 = vmatprep.subr.bf16.mxu0 %v1281
    %5878 = vmatpush1.bf16.msra.mxu0 %v1280
    %5879 = vmatprep.subr.bf16.mxu0 %v1297
    %5880 = vmatpush1.bf16.msra.mxu0 %v1296
    %5881 = vmatprep.subr.bf16.mxu0 %v1313
    %5882 = vmatpush1.bf16.msra.mxu0 %v1312
    %5883 = vmatprep.subr.bf16.mxu0 %v1329
    %5884 = vmatpush1.bf16.msra.mxu0 %v1328
    %5885 = vmatprep.subr.bf16.mxu0 %v1345
    %5886 = vmatpush1.bf16.msra.mxu0 %v1344
    %5887 = vmatprep.subr.bf16.mxu0 %v1361
    %5888 = vmatpush1.bf16.msra.mxu0 %v1360
    %5889 = vmatprep.mubr.bf16.mxu0 %v5444
    %5890 = vmatmul.mubr.bf16.gmra.mrb[0].mxu0 %v5443
    %v5891 = vpop.f32.mrb[0].mxu0
    %v5892 = vadd.f32 0.0, %v5891
    %v5893 = vpop.f32.mrb[0].mxu0
    %v5894 = vadd.f32 0.0, %v5893
    %v5895 = vpop.f32.mrb[0].mxu0
    %v5896 = vpop.f32.mrb[0].mxu0
    %5897 = vdwg.mxu0
    %5898 = vmatprep.subr.bf16.mxu0 %v1377
    %5899 = vmatpush1.bf16.msra.mxu0 %v1376
    %5900 = vmatprep.subr.bf16.mxu0 %v1393
    %5901 = vmatpush1.bf16.msra.mxu0 %v1392
    %5902 = vmatprep.subr.bf16.mxu0 %v1409
    %5903 = vmatpush1.bf16.msra.mxu0 %v1408
    %5904 = vmatprep.subr.bf16.mxu0 %v1425
    %5905 = vmatpush1.bf16.msra.mxu0 %v1424
    %5906 = vmatprep.subr.bf16.mxu0 %v1441
    %5907 = vmatpush1.bf16.msra.mxu0 %v1440
    %5908 = vmatprep.subr.bf16.mxu0 %v1457
    %5909 = vmatpush1.bf16.msra.mxu0 %v1456
    %5910 = vmatprep.subr.bf16.mxu0 %v1473
    %5911 = vmatpush1.bf16.msra.mxu0 %v1472
    %5912 = vmatprep.subr.bf16.mxu0 %v1489
    %5913 = vmatpush1.bf16.msra.mxu0 %v1488
    %5914 = vmatprep.subr.bf16.mxu0 %v1505
    %5915 = vmatpush1.bf16.msra.mxu0 %v1504
    %5916 = vmatprep.subr.bf16.mxu0 %v1521
    %5917 = vmatpush1.bf16.msra.mxu0 %v1520
    %5918 = vmatprep.subr.bf16.mxu0 %v1537
    %5919 = vmatpush1.bf16.msra.mxu0 %v1536
    %5920 = vmatprep.subr.bf16.mxu0 %v1553
    %5921 = vmatpush1.bf16.msra.mxu0 %v1552
    %5922 = vmatprep.subr.bf16.mxu0 %v1569
    %5923 = vmatpush1.bf16.msra.mxu0 %v1568
    %5924 = vmatprep.subr.bf16.mxu0 %v1585
    %5925 = vmatpush1.bf16.msra.mxu0 %v1584
    %5926 = vmatprep.subr.bf16.mxu0 %v1601
    %5927 = vmatpush1.bf16.msra.mxu0 %v1600
    %5928 = vmatprep.subr.bf16.mxu0 %v1617
    %5929 = vmatpush1.bf16.msra.mxu0 %v1616
    %5930 = vmatprep.mubr.bf16.mxu0 %v5446
    %5931 = vmatmul.mubr.bf16.gmra.mrb[0].mxu0 %v5445
    %v5932 = vpop.f32.mrb[0].mxu0
    %v5933 = vadd.f32 %v5892, %v5932
    %v5934 = vpop.f32.mrb[0].mxu0
    %v5935 = vadd.f32 %v5894, %v5934
    %v5936 = vpop.f32.mrb[0].mxu0
    %v5937 = vpop.f32.mrb[0].mxu0
    %5938 = vdwg.mxu0
    %5939 = vmatprep.subr.bf16.mxu0 %v1123
    %5940 = vmatpush1.bf16.msra.mxu0 %v1122
    %5941 = vmatprep.subr.bf16.mxu0 %v1139
    %5942 = vmatpush1.bf16.msra.mxu0 %v1138
    %5943 = vmatprep.subr.bf16.mxu0 %v1155
    %5944 = vmatpush1.bf16.msra.mxu0 %v1154
    %5945 = vmatprep.subr.bf16.mxu0 %v1171
    %5946 = vmatpush1.bf16.msra.mxu0 %v1170
    %5947 = vmatprep.subr.bf16.mxu0 %v1187
    %5948 = vmatpush1.bf16.msra.mxu0 %v1186
    %5949 = vmatprep.subr.bf16.mxu0 %v1203
    %5950 = vmatpush1.bf16.msra.mxu0 %v1202
    %5951 = vmatprep.subr.bf16.mxu0 %v1219
    %5952 = vmatpush1.bf16.msra.mxu0 %v1218
    %5953 = vmatprep.subr.bf16.mxu0 %v1235
    %5954 = vmatpush1.bf16.msra.mxu0 %v1234
    %5955 = vmatprep.subr.bf16.mxu0 %v1251
    %5956 = vmatpush1.bf16.msra.mxu0 %v1250
    %5957 = vmatprep.subr.bf16.mxu0 %v1267
    %5958 = vmatpush1.bf16.msra.mxu0 %v1266
    %5959 = vmatprep.subr.bf16.mxu0 %v1283
    %5960 = vmatpush1.bf16.msra.mxu0 %v1282
    %5961 = vmatprep.subr.bf16.mxu0 %v1299
    %5962 = vmatpush1.bf16.msra.mxu0 %v1298
    %5963 = vmatprep.subr.bf16.mxu0 %v1315
    %5964 = vmatpush1.bf16.msra.mxu0 %v1314
    %5965 = vmatprep.subr.bf16.mxu0 %v1331
    %5966 = vmatpush1.bf16.msra.mxu0 %v1330
    %5967 = vmatprep.subr.bf16.mxu0 %v1347
    %5968 = vmatpush1.bf16.msra.mxu0 %v1346
    %5969 = vmatprep.subr.bf16.mxu0 %v1363
    %5970 = vmatpush1.bf16.msra.mxu0 %v1362
    %5971 = vmatprep.mubr.bf16.mxu0 %v5444
    %5972 = vmatmul.mubr.bf16.gmra.mrb[0].mxu0 %v5443
    %v5973 = vpop.f32.mrb[0].mxu0
    %v5974 = vadd.f32 0.0, %v5973
    %v5975 = vpop.f32.mrb[0].mxu0
    %v5976 = vadd.f32 0.0, %v5975
    %v5977 = vpop.f32.mrb[0].mxu0
    %v5978 = vpop.f32.mrb[0].mxu0
    %5979 = vdwg.mxu0
    %5980 = vmatprep.subr.bf16.mxu0 %v1379
    %5981 = vmatpush1.bf16.msra.mxu0 %v1378
    %5982 = vmatprep.subr.bf16.mxu0 %v1395
    %5983 = vmatpush1.bf16.msra.mxu0 %v1394
    %5984 = vmatprep.subr.bf16.mxu0 %v1411
    %5985 = vmatpush1.bf16.msra.mxu0 %v1410
    %5986 = vmatprep.subr.bf16.mxu0 %v1427
    %5987 = vmatpush1.bf16.msra.mxu0 %v1426
    %5988 = vmatprep.subr.bf16.mxu0 %v1443
    %5989 = vmatpush1.bf16.msra.mxu0 %v1442
    %5990 = vmatprep.subr.bf16.mxu0 %v1459
    %5991 = vmatpush1.bf16.msra.mxu0 %v1458
    %5992 = vmatprep.subr.bf16.mxu0 %v1475
    %5993 = vmatpush1.bf16.msra.mxu0 %v1474
    %5994 = vmatprep.subr.bf16.mxu0 %v1491
    %5995 = vmatpush1.bf16.msra.mxu0 %v1490
    %5996 = vmatprep.subr.bf16.mxu0 %v1507
    %5997 = vmatpush1.bf16.msra.mxu0 %v1506
    %5998 = vmatprep.subr.bf16.mxu0 %v1523
    %5999 = vmatpush1.bf16.msra.mxu0 %v1522
    %6000 = vmatprep.subr.bf16.mxu0 %v1539
    %6001 = vmatpush1.bf16.msra.mxu0 %v1538
    %6002 = vmatprep.subr.bf16.mxu0 %v1555
    %6003 = vmatpush1.bf16.msra.mxu0 %v1554
    %6004 = vmatprep.subr.bf16.mxu0 %v1571
    %6005 = vmatpush1.bf16.msra.mxu0 %v1570
    %6006 = vmatprep.subr.bf16.mxu0 %v1587
    %6007 = vmatpush1.bf16.msra.mxu0 %v1586
    %6008 = vmatprep.subr.bf16.mxu0 %v1603
    %6009 = vmatpush1.bf16.msra.mxu0 %v1602
    %6010 = vmatprep.subr.bf16.mxu0 %v1619
    %6011 = vmatpush1.bf16.msra.mxu0 %v1618
    %6012 = vmatprep.mubr.bf16.mxu0 %v5446
    %6013 = vmatmul.mubr.bf16.gmra.mrb[0].mxu0 %v5445
    %v6014 = vpop.f32.mrb[0].mxu0
    %v6015 = vadd.f32 %v5974, %v6014
    %v6016 = vpop.f32.mrb[0].mxu0
    %v6017 = vadd.f32 %v5976, %v6016
    %v6018 = vpop.f32.mrb[0].mxu0
    %v6019 = vpop.f32.mrb[0].mxu0
    %6020 = vdwg.mxu0
    %6021 = vmatprep.subr.bf16.mxu0 %v1125
    %6022 = vmatpush1.bf16.msra.mxu0 %v1124
    %6023 = vmatprep.subr.bf16.mxu0 %v1141
    %6024 = vmatpush1.bf16.msra.mxu0 %v1140
    %6025 = vmatprep.subr.bf16.mxu0 %v1157
    %6026 = vmatpush1.bf16.msra.mxu0 %v1156
    %6027 = vmatprep.subr.bf16.mxu0 %v1173
    %6028 = vmatpush1.bf16.msra.mxu0 %v1172
    %6029 = vmatprep.subr.bf16.mxu0 %v1189
    %6030 = vmatpush1.bf16.msra.mxu0 %v1188
    %6031 = vmatprep.subr.bf16.mxu0 %v1205
    %6032 = vmatpush1.bf16.msra.mxu0 %v1204
    %6033 = vmatprep.subr.bf16.mxu0 %v1221
    %6034 = vmatpush1.bf16.msra.mxu0 %v1220
    %6035 = vmatprep.subr.bf16.mxu0 %v1237
    %6036 = vmatpush1.bf16.msra.mxu0 %v1236
    %6037 = vmatprep.subr.bf16.mxu0 %v1253
    %6038 = vmatpush1.bf16.msra.mxu0 %v1252
    %6039 = vmatprep.subr.bf16.mxu0 %v1269
    %6040 = vmatpush1.bf16.msra.mxu0 %v1268
    %6041 = vmatprep.subr.bf16.mxu0 %v1285
    %6042 = vmatpush1.bf16.msra.mxu0 %v1284
    %6043 = vmatprep.subr.bf16.mxu0 %v1301
    %6044 = vmatpush1.bf16.msra.mxu0 %v1300
    %6045 = vmatprep.subr.bf16.mxu0 %v1317
    %6046 = vmatpush1.bf16.msra.mxu0 %v1316
    %6047 = vmatprep.subr.bf16.mxu0 %v1333
    %6048 = vmatpush1.bf16.msra.mxu0 %v1332
    %6049 = vmatprep.subr.bf16.mxu0 %v1349
    %6050 = vmatpush1.bf16.msra.mxu0 %v1348
    %6051 = vmatprep.subr.bf16.mxu0 %v1365
    %6052 = vmatpush1.bf16.msra.mxu0 %v1364
    %6053 = vmatprep.mubr.bf16.mxu0 %v5444
    %6054 = vmatmul.mubr.bf16.gmra.mrb[0].mxu0 %v5443
    %v6055 = vpop.f32.mrb[0].mxu0
    %v6056 = vadd.f32 0.0, %v6055
    %v6057 = vpop.f32.mrb[0].mxu0
    %v6058 = vadd.f32 0.0, %v6057
    %v6059 = vpop.f32.mrb[0].mxu0
    %v6060 = vpop.f32.mrb[0].mxu0
    %6061 = vdwg.mxu0
    %6062 = vmatprep.subr.bf16.mxu0 %v1381
    %6063 = vmatpush1.bf16.msra.mxu0 %v1380
    %6064 = vmatprep.subr.bf16.mxu0 %v1397
    %6065 = vmatpush1.bf16.msra.mxu0 %v1396
    %6066 = vmatprep.subr.bf16.mxu0 %v1413
    %6067 = vmatpush1.bf16.msra.mxu0 %v1412
    %6068 = vmatprep.subr.bf16.mxu0 %v1429
    %6069 = vmatpush1.bf16.msra.mxu0 %v1428
    %6070 = vmatprep.subr.bf16.mxu0 %v1445
    %6071 = vmatpush1.bf16.msra.mxu0 %v1444
    %6072 = vmatprep.subr.bf16.mxu0 %v1461
    %6073 = vmatpush1.bf16.msra.mxu0 %v1460
    %6074 = vmatprep.subr.bf16.mxu0 %v1477
    %6075 = vmatpush1.bf16.msra.mxu0 %v1476
    %6076 = vmatprep.subr.bf16.mxu0 %v1493
    %6077 = vmatpush1.bf16.msra.mxu0 %v1492
    %6078 = vmatprep.subr.bf16.mxu0 %v1509
    %6079 = vmatpush1.bf16.msra.mxu0 %v1508
    %6080 = vmatprep.subr.bf16.mxu0 %v1525
    %6081 = vmatpush1.bf16.msra.mxu0 %v1524
    %6082 = vmatprep.subr.bf16.mxu0 %v1541
    %6083 = vmatpush1.bf16.msra.mxu0 %v1540
    %6084 = vmatprep.subr.bf16.mxu0 %v1557
    %6085 = vmatpush1.bf16.msra.mxu0 %v1556
    %6086 = vmatprep.subr.bf16.mxu0 %v1573
    %6087 = vmatpush1.bf16.msra.mxu0 %v1572
    %6088 = vmatprep.subr.bf16.mxu0 %v1589
    %6089 = vmatpush1.bf16.msra.mxu0 %v1588
    %6090 = vmatprep.subr.bf16.mxu0 %v1605
    %6091 = vmatpush1.bf16.msra.mxu0 %v1604
    %6092 = vmatprep.subr.bf16.mxu0 %v1621
    %6093 = vmatpush1.bf16.msra.mxu0 %v1620
    %6094 = vmatprep.mubr.bf16.mxu0 %v5446
    %6095 = vmatmul.mubr.bf16.gmra.mrb[0].mxu0 %v5445
    %v6096 = vpop.f32.mrb[0].mxu0
    %v6097 = vadd.f32 %v6056, %v6096
    %v6098 = vpop.f32.mrb[0].mxu0
    %v6099 = vadd.f32 %v6058, %v6098
    %v6100 = vpop.f32.mrb[0].mxu0
    %v6101 = vpop.f32.mrb[0].mxu0
    %6102 = vdwg.mxu0
    %v6103 = vadd.f32 %v5427, %v5523
    %v6104 = vadd.f32 %v5428, %v5525
    %v6105 = vadd.f32 %v5429, %v5605
    %v6106 = vadd.f32 %v5430, %v5607
    %v6107 = vadd.f32 %v5431, %v5687
    %v6108 = vadd.f32 %v5432, %v5689
    %v6109 = vadd.f32 %v5433, %v5769
    %v6110 = vadd.f32 %v5434, %v5771
    %v6111 = vadd.f32 %v5435, %v5851
    %v6112 = vadd.f32 %v5436, %v5853
    %v6113 = vadd.f32 %v5437, %v5933
    %v6114 = vadd.f32 %v5438, %v5935
    %v6115 = vadd.f32 %v5439, %v6015
    %v6116 = vadd.f32 %v5440, %v6017
    %v6117 = vadd.f32 %v5441, %v6097
    %v6118 = vadd.f32 %v5442, %v6099
    %v6119 = vmul.f32 %v6103, 0.5
    %v6120 = vmul.f32 %v6104, 0.5
    %v6121 = vmul.f32 %v6105, 0.5
    %v6122 = vmul.f32 %v6106, 0.5
    %v6123 = vtanh.pop %v6119
    %v6124 = vtanh.pop %v6120
    %v6125 = vtanh.pop %v6121
    %v6126 = vtanh.pop %v6122
    %v6127 = vmul.f32 %v6123, 0.5
    %v6128 = vmul.f32 %v6124, 0.5
    %v6129 = vmul.f32 %v6125, 0.5
    %v6130 = vmul.f32 %v6126, 0.5
    %v6131 = vadd.f32 %v6127, 0.5
    %v6132 = vadd.f32 %v6128, 0.5
    %v6133 = vadd.f32 %v6129, 0.5
    %v6134 = vadd.f32 %v6130, 0.5
    %v6135 = vmul.f32 %v6107, 0.5
    %v6136 = vmul.f32 %v6108, 0.5
    %v6137 = vmul.f32 %v6109, 0.5
    %v6138 = vmul.f32 %v6110, 0.5
    %v6139 = vtanh.pop %v6135
    %v6140 = vtanh.pop %v6136
    %v6141 = vtanh.pop %v6137
    %v6142 = vtanh.pop %v6138
    %v6143 = vmul.f32 %v6139, 0.5
    %v6144 = vmul.f32 %v6140, 0.5
    %v6145 = vmul.f32 %v6141, 0.5
    %v6146 = vmul.f32 %v6142, 0.5
    %v6147 = vadd.f32 %v6143, 0.5
    %v6148 = vadd.f32 %v6144, 0.5
    %v6149 = vadd.f32 %v6145, 0.5
    %v6150 = vadd.f32 %v6146, 0.5
    %v6151 = vtanh.pop %v6111
    %v6152 = vtanh.pop %v6112
    %v6153 = vtanh.pop %v6113
    %v6154 = vtanh.pop %v6114
    %v6155 = vmul.f32 %v6115, 0.5
    %v6156 = vmul.f32 %v6116, 0.5
    %v6157 = vmul.f32 %v6117, 0.5
    %v6158 = vmul.f32 %v6118, 0.5
    %v6159 = vtanh.pop %v6155
    %v6160 = vtanh.pop %v6156
    %v6161 = vtanh.pop %v6157
    %v6162 = vtanh.pop %v6158
    %v6163 = vmul.f32 %v6159, 0.5
    %v6164 = vmul.f32 %v6160, 0.5
    %v6165 = vmul.f32 %v6161, 0.5
    %v6166 = vmul.f32 %v6162, 0.5
    %v6167 = vadd.f32 %v6163, 0.5
    %v6168 = vadd.f32 %v6164, 0.5
    %v6169 = vadd.f32 %v6165, 0.5
    %v6170 = vadd.f32 %v6166, 0.5
    %v6171 = vmul.f32 %v6147, %v5414
    %v6172 = vmul.f32 %v6148, %v5415
    %v6173 = vmul.f32 %v6149, %v5416
    %v6174 = vmul.f32 %v6150, %v5417
    %v6175 = vmul.f32 %v6131, %v6151
    %v6176 = vmul.f32 %v6132, %v6152
    %v6177 = vmul.f32 %v6133, %v6153
    %v6178 = vmul.f32 %v6134, %v6154
    %v6179 = vadd.f32 %v6171, %v6175
    %v6180 = vadd.f32 %v6172, %v6176
    %v6181 = vadd.f32 %v6173, %v6177
    %v6182 = vadd.f32 %v6174, %v6178
    %v6183 = vtanh.pop %v6179
    %v6184 = vtanh.pop %v6180
    %v6185 = vtanh.pop %v6181
    %v6186 = vtanh.pop %v6182
    %v6187 = vmul.f32 %v6167, %v6183
    %v6188 = vmul.f32 %v6168, %v6184
    %v6189 = vmul.f32 %v6169, %v6185
    %v6190 = vmul.f32 %v6170, %v6186
    %s6191 = scalar_lea.vmem [#allocation5], 768
    %v6192 = vld [vmem:[%s6191] sm:$0xff]
    %v6193 = vld [vmem:[%s6191 + $0x8] sm:$0xff]
    %v6194 = vld [vmem:[%s6191 + $0x10] sm:$0xff]
    %v6195 = vld [vmem:[%s6191 + $0x18] sm:$0xff]
    %v6196 = vld [vmem:[%s6191 + $0x20] sm:$0xff]
    %v6197 = vld [vmem:[%s6191 + $0x28] sm:$0xff]
    %v6198 = vld [vmem:[%s6191 + $0x30] sm:$0xff]
    %v6199 = vld [vmem:[%s6191 + $0x38] sm:$0xff]
    %v6200 = vld [vmem:[%s6191 + $0x40] sm:$0xff]
    %v6201 = vld [vmem:[%s6191 + $0x48] sm:$0xff]
    %v6202 = vld [vmem:[%s6191 + $0x50] sm:$0xff]
    %v6203 = vld [vmem:[%s6191 + $0x58] sm:$0xff]
    %v6204 = vld [vmem:[%s6191 + $0x60] sm:$0xff]
    %v6205 = vld [vmem:[%s6191 + $0x68] sm:$0xff]
    %v6206 = vld [vmem:[%s6191 + $0x70] sm:$0xff]
    %v6207 = vld [vmem:[%s6191 + $0x78] sm:$0xff]
    %v6208 = vpack.c.bf16 %v6187, %v6187
    %v6209 = vpack.c.bf16 %v6188, %v6188
    %v6210 = vpack.c.bf16 %v6189, %v6189
    %v6211 = vpack.c.bf16 %v6190, %v6190
    %6212 = vmatprep.subr.bf16.mxu0 %v1111
    %6213 = vmatpush1.bf16.msra.mxu0 %v1110
    %6214 = vmatprep.subr.bf16.mxu0 %v1127
    %6215 = vmatpush1.bf16.msra.mxu0 %v1126
    %6216 = vmatprep.subr.bf16.mxu0 %v1143
    %6217 = vmatpush1.bf16.msra.mxu0 %v1142
    %6218 = vmatprep.subr.bf16.mxu0 %v1159
    %6219 = vmatpush1.bf16.msra.mxu0 %v1158
    %6220 = vmatprep.subr.bf16.mxu0 %v1175
    %6221 = vmatpush1.bf16.msra.mxu0 %v1174
    %6222 = vmatprep.subr.bf16.mxu0 %v1191
    %6223 = vmatpush1.bf16.msra.mxu0 %v1190
    %6224 = vmatprep.subr.bf16.mxu0 %v1207
    %6225 = vmatpush1.bf16.msra.mxu0 %v1206
    %6226 = vmatprep.subr.bf16.mxu0 %v1223
    %6227 = vmatpush1.bf16.msra.mxu0 %v1222
    %6228 = vmatprep.subr.bf16.mxu0 %v1239
    %6229 = vmatpush1.bf16.msra.mxu0 %v1238
    %6230 = vmatprep.subr.bf16.mxu0 %v1255
    %6231 = vmatpush1.bf16.msra.mxu0 %v1254
    %6232 = vmatprep.subr.bf16.mxu0 %v1271
    %6233 = vmatpush1.bf16.msra.mxu0 %v1270
    %6234 = vmatprep.subr.bf16.mxu0 %v1287
    %6235 = vmatpush1.bf16.msra.mxu0 %v1286
    %6236 = vmatprep.subr.bf16.mxu0 %v1303
    %6237 = vmatpush1.bf16.msra.mxu0 %v1302
    %6238 = vmatprep.subr.bf16.mxu0 %v1319
    %6239 = vmatpush1.bf16.msra.mxu0 %v1318
    %6240 = vmatprep.subr.bf16.mxu0 %v1335
    %6241 = vmatpush1.bf16.msra.mxu0 %v1334
    %6242 = vmatprep.subr.bf16.mxu0 %v1351
    %6243 = vmatpush1.bf16.msra.mxu0 %v1350
    %6244 = vmatprep.mubr.bf16.mxu0 %v6209
    %6245 = vmatmul.mubr.bf16.gmra.mrb[0].mxu0 %v6208
    %v6246 = vpop.f32.mrb[0].mxu0
    %v6247 = vadd.f32 0.0, %v6246
    %v6248 = vpop.f32.mrb[0].mxu0
    %v6249 = vadd.f32 0.0, %v6248
    %v6250 = vpop.f32.mrb[0].mxu0
    %v6251 = vpop.f32.mrb[0].mxu0
    %6252 = vdwg.mxu0
    %6253 = vmatprep.subr.bf16.mxu0 %v1367
    %6254 = vmatpush1.bf16.msra.mxu0 %v1366
    %6255 = vmatprep.subr.bf16.mxu0 %v1383
    %6256 = vmatpush1.bf16.msra.mxu0 %v1382
    %6257 = vmatprep.subr.bf16.mxu0 %v1399
    %6258 = vmatpush1.bf16.msra.mxu0 %v1398
    %6259 = vmatprep.subr.bf16.mxu0 %v1415
    %6260 = vmatpush1.bf16.msra.mxu0 %v1414
    %6261 = vmatprep.subr.bf16.mxu0 %v1431
    %6262 = vmatpush1.bf16.msra.mxu0 %v1430
    %6263 = vmatprep.subr.bf16.mxu0 %v1447
    %6264 = vmatpush1.bf16.msra.mxu0 %v1446
    %6265 = vmatprep.subr.bf16.mxu0 %v1463
    %6266 = vmatpush1.bf16.msra.mxu0 %v1462
    %6267 = vmatprep.subr.bf16.mxu0 %v1479
    %6268 = vmatpush1.bf16.msra.mxu0 %v1478
    %6269 = vmatprep.subr.bf16.mxu0 %v1495
    %6270 = vmatpush1.bf16.msra.mxu0 %v1494
    %6271 = vmatprep.subr.bf16.mxu0 %v1511
    %6272 = vmatpush1.bf16.msra.mxu0 %v1510
    %6273 = vmatprep.subr.bf16.mxu0 %v1527
    %6274 = vmatpush1.bf16.msra.mxu0 %v1526
    %6275 = vmatprep.subr.bf16.mxu0 %v1543
    %6276 = vmatpush1.bf16.msra.mxu0 %v1542
    %6277 = vmatprep.subr.bf16.mxu0 %v1559
    %6278 = vmatpush1.bf16.msra.mxu0 %v1558
    %6279 = vmatprep.subr.bf16.mxu0 %v1575
    %6280 = vmatpush1.bf16.msra.mxu0 %v1574
    %6281 = vmatprep.subr.bf16.mxu0 %v1591
    %6282 = vmatpush1.bf16.msra.mxu0 %v1590
    %6283 = vmatprep.subr.bf16.mxu0 %v1607
    %6284 = vmatpush1.bf16.msra.mxu0 %v1606
    %6285 = vmatprep.mubr.bf16.mxu0 %v6211
    %6286 = vmatmul.mubr.bf16.gmra.mrb[0].mxu0 %v6210
    %v6287 = vpop.f32.mrb[0].mxu0
    %v6288 = vadd.f32 %v6247, %v6287
    %v6289 = vpop.f32.mrb[0].mxu0
    %v6290 = vadd.f32 %v6249, %v6289
    %v6291 = vpop.f32.mrb[0].mxu0
    %v6292 = vpop.f32.mrb[0].mxu0
    %6293 = vdwg.mxu0
    %6294 = vmatprep.subr.bf16.mxu0 %v1113
    %6295 = vmatpush1.bf16.msra.mxu0 %v1112
    %6296 = vmatprep.subr.bf16.mxu0 %v1129
    %6297 = vmatpush1.bf16.msra.mxu0 %v1128
    %6298 = vmatprep.subr.bf16.mxu0 %v1145
    %6299 = vmatpush1.bf16.msra.mxu0 %v1144
    %6300 = vmatprep.subr.bf16.mxu0 %v1161
    %6301 = vmatpush1.bf16.msra.mxu0 %v1160
    %6302 = vmatprep.subr.bf16.mxu0 %v1177
    %6303 = vmatpush1.bf16.msra.mxu0 %v1176
    %6304 = vmatprep.subr.bf16.mxu0 %v1193
    %6305 = vmatpush1.bf16.msra.mxu0 %v1192
    %6306 = vmatprep.subr.bf16.mxu0 %v1209
    %6307 = vmatpush1.bf16.msra.mxu0 %v1208
    %6308 = vmatprep.subr.bf16.mxu0 %v1225
    %6309 = vmatpush1.bf16.msra.mxu0 %v1224
    %6310 = vmatprep.subr.bf16.mxu0 %v1241
    %6311 = vmatpush1.bf16.msra.mxu0 %v1240
    %6312 = vmatprep.subr.bf16.mxu0 %v1257
    %6313 = vmatpush1.bf16.msra.mxu0 %v1256
    %6314 = vmatprep.subr.bf16.mxu0 %v1273
    %6315 = vmatpush1.bf16.msra.mxu0 %v1272
    %6316 = vmatprep.subr.bf16.mxu0 %v1289
    %6317 = vmatpush1.bf16.msra.mxu0 %v1288
    %6318 = vmatprep.subr.bf16.mxu0 %v1305
    %6319 = vmatpush1.bf16.msra.mxu0 %v1304
    %6320 = vmatprep.subr.bf16.mxu0 %v1321
    %6321 = vmatpush1.bf16.msra.mxu0 %v1320
    %6322 = vmatprep.subr.bf16.mxu0 %v1337
    %6323 = vmatpush1.bf16.msra.mxu0 %v1336
    %6324 = vmatprep.subr.bf16.mxu0 %v1353
    %6325 = vmatpush1.bf16.msra.mxu0 %v1352
    %6326 = vmatprep.mubr.bf16.mxu0 %v6209
    %6327 = vmatmul.mubr.bf16.gmra.mrb[0].mxu0 %v6208
    %v6328 = vpop.f32.mrb[0].mxu0
    %v6329 = vadd.f32 0.0, %v6328
    %v6330 = vpop.f32.mrb[0].mxu0
    %v6331 = vadd.f32 0.0, %v6330
    %v6332 = vpop.f32.mrb[0].mxu0
    %v6333 = vpop.f32.mrb[0].mxu0
    %6334 = vdwg.mxu0
    %6335 = vmatprep.subr.bf16.mxu0 %v1369
    %6336 = vmatpush1.bf16.msra.mxu0 %v1368
    %6337 = vmatprep.subr.bf16.mxu0 %v1385
    %6338 = vmatpush1.bf16.msra.mxu0 %v1384
    %6339 = vmatprep.subr.bf16.mxu0 %v1401
    %6340 = vmatpush1.bf16.msra.mxu0 %v1400
    %6341 = vmatprep.subr.bf16.mxu0 %v1417
    %6342 = vmatpush1.bf16.msra.mxu0 %v1416
    %6343 = vmatprep.subr.bf16.mxu0 %v1433
    %6344 = vmatpush1.bf16.msra.mxu0 %v1432
    %6345 = vmatprep.subr.bf16.mxu0 %v1449
    %6346 = vmatpush1.bf16.msra.mxu0 %v1448
    %6347 = vmatprep.subr.bf16.mxu0 %v1465
    %6348 = vmatpush1.bf16.msra.mxu0 %v1464
    %6349 = vmatprep.subr.bf16.mxu0 %v1481
    %6350 = vmatpush1.bf16.msra.mxu0 %v1480
    %6351 = vmatprep.subr.bf16.mxu0 %v1497
    %6352 = vmatpush1.bf16.msra.mxu0 %v1496
    %6353 = vmatprep.subr.bf16.mxu0 %v1513
    %6354 = vmatpush1.bf16.msra.mxu0 %v1512
    %6355 = vmatprep.subr.bf16.mxu0 %v1529
    %6356 = vmatpush1.bf16.msra.mxu0 %v1528
    %6357 = vmatprep.subr.bf16.mxu0 %v1545
    %6358 = vmatpush1.bf16.msra.mxu0 %v1544
    %6359 = vmatprep.subr.bf16.mxu0 %v1561
    %6360 = vmatpush1.bf16.msra.mxu0 %v1560
    %6361 = vmatprep.subr.bf16.mxu0 %v1577
    %6362 = vmatpush1.bf16.msra.mxu0 %v1576
    %6363 = vmatprep.subr.bf16.mxu0 %v1593
    %6364 = vmatpush1.bf16.msra.mxu0 %v1592
    %6365 = vmatprep.subr.bf16.mxu0 %v1609
    %6366 = vmatpush1.bf16.msra.mxu0 %v1608
    %6367 = vmatprep.mubr.bf16.mxu0 %v6211
    %6368 = vmatmul.mubr.bf16.gmra.mrb[0].mxu0 %v6210
    %v6369 = vpop.f32.mrb[0].mxu0
    %v6370 = vadd.f32 %v6329, %v6369
    %v6371 = vpop.f32.mrb[0].mxu0
    %v6372 = vadd.f32 %v6331, %v6371
    %v6373 = vpop.f32.mrb[0].mxu0
    %v6374 = vpop.f32.mrb[0].mxu0
    %6375 = vdwg.mxu0
    %6376 = vmatprep.subr.bf16.mxu0 %v1115
    %6377 = vmatpush1.bf16.msra.mxu0 %v1114
    %6378 = vmatprep.subr.bf16.mxu0 %v1131
    %6379 = vmatpush1.bf16.msra.mxu0 %v1130
    %6380 = vmatprep.subr.bf16.mxu0 %v1147
    %6381 = vmatpush1.bf16.msra.mxu0 %v1146
    %6382 = vmatprep.subr.bf16.mxu0 %v1163
    %6383 = vmatpush1.bf16.msra.mxu0 %v1162
    %6384 = vmatprep.subr.bf16.mxu0 %v1179
    %6385 = vmatpush1.bf16.msra.mxu0 %v1178
    %6386 = vmatprep.subr.bf16.mxu0 %v1195
    %6387 = vmatpush1.bf16.msra.mxu0 %v1194
    %6388 = vmatprep.subr.bf16.mxu0 %v1211
    %6389 = vmatpush1.bf16.msra.mxu0 %v1210
    %6390 = vmatprep.subr.bf16.mxu0 %v1227
    %6391 = vmatpush1.bf16.msra.mxu0 %v1226
    %6392 = vmatprep.subr.bf16.mxu0 %v1243
    %6393 = vmatpush1.bf16.msra.mxu0 %v1242
    %6394 = vmatprep.subr.bf16.mxu0 %v1259
    %6395 = vmatpush1.bf16.msra.mxu0 %v1258
    %6396 = vmatprep.subr.bf16.mxu0 %v1275
    %6397 = vmatpush1.bf16.msra.mxu0 %v1274
    %6398 = vmatprep.subr.bf16.mxu0 %v1291
    %6399 = vmatpush1.bf16.msra.mxu0 %v1290
    %6400 = vmatprep.subr.bf16.mxu0 %v1307
    %6401 = vmatpush1.bf16.msra.mxu0 %v1306
    %6402 = vmatprep.subr.bf16.mxu0 %v1323
    %6403 = vmatpush1.bf16.msra.mxu0 %v1322
    %6404 = vmatprep.subr.bf16.mxu0 %v1339
    %6405 = vmatpush1.bf16.msra.mxu0 %v1338
    %6406 = vmatprep.subr.bf16.mxu0 %v1355
    %6407 = vmatpush1.bf16.msra.mxu0 %v1354
    %6408 = vmatprep.mubr.bf16.mxu0 %v6209
    %6409 = vmatmul.mubr.bf16.gmra.mrb[0].mxu0 %v6208
    %v6410 = vpop.f32.mrb[0].mxu0
    %v6411 = vadd.f32 0.0, %v6410
    %v6412 = vpop.f32.mrb[0].mxu0
    %v6413 = vadd.f32 0.0, %v6412
    %v6414 = vpop.f32.mrb[0].mxu0
    %v6415 = vpop.f32.mrb[0].mxu0
    %6416 = vdwg.mxu0
    %6417 = vmatprep.subr.bf16.mxu0 %v1371
    %6418 = vmatpush1.bf16.msra.mxu0 %v1370
    %6419 = vmatprep.subr.bf16.mxu0 %v1387
    %6420 = vmatpush1.bf16.msra.mxu0 %v1386
    %6421 = vmatprep.subr.bf16.mxu0 %v1403
    %6422 = vmatpush1.bf16.msra.mxu0 %v1402
    %6423 = vmatprep.subr.bf16.mxu0 %v1419
    %6424 = vmatpush1.bf16.msra.mxu0 %v1418
    %6425 = vmatprep.subr.bf16.mxu0 %v1435
    %6426 = vmatpush1.bf16.msra.mxu0 %v1434
    %6427 = vmatprep.subr.bf16.mxu0 %v1451
    %6428 = vmatpush1.bf16.msra.mxu0 %v1450
    %6429 = vmatprep.subr.bf16.mxu0 %v1467
    %6430 = vmatpush1.bf16.msra.mxu0 %v1466
    %6431 = vmatprep.subr.bf16.mxu0 %v1483
    %6432 = vmatpush1.bf16.msra.mxu0 %v1482
    %6433 = vmatprep.subr.bf16.mxu0 %v1499
    %6434 = vmatpush1.bf16.msra.mxu0 %v1498
    %6435 = vmatprep.subr.bf16.mxu0 %v1515
    %6436 = vmatpush1.bf16.msra.mxu0 %v1514
    %6437 = vmatprep.subr.bf16.mxu0 %v1531
    %6438 = vmatpush1.bf16.msra.mxu0 %v1530
    %6439 = vmatprep.subr.bf16.mxu0 %v1547
    %6440 = vmatpush1.bf16.msra.mxu0 %v1546
    %6441 = vmatprep.subr.bf16.mxu0 %v1563
    %6442 = vmatpush1.bf16.msra.mxu0 %v1562
    %6443 = vmatprep.subr.bf16.mxu0 %v1579
    %6444 = vmatpush1.bf16.msra.mxu0 %v1578
    %6445 = vmatprep.subr.bf16.mxu0 %v1595
    %6446 = vmatpush1.bf16.msra.mxu0 %v1594
    %6447 = vmatprep.subr.bf16.mxu0 %v1611
    %6448 = vmatpush1.bf16.msra.mxu0 %v1610
    %6449 = vmatprep.mubr.bf16.mxu0 %v6211
    %6450 = vmatmul.mubr.bf16.gmra.mrb[0].mxu0 %v6210
    %v6451 = vpop.f32.mrb[0].mxu0
    %v6452 = vadd.f32 %v6411, %v6451
    %v6453 = vpop.f32.mrb[0].mxu0
    %v6454 = vadd.f32 %v6413, %v6453
    %v6455 = vpop.f32.mrb[0].mxu0
    %v6456 = vpop.f32.mrb[0].mxu0
    %6457 = vdwg.mxu0
    %6458 = vmatprep.subr.bf16.mxu0 %v1117
    %6459 = vmatpush1.bf16.msra.mxu0 %v1116
    %6460 = vmatprep.subr.bf16.mxu0 %v1133
    %6461 = vmatpush1.bf16.msra.mxu0 %v1132
    %6462 = vmatprep.subr.bf16.mxu0 %v1149
    %6463 = vmatpush1.bf16.msra.mxu0 %v1148
    %6464 = vmatprep.subr.bf16.mxu0 %v1165
    %6465 = vmatpush1.bf16.msra.mxu0 %v1164
    %6466 = vmatprep.subr.bf16.mxu0 %v1181
    %6467 = vmatpush1.bf16.msra.mxu0 %v1180
    %6468 = vmatprep.subr.bf16.mxu0 %v1197
    %6469 = vmatpush1.bf16.msra.mxu0 %v1196
    %6470 = vmatprep.subr.bf16.mxu0 %v1213
    %6471 = vmatpush1.bf16.msra.mxu0 %v1212
    %6472 = vmatprep.subr.bf16.mxu0 %v1229
    %6473 = vmatpush1.bf16.msra.mxu0 %v1228
    %6474 = vmatprep.subr.bf16.mxu0 %v1245
    %6475 = vmatpush1.bf16.msra.mxu0 %v1244
    %6476 = vmatprep.subr.bf16.mxu0 %v1261
    %6477 = vmatpush1.bf16.msra.mxu0 %v1260
    %6478 = vmatprep.subr.bf16.mxu0 %v1277
    %6479 = vmatpush1.bf16.msra.mxu0 %v1276
    %6480 = vmatprep.subr.bf16.mxu0 %v1293
    %6481 = vmatpush1.bf16.msra.mxu0 %v1292
    %6482 = vmatprep.subr.bf16.mxu0 %v1309
    %6483 = vmatpush1.bf16.msra.mxu0 %v1308
    %6484 = vmatprep.subr.bf16.mxu0 %v1325
    %6485 = vmatpush1.bf16.msra.mxu0 %v1324
    %6486 = vmatprep.subr.bf16.mxu0 %v1341
    %6487 = vmatpush1.bf16.msra.mxu0 %v1340
    %6488 = vmatprep.subr.bf16.mxu0 %v1357
    %6489 = vmatpush1.bf16.msra.mxu0 %v1356
    %6490 = vmatprep.mubr.bf16.mxu0 %v6209
    %6491 = vmatmul.mubr.bf16.gmra.mrb[0].mxu0 %v6208
    %v6492 = vpop.f32.mrb[0].mxu0
    %v6493 = vadd.f32 0.0, %v6492
    %v6494 = vpop.f32.mrb[0].mxu0
    %v6495 = vadd.f32 0.0, %v6494
    %v6496 = vpop.f32.mrb[0].mxu0
    %v6497 = vpop.f32.mrb[0].mxu0
    %6498 = vdwg.mxu0
    %6499 = vmatprep.subr.bf16.mxu0 %v1373
    %6500 = vmatpush1.bf16.msra.mxu0 %v1372
    %6501 = vmatprep.subr.bf16.mxu0 %v1389
    %6502 = vmatpush1.bf16.msra.mxu0 %v1388
    %6503 = vmatprep.subr.bf16.mxu0 %v1405
    %6504 = vmatpush1.bf16.msra.mxu0 %v1404
    %6505 = vmatprep.subr.bf16.mxu0 %v1421
    %6506 = vmatpush1.bf16.msra.mxu0 %v1420
    %6507 = vmatprep.subr.bf16.mxu0 %v1437
    %6508 = vmatpush1.bf16.msra.mxu0 %v1436
    %6509 = vmatprep.subr.bf16.mxu0 %v1453
    %6510 = vmatpush1.bf16.msra.mxu0 %v1452
    %6511 = vmatprep.subr.bf16.mxu0 %v1469
    %6512 = vmatpush1.bf16.msra.mxu0 %v1468
    %6513 = vmatprep.subr.bf16.mxu0 %v1485
    %6514 = vmatpush1.bf16.msra.mxu0 %v1484
    %6515 = vmatprep.subr.bf16.mxu0 %v1501
    %6516 = vmatpush1.bf16.msra.mxu0 %v1500
    %6517 = vmatprep.subr.bf16.mxu0 %v1517
    %6518 = vmatpush1.bf16.msra.mxu0 %v1516
    %6519 = vmatprep.subr.bf16.mxu0 %v1533
    %6520 = vmatpush1.bf16.msra.mxu0 %v1532
    %6521 = vmatprep.subr.bf16.mxu0 %v1549
    %6522 = vmatpush1.bf16.msra.mxu0 %v1548
    %6523 = vmatprep.subr.bf16.mxu0 %v1565
    %6524 = vmatpush1.bf16.msra.mxu0 %v1564
    %6525 = vmatprep.subr.bf16.mxu0 %v1581
    %6526 = vmatpush1.bf16.msra.mxu0 %v1580
    %6527 = vmatprep.subr.bf16.mxu0 %v1597
    %6528 = vmatpush1.bf16.msra.mxu0 %v1596
    %6529 = vmatprep.subr.bf16.mxu0 %v1613
    %6530 = vmatpush1.bf16.msra.mxu0 %v1612
    %6531 = vmatprep.mubr.bf16.mxu0 %v6211
    %6532 = vmatmul.mubr.bf16.gmra.mrb[0].mxu0 %v6210
    %v6533 = vpop.f32.mrb[0].mxu0
    %v6534 = vadd.f32 %v6493, %v6533
    %v6535 = vpop.f32.mrb[0].mxu0
    %v6536 = vadd.f32 %v6495, %v6535
    %v6537 = vpop.f32.mrb[0].mxu0
    %v6538 = vpop.f32.mrb[0].mxu0
    %6539 = vdwg.mxu0
    %6540 = vmatprep.subr.bf16.mxu0 %v1119
    %6541 = vmatpush1.bf16.msra.mxu0 %v1118
    %6542 = vmatprep.subr.bf16.mxu0 %v1135
    %6543 = vmatpush1.bf16.msra.mxu0 %v1134
    %6544 = vmatprep.subr.bf16.mxu0 %v1151
    %6545 = vmatpush1.bf16.msra.mxu0 %v1150
    %6546 = vmatprep.subr.bf16.mxu0 %v1167
    %6547 = vmatpush1.bf16.msra.mxu0 %v1166
    %6548 = vmatprep.subr.bf16.mxu0 %v1183
    %6549 = vmatpush1.bf16.msra.mxu0 %v1182
    %6550 = vmatprep.subr.bf16.mxu0 %v1199
    %6551 = vmatpush1.bf16.msra.mxu0 %v1198
    %6552 = vmatprep.subr.bf16.mxu0 %v1215
    %6553 = vmatpush1.bf16.msra.mxu0 %v1214
    %6554 = vmatprep.subr.bf16.mxu0 %v1231
    %6555 = vmatpush1.bf16.msra.mxu0 %v1230
    %6556 = vmatprep.subr.bf16.mxu0 %v1247
    %6557 = vmatpush1.bf16.msra.mxu0 %v1246
    %6558 = vmatprep.subr.bf16.mxu0 %v1263
    %6559 = vmatpush1.bf16.msra.mxu0 %v1262
    %6560 = vmatprep.subr.bf16.mxu0 %v1279
    %6561 = vmatpush1.bf16.msra.mxu0 %v1278
    %6562 = vmatprep.subr.bf16.mxu0 %v1295
    %6563 = vmatpush1.bf16.msra.mxu0 %v1294
    %6564 = vmatprep.subr.bf16.mxu0 %v1311
    %6565 = vmatpush1.bf16.msra.mxu0 %v1310
    %6566 = vmatprep.subr.bf16.mxu0 %v1327
    %6567 = vmatpush1.bf16.msra.mxu0 %v1326
    %6568 = vmatprep.subr.bf16.mxu0 %v1343
    %6569 = vmatpush1.bf16.msra.mxu0 %v1342
    %6570 = vmatprep.subr.bf16.mxu0 %v1359
    %6571 = vmatpush1.bf16.msra.mxu0 %v1358
    %6572 = vmatprep.mubr.bf16.mxu0 %v6209
    %6573 = vmatmul.mubr.bf16.gmra.mrb[0].mxu0 %v6208
    %v6574 = vpop.f32.mrb[0].mxu0
    %v6575 = vadd.f32 0.0, %v6574
    %v6576 = vpop.f32.mrb[0].mxu0
    %v6577 = vadd.f32 0.0, %v6576
    %v6578 = vpop.f32.mrb[0].mxu0
    %v6579 = vpop.f32.mrb[0].mxu0
    %6580 = vdwg.mxu0
    %6581 = vmatprep.subr.bf16.mxu0 %v1375
    %6582 = vmatpush1.bf16.msra.mxu0 %v1374
    %6583 = vmatprep.subr.bf16.mxu0 %v1391
    %6584 = vmatpush1.bf16.msra.mxu0 %v1390
    %6585 = vmatprep.subr.bf16.mxu0 %v1407
    %6586 = vmatpush1.bf16.msra.mxu0 %v1406
    %6587 = vmatprep.subr.bf16.mxu0 %v1423
    %6588 = vmatpush1.bf16.msra.mxu0 %v1422
    %6589 = vmatprep.subr.bf16.mxu0 %v1439
    %6590 = vmatpush1.bf16.msra.mxu0 %v1438
    %6591 = vmatprep.subr.bf16.mxu0 %v1455
    %6592 = vmatpush1.bf16.msra.mxu0 %v1454
    %6593 = vmatprep.subr.bf16.mxu0 %v1471
    %6594 = vmatpush1.bf16.msra.mxu0 %v1470
    %6595 = vmatprep.subr.bf16.mxu0 %v1487
    %6596 = vmatpush1.bf16.msra.mxu0 %v1486
    %6597 = vmatprep.subr.bf16.mxu0 %v1503
    %6598 = vmatpush1.bf16.msra.mxu0 %v1502
    %6599 = vmatprep.subr.bf16.mxu0 %v1519
    %6600 = vmatpush1.bf16.msra.mxu0 %v1518
    %6601 = vmatprep.subr.bf16.mxu0 %v1535
    %6602 = vmatpush1.bf16.msra.mxu0 %v1534
    %6603 = vmatprep.subr.bf16.mxu0 %v1551
    %6604 = vmatpush1.bf16.msra.mxu0 %v1550
    %6605 = vmatprep.subr.bf16.mxu0 %v1567
    %6606 = vmatpush1.bf16.msra.mxu0 %v1566
    %6607 = vmatprep.subr.bf16.mxu0 %v1583
    %6608 = vmatpush1.bf16.msra.mxu0 %v1582
    %6609 = vmatprep.subr.bf16.mxu0 %v1599
    %6610 = vmatpush1.bf16.msra.mxu0 %v1598
    %6611 = vmatprep.subr.bf16.mxu0 %v1615
    %6612 = vmatpush1.bf16.msra.mxu0 %v1614
    %6613 = vmatprep.mubr.bf16.mxu0 %v6211
    %6614 = vmatmul.mubr.bf16.gmra.mrb[0].mxu0 %v6210
    %v6615 = vpop.f32.mrb[0].mxu0
    %v6616 = vadd.f32 %v6575, %v6615
    %v6617 = vpop.f32.mrb[0].mxu0
    %v6618 = vadd.f32 %v6577, %v6617
    %v6619 = vpop.f32.mrb[0].mxu0
    %v6620 = vpop.f32.mrb[0].mxu0
    %6621 = vdwg.mxu0
    %6622 = vmatprep.subr.bf16.mxu0 %v1121
    %6623 = vmatpush1.bf16.msra.mxu0 %v1120
    %6624 = vmatprep.subr.bf16.mxu0 %v1137
    %6625 = vmatpush1.bf16.msra.mxu0 %v1136
    %6626 = vmatprep.subr.bf16.mxu0 %v1153
    %6627 = vmatpush1.bf16.msra.mxu0 %v1152
    %6628 = vmatprep.subr.bf16.mxu0 %v1169
    %6629 = vmatpush1.bf16.msra.mxu0 %v1168
    %6630 = vmatprep.subr.bf16.mxu0 %v1185
    %6631 = vmatpush1.bf16.msra.mxu0 %v1184
    %6632 = vmatprep.subr.bf16.mxu0 %v1201
    %6633 = vmatpush1.bf16.msra.mxu0 %v1200
    %6634 = vmatprep.subr.bf16.mxu0 %v1217
    %6635 = vmatpush1.bf16.msra.mxu0 %v1216
    %6636 = vmatprep.subr.bf16.mxu0 %v1233
    %6637 = vmatpush1.bf16.msra.mxu0 %v1232
    %6638 = vmatprep.subr.bf16.mxu0 %v1249
    %6639 = vmatpush1.bf16.msra.mxu0 %v1248
    %6640 = vmatprep.subr.bf16.mxu0 %v1265
    %6641 = vmatpush1.bf16.msra.mxu0 %v1264
    %6642 = vmatprep.subr.bf16.mxu0 %v1281
    %6643 = vmatpush1.bf16.msra.mxu0 %v1280
    %6644 = vmatprep.subr.bf16.mxu0 %v1297
    %6645 = vmatpush1.bf16.msra.mxu0 %v1296
    %6646 = vmatprep.subr.bf16.mxu0 %v1313
    %6647 = vmatpush1.bf16.msra.mxu0 %v1312
    %6648 = vmatprep.subr.bf16.mxu0 %v1329
    %6649 = vmatpush1.bf16.msra.mxu0 %v1328
    %6650 = vmatprep.subr.bf16.mxu0 %v1345
    %6651 = vmatpush1.bf16.msra.mxu0 %v1344
    %6652 = vmatprep.subr.bf16.mxu0 %v1361
    %6653 = vmatpush1.bf16.msra.mxu0 %v1360
    %6654 = vmatprep.mubr.bf16.mxu0 %v6209
    %6655 = vmatmul.mubr.bf16.gmra.mrb[0].mxu0 %v6208
    %v6656 = vpop.f32.mrb[0].mxu0
    %v6657 = vadd.f32 0.0, %v6656
    %v6658 = vpop.f32.mrb[0].mxu0
    %v6659 = vadd.f32 0.0, %v6658
    %v6660 = vpop.f32.mrb[0].mxu0
    %v6661 = vpop.f32.mrb[0].mxu0
    %6662 = vdwg.mxu0
    %6663 = vmatprep.subr.bf16.mxu0 %v1377
    %6664 = vmatpush1.bf16.msra.mxu0 %v1376
    %6665 = vmatprep.subr.bf16.mxu0 %v1393
    %6666 = vmatpush1.bf16.msra.mxu0 %v1392
    %6667 = vmatprep.subr.bf16.mxu0 %v1409
    %6668 = vmatpush1.bf16.msra.mxu0 %v1408
    %6669 = vmatprep.subr.bf16.mxu0 %v1425
    %6670 = vmatpush1.bf16.msra.mxu0 %v1424
    %6671 = vmatprep.subr.bf16.mxu0 %v1441
    %6672 = vmatpush1.bf16.msra.mxu0 %v1440
    %6673 = vmatprep.subr.bf16.mxu0 %v1457
    %6674 = vmatpush1.bf16.msra.mxu0 %v1456
    %6675 = vmatprep.subr.bf16.mxu0 %v1473
    %6676 = vmatpush1.bf16.msra.mxu0 %v1472
    %6677 = vmatprep.subr.bf16.mxu0 %v1489
    %6678 = vmatpush1.bf16.msra.mxu0 %v1488
    %6679 = vmatprep.subr.bf16.mxu0 %v1505
    %6680 = vmatpush1.bf16.msra.mxu0 %v1504
    %6681 = vmatprep.subr.bf16.mxu0 %v1521
    %6682 = vmatpush1.bf16.msra.mxu0 %v1520
    %6683 = vmatprep.subr.bf16.mxu0 %v1537
    %6684 = vmatpush1.bf16.msra.mxu0 %v1536
    %6685 = vmatprep.subr.bf16.mxu0 %v1553
    %6686 = vmatpush1.bf16.msra.mxu0 %v1552
    %6687 = vmatprep.subr.bf16.mxu0 %v1569
    %6688 = vmatpush1.bf16.msra.mxu0 %v1568
    %6689 = vmatprep.subr.bf16.mxu0 %v1585
    %6690 = vmatpush1.bf16.msra.mxu0 %v1584
    %6691 = vmatprep.subr.bf16.mxu0 %v1601
    %6692 = vmatpush1.bf16.msra.mxu0 %v1600
    %6693 = vmatprep.subr.bf16.mxu0 %v1617
    %6694 = vmatpush1.bf16.msra.mxu0 %v1616
    %6695 = vmatprep.mubr.bf16.mxu0 %v6211
    %6696 = vmatmul.mubr.bf16.gmra.mrb[0].mxu0 %v6210
    %v6697 = vpop.f32.mrb[0].mxu0
    %v6698 = vadd.f32 %v6657, %v6697
    %v6699 = vpop.f32.mrb[0].mxu0
    %v6700 = vadd.f32 %v6659, %v6699
    %v6701 = vpop.f32.mrb[0].mxu0
    %v6702 = vpop.f32.mrb[0].mxu0
    %6703 = vdwg.mxu0
    %6704 = vmatprep.subr.bf16.mxu0 %v1123
    %6705 = vmatpush1.bf16.msra.mxu0 %v1122
    %6706 = vmatprep.subr.bf16.mxu0 %v1139
    %6707 = vmatpush1.bf16.msra.mxu0 %v1138
    %6708 = vmatprep.subr.bf16.mxu0 %v1155
    %6709 = vmatpush1.bf16.msra.mxu0 %v1154
    %6710 = vmatprep.subr.bf16.mxu0 %v1171
    %6711 = vmatpush1.bf16.msra.mxu0 %v1170
    %6712 = vmatprep.subr.bf16.mxu0 %v1187
    %6713 = vmatpush1.bf16.msra.mxu0 %v1186
    %6714 = vmatprep.subr.bf16.mxu0 %v1203
    %6715 = vmatpush1.bf16.msra.mxu0 %v1202
    %6716 = vmatprep.subr.bf16.mxu0 %v1219
    %6717 = vmatpush1.bf16.msra.mxu0 %v1218
    %6718 = vmatprep.subr.bf16.mxu0 %v1235
    %6719 = vmatpush1.bf16.msra.mxu0 %v1234
    %6720 = vmatprep.subr.bf16.mxu0 %v1251
    %6721 = vmatpush1.bf16.msra.mxu0 %v1250
    %6722 = vmatprep.subr.bf16.mxu0 %v1267
    %6723 = vmatpush1.bf16.msra.mxu0 %v1266
    %6724 = vmatprep.subr.bf16.mxu0 %v1283
    %6725 = vmatpush1.bf16.msra.mxu0 %v1282
    %6726 = vmatprep.subr.bf16.mxu0 %v1299
    %6727 = vmatpush1.bf16.msra.mxu0 %v1298
    %6728 = vmatprep.subr.bf16.mxu0 %v1315
    %6729 = vmatpush1.bf16.msra.mxu0 %v1314
    %6730 = vmatprep.subr.bf16.mxu0 %v1331
    %6731 = vmatpush1.bf16.msra.mxu0 %v1330
    %6732 = vmatprep.subr.bf16.mxu0 %v1347
    %6733 = vmatpush1.bf16.msra.mxu0 %v1346
    %6734 = vmatprep.subr.bf16.mxu0 %v1363
    %6735 = vmatpush1.bf16.msra.mxu0 %v1362
    %6736 = vmatprep.mubr.bf16.mxu0 %v6209
    %6737 = vmatmul.mubr.bf16.gmra.mrb[0].mxu0 %v6208
    %v6738 = vpop.f32.mrb[0].mxu0
    %v6739 = vadd.f32 0.0, %v6738
    %v6740 = vpop.f32.mrb[0].mxu0
    %v6741 = vadd.f32 0.0, %v6740
    %v6742 = vpop.f32.mrb[0].mxu0
    %v6743 = vpop.f32.mrb[0].mxu0
    %6744 = vdwg.mxu0
    %6745 = vmatprep.subr.bf16.mxu0 %v1379
    %6746 = vmatpush1.bf16.msra.mxu0 %v1378
    %6747 = vmatprep.subr.bf16.mxu0 %v1395
    %6748 = vmatpush1.bf16.msra.mxu0 %v1394
    %6749 = vmatprep.subr.bf16.mxu0 %v1411
    %6750 = vmatpush1.bf16.msra.mxu0 %v1410
    %6751 = vmatprep.subr.bf16.mxu0 %v1427
    %6752 = vmatpush1.bf16.msra.mxu0 %v1426
    %6753 = vmatprep.subr.bf16.mxu0 %v1443
    %6754 = vmatpush1.bf16.msra.mxu0 %v1442
    %6755 = vmatprep.subr.bf16.mxu0 %v1459
    %6756 = vmatpush1.bf16.msra.mxu0 %v1458
    %6757 = vmatprep.subr.bf16.mxu0 %v1475
    %6758 = vmatpush1.bf16.msra.mxu0 %v1474
    %6759 = vmatprep.subr.bf16.mxu0 %v1491
    %6760 = vmatpush1.bf16.msra.mxu0 %v1490
    %6761 = vmatprep.subr.bf16.mxu0 %v1507
    %6762 = vmatpush1.bf16.msra.mxu0 %v1506
    %6763 = vmatprep.subr.bf16.mxu0 %v1523
    %6764 = vmatpush1.bf16.msra.mxu0 %v1522
    %6765 = vmatprep.subr.bf16.mxu0 %v1539
    %6766 = vmatpush1.bf16.msra.mxu0 %v1538
    %6767 = vmatprep.subr.bf16.mxu0 %v1555
    %6768 = vmatpush1.bf16.msra.mxu0 %v1554
    %6769 = vmatprep.subr.bf16.mxu0 %v1571
    %6770 = vmatpush1.bf16.msra.mxu0 %v1570
    %6771 = vmatprep.subr.bf16.mxu0 %v1587
    %6772 = vmatpush1.bf16.msra.mxu0 %v1586
    %6773 = vmatprep.subr.bf16.mxu0 %v1603
    %6774 = vmatpush1.bf16.msra.mxu0 %v1602
    %6775 = vmatprep.subr.bf16.mxu0 %v1619
    %6776 = vmatpush1.bf16.msra.mxu0 %v1618
    %6777 = vmatprep.mubr.bf16.mxu0 %v6211
    %6778 = vmatmul.mubr.bf16.gmra.mrb[0].mxu0 %v6210
    %v6779 = vpop.f32.mrb[0].mxu0
    %v6780 = vadd.f32 %v6739, %v6779
    %v6781 = vpop.f32.mrb[0].mxu0
    %v6782 = vadd.f32 %v6741, %v6781
    %v6783 = vpop.f32.mrb[0].mxu0
    %v6784 = vpop.f32.mrb[0].mxu0
    %6785 = vdwg.mxu0
    %6786 = vmatprep.subr.bf16.mxu0 %v1125
    %6787 = vmatpush1.bf16.msra.mxu0 %v1124
    %6788 = vmatprep.subr.bf16.mxu0 %v1141
    %6789 = vmatpush1.bf16.msra.mxu0 %v1140
    %6790 = vmatprep.subr.bf16.mxu0 %v1157
    %6791 = vmatpush1.bf16.msra.mxu0 %v1156
    %6792 = vmatprep.subr.bf16.mxu0 %v1173
    %6793 = vmatpush1.bf16.msra.mxu0 %v1172
    %6794 = vmatprep.subr.bf16.mxu0 %v1189
    %6795 = vmatpush1.bf16.msra.mxu0 %v1188
    %6796 = vmatprep.subr.bf16.mxu0 %v1205
    %6797 = vmatpush1.bf16.msra.mxu0 %v1204
    %6798 = vmatprep.subr.bf16.mxu0 %v1221
    %6799 = vmatpush1.bf16.msra.mxu0 %v1220
    %6800 = vmatprep.subr.bf16.mxu0 %v1237
    %6801 = vmatpush1.bf16.msra.mxu0 %v1236
    %6802 = vmatprep.subr.bf16.mxu0 %v1253
    %6803 = vmatpush1.bf16.msra.mxu0 %v1252
    %6804 = vmatprep.subr.bf16.mxu0 %v1269
    %6805 = vmatpush1.bf16.msra.mxu0 %v1268
    %6806 = vmatprep.subr.bf16.mxu0 %v1285
    %6807 = vmatpush1.bf16.msra.mxu0 %v1284
    %6808 = vmatprep.subr.bf16.mxu0 %v1301
    %6809 = vmatpush1.bf16.msra.mxu0 %v1300
    %6810 = vmatprep.subr.bf16.mxu0 %v1317
    %6811 = vmatpush1.bf16.msra.mxu0 %v1316
    %6812 = vmatprep.subr.bf16.mxu0 %v1333
    %6813 = vmatpush1.bf16.msra.mxu0 %v1332
    %6814 = vmatprep.subr.bf16.mxu0 %v1349
    %6815 = vmatpush1.bf16.msra.mxu0 %v1348
    %6816 = vmatprep.subr.bf16.mxu0 %v1365
    %6817 = vmatpush1.bf16.msra.mxu0 %v1364
    %6818 = vmatprep.mubr.bf16.mxu0 %v6209
    %6819 = vmatmul.mubr.bf16.gmra.mrb[0].mxu0 %v6208
    %v6820 = vpop.f32.mrb[0].mxu0
    %v6821 = vadd.f32 0.0, %v6820
    %v6822 = vpop.f32.mrb[0].mxu0
    %v6823 = vadd.f32 0.0, %v6822
    %v6824 = vpop.f32.mrb[0].mxu0
    %v6825 = vpop.f32.mrb[0].mxu0
    %6826 = vdwg.mxu0
    %6827 = vmatprep.subr.bf16.mxu0 %v1381
    %6828 = vmatpush1.bf16.msra.mxu0 %v1380
    %6829 = vmatprep.subr.bf16.mxu0 %v1397
    %6830 = vmatpush1.bf16.msra.mxu0 %v1396
    %6831 = vmatprep.subr.bf16.mxu0 %v1413
    %6832 = vmatpush1.bf16.msra.mxu0 %v1412
    %6833 = vmatprep.subr.bf16.mxu0 %v1429
    %6834 = vmatpush1.bf16.msra.mxu0 %v1428
    %6835 = vmatprep.subr.bf16.mxu0 %v1445
    %6836 = vmatpush1.bf16.msra.mxu0 %v1444
    %6837 = vmatprep.subr.bf16.mxu0 %v1461
    %6838 = vmatpush1.bf16.msra.mxu0 %v1460
    %6839 = vmatprep.subr.bf16.mxu0 %v1477
    %6840 = vmatpush1.bf16.msra.mxu0 %v1476
    %6841 = vmatprep.subr.bf16.mxu0 %v1493
    %6842 = vmatpush1.bf16.msra.mxu0 %v1492
    %6843 = vmatprep.subr.bf16.mxu0 %v1509
    %6844 = vmatpush1.bf16.msra.mxu0 %v1508
    %6845 = vmatprep.subr.bf16.mxu0 %v1525
    %6846 = vmatpush1.bf16.msra.mxu0 %v1524
    %6847 = vmatprep.subr.bf16.mxu0 %v1541
    %6848 = vmatpush1.bf16.msra.mxu0 %v1540
    %6849 = vmatprep.subr.bf16.mxu0 %v1557
    %6850 = vmatpush1.bf16.msra.mxu0 %v1556
    %6851 = vmatprep.subr.bf16.mxu0 %v1573
    %6852 = vmatpush1.bf16.msra.mxu0 %v1572
    %6853 = vmatprep.subr.bf16.mxu0 %v1589
    %6854 = vmatpush1.bf16.msra.mxu0 %v1588
    %6855 = vmatprep.subr.bf16.mxu0 %v1605
    %6856 = vmatpush1.bf16.msra.mxu0 %v1604
    %6857 = vmatprep.subr.bf16.mxu0 %v1621
    %6858 = vmatpush1.bf16.msra.mxu0 %v1620
    %6859 = vmatprep.mubr.bf16.mxu0 %v6211
    %6860 = vmatmul.mubr.bf16.gmra.mrb[0].mxu0 %v6210
    %v6861 = vpop.f32.mrb[0].mxu0
    %v6862 = vadd.f32 %v6821, %v6861
    %v6863 = vpop.f32.mrb[0].mxu0
    %v6864 = vadd.f32 %v6823, %v6863
    %v6865 = vpop.f32.mrb[0].mxu0
    %v6866 = vpop.f32.mrb[0].mxu0
    %6867 = vdwg.mxu0
    %v6868 = vadd.f32 %v6192, %v6288
    %v6869 = vadd.f32 %v6193, %v6290
    %v6870 = vadd.f32 %v6194, %v6370
    %v6871 = vadd.f32 %v6195, %v6372
    %v6872 = vadd.f32 %v6196, %v6452
    %v6873 = vadd.f32 %v6197, %v6454
    %v6874 = vadd.f32 %v6198, %v6534
    %v6875 = vadd.f32 %v6199, %v6536
    %v6876 = vadd.f32 %v6200, %v6616
    %v6877 = vadd.f32 %v6201, %v6618
    %v6878 = vadd.f32 %v6202, %v6698
    %v6879 = vadd.f32 %v6203, %v6700
    %v6880 = vadd.f32 %v6204, %v6780
    %v6881 = vadd.f32 %v6205, %v6782
    %v6882 = vadd.f32 %v6206, %v6862
    %v6883 = vadd.f32 %v6207, %v6864
    %v6884 = vmul.f32 %v6868, 0.5
    %v6885 = vmul.f32 %v6869, 0.5
    %v6886 = vmul.f32 %v6870, 0.5
    %v6887 = vmul.f32 %v6871, 0.5
    %v6888 = vtanh.pop %v6884
    %v6889 = vtanh.pop %v6885
    %v6890 = vtanh.pop %v6886
    %v6891 = vtanh.pop %v6887
    %v6892 = vmul.f32 %v6888, 0.5
    %v6893 = vmul.f32 %v6889, 0.5
    %v6894 = vmul.f32 %v6890, 0.5
    %v6895 = vmul.f32 %v6891, 0.5
    %v6896 = vadd.f32 %v6892, 0.5
    %v6897 = vadd.f32 %v6893, 0.5
    %v6898 = vadd.f32 %v6894, 0.5
    %v6899 = vadd.f32 %v6895, 0.5
    %v6900 = vmul.f32 %v6872, 0.5
    %v6901 = vmul.f32 %v6873, 0.5
    %v6902 = vmul.f32 %v6874, 0.5
    %v6903 = vmul.f32 %v6875, 0.5
    %v6904 = vtanh.pop %v6900
    %v6905 = vtanh.pop %v6901
    %v6906 = vtanh.pop %v6902
    %v6907 = vtanh.pop %v6903
    %v6908 = vmul.f32 %v6904, 0.5
    %v6909 = vmul.f32 %v6905, 0.5
    %v6910 = vmul.f32 %v6906, 0.5
    %v6911 = vmul.f32 %v6907, 0.5
    %v6912 = vadd.f32 %v6908, 0.5
    %v6913 = vadd.f32 %v6909, 0.5
    %v6914 = vadd.f32 %v6910, 0.5
    %v6915 = vadd.f32 %v6911, 0.5
    %v6916 = vtanh.pop %v6876
    %v6917 = vtanh.pop %v6877
    %v6918 = vtanh.pop %v6878
    %v6919 = vtanh.pop %v6879
    %v6920 = vmul.f32 %v6880, 0.5
    %v6921 = vmul.f32 %v6881, 0.5
    %v6922 = vmul.f32 %v6882, 0.5
    %v6923 = vmul.f32 %v6883, 0.5
    %v6924 = vtanh.pop %v6920
    %v6925 = vtanh.pop %v6921
    %v6926 = vtanh.pop %v6922
    %v6927 = vtanh.pop %v6923
    %v6928 = vmul.f32 %v6924, 0.5
    %v6929 = vmul.f32 %v6925, 0.5
    %v6930 = vmul.f32 %v6926, 0.5
    %v6931 = vmul.f32 %v6927, 0.5
    %v6932 = vadd.f32 %v6928, 0.5
    %v6933 = vadd.f32 %v6929, 0.5
    %v6934 = vadd.f32 %v6930, 0.5
    %v6935 = vadd.f32 %v6931, 0.5
    %v6936 = vmul.f32 %v6912, %v6179
    %v6937 = vmul.f32 %v6913, %v6180
    %v6938 = vmul.f32 %v6914, %v6181
    %v6939 = vmul.f32 %v6915, %v6182
    %v6940 = vmul.f32 %v6896, %v6916
    %v6941 = vmul.f32 %v6897, %v6917
    %v6942 = vmul.f32 %v6898, %v6918
    %v6943 = vmul.f32 %v6899, %v6919
    %v6944 = vadd.f32 %v6936, %v6940
    %v6945 = vadd.f32 %v6937, %v6941
    %v6946 = vadd.f32 %v6938, %v6942
    %v6947 = vadd.f32 %v6939, %v6943
    %v6948 = vtanh.pop %v6944
    %v6949 = vtanh.pop %v6945
    %v6950 = vtanh.pop %v6946
    %v6951 = vtanh.pop %v6947
    %v6952 = vmul.f32 %v6932, %v6948
    %v6953 = vmul.f32 %v6933, %v6949
    %v6954 = vmul.f32 %v6934, %v6950
    %v6955 = vmul.f32 %v6935, %v6951
    %s6956 = scalar_lea.vmem [#allocation5], 896
    %v6957 = vld [vmem:[%s6956] sm:$0xff]
    %v6958 = vld [vmem:[%s6956 + $0x8] sm:$0xff]
    %v6959 = vld [vmem:[%s6956 + $0x10] sm:$0xff]
    %v6960 = vld [vmem:[%s6956 + $0x18] sm:$0xff]
    %v6961 = vld [vmem:[%s6956 + $0x20] sm:$0xff]
    %v6962 = vld [vmem:[%s6956 + $0x28] sm:$0xff]
    %v6963 = vld [vmem:[%s6956 + $0x30] sm:$0xff]
    %v6964 = vld [vmem:[%s6956 + $0x38] sm:$0xff]
    %v6965 = vld [vmem:[%s6956 + $0x40] sm:$0xff]
    %v6966 = vld [vmem:[%s6956 + $0x48] sm:$0xff]
    %v6967 = vld [vmem:[%s6956 + $0x50] sm:$0xff]
    %v6968 = vld [vmem:[%s6956 + $0x58] sm:$0xff]
    %v6969 = vld [vmem:[%s6956 + $0x60] sm:$0xff]
    %v6970 = vld [vmem:[%s6956 + $0x68] sm:$0xff]
    %v6971 = vld [vmem:[%s6956 + $0x70] sm:$0xff]
    %v6972 = vld [vmem:[%s6956 + $0x78] sm:$0xff]
    %v6973 = vpack.c.bf16 %v6952, %v6952
    %v6974 = vpack.c.bf16 %v6953, %v6953
    %v6975 = vpack.c.bf16 %v6954, %v6954
    %v6976 = vpack.c.bf16 %v6955, %v6955
    %6977 = vmatprep.subr.bf16.mxu0 %v1111
    %6978 = vmatpush1.bf16.msra.mxu0 %v1110
    %6979 = vmatprep.subr.bf16.mxu0 %v1127
    %6980 = vmatpush1.bf16.msra.mxu0 %v1126
    %6981 = vmatprep.subr.bf16.mxu0 %v1143
    %6982 = vmatpush1.bf16.msra.mxu0 %v1142
    %6983 = vmatprep.subr.bf16.mxu0 %v1159
    %6984 = vmatpush1.bf16.msra.mxu0 %v1158
    %6985 = vmatprep.subr.bf16.mxu0 %v1175
    %6986 = vmatpush1.bf16.msra.mxu0 %v1174
    %6987 = vmatprep.subr.bf16.mxu0 %v1191
    %6988 = vmatpush1.bf16.msra.mxu0 %v1190
    %6989 = vmatprep.subr.bf16.mxu0 %v1207
    %6990 = vmatpush1.bf16.msra.mxu0 %v1206
    %6991 = vmatprep.subr.bf16.mxu0 %v1223
    %6992 = vmatpush1.bf16.msra.mxu0 %v1222
    %6993 = vmatprep.subr.bf16.mxu0 %v1239
    %6994 = vmatpush1.bf16.msra.mxu0 %v1238
    %6995 = vmatprep.subr.bf16.mxu0 %v1255
    %6996 = vmatpush1.bf16.msra.mxu0 %v1254
    %6997 = vmatprep.subr.bf16.mxu0 %v1271
    %6998 = vmatpush1.bf16.msra.mxu0 %v1270
    %6999 = vmatprep.subr.bf16.mxu0 %v1287
    %7000 = vmatpush1.bf16.msra.mxu0 %v1286
    %7001 = vmatprep.subr.bf16.mxu0 %v1303
    %7002 = vmatpush1.bf16.msra.mxu0 %v1302
    %7003 = vmatprep.subr.bf16.mxu0 %v1319
    %7004 = vmatpush1.bf16.msra.mxu0 %v1318
    %7005 = vmatprep.subr.bf16.mxu0 %v1335
    %7006 = vmatpush1.bf16.msra.mxu0 %v1334
    %7007 = vmatprep.subr.bf16.mxu0 %v1351
    %7008 = vmatpush1.bf16.msra.mxu0 %v1350
    %7009 = vmatprep.mubr.bf16.mxu0 %v6974
    %7010 = vmatmul.mubr.bf16.gmra.mrb[0].mxu0 %v6973
    %v7011 = vpop.f32.mrb[0].mxu0
    %v7012 = vadd.f32 0.0, %v7011
    %v7013 = vpop.f32.mrb[0].mxu0
    %v7014 = vadd.f32 0.0, %v7013
    %v7015 = vpop.f32.mrb[0].mxu0
    %v7016 = vpop.f32.mrb[0].mxu0
    %7017 = vdwg.mxu0
    %7018 = vmatprep.subr.bf16.mxu0 %v1367
    %7019 = vmatpush1.bf16.msra.mxu0 %v1366
    %7020 = vmatprep.subr.bf16.mxu0 %v1383
    %7021 = vmatpush1.bf16.msra.mxu0 %v1382
    %7022 = vmatprep.subr.bf16.mxu0 %v1399
    %7023 = vmatpush1.bf16.msra.mxu0 %v1398
    %7024 = vmatprep.subr.bf16.mxu0 %v1415
    %7025 = vmatpush1.bf16.msra.mxu0 %v1414
    %7026 = vmatprep.subr.bf16.mxu0 %v1431
    %7027 = vmatpush1.bf16.msra.mxu0 %v1430
    %7028 = vmatprep.subr.bf16.mxu0 %v1447
    %7029 = vmatpush1.bf16.msra.mxu0 %v1446
    %7030 = vmatprep.subr.bf16.mxu0 %v1463
    %7031 = vmatpush1.bf16.msra.mxu0 %v1462
    %7032 = vmatprep.subr.bf16.mxu0 %v1479
    %7033 = vmatpush1.bf16.msra.mxu0 %v1478
    %7034 = vmatprep.subr.bf16.mxu0 %v1495
    %7035 = vmatpush1.bf16.msra.mxu0 %v1494
    %7036 = vmatprep.subr.bf16.mxu0 %v1511
    %7037 = vmatpush1.bf16.msra.mxu0 %v1510
    %7038 = vmatprep.subr.bf16.mxu0 %v1527
    %7039 = vmatpush1.bf16.msra.mxu0 %v1526
    %7040 = vmatprep.subr.bf16.mxu0 %v1543
    %7041 = vmatpush1.bf16.msra.mxu0 %v1542
    %7042 = vmatprep.subr.bf16.mxu0 %v1559
    %7043 = vmatpush1.bf16.msra.mxu0 %v1558
    %7044 = vmatprep.subr.bf16.mxu0 %v1575
    %7045 = vmatpush1.bf16.msra.mxu0 %v1574
    %7046 = vmatprep.subr.bf16.mxu0 %v1591
    %7047 = vmatpush1.bf16.msra.mxu0 %v1590
    %7048 = vmatprep.subr.bf16.mxu0 %v1607
    %7049 = vmatpush1.bf16.msra.mxu0 %v1606
    %7050 = vmatprep.mubr.bf16.mxu0 %v6976
    %7051 = vmatmul.mubr.bf16.gmra.mrb[0].mxu0 %v6975
    %v7052 = vpop.f32.mrb[0].mxu0
    %v7053 = vadd.f32 %v7012, %v7052
    %v7054 = vpop.f32.mrb[0].mxu0
    %v7055 = vadd.f32 %v7014, %v7054
    %v7056 = vpop.f32.mrb[0].mxu0
    %v7057 = vpop.f32.mrb[0].mxu0
    %7058 = vdwg.mxu0
    %7059 = vmatprep.subr.bf16.mxu0 %v1113
    %7060 = vmatpush1.bf16.msra.mxu0 %v1112
    %7061 = vmatprep.subr.bf16.mxu0 %v1129
    %7062 = vmatpush1.bf16.msra.mxu0 %v1128
    %7063 = vmatprep.subr.bf16.mxu0 %v1145
    %7064 = vmatpush1.bf16.msra.mxu0 %v1144
    %7065 = vmatprep.subr.bf16.mxu0 %v1161
    %7066 = vmatpush1.bf16.msra.mxu0 %v1160
    %7067 = vmatprep.subr.bf16.mxu0 %v1177
    %7068 = vmatpush1.bf16.msra.mxu0 %v1176
    %7069 = vmatprep.subr.bf16.mxu0 %v1193
    %7070 = vmatpush1.bf16.msra.mxu0 %v1192
    %7071 = vmatprep.subr.bf16.mxu0 %v1209
    %7072 = vmatpush1.bf16.msra.mxu0 %v1208
    %7073 = vmatprep.subr.bf16.mxu0 %v1225
    %7074 = vmatpush1.bf16.msra.mxu0 %v1224
    %7075 = vmatprep.subr.bf16.mxu0 %v1241
    %7076 = vmatpush1.bf16.msra.mxu0 %v1240
    %7077 = vmatprep.subr.bf16.mxu0 %v1257
    %7078 = vmatpush1.bf16.msra.mxu0 %v1256
    %7079 = vmatprep.subr.bf16.mxu0 %v1273
    %7080 = vmatpush1.bf16.msra.mxu0 %v1272
    %7081 = vmatprep.subr.bf16.mxu0 %v1289
    %7082 = vmatpush1.bf16.msra.mxu0 %v1288
    %7083 = vmatprep.subr.bf16.mxu0 %v1305
    %7084 = vmatpush1.bf16.msra.mxu0 %v1304
    %7085 = vmatprep.subr.bf16.mxu0 %v1321
    %7086 = vmatpush1.bf16.msra.mxu0 %v1320
    %7087 = vmatprep.subr.bf16.mxu0 %v1337
    %7088 = vmatpush1.bf16.msra.mxu0 %v1336
    %7089 = vmatprep.subr.bf16.mxu0 %v1353
    %7090 = vmatpush1.bf16.msra.mxu0 %v1352
    %7091 = vmatprep.mubr.bf16.mxu0 %v6974
    %7092 = vmatmul.mubr.bf16.gmra.mrb[0].mxu0 %v6973
    %v7093 = vpop.f32.mrb[0].mxu0
    %v7094 = vadd.f32 0.0, %v7093
    %v7095 = vpop.f32.mrb[0].mxu0
    %v7096 = vadd.f32 0.0, %v7095
    %v7097 = vpop.f32.mrb[0].mxu0
    %v7098 = vpop.f32.mrb[0].mxu0
    %7099 = vdwg.mxu0
    %7100 = vmatprep.subr.bf16.mxu0 %v1369
    %7101 = vmatpush1.bf16.msra.mxu0 %v1368
    %7102 = vmatprep.subr.bf16.mxu0 %v1385
    %7103 = vmatpush1.bf16.msra.mxu0 %v1384
    %7104 = vmatprep.subr.bf16.mxu0 %v1401
    %7105 = vmatpush1.bf16.msra.mxu0 %v1400
    %7106 = vmatprep.subr.bf16.mxu0 %v1417
    %7107 = vmatpush1.bf16.msra.mxu0 %v1416
    %7108 = vmatprep.subr.bf16.mxu0 %v1433
    %7109 = vmatpush1.bf16.msra.mxu0 %v1432
    %7110 = vmatprep.subr.bf16.mxu0 %v1449
    %7111 = vmatpush1.bf16.msra.mxu0 %v1448
    %7112 = vmatprep.subr.bf16.mxu0 %v1465
    %7113 = vmatpush1.bf16.msra.mxu0 %v1464
    %7114 = vmatprep.subr.bf16.mxu0 %v1481
    %7115 = vmatpush1.bf16.msra.mxu0 %v1480
    %7116 = vmatprep.subr.bf16.mxu0 %v1497
    %7117 = vmatpush1.bf16.msra.mxu0 %v1496
    %7118 = vmatprep.subr.bf16.mxu0 %v1513
    %7119 = vmatpush1.bf16.msra.mxu0 %v1512
    %7120 = vmatprep.subr.bf16.mxu0 %v1529
    %7121 = vmatpush1.bf16.msra.mxu0 %v1528
    %7122 = vmatprep.subr.bf16.mxu0 %v1545
    %7123 = vmatpush1.bf16.msra.mxu0 %v1544
    %7124 = vmatprep.subr.bf16.mxu0 %v1561
    %7125 = vmatpush1.bf16.msra.mxu0 %v1560
    %7126 = vmatprep.subr.bf16.mxu0 %v1577
    %7127 = vmatpush1.bf16.msra.mxu0 %v1576
    %7128 = vmatprep.subr.bf16.mxu0 %v1593
    %7129 = vmatpush1.bf16.msra.mxu0 %v1592
    %7130 = vmatprep.subr.bf16.mxu0 %v1609
    %7131 = vmatpush1.bf16.msra.mxu0 %v1608
    %7132 = vmatprep.mubr.bf16.mxu0 %v6976
    %7133 = vmatmul.mubr.bf16.gmra.mrb[0].mxu0 %v6975
    %v7134 = vpop.f32.mrb[0].mxu0
    %v7135 = vadd.f32 %v7094, %v7134
    %v7136 = vpop.f32.mrb[0].mxu0
    %v7137 = vadd.f32 %v7096, %v7136
    %v7138 = vpop.f32.mrb[0].mxu0
    %v7139 = vpop.f32.mrb[0].mxu0
    %7140 = vdwg.mxu0
    %7141 = vmatprep.subr.bf16.mxu0 %v1115
    %7142 = vmatpush1.bf16.msra.mxu0 %v1114
    %7143 = vmatprep.subr.bf16.mxu0 %v1131
    %7144 = vmatpush1.bf16.msra.mxu0 %v1130
    %7145 = vmatprep.subr.bf16.mxu0 %v1147
    %7146 = vmatpush1.bf16.msra.mxu0 %v1146
    %7147 = vmatprep.subr.bf16.mxu0 %v1163
    %7148 = vmatpush1.bf16.msra.mxu0 %v1162
    %7149 = vmatprep.subr.bf16.mxu0 %v1179
    %7150 = vmatpush1.bf16.msra.mxu0 %v1178
    %7151 = vmatprep.subr.bf16.mxu0 %v1195
    %7152 = vmatpush1.bf16.msra.mxu0 %v1194
    %7153 = vmatprep.subr.bf16.mxu0 %v1211
    %7154 = vmatpush1.bf16.msra.mxu0 %v1210
    %7155 = vmatprep.subr.bf16.mxu0 %v1227
    %7156 = vmatpush1.bf16.msra.mxu0 %v1226
    %7157 = vmatprep.subr.bf16.mxu0 %v1243
    %7158 = vmatpush1.bf16.msra.mxu0 %v1242
    %7159 = vmatprep.subr.bf16.mxu0 %v1259
    %7160 = vmatpush1.bf16.msra.mxu0 %v1258
    %7161 = vmatprep.subr.bf16.mxu0 %v1275
    %7162 = vmatpush1.bf16.msra.mxu0 %v1274
    %7163 = vmatprep.subr.bf16.mxu0 %v1291
    %7164 = vmatpush1.bf16.msra.mxu0 %v1290
    %7165 = vmatprep.subr.bf16.mxu0 %v1307
    %7166 = vmatpush1.bf16.msra.mxu0 %v1306
    %7167 = vmatprep.subr.bf16.mxu0 %v1323
    %7168 = vmatpush1.bf16.msra.mxu0 %v1322
    %7169 = vmatprep.subr.bf16.mxu0 %v1339
    %7170 = vmatpush1.bf16.msra.mxu0 %v1338
    %7171 = vmatprep.subr.bf16.mxu0 %v1355
    %7172 = vmatpush1.bf16.msra.mxu0 %v1354
    %7173 = vmatprep.mubr.bf16.mxu0 %v6974
    %7174 = vmatmul.mubr.bf16.gmra.mrb[0].mxu0 %v6973
    %v7175 = vpop.f32.mrb[0].mxu0
    %v7176 = vadd.f32 0.0, %v7175
    %v7177 = vpop.f32.mrb[0].mxu0
    %v7178 = vadd.f32 0.0, %v7177
    %v7179 = vpop.f32.mrb[0].mxu0
    %v7180 = vpop.f32.mrb[0].mxu0
    %7181 = vdwg.mxu0
    %7182 = vmatprep.subr.bf16.mxu0 %v1371
    %7183 = vmatpush1.bf16.msra.mxu0 %v1370
    %7184 = vmatprep.subr.bf16.mxu0 %v1387
    %7185 = vmatpush1.bf16.msra.mxu0 %v1386
    %7186 = vmatprep.subr.bf16.mxu0 %v1403
    %7187 = vmatpush1.bf16.msra.mxu0 %v1402
    %7188 = vmatprep.subr.bf16.mxu0 %v1419
    %7189 = vmatpush1.bf16.msra.mxu0 %v1418
    %7190 = vmatprep.subr.bf16.mxu0 %v1435
    %7191 = vmatpush1.bf16.msra.mxu0 %v1434
    %7192 = vmatprep.subr.bf16.mxu0 %v1451
    %7193 = vmatpush1.bf16.msra.mxu0 %v1450
    %7194 = vmatprep.subr.bf16.mxu0 %v1467
    %7195 = vmatpush1.bf16.msra.mxu0 %v1466
    %7196 = vmatprep.subr.bf16.mxu0 %v1483
    %7197 = vmatpush1.bf16.msra.mxu0 %v1482
    %7198 = vmatprep.subr.bf16.mxu0 %v1499
    %7199 = vmatpush1.bf16.msra.mxu0 %v1498
    %7200 = vmatprep.subr.bf16.mxu0 %v1515
    %7201 = vmatpush1.bf16.msra.mxu0 %v1514
    %7202 = vmatprep.subr.bf16.mxu0 %v1531
    %7203 = vmatpush1.bf16.msra.mxu0 %v1530
    %7204 = vmatprep.subr.bf16.mxu0 %v1547
    %7205 = vmatpush1.bf16.msra.mxu0 %v1546
    %7206 = vmatprep.subr.bf16.mxu0 %v1563
    %7207 = vmatpush1.bf16.msra.mxu0 %v1562
    %7208 = vmatprep.subr.bf16.mxu0 %v1579
    %7209 = vmatpush1.bf16.msra.mxu0 %v1578
    %7210 = vmatprep.subr.bf16.mxu0 %v1595
    %7211 = vmatpush1.bf16.msra.mxu0 %v1594
    %7212 = vmatprep.subr.bf16.mxu0 %v1611
    %7213 = vmatpush1.bf16.msra.mxu0 %v1610
    %7214 = vmatprep.mubr.bf16.mxu0 %v6976
    %7215 = vmatmul.mubr.bf16.gmra.mrb[0].mxu0 %v6975
    %v7216 = vpop.f32.mrb[0].mxu0
    %v7217 = vadd.f32 %v7176, %v7216
    %v7218 = vpop.f32.mrb[0].mxu0
    %v7219 = vadd.f32 %v7178, %v7218
    %v7220 = vpop.f32.mrb[0].mxu0
    %v7221 = vpop.f32.mrb[0].mxu0
    %7222 = vdwg.mxu0
    %7223 = vmatprep.subr.bf16.mxu0 %v1117
    %7224 = vmatpush1.bf16.msra.mxu0 %v1116
    %7225 = vmatprep.subr.bf16.mxu0 %v1133
    %7226 = vmatpush1.bf16.msra.mxu0 %v1132
    %7227 = vmatprep.subr.bf16.mxu0 %v1149
    %7228 = vmatpush1.bf16.msra.mxu0 %v1148
    %7229 = vmatprep.subr.bf16.mxu0 %v1165
    %7230 = vmatpush1.bf16.msra.mxu0 %v1164
    %7231 = vmatprep.subr.bf16.mxu0 %v1181
    %7232 = vmatpush1.bf16.msra.mxu0 %v1180
    %7233 = vmatprep.subr.bf16.mxu0 %v1197
    %7234 = vmatpush1.bf16.msra.mxu0 %v1196
    %7235 = vmatprep.subr.bf16.mxu0 %v1213
    %7236 = vmatpush1.bf16.msra.mxu0 %v1212
    %7237 = vmatprep.subr.bf16.mxu0 %v1229
    %7238 = vmatpush1.bf16.msra.mxu0 %v1228
    %7239 = vmatprep.subr.bf16.mxu0 %v1245
    %7240 = vmatpush1.bf16.msra.mxu0 %v1244
    %7241 = vmatprep.subr.bf16.mxu0 %v1261
    %7242 = vmatpush1.bf16.msra.mxu0 %v1260
    %7243 = vmatprep.subr.bf16.mxu0 %v1277
    %7244 = vmatpush1.bf16.msra.mxu0 %v1276
    %7245 = vmatprep.subr.bf16.mxu0 %v1293
    %7246 = vmatpush1.bf16.msra.mxu0 %v1292
    %7247 = vmatprep.subr.bf16.mxu0 %v1309
    %7248 = vmatpush1.bf16.msra.mxu0 %v1308
    %7249 = vmatprep.subr.bf16.mxu0 %v1325
    %7250 = vmatpush1.bf16.msra.mxu0 %v1324
    %7251 = vmatprep.subr.bf16.mxu0 %v1341
    %7252 = vmatpush1.bf16.msra.mxu0 %v1340
    %7253 = vmatprep.subr.bf16.mxu0 %v1357
    %7254 = vmatpush1.bf16.msra.mxu0 %v1356
    %7255 = vmatprep.mubr.bf16.mxu0 %v6974
    %7256 = vmatmul.mubr.bf16.gmra.mrb[0].mxu0 %v6973
    %v7257 = vpop.f32.mrb[0].mxu0
    %v7258 = vadd.f32 0.0, %v7257
    %v7259 = vpop.f32.mrb[0].mxu0
    %v7260 = vadd.f32 0.0, %v7259
    %v7261 = vpop.f32.mrb[0].mxu0
    %v7262 = vpop.f32.mrb[0].mxu0
    %7263 = vdwg.mxu0
    %7264 = vmatprep.subr.bf16.mxu0 %v1373
    %7265 = vmatpush1.bf16.msra.mxu0 %v1372
    %7266 = vmatprep.subr.bf16.mxu0 %v1389
    %7267 = vmatpush1.bf16.msra.mxu0 %v1388
    %7268 = vmatprep.subr.bf16.mxu0 %v1405
    %7269 = vmatpush1.bf16.msra.mxu0 %v1404
    %7270 = vmatprep.subr.bf16.mxu0 %v1421
    %7271 = vmatpush1.bf16.msra.mxu0 %v1420
    %7272 = vmatprep.subr.bf16.mxu0 %v1437
    %7273 = vmatpush1.bf16.msra.mxu0 %v1436
    %7274 = vmatprep.subr.bf16.mxu0 %v1453
    %7275 = vmatpush1.bf16.msra.mxu0 %v1452
    %7276 = vmatprep.subr.bf16.mxu0 %v1469
    %7277 = vmatpush1.bf16.msra.mxu0 %v1468
    %7278 = vmatprep.subr.bf16.mxu0 %v1485
    %7279 = vmatpush1.bf16.msra.mxu0 %v1484
    %7280 = vmatprep.subr.bf16.mxu0 %v1501
    %7281 = vmatpush1.bf16.msra.mxu0 %v1500
    %7282 = vmatprep.subr.bf16.mxu0 %v1517
    %7283 = vmatpush1.bf16.msra.mxu0 %v1516
    %7284 = vmatprep.subr.bf16.mxu0 %v1533
    %7285 = vmatpush1.bf16.msra.mxu0 %v1532
    %7286 = vmatprep.subr.bf16.mxu0 %v1549
    %7287 = vmatpush1.bf16.msra.mxu0 %v1548
    %7288 = vmatprep.subr.bf16.mxu0 %v1565
    %7289 = vmatpush1.bf16.msra.mxu0 %v1564
    %7290 = vmatprep.subr.bf16.mxu0 %v1581
    %7291 = vmatpush1.bf16.msra.mxu0 %v1580
    %7292 = vmatprep.subr.bf16.mxu0 %v1597
    %7293 = vmatpush1.bf16.msra.mxu0 %v1596
    %7294 = vmatprep.subr.bf16.mxu0 %v1613
    %7295 = vmatpush1.bf16.msra.mxu0 %v1612
    %7296 = vmatprep.mubr.bf16.mxu0 %v6976
    %7297 = vmatmul.mubr.bf16.gmra.mrb[0].mxu0 %v6975
    %v7298 = vpop.f32.mrb[0].mxu0
    %v7299 = vadd.f32 %v7258, %v7298
    %v7300 = vpop.f32.mrb[0].mxu0
    %v7301 = vadd.f32 %v7260, %v7300
    %v7302 = vpop.f32.mrb[0].mxu0
    %v7303 = vpop.f32.mrb[0].mxu0
    %7304 = vdwg.mxu0
    %7305 = vmatprep.subr.bf16.mxu0 %v1119
    %7306 = vmatpush1.bf16.msra.mxu0 %v1118
    %7307 = vmatprep.subr.bf16.mxu0 %v1135
    %7308 = vmatpush1.bf16.msra.mxu0 %v1134
    %7309 = vmatprep.subr.bf16.mxu0 %v1151
    %7310 = vmatpush1.bf16.msra.mxu0 %v1150
    %7311 = vmatprep.subr.bf16.mxu0 %v1167
    %7312 = vmatpush1.bf16.msra.mxu0 %v1166
    %7313 = vmatprep.subr.bf16.mxu0 %v1183
    %7314 = vmatpush1.bf16.msra.mxu0 %v1182
    %7315 = vmatprep.subr.bf16.mxu0 %v1199
    %7316 = vmatpush1.bf16.msra.mxu0 %v1198
    %7317 = vmatprep.subr.bf16.mxu0 %v1215
    %7318 = vmatpush1.bf16.msra.mxu0 %v1214
    %7319 = vmatprep.subr.bf16.mxu0 %v1231
    %7320 = vmatpush1.bf16.msra.mxu0 %v1230
    %7321 = vmatprep.subr.bf16.mxu0 %v1247
    %7322 = vmatpush1.bf16.msra.mxu0 %v1246
    %7323 = vmatprep.subr.bf16.mxu0 %v1263
    %7324 = vmatpush1.bf16.msra.mxu0 %v1262
    %7325 = vmatprep.subr.bf16.mxu0 %v1279
    %7326 = vmatpush1.bf16.msra.mxu0 %v1278
    %7327 = vmatprep.subr.bf16.mxu0 %v1295
    %7328 = vmatpush1.bf16.msra.mxu0 %v1294
    %7329 = vmatprep.subr.bf16.mxu0 %v1311
    %7330 = vmatpush1.bf16.msra.mxu0 %v1310
    %7331 = vmatprep.subr.bf16.mxu0 %v1327
    %7332 = vmatpush1.bf16.msra.mxu0 %v1326
    %7333 = vmatprep.subr.bf16.mxu0 %v1343
    %7334 = vmatpush1.bf16.msra.mxu0 %v1342
    %7335 = vmatprep.subr.bf16.mxu0 %v1359
    %7336 = vmatpush1.bf16.msra.mxu0 %v1358
    %7337 = vmatprep.mubr.bf16.mxu0 %v6974
    %7338 = vmatmul.mubr.bf16.gmra.mrb[0].mxu0 %v6973
    %v7339 = vpop.f32.mrb[0].mxu0
    %v7340 = vadd.f32 0.0, %v7339
    %v7341 = vpop.f32.mrb[0].mxu0
    %v7342 = vadd.f32 0.0, %v7341
    %v7343 = vpop.f32.mrb[0].mxu0
    %v7344 = vpop.f32.mrb[0].mxu0
    %7345 = vdwg.mxu0
    %7346 = vmatprep.subr.bf16.mxu0 %v1375
    %7347 = vmatpush1.bf16.msra.mxu0 %v1374
    %7348 = vmatprep.subr.bf16.mxu0 %v1391
    %7349 = vmatpush1.bf16.msra.mxu0 %v1390
    %7350 = vmatprep.subr.bf16.mxu0 %v1407
    %7351 = vmatpush1.bf16.msra.mxu0 %v1406
    %7352 = vmatprep.subr.bf16.mxu0 %v1423
    %7353 = vmatpush1.bf16.msra.mxu0 %v1422
    %7354 = vmatprep.subr.bf16.mxu0 %v1439
    %7355 = vmatpush1.bf16.msra.mxu0 %v1438
    %7356 = vmatprep.subr.bf16.mxu0 %v1455
    %7357 = vmatpush1.bf16.msra.mxu0 %v1454
    %7358 = vmatprep.subr.bf16.mxu0 %v1471
    %7359 = vmatpush1.bf16.msra.mxu0 %v1470
    %7360 = vmatprep.subr.bf16.mxu0 %v1487
    %7361 = vmatpush1.bf16.msra.mxu0 %v1486
    %7362 = vmatprep.subr.bf16.mxu0 %v1503
    %7363 = vmatpush1.bf16.msra.mxu0 %v1502
    %7364 = vmatprep.subr.bf16.mxu0 %v1519
    %7365 = vmatpush1.bf16.msra.mxu0 %v1518
    %7366 = vmatprep.subr.bf16.mxu0 %v1535
    %7367 = vmatpush1.bf16.msra.mxu0 %v1534
    %7368 = vmatprep.subr.bf16.mxu0 %v1551
    %7369 = vmatpush1.bf16.msra.mxu0 %v1550
    %7370 = vmatprep.subr.bf16.mxu0 %v1567
    %7371 = vmatpush1.bf16.msra.mxu0 %v1566
    %7372 = vmatprep.subr.bf16.mxu0 %v1583
    %7373 = vmatpush1.bf16.msra.mxu0 %v1582
    %7374 = vmatprep.subr.bf16.mxu0 %v1599
    %7375 = vmatpush1.bf16.msra.mxu0 %v1598
    %7376 = vmatprep.subr.bf16.mxu0 %v1615
    %7377 = vmatpush1.bf16.msra.mxu0 %v1614
    %7378 = vmatprep.mubr.bf16.mxu0 %v6976
    %7379 = vmatmul.mubr.bf16.gmra.mrb[0].mxu0 %v6975
    %v7380 = vpop.f32.mrb[0].mxu0
    %v7381 = vadd.f32 %v7340, %v7380
    %v7382 = vpop.f32.mrb[0].mxu0
    %v7383 = vadd.f32 %v7342, %v7382
    %v7384 = vpop.f32.mrb[0].mxu0
    %v7385 = vpop.f32.mrb[0].mxu0
    %7386 = vdwg.mxu0
    %7387 = vmatprep.subr.bf16.mxu0 %v1121
    %7388 = vmatpush1.bf16.msra.mxu0 %v1120
    %7389 = vmatprep.subr.bf16.mxu0 %v1137
    %7390 = vmatpush1.bf16.msra.mxu0 %v1136
    %7391 = vmatprep.subr.bf16.mxu0 %v1153
    %7392 = vmatpush1.bf16.msra.mxu0 %v1152
    %7393 = vmatprep.subr.bf16.mxu0 %v1169
    %7394 = vmatpush1.bf16.msra.mxu0 %v1168
    %7395 = vmatprep.subr.bf16.mxu0 %v1185
    %7396 = vmatpush1.bf16.msra.mxu0 %v1184
    %7397 = vmatprep.subr.bf16.mxu0 %v1201
    %7398 = vmatpush1.bf16.msra.mxu0 %v1200
    %7399 = vmatprep.subr.bf16.mxu0 %v1217
    %7400 = vmatpush1.bf16.msra.mxu0 %v1216
    %7401 = vmatprep.subr.bf16.mxu0 %v1233
    %7402 = vmatpush1.bf16.msra.mxu0 %v1232
    %7403 = vmatprep.subr.bf16.mxu0 %v1249
    %7404 = vmatpush1.bf16.msra.mxu0 %v1248
    %7405 = vmatprep.subr.bf16.mxu0 %v1265
    %7406 = vmatpush1.bf16.msra.mxu0 %v1264
    %7407 = vmatprep.subr.bf16.mxu0 %v1281
    %7408 = vmatpush1.bf16.msra.mxu0 %v1280
    %7409 = vmatprep.subr.bf16.mxu0 %v1297
    %7410 = vmatpush1.bf16.msra.mxu0 %v1296
    %7411 = vmatprep.subr.bf16.mxu0 %v1313
    %7412 = vmatpush1.bf16.msra.mxu0 %v1312
    %7413 = vmatprep.subr.bf16.mxu0 %v1329
    %7414 = vmatpush1.bf16.msra.mxu0 %v1328
    %7415 = vmatprep.subr.bf16.mxu0 %v1345
    %7416 = vmatpush1.bf16.msra.mxu0 %v1344
    %7417 = vmatprep.subr.bf16.mxu0 %v1361
    %7418 = vmatpush1.bf16.msra.mxu0 %v1360
    %7419 = vmatprep.mubr.bf16.mxu0 %v6974
    %7420 = vmatmul.mubr.bf16.gmra.mrb[0].mxu0 %v6973
    %v7421 = vpop.f32.mrb[0].mxu0
    %v7422 = vadd.f32 0.0, %v7421
    %v7423 = vpop.f32.mrb[0].mxu0
    %v7424 = vadd.f32 0.0, %v7423
    %v7425 = vpop.f32.mrb[0].mxu0
    %v7426 = vpop.f32.mrb[0].mxu0
    %7427 = vdwg.mxu0
    %7428 = vmatprep.subr.bf16.mxu0 %v1377
    %7429 = vmatpush1.bf16.msra.mxu0 %v1376
    %7430 = vmatprep.subr.bf16.mxu0 %v1393
    %7431 = vmatpush1.bf16.msra.mxu0 %v1392
    %7432 = vmatprep.subr.bf16.mxu0 %v1409
    %7433 = vmatpush1.bf16.msra.mxu0 %v1408
    %7434 = vmatprep.subr.bf16.mxu0 %v1425
    %7435 = vmatpush1.bf16.msra.mxu0 %v1424
    %7436 = vmatprep.subr.bf16.mxu0 %v1441
    %7437 = vmatpush1.bf16.msra.mxu0 %v1440
    %7438 = vmatprep.subr.bf16.mxu0 %v1457
    %7439 = vmatpush1.bf16.msra.mxu0 %v1456
    %7440 = vmatprep.subr.bf16.mxu0 %v1473
    %7441 = vmatpush1.bf16.msra.mxu0 %v1472
    %7442 = vmatprep.subr.bf16.mxu0 %v1489
    %7443 = vmatpush1.bf16.msra.mxu0 %v1488
    %7444 = vmatprep.subr.bf16.mxu0 %v1505
    %7445 = vmatpush1.bf16.msra.mxu0 %v1504
    %7446 = vmatprep.subr.bf16.mxu0 %v1521
    %7447 = vmatpush1.bf16.msra.mxu0 %v1520
    %7448 = vmatprep.subr.bf16.mxu0 %v1537
    %7449 = vmatpush1.bf16.msra.mxu0 %v1536
    %7450 = vmatprep.subr.bf16.mxu0 %v1553
    %7451 = vmatpush1.bf16.msra.mxu0 %v1552
    %7452 = vmatprep.subr.bf16.mxu0 %v1569
    %7453 = vmatpush1.bf16.msra.mxu0 %v1568
    %7454 = vmatprep.subr.bf16.mxu0 %v1585
    %7455 = vmatpush1.bf16.msra.mxu0 %v1584
    %7456 = vmatprep.subr.bf16.mxu0 %v1601
    %7457 = vmatpush1.bf16.msra.mxu0 %v1600
    %7458 = vmatprep.subr.bf16.mxu0 %v1617
    %7459 = vmatpush1.bf16.msra.mxu0 %v1616
    %7460 = vmatprep.mubr.bf16.mxu0 %v6976
    %7461 = vmatmul.mubr.bf16.gmra.mrb[0].mxu0 %v6975
    %v7462 = vpop.f32.mrb[0].mxu0
    %v7463 = vadd.f32 %v7422, %v7462
    %v7464 = vpop.f32.mrb[0].mxu0
    %v7465 = vadd.f32 %v7424, %v7464
    %v7466 = vpop.f32.mrb[0].mxu0
    %v7467 = vpop.f32.mrb[0].mxu0
    %7468 = vdwg.mxu0
    %7469 = vmatprep.subr.bf16.mxu0 %v1123
    %7470 = vmatpush1.bf16.msra.mxu0 %v1122
    %7471 = vmatprep.subr.bf16.mxu0 %v1139
    %7472 = vmatpush1.bf16.msra.mxu0 %v1138
    %7473 = vmatprep.subr.bf16.mxu0 %v1155
    %7474 = vmatpush1.bf16.msra.mxu0 %v1154
    %7475 = vmatprep.subr.bf16.mxu0 %v1171
    %7476 = vmatpush1.bf16.msra.mxu0 %v1170
    %7477 = vmatprep.subr.bf16.mxu0 %v1187
    %7478 = vmatpush1.bf16.msra.mxu0 %v1186
    %7479 = vmatprep.subr.bf16.mxu0 %v1203
    %7480 = vmatpush1.bf16.msra.mxu0 %v1202
    %7481 = vmatprep.subr.bf16.mxu0 %v1219
    %7482 = vmatpush1.bf16.msra.mxu0 %v1218
    %7483 = vmatprep.subr.bf16.mxu0 %v1235
    %7484 = vmatpush1.bf16.msra.mxu0 %v1234
    %7485 = vmatprep.subr.bf16.mxu0 %v1251
    %7486 = vmatpush1.bf16.msra.mxu0 %v1250
    %7487 = vmatprep.subr.bf16.mxu0 %v1267
    %7488 = vmatpush1.bf16.msra.mxu0 %v1266
    %7489 = vmatprep.subr.bf16.mxu0 %v1283
    %7490 = vmatpush1.bf16.msra.mxu0 %v1282
    %7491 = vmatprep.subr.bf16.mxu0 %v1299
    %7492 = vmatpush1.bf16.msra.mxu0 %v1298
    %7493 = vmatprep.subr.bf16.mxu0 %v1315
    %7494 = vmatpush1.bf16.msra.mxu0 %v1314
    %7495 = vmatprep.subr.bf16.mxu0 %v1331
    %7496 = vmatpush1.bf16.msra.mxu0 %v1330
    %7497 = vmatprep.subr.bf16.mxu0 %v1347
    %7498 = vmatpush1.bf16.msra.mxu0 %v1346
    %7499 = vmatprep.subr.bf16.mxu0 %v1363
    %7500 = vmatpush1.bf16.msra.mxu0 %v1362
    %7501 = vmatprep.mubr.bf16.mxu0 %v6974
    %7502 = vmatmul.mubr.bf16.gmra.mrb[0].mxu0 %v6973
    %v7503 = vpop.f32.mrb[0].mxu0
    %v7504 = vadd.f32 0.0, %v7503
    %v7505 = vpop.f32.mrb[0].mxu0
    %v7506 = vadd.f32 0.0, %v7505
    %v7507 = vpop.f32.mrb[0].mxu0
    %v7508 = vpop.f32.mrb[0].mxu0
    %7509 = vdwg.mxu0
    %7510 = vmatprep.subr.bf16.mxu0 %v1379
    %7511 = vmatpush1.bf16.msra.mxu0 %v1378
    %7512 = vmatprep.subr.bf16.mxu0 %v1395
    %7513 = vmatpush1.bf16.msra.mxu0 %v1394
    %7514 = vmatprep.subr.bf16.mxu0 %v1411
    %7515 = vmatpush1.bf16.msra.mxu0 %v1410
    %7516 = vmatprep.subr.bf16.mxu0 %v1427
    %7517 = vmatpush1.bf16.msra.mxu0 %v1426
    %7518 = vmatprep.subr.bf16.mxu0 %v1443
    %7519 = vmatpush1.bf16.msra.mxu0 %v1442
    %7520 = vmatprep.subr.bf16.mxu0 %v1459
    %7521 = vmatpush1.bf16.msra.mxu0 %v1458
    %7522 = vmatprep.subr.bf16.mxu0 %v1475
    %7523 = vmatpush1.bf16.msra.mxu0 %v1474
    %7524 = vmatprep.subr.bf16.mxu0 %v1491
    %7525 = vmatpush1.bf16.msra.mxu0 %v1490
    %7526 = vmatprep.subr.bf16.mxu0 %v1507
    %7527 = vmatpush1.bf16.msra.mxu0 %v1506
    %7528 = vmatprep.subr.bf16.mxu0 %v1523
    %7529 = vmatpush1.bf16.msra.mxu0 %v1522
    %7530 = vmatprep.subr.bf16.mxu0 %v1539
    %7531 = vmatpush1.bf16.msra.mxu0 %v1538
    %7532 = vmatprep.subr.bf16.mxu0 %v1555
    %7533 = vmatpush1.bf16.msra.mxu0 %v1554
    %7534 = vmatprep.subr.bf16.mxu0 %v1571
    %7535 = vmatpush1.bf16.msra.mxu0 %v1570
    %7536 = vmatprep.subr.bf16.mxu0 %v1587
    %7537 = vmatpush1.bf16.msra.mxu0 %v1586
    %7538 = vmatprep.subr.bf16.mxu0 %v1603
    %7539 = vmatpush1.bf16.msra.mxu0 %v1602
    %7540 = vmatprep.subr.bf16.mxu0 %v1619
    %7541 = vmatpush1.bf16.msra.mxu0 %v1618
    %7542 = vmatprep.mubr.bf16.mxu0 %v6976
    %7543 = vmatmul.mubr.bf16.gmra.mrb[0].mxu0 %v6975
    %v7544 = vpop.f32.mrb[0].mxu0
    %v7545 = vadd.f32 %v7504, %v7544
    %v7546 = vpop.f32.mrb[0].mxu0
    %v7547 = vadd.f32 %v7506, %v7546
    %v7548 = vpop.f32.mrb[0].mxu0
    %v7549 = vpop.f32.mrb[0].mxu0
    %7550 = vdwg.mxu0
    %7551 = vmatprep.subr.bf16.mxu0 %v1125
    %7552 = vmatpush1.bf16.msra.mxu0 %v1124
    %7553 = vmatprep.subr.bf16.mxu0 %v1141
    %7554 = vmatpush1.bf16.msra.mxu0 %v1140
    %7555 = vmatprep.subr.bf16.mxu0 %v1157
    %7556 = vmatpush1.bf16.msra.mxu0 %v1156
    %7557 = vmatprep.subr.bf16.mxu0 %v1173
    %7558 = vmatpush1.bf16.msra.mxu0 %v1172
    %7559 = vmatprep.subr.bf16.mxu0 %v1189
    %7560 = vmatpush1.bf16.msra.mxu0 %v1188
    %7561 = vmatprep.subr.bf16.mxu0 %v1205
    %7562 = vmatpush1.bf16.msra.mxu0 %v1204
    %7563 = vmatprep.subr.bf16.mxu0 %v1221
    %7564 = vmatpush1.bf16.msra.mxu0 %v1220
    %7565 = vmatprep.subr.bf16.mxu0 %v1237
    %7566 = vmatpush1.bf16.msra.mxu0 %v1236
    %7567 = vmatprep.subr.bf16.mxu0 %v1253
    %7568 = vmatpush1.bf16.msra.mxu0 %v1252
    %7569 = vmatprep.subr.bf16.mxu0 %v1269
    %7570 = vmatpush1.bf16.msra.mxu0 %v1268
    %7571 = vmatprep.subr.bf16.mxu0 %v1285
    %7572 = vmatpush1.bf16.msra.mxu0 %v1284
    %7573 = vmatprep.subr.bf16.mxu0 %v1301
    %7574 = vmatpush1.bf16.msra.mxu0 %v1300
    %7575 = vmatprep.subr.bf16.mxu0 %v1317
    %7576 = vmatpush1.bf16.msra.mxu0 %v1316
    %7577 = vmatprep.subr.bf16.mxu0 %v1333
    %7578 = vmatpush1.bf16.msra.mxu0 %v1332
    %7579 = vmatprep.subr.bf16.mxu0 %v1349
    %7580 = vmatpush1.bf16.msra.mxu0 %v1348
    %7581 = vmatprep.subr.bf16.mxu0 %v1365
    %7582 = vmatpush1.bf16.msra.mxu0 %v1364
    %7583 = vmatprep.mubr.bf16.mxu0 %v6974
    %7584 = vmatmul.mubr.bf16.gmra.mrb[0].mxu0 %v6973
    %v7585 = vpop.f32.mrb[0].mxu0
    %v7586 = vadd.f32 0.0, %v7585
    %v7587 = vpop.f32.mrb[0].mxu0
    %v7588 = vadd.f32 0.0, %v7587
    %v7589 = vpop.f32.mrb[0].mxu0
    %v7590 = vpop.f32.mrb[0].mxu0
    %7591 = vdwg.mxu0
    %7592 = vmatprep.subr.bf16.mxu0 %v1381
    %7593 = vmatpush1.bf16.msra.mxu0 %v1380
    %7594 = vmatprep.subr.bf16.mxu0 %v1397
    %7595 = vmatpush1.bf16.msra.mxu0 %v1396
    %7596 = vmatprep.subr.bf16.mxu0 %v1413
    %7597 = vmatpush1.bf16.msra.mxu0 %v1412
    %7598 = vmatprep.subr.bf16.mxu0 %v1429
    %7599 = vmatpush1.bf16.msra.mxu0 %v1428
    %7600 = vmatprep.subr.bf16.mxu0 %v1445
    %7601 = vmatpush1.bf16.msra.mxu0 %v1444
    %7602 = vmatprep.subr.bf16.mxu0 %v1461
    %7603 = vmatpush1.bf16.msra.mxu0 %v1460
    %7604 = vmatprep.subr.bf16.mxu0 %v1477
    %7605 = vmatpush1.bf16.msra.mxu0 %v1476
    %7606 = vmatprep.subr.bf16.mxu0 %v1493
    %7607 = vmatpush1.bf16.msra.mxu0 %v1492
    %7608 = vmatprep.subr.bf16.mxu0 %v1509
    %7609 = vmatpush1.bf16.msra.mxu0 %v1508
    %7610 = vmatprep.subr.bf16.mxu0 %v1525
    %7611 = vmatpush1.bf16.msra.mxu0 %v1524
    %7612 = vmatprep.subr.bf16.mxu0 %v1541
    %7613 = vmatpush1.bf16.msra.mxu0 %v1540
    %7614 = vmatprep.subr.bf16.mxu0 %v1557
    %7615 = vmatpush1.bf16.msra.mxu0 %v1556
    %7616 = vmatprep.subr.bf16.mxu0 %v1573
    %7617 = vmatpush1.bf16.msra.mxu0 %v1572
    %7618 = vmatprep.subr.bf16.mxu0 %v1589
    %7619 = vmatpush1.bf16.msra.mxu0 %v1588
    %7620 = vmatprep.subr.bf16.mxu0 %v1605
    %7621 = vmatpush1.bf16.msra.mxu0 %v1604
    %7622 = vmatprep.subr.bf16.mxu0 %v1621
    %7623 = vmatpush1.bf16.msra.mxu0 %v1620
    %7624 = vmatprep.mubr.bf16.mxu0 %v6976
    %7625 = vmatmul.mubr.bf16.gmra.mrb[0].mxu0 %v6975
    %v7626 = vpop.f32.mrb[0].mxu0
    %v7627 = vadd.f32 %v7586, %v7626
    %v7628 = vpop.f32.mrb[0].mxu0
    %v7629 = vadd.f32 %v7588, %v7628
    %v7630 = vpop.f32.mrb[0].mxu0
    %v7631 = vpop.f32.mrb[0].mxu0
    %7632 = vdwg.mxu0
    %v7633 = vadd.f32 %v6957, %v7053
    %v7634 = vadd.f32 %v6958, %v7055
    %v7635 = vadd.f32 %v6959, %v7135
    %v7636 = vadd.f32 %v6960, %v7137
    %v7637 = vadd.f32 %v6961, %v7217
    %v7638 = vadd.f32 %v6962, %v7219
    %v7639 = vadd.f32 %v6963, %v7299
    %v7640 = vadd.f32 %v6964, %v7301
    %v7641 = vadd.f32 %v6965, %v7381
    %v7642 = vadd.f32 %v6966, %v7383
    %v7643 = vadd.f32 %v6967, %v7463
    %v7644 = vadd.f32 %v6968, %v7465
    %v7645 = vadd.f32 %v6969, %v7545
    %v7646 = vadd.f32 %v6970, %v7547
    %v7647 = vadd.f32 %v6971, %v7627
    %v7648 = vadd.f32 %v6972, %v7629
    %v7649 = vmul.f32 %v7633, 0.5
    %v7650 = vmul.f32 %v7634, 0.5
    %v7651 = vmul.f32 %v7635, 0.5
    %v7652 = vmul.f32 %v7636, 0.5
    %v7653 = vtanh.pop %v7649
    %v7654 = vtanh.pop %v7650
    %v7655 = vtanh.pop %v7651
    %v7656 = vtanh.pop %v7652
    %v7657 = vmul.f32 %v7653, 0.5
    %v7658 = vmul.f32 %v7654, 0.5
    %v7659 = vmul.f32 %v7655, 0.5
    %v7660 = vmul.f32 %v7656, 0.5
    %v7661 = vadd.f32 %v7657, 0.5
    %v7662 = vadd.f32 %v7658, 0.5
    %v7663 = vadd.f32 %v7659, 0.5
    %v7664 = vadd.f32 %v7660, 0.5
    %v7665 = vmul.f32 %v7637, 0.5
    %v7666 = vmul.f32 %v7638, 0.5
    %v7667 = vmul.f32 %v7639, 0.5
    %v7668 = vmul.f32 %v7640, 0.5
    %v7669 = vtanh.pop %v7665
    %v7670 = vtanh.pop %v7666
    %v7671 = vtanh.pop %v7667
    %v7672 = vtanh.pop %v7668
    %v7673 = vmul.f32 %v7669, 0.5
    %v7674 = vmul.f32 %v7670, 0.5
    %v7675 = vmul.f32 %v7671, 0.5
    %v7676 = vmul.f32 %v7672, 0.5
    %v7677 = vadd.f32 %v7673, 0.5
    %v7678 = vadd.f32 %v7674, 0.5
    %v7679 = vadd.f32 %v7675, 0.5
    %v7680 = vadd.f32 %v7676, 0.5
    %v7681 = vtanh.pop %v7641
    %v7682 = vtanh.pop %v7642
    %v7683 = vtanh.pop %v7643
    %v7684 = vtanh.pop %v7644
    %v7685 = vmul.f32 %v7645, 0.5
    %v7686 = vmul.f32 %v7646, 0.5
    %v7687 = vmul.f32 %v7647, 0.5
    %v7688 = vmul.f32 %v7648, 0.5
    %v7689 = vtanh.pop %v7685
    %v7690 = vtanh.pop %v7686
    %v7691 = vtanh.pop %v7687
    %v7692 = vtanh.pop %v7688
    %v7693 = vmul.f32 %v7689, 0.5
    %v7694 = vmul.f32 %v7690, 0.5
    %v7695 = vmul.f32 %v7691, 0.5
    %v7696 = vmul.f32 %v7692, 0.5
    %v7697 = vadd.f32 %v7693, 0.5
    %v7698 = vadd.f32 %v7694, 0.5
    %v7699 = vadd.f32 %v7695, 0.5
    %v7700 = vadd.f32 %v7696, 0.5
    %v7701 = vmul.f32 %v7677, %v6944
    %v7702 = vmul.f32 %v7678, %v6945
    %v7703 = vmul.f32 %v7679, %v6946
    %v7704 = vmul.f32 %v7680, %v6947
    %v7705 = vmul.f32 %v7661, %v7681
    %v7706 = vmul.f32 %v7662, %v7682
    %v7707 = vmul.f32 %v7663, %v7683
    %v7708 = vmul.f32 %v7664, %v7684
    %v7709 = vadd.f32 %v7701, %v7705
    %v7710 = vadd.f32 %v7702, %v7706
    %v7711 = vadd.f32 %v7703, %v7707
    %v7712 = vadd.f32 %v7704, %v7708
    %v7713 = vtanh.pop %v7709
    %v7714 = vtanh.pop %v7710
    %v7715 = vtanh.pop %v7711
    %v7716 = vtanh.pop %v7712
    %v7717 = vmul.f32 %v7697, %v7713
    %v7718 = vmul.f32 %v7698, %v7714
    %v7719 = vmul.f32 %v7699, %v7715
    %v7720 = vmul.f32 %v7700, %v7716
    %s7721 = smul.u32 %s1090, 6
    %s7722 = sshll.u32 %s7721, 4
    %7723 = dma.done %s125, %s7722
    %s7724 = smul.u32 2, 1
    %s7725 = smul.u32 %s7724, 6
    %s7726 = sshll.u32 %s7725, 4
    %7727 = dma.done %s160, %s7726
    %v7728 = vpack.c.bf16 %v7717, %v7717
    %v7729 = vpack.c.bf16 %v7718, %v7718
    %v7730 = vpack.c.bf16 %v7719, %v7719
    %v7731 = vpack.c.bf16 %v7720, %v7720
    %v7732 = vld [vmem:[#allocation3] sm:$0xff]
    %v7733 = vld [vmem:[#allocation3 + $0x8] sm:$0xff]
    %v7734 = vld [vmem:[#allocation3 + $0x10] sm:$0xff]
    %v7735 = vld [vmem:[#allocation3 + $0x18] sm:$0xff]
    %v7736 = vld [vmem:[#allocation3 + $0x20] sm:$0xff]
    %v7737 = vld [vmem:[#allocation3 + $0x28] sm:$0xff]
    %v7738 = vld [vmem:[#allocation3 + $0x30] sm:$0xff]
    %v7739 = vld [vmem:[#allocation3 + $0x38] sm:$0xff]
    %v7740 = vld [vmem:[#allocation3 + $0x40] sm:$0xff]
    %v7741 = vld [vmem:[#allocation3 + $0x48] sm:$0xff]
    %v7742 = vld [vmem:[#allocation3 + $0x50] sm:$0xff]
    %v7743 = vld [vmem:[#allocation3 + $0x58] sm:$0xff]
    %v7744 = vld [vmem:[#allocation3 + $0x60] sm:$0xff]
    %v7745 = vld [vmem:[#allocation3 + $0x68] sm:$0xff]
    %v7746 = vld [vmem:[#allocation3 + $0x70] sm:$0xff]
    %v7747 = vld [vmem:[#allocation3 + $0x78] sm:$0xff]
    %v7748 = vld [vmem:[#allocation3 + $0x80] sm:$0xff]
    %v7749 = vld [vmem:[#allocation3 + $0x88] sm:$0xff]
    %v7750 = vld [vmem:[#allocation3 + $0x90] sm:$0xff]
    %v7751 = vld [vmem:[#allocation3 + $0x98] sm:$0xff]
    %v7752 = vld [vmem:[#allocation3 + $0xa0] sm:$0xff]
    %v7753 = vld [vmem:[#allocation3 + $0xa8] sm:$0xff]
    %v7754 = vld [vmem:[#allocation3 + $0xb0] sm:$0xff]
    %v7755 = vld [vmem:[#allocation3 + $0xb8] sm:$0xff]
    %v7756 = vld [vmem:[#allocation3 + $0xc0] sm:$0xff]
    %v7757 = vld [vmem:[#allocation3 + $0xc8] sm:$0xff]
    %v7758 = vld [vmem:[#allocation3 + $0xd0] sm:$0xff]
    %v7759 = vld [vmem:[#allocation3 + $0xd8] sm:$0xff]
    %v7760 = vld [vmem:[#allocation3 + $0xe0] sm:$0xff]
    %v7761 = vld [vmem:[#allocation3 + $0xe8] sm:$0xff]
    %v7762 = vld [vmem:[#allocation3 + $0xf0] sm:$0xff]
    %v7763 = vld [vmem:[#allocation3 + $0xf8] sm:$0xff]
    %v7764 = vld [vmem:[#allocation3 + $0x100] sm:$0xff]
    %v7765 = vld [vmem:[#allocation3 + $0x108] sm:$0xff]
    %v7766 = vld [vmem:[#allocation3 + $0x110] sm:$0xff]
    %v7767 = vld [vmem:[#allocation3 + $0x118] sm:$0xff]
    %v7768 = vld [vmem:[#allocation3 + $0x120] sm:$0xff]
    %v7769 = vld [vmem:[#allocation3 + $0x128] sm:$0xff]
    %v7770 = vld [vmem:[#allocation3 + $0x130] sm:$0xff]
    %v7771 = vld [vmem:[#allocation3 + $0x138] sm:$0xff]
    %v7772 = vld [vmem:[#allocation3 + $0x140] sm:$0xff]
    %v7773 = vld [vmem:[#allocation3 + $0x148] sm:$0xff]
    %v7774 = vld [vmem:[#allocation3 + $0x150] sm:$0xff]
    %v7775 = vld [vmem:[#allocation3 + $0x158] sm:$0xff]
    %v7776 = vld [vmem:[#allocation3 + $0x160] sm:$0xff]
    %v7777 = vld [vmem:[#allocation3 + $0x168] sm:$0xff]
    %v7778 = vld [vmem:[#allocation3 + $0x170] sm:$0xff]
    %v7779 = vld [vmem:[#allocation3 + $0x178] sm:$0xff]
    %v7780 = vld [vmem:[#allocation3 + $0x180] sm:$0xff]
    %v7781 = vld [vmem:[#allocation3 + $0x188] sm:$0xff]
    %v7782 = vld [vmem:[#allocation3 + $0x190] sm:$0xff]
    %v7783 = vld [vmem:[#allocation3 + $0x198] sm:$0xff]
    %v7784 = vld [vmem:[#allocation3 + $0x1a0] sm:$0xff]
    %v7785 = vld [vmem:[#allocation3 + $0x1a8] sm:$0xff]
    %v7786 = vld [vmem:[#allocation3 + $0x1b0] sm:$0xff]
    %v7787 = vld [vmem:[#allocation3 + $0x1b8] sm:$0xff]
    %v7788 = vld [vmem:[#allocation3 + $0x1c0] sm:$0xff]
    %v7789 = vld [vmem:[#allocation3 + $0x1c8] sm:$0xff]
    %v7790 = vld [vmem:[#allocation3 + $0x1d0] sm:$0xff]
    %v7791 = vld [vmem:[#allocation3 + $0x1d8] sm:$0xff]
    %v7792 = vld [vmem:[#allocation3 + $0x1e0] sm:$0xff]
    %v7793 = vld [vmem:[#allocation3 + $0x1e8] sm:$0xff]
    %v7794 = vld [vmem:[#allocation3 + $0x1f0] sm:$0xff]
    %v7795 = vld [vmem:[#allocation3 + $0x1f8] sm:$0xff]
    %v7796 = vld [vmem:[#allocation3 + $0x200] sm:$0xff]
    %v7797 = vld [vmem:[#allocation3 + $0x208] sm:$0xff]
    %v7798 = vld [vmem:[#allocation3 + $0x210] sm:$0xff]
    %v7799 = vld [vmem:[#allocation3 + $0x218] sm:$0xff]
    %v7800 = vld [vmem:[#allocation3 + $0x220] sm:$0xff]
    %v7801 = vld [vmem:[#allocation3 + $0x228] sm:$0xff]
    %v7802 = vld [vmem:[#allocation3 + $0x230] sm:$0xff]
    %v7803 = vld [vmem:[#allocation3 + $0x238] sm:$0xff]
    %v7804 = vld [vmem:[#allocation3 + $0x240] sm:$0xff]
    %v7805 = vld [vmem:[#allocation3 + $0x248] sm:$0xff]
    %v7806 = vld [vmem:[#allocation3 + $0x250] sm:$0xff]
    %v7807 = vld [vmem:[#allocation3 + $0x258] sm:$0xff]
    %v7808 = vld [vmem:[#allocation3 + $0x260] sm:$0xff]
    %v7809 = vld [vmem:[#allocation3 + $0x268] sm:$0xff]
    %v7810 = vld [vmem:[#allocation3 + $0x270] sm:$0xff]
    %v7811 = vld [vmem:[#allocation3 + $0x278] sm:$0xff]
    %v7812 = vld [vmem:[#allocation3 + $0x280] sm:$0xff]
    %v7813 = vld [vmem:[#allocation3 + $0x288] sm:$0xff]
    %v7814 = vld [vmem:[#allocation3 + $0x290] sm:$0xff]
    %v7815 = vld [vmem:[#allocation3 + $0x298] sm:$0xff]
    %v7816 = vld [vmem:[#allocation3 + $0x2a0] sm:$0xff]
    %v7817 = vld [vmem:[#allocation3 + $0x2a8] sm:$0xff]
    %v7818 = vld [vmem:[#allocation3 + $0x2b0] sm:$0xff]
    %v7819 = vld [vmem:[#allocation3 + $0x2b8] sm:$0xff]
    %v7820 = vld [vmem:[#allocation3 + $0x2c0] sm:$0xff]
    %v7821 = vld [vmem:[#allocation3 + $0x2c8] sm:$0xff]
    %v7822 = vld [vmem:[#allocation3 + $0x2d0] sm:$0xff]
    %v7823 = vld [vmem:[#allocation3 + $0x2d8] sm:$0xff]
    %v7824 = vld [vmem:[#allocation3 + $0x2e0] sm:$0xff]
    %v7825 = vld [vmem:[#allocation3 + $0x2e8] sm:$0xff]
    %v7826 = vld [vmem:[#allocation3 + $0x2f0] sm:$0xff]
    %v7827 = vld [vmem:[#allocation3 + $0x2f8] sm:$0xff]
    %v7828 = vld [vmem:[#allocation3 + $0x300] sm:$0xff]
    %v7829 = vld [vmem:[#allocation3 + $0x308] sm:$0xff]
    %v7830 = vld [vmem:[#allocation3 + $0x310] sm:$0xff]
    %v7831 = vld [vmem:[#allocation3 + $0x318] sm:$0xff]
    %v7832 = vld [vmem:[#allocation3 + $0x320] sm:$0xff]
    %v7833 = vld [vmem:[#allocation3 + $0x328] sm:$0xff]
    %v7834 = vld [vmem:[#allocation3 + $0x330] sm:$0xff]
    %v7835 = vld [vmem:[#allocation3 + $0x338] sm:$0xff]
    %v7836 = vld [vmem:[#allocation3 + $0x340] sm:$0xff]
    %v7837 = vld [vmem:[#allocation3 + $0x348] sm:$0xff]
    %v7838 = vld [vmem:[#allocation3 + $0x350] sm:$0xff]
    %v7839 = vld [vmem:[#allocation3 + $0x358] sm:$0xff]
    %v7840 = vld [vmem:[#allocation3 + $0x360] sm:$0xff]
    %v7841 = vld [vmem:[#allocation3 + $0x368] sm:$0xff]
    %v7842 = vld [vmem:[#allocation3 + $0x370] sm:$0xff]
    %v7843 = vld [vmem:[#allocation3 + $0x378] sm:$0xff]
    %v7844 = vld [vmem:[#allocation3 + $0x380] sm:$0xff]
    %v7845 = vld [vmem:[#allocation3 + $0x388] sm:$0xff]
    %v7846 = vld [vmem:[#allocation3 + $0x390] sm:$0xff]
    %v7847 = vld [vmem:[#allocation3 + $0x398] sm:$0xff]
    %v7848 = vld [vmem:[#allocation3 + $0x3a0] sm:$0xff]
    %v7849 = vld [vmem:[#allocation3 + $0x3a8] sm:$0xff]
    %v7850 = vld [vmem:[#allocation3 + $0x3b0] sm:$0xff]
    %v7851 = vld [vmem:[#allocation3 + $0x3b8] sm:$0xff]
    %v7852 = vld [vmem:[#allocation3 + $0x3c0] sm:$0xff]
    %v7853 = vld [vmem:[#allocation3 + $0x3c8] sm:$0xff]
    %v7854 = vld [vmem:[#allocation3 + $0x3d0] sm:$0xff]
    %v7855 = vld [vmem:[#allocation3 + $0x3d8] sm:$0xff]
    %v7856 = vld [vmem:[#allocation3 + $0x3e0] sm:$0xff]
    %v7857 = vld [vmem:[#allocation3 + $0x3e8] sm:$0xff]
    %v7858 = vld [vmem:[#allocation3 + $0x3f0] sm:$0xff]
    %v7859 = vld [vmem:[#allocation3 + $0x3f8] sm:$0xff]
    %v7860 = vld [vmem:[#allocation3 + $0x400] sm:$0xff]
    %v7861 = vld [vmem:[#allocation3 + $0x408] sm:$0xff]
    %v7862 = vld [vmem:[#allocation3 + $0x410] sm:$0xff]
    %v7863 = vld [vmem:[#allocation3 + $0x418] sm:$0xff]
    %v7864 = vld [vmem:[#allocation3 + $0x420] sm:$0xff]
    %v7865 = vld [vmem:[#allocation3 + $0x428] sm:$0xff]
    %v7866 = vld [vmem:[#allocation3 + $0x430] sm:$0xff]
    %v7867 = vld [vmem:[#allocation3 + $0x438] sm:$0xff]
    %v7868 = vld [vmem:[#allocation3 + $0x440] sm:$0xff]
    %v7869 = vld [vmem:[#allocation3 + $0x448] sm:$0xff]
    %v7870 = vld [vmem:[#allocation3 + $0x450] sm:$0xff]
    %v7871 = vld [vmem:[#allocation3 + $0x458] sm:$0xff]
    %v7872 = vld [vmem:[#allocation3 + $0x460] sm:$0xff]
    %v7873 = vld [vmem:[#allocation3 + $0x468] sm:$0xff]
    %v7874 = vld [vmem:[#allocation3 + $0x470] sm:$0xff]
    %v7875 = vld [vmem:[#allocation3 + $0x478] sm:$0xff]
    %v7876 = vld [vmem:[#allocation3 + $0x480] sm:$0xff]
    %v7877 = vld [vmem:[#allocation3 + $0x488] sm:$0xff]
    %v7878 = vld [vmem:[#allocation3 + $0x490] sm:$0xff]
    %v7879 = vld [vmem:[#allocation3 + $0x498] sm:$0xff]
    %v7880 = vld [vmem:[#allocation3 + $0x4a0] sm:$0xff]
    %v7881 = vld [vmem:[#allocation3 + $0x4a8] sm:$0xff]
    %v7882 = vld [vmem:[#allocation3 + $0x4b0] sm:$0xff]
    %v7883 = vld [vmem:[#allocation3 + $0x4b8] sm:$0xff]
    %v7884 = vld [vmem:[#allocation3 + $0x4c0] sm:$0xff]
    %v7885 = vld [vmem:[#allocation3 + $0x4c8] sm:$0xff]
    %v7886 = vld [vmem:[#allocation3 + $0x4d0] sm:$0xff]
    %v7887 = vld [vmem:[#allocation3 + $0x4d8] sm:$0xff]
    %v7888 = vld [vmem:[#allocation3 + $0x4e0] sm:$0xff]
    %v7889 = vld [vmem:[#allocation3 + $0x4e8] sm:$0xff]
    %v7890 = vld [vmem:[#allocation3 + $0x4f0] sm:$0xff]
    %v7891 = vld [vmem:[#allocation3 + $0x4f8] sm:$0xff]
    %v7892 = vld [vmem:[#allocation3 + $0x500] sm:$0xff]
    %v7893 = vld [vmem:[#allocation3 + $0x508] sm:$0xff]
    %v7894 = vld [vmem:[#allocation3 + $0x510] sm:$0xff]
    %v7895 = vld [vmem:[#allocation3 + $0x518] sm:$0xff]
    %v7896 = vld [vmem:[#allocation3 + $0x520] sm:$0xff]
    %v7897 = vld [vmem:[#allocation3 + $0x528] sm:$0xff]
    %v7898 = vld [vmem:[#allocation3 + $0x530] sm:$0xff]
    %v7899 = vld [vmem:[#allocation3 + $0x538] sm:$0xff]
    %v7900 = vld [vmem:[#allocation3 + $0x540] sm:$0xff]
    %v7901 = vld [vmem:[#allocation3 + $0x548] sm:$0xff]
    %v7902 = vld [vmem:[#allocation3 + $0x550] sm:$0xff]
    %v7903 = vld [vmem:[#allocation3 + $0x558] sm:$0xff]
    %v7904 = vld [vmem:[#allocation3 + $0x560] sm:$0xff]
    %v7905 = vld [vmem:[#allocation3 + $0x568] sm:$0xff]
    %v7906 = vld [vmem:[#allocation3 + $0x570] sm:$0xff]
    %v7907 = vld [vmem:[#allocation3 + $0x578] sm:$0xff]
    %v7908 = vld [vmem:[#allocation3 + $0x580] sm:$0xff]
    %v7909 = vld [vmem:[#allocation3 + $0x588] sm:$0xff]
    %v7910 = vld [vmem:[#allocation3 + $0x590] sm:$0xff]
    %v7911 = vld [vmem:[#allocation3 + $0x598] sm:$0xff]
    %v7912 = vld [vmem:[#allocation3 + $0x5a0] sm:$0xff]
    %v7913 = vld [vmem:[#allocation3 + $0x5a8] sm:$0xff]
    %v7914 = vld [vmem:[#allocation3 + $0x5b0] sm:$0xff]
    %v7915 = vld [vmem:[#allocation3 + $0x5b8] sm:$0xff]
    %v7916 = vld [vmem:[#allocation3 + $0x5c0] sm:$0xff]
    %v7917 = vld [vmem:[#allocation3 + $0x5c8] sm:$0xff]
    %v7918 = vld [vmem:[#allocation3 + $0x5d0] sm:$0xff]
    %v7919 = vld [vmem:[#allocation3 + $0x5d8] sm:$0xff]
    %v7920 = vld [vmem:[#allocation3 + $0x5e0] sm:$0xff]
    %v7921 = vld [vmem:[#allocation3 + $0x5e8] sm:$0xff]
    %v7922 = vld [vmem:[#allocation3 + $0x5f0] sm:$0xff]
    %v7923 = vld [vmem:[#allocation3 + $0x5f8] sm:$0xff]
    %v7924 = vld [vmem:[%s1] sm:$0xff]
    %v7925 = vpack.c.bf16 %v7924, %v7924
    %v7926 = vld [vmem:[#allocation4] sm:$0xff]
    %v7927 = vld [vmem:[#allocation4 + $0x8] sm:$0xf]
    %v7930 = vcombine.high %v7926, %v7926
    %v7932 = vunpack.c.l.s4 1983009808
    %v7933 = vunpack.c.0.s8 %v7932
    %v7934 = vlaneseq
    %v7935 = vshrl.u32 %v7934, 7
    %v7936 = vsub.s32 %v7933, %v7935
    %v7937 = vrot.slane %v7926, %v7936
    %v7939 = vunpack.c.l.s4 1983009808
    %v7940 = vunpack.c.0.s8 %v7939
    %v7941 = vlaneseq
    %v7942 = vshrl.u32 %v7941, 7
    %v7943 = vsub.s32 %v7940, %v7942
    %v7944 = vrot.slane %v7930, %v7943
    %v7945 = vcombine.high %v7937, %v7937
    %v7946 = vcombine.high %v7944, %v7944
    %v7948 = vunpack.c.l.s4 1983009808
    %v7949 = vunpack.c.0.s8 %v7948
    %v7950 = vlaneseq
    %v7951 = vshrl.u32 %v7950, 7
    %v7952 = vsub.s32 %v7949, %v7951
    %v7953 = vrot.slane %v7927, %v7952
    %v7954 = vcombine.high %v7953, %v7953
    %vm7955 = vcmask 31744
    %v7957 = vsel %vm7955, %v7925, 0
    %vm7959 = vcmask 1041408
    %v7961 = vsel %vm7959, %v7937, 0
    %v7964 = vsel %vm7959, %v7945, 0
    %v7967 = vsel %vm7959, %v7944, 0
    %v7970 = vsel %vm7959, %v7946, 0
    %v7973 = vsel %vm7959, %v7953, 0
    %v7976 = vsel %vm7959, %v7954, 0
    %7978 = vmatprep.subr.bf16.mxu0 %v7964
    %7979 = vmatpush1.bf16.msra.mxu0 %v7961
    %7980 = vmatprep.subr.bf16.mxu0 0
    %7981 = vmatpush1.bf16.msra.mxu0 0
    %7982 = vmatprep.subr.bf16.mxu0 0
    %7983 = vmatpush1.bf16.msra.mxu0 0
    %7984 = vmatprep.subr.bf16.mxu0 0
    %7985 = vmatpush1.bf16.msra.mxu0 0
    %7986 = vmatprep.subr.bf16.mxu0 0
    %7987 = vmatpush1.bf16.msra.mxu0 0
    %7988 = vmatprep.subr.bf16.mxu0 0
    %7989 = vmatpush1.bf16.msra.mxu0 0
    %7990 = vmatprep.subr.bf16.mxu0 0
    %7991 = vmatpush1.bf16.msra.mxu0 0
    %7992 = vmatprep.subr.bf16.mxu0 0
    %7993 = vmatpush1.bf16.msra.mxu0 0
    %7994 = vmatprep.subr.bf16.mxu0 0
    %7995 = vmatpush1.bf16.msra.mxu0 0
    %7996 = vmatprep.subr.bf16.mxu0 0
    %7997 = vmatpush1.bf16.msra.mxu0 0
    %7998 = vmatprep.subr.bf16.mxu0 0
    %7999 = vmatpush1.bf16.msra.mxu0 0
    %8000 = vmatprep.subr.bf16.mxu0 0
    %8001 = vmatpush1.bf16.msra.mxu0 0
    %8002 = vmatprep.subr.bf16.mxu0 0
    %8003 = vmatpush1.bf16.msra.mxu0 0
    %8004 = vmatprep.subr.bf16.mxu0 0
    %8005 = vmatpush1.bf16.msra.mxu0 0
    %8006 = vmatprep.subr.bf16.mxu0 0
    %8007 = vmatpush1.bf16.msra.mxu0 0
    %8008 = vmatprep.subr.bf16.mxu0 0
    %8009 = vmatpush1.bf16.msra.mxu0 0
    %8010 = vmatprep.mubr.bf16.mxu0 0
    %8011 = vmatmul.mubr.bf16.gmra.mrb[0].mxu0 %v7957
    %v8012 = vpop.f32.mrb[0].mxu0
    %v8013 = vadd.f32 0.0, %v8012
    %v8014 = vpop.f32.mrb[0].mxu0
    %v8015 = vadd.f32 0.0, %v8014
    %v8016 = vpop.f32.mrb[0].mxu0
    %v8017 = vpop.f32.mrb[0].mxu0
    %8018 = vdwg.mxu0
    %8019 = vmatprep.subr.bf16.mxu0 %v7970
    %8020 = vmatpush1.bf16.msra.mxu0 %v7967
    %8021 = vmatprep.subr.bf16.mxu0 0
    %8022 = vmatpush1.bf16.msra.mxu0 0
    %8023 = vmatprep.subr.bf16.mxu0 0
    %8024 = vmatpush1.bf16.msra.mxu0 0
    %8025 = vmatprep.subr.bf16.mxu0 0
    %8026 = vmatpush1.bf16.msra.mxu0 0
    %8027 = vmatprep.subr.bf16.mxu0 0
    %8028 = vmatpush1.bf16.msra.mxu0 0
    %8029 = vmatprep.subr.bf16.mxu0 0
    %8030 = vmatpush1.bf16.msra.mxu0 0
    %8031 = vmatprep.subr.bf16.mxu0 0
    %8032 = vmatpush1.bf16.msra.mxu0 0
    %8033 = vmatprep.subr.bf16.mxu0 0
    %8034 = vmatpush1.bf16.msra.mxu0 0
    %8035 = vmatprep.subr.bf16.mxu0 0
    %8036 = vmatpush1.bf16.msra.mxu0 0
    %8037 = vmatprep.subr.bf16.mxu0 0
    %8038 = vmatpush1.bf16.msra.mxu0 0
    %8039 = vmatprep.subr.bf16.mxu0 0
    %8040 = vmatpush1.bf16.msra.mxu0 0
    %8041 = vmatprep.subr.bf16.mxu0 0
    %8042 = vmatpush1.bf16.msra.mxu0 0
    %8043 = vmatprep.subr.bf16.mxu0 0
    %8044 = vmatpush1.bf16.msra.mxu0 0
    %8045 = vmatprep.subr.bf16.mxu0 0
    %8046 = vmatpush1.bf16.msra.mxu0 0
    %8047 = vmatprep.subr.bf16.mxu0 0
    %8048 = vmatpush1.bf16.msra.mxu0 0
    %8049 = vmatprep.subr.bf16.mxu0 0
    %8050 = vmatpush1.bf16.msra.mxu0 0
    %8051 = vmatprep.mubr.bf16.mxu0 0
    %8052 = vmatmul.mubr.bf16.gmra.mrb[0].mxu0 %v7957
    %v8053 = vpop.f32.mrb[0].mxu0
    %v8054 = vadd.f32 0.0, %v8053
    %v8055 = vpop.f32.mrb[0].mxu0
    %v8056 = vadd.f32 0.0, %v8055
    %v8057 = vpop.f32.mrb[0].mxu0
    %v8058 = vpop.f32.mrb[0].mxu0
    %8059 = vdwg.mxu0
    %8060 = vmatprep.subr.bf16.mxu0 %v7976
    %8061 = vmatpush1.bf16.msra.mxu0 %v7973
    %8062 = vmatprep.subr.bf16.mxu0 0
    %8063 = vmatpush1.bf16.msra.mxu0 0
    %8064 = vmatprep.subr.bf16.mxu0 0
    %8065 = vmatpush1.bf16.msra.mxu0 0
    %8066 = vmatprep.subr.bf16.mxu0 0
    %8067 = vmatpush1.bf16.msra.mxu0 0
    %8068 = vmatprep.subr.bf16.mxu0 0
    %8069 = vmatpush1.bf16.msra.mxu0 0
    %8070 = vmatprep.subr.bf16.mxu0 0
    %8071 = vmatpush1.bf16.msra.mxu0 0
    %8072 = vmatprep.subr.bf16.mxu0 0
    %8073 = vmatpush1.bf16.msra.mxu0 0
    %8074 = vmatprep.subr.bf16.mxu0 0
    %8075 = vmatpush1.bf16.msra.mxu0 0
    %8076 = vmatprep.subr.bf16.mxu0 0
    %8077 = vmatpush1.bf16.msra.mxu0 0
    %8078 = vmatprep.subr.bf16.mxu0 0
    %8079 = vmatpush1.bf16.msra.mxu0 0
    %8080 = vmatprep.subr.bf16.mxu0 0
    %8081 = vmatpush1.bf16.msra.mxu0 0
    %8082 = vmatprep.subr.bf16.mxu0 0
    %8083 = vmatpush1.bf16.msra.mxu0 0
    %8084 = vmatprep.subr.bf16.mxu0 0
    %8085 = vmatpush1.bf16.msra.mxu0 0
    %8086 = vmatprep.subr.bf16.mxu0 0
    %8087 = vmatpush1.bf16.msra.mxu0 0
    %8088 = vmatprep.subr.bf16.mxu0 0
    %8089 = vmatpush1.bf16.msra.mxu0 0
    %8090 = vmatprep.subr.bf16.mxu0 0
    %8091 = vmatpush1.bf16.msra.mxu0 0
    %8092 = vmatprep.mubr.bf16.mxu0 0
    %8093 = vmatmul.mubr.bf16.gmra.mrb[0].mxu0 %v7957
    %v8094 = vpop.f32.mrb[0].mxu0
    %v8095 = vadd.f32 0.0, %v8094
    %v8096 = vpop.f32.mrb[0].mxu0
    %v8097 = vadd.f32 0.0, %v8096
    %v8098 = vpop.f32.mrb[0].mxu0
    %v8099 = vpop.f32.mrb[0].mxu0
    %8100 = vdwg.mxu0
    %8101 = vmatprep.subr.bf16.mxu0 %v7733
    %8102 = vmatpush1.bf16.msra.mxu0 %v7732
    %8103 = vmatprep.subr.bf16.mxu0 %v7739
    %8104 = vmatpush1.bf16.msra.mxu0 %v7738
    %8105 = vmatprep.subr.bf16.mxu0 %v7745
    %8106 = vmatpush1.bf16.msra.mxu0 %v7744
    %8107 = vmatprep.subr.bf16.mxu0 %v7751
    %8108 = vmatpush1.bf16.msra.mxu0 %v7750
    %8109 = vmatprep.subr.bf16.mxu0 %v7757
    %8110 = vmatpush1.bf16.msra.mxu0 %v7756
    %8111 = vmatprep.subr.bf16.mxu0 %v7763
    %8112 = vmatpush1.bf16.msra.mxu0 %v7762
    %8113 = vmatprep.subr.bf16.mxu0 %v7769
    %8114 = vmatpush1.bf16.msra.mxu0 %v7768
    %8115 = vmatprep.subr.bf16.mxu0 %v7775
    %8116 = vmatpush1.bf16.msra.mxu0 %v7774
    %8117 = vmatprep.subr.bf16.mxu0 %v7781
    %8118 = vmatpush1.bf16.msra.mxu0 %v7780
    %8119 = vmatprep.subr.bf16.mxu0 %v7787
    %8120 = vmatpush1.bf16.msra.mxu0 %v7786
    %8121 = vmatprep.subr.bf16.mxu0 %v7793
    %8122 = vmatpush1.bf16.msra.mxu0 %v7792
    %8123 = vmatprep.subr.bf16.mxu0 %v7799
    %8124 = vmatpush1.bf16.msra.mxu0 %v7798
    %8125 = vmatprep.subr.bf16.mxu0 %v7805
    %8126 = vmatpush1.bf16.msra.mxu0 %v7804
    %8127 = vmatprep.subr.bf16.mxu0 %v7811
    %8128 = vmatpush1.bf16.msra.mxu0 %v7810
    %8129 = vmatprep.subr.bf16.mxu0 %v7817
    %8130 = vmatpush1.bf16.msra.mxu0 %v7816
    %8131 = vmatprep.subr.bf16.mxu0 %v7823
    %8132 = vmatpush1.bf16.msra.mxu0 %v7822
    %8133 = vmatprep.mubr.bf16.mxu0 %v7729
    %8134 = vmatmul.mubr.bf16.gmra.mrb[0].mxu0 %v7728
    %v8135 = vpop.f32.mrb[0].mxu0
    %v8136 = vadd.f32 %v8013, %v8135
    %v8137 = vpop.f32.mrb[0].mxu0
    %v8138 = vadd.f32 %v8015, %v8137
    %v8139 = vpop.f32.mrb[0].mxu0
    %v8140 = vpop.f32.mrb[0].mxu0
    %8141 = vdwg.mxu0
    %8142 = vmatprep.subr.bf16.mxu0 %v7829
    %8143 = vmatpush1.bf16.msra.mxu0 %v7828
    %8144 = vmatprep.subr.bf16.mxu0 %v7835
    %8145 = vmatpush1.bf16.msra.mxu0 %v7834
    %8146 = vmatprep.subr.bf16.mxu0 %v7841
    %8147 = vmatpush1.bf16.msra.mxu0 %v7840
    %8148 = vmatprep.subr.bf16.mxu0 %v7847
    %8149 = vmatpush1.bf16.msra.mxu0 %v7846
    %8150 = vmatprep.subr.bf16.mxu0 %v7853
    %8151 = vmatpush1.bf16.msra.mxu0 %v7852
    %8152 = vmatprep.subr.bf16.mxu0 %v7859
    %8153 = vmatpush1.bf16.msra.mxu0 %v7858
    %8154 = vmatprep.subr.bf16.mxu0 %v7865
    %8155 = vmatpush1.bf16.msra.mxu0 %v7864
    %8156 = vmatprep.subr.bf16.mxu0 %v7871
    %8157 = vmatpush1.bf16.msra.mxu0 %v7870
    %8158 = vmatprep.subr.bf16.mxu0 %v7877
    %8159 = vmatpush1.bf16.msra.mxu0 %v7876
    %8160 = vmatprep.subr.bf16.mxu0 %v7883
    %8161 = vmatpush1.bf16.msra.mxu0 %v7882
    %8162 = vmatprep.subr.bf16.mxu0 %v7889
    %8163 = vmatpush1.bf16.msra.mxu0 %v7888
    %8164 = vmatprep.subr.bf16.mxu0 %v7895
    %8165 = vmatpush1.bf16.msra.mxu0 %v7894
    %8166 = vmatprep.subr.bf16.mxu0 %v7901
    %8167 = vmatpush1.bf16.msra.mxu0 %v7900
    %8168 = vmatprep.subr.bf16.mxu0 %v7907
    %8169 = vmatpush1.bf16.msra.mxu0 %v7906
    %8170 = vmatprep.subr.bf16.mxu0 %v7913
    %8171 = vmatpush1.bf16.msra.mxu0 %v7912
    %8172 = vmatprep.subr.bf16.mxu0 %v7919
    %8173 = vmatpush1.bf16.msra.mxu0 %v7918
    %8174 = vmatprep.mubr.bf16.mxu0 %v7731
    %8175 = vmatmul.mubr.bf16.gmra.mrb[0].mxu0 %v7730
    %v8176 = vpop.f32.mrb[0].mxu0
    %v8177 = vadd.f32 %v8136, %v8176
    %v8178 = vpop.f32.mrb[0].mxu0
    %v8179 = vadd.f32 %v8138, %v8178
    %v8180 = vpop.f32.mrb[0].mxu0
    %v8181 = vpop.f32.mrb[0].mxu0
    %8182 = vdwg.mxu0
    %8183 = vmatprep.subr.bf16.mxu0 %v7735
    %8184 = vmatpush1.bf16.msra.mxu0 %v7734
    %8185 = vmatprep.subr.bf16.mxu0 %v7741
    %8186 = vmatpush1.bf16.msra.mxu0 %v7740
    %8187 = vmatprep.subr.bf16.mxu0 %v7747
    %8188 = vmatpush1.bf16.msra.mxu0 %v7746
    %8189 = vmatprep.subr.bf16.mxu0 %v7753
    %8190 = vmatpush1.bf16.msra.mxu0 %v7752
    %8191 = vmatprep.subr.bf16.mxu0 %v7759
    %8192 = vmatpush1.bf16.msra.mxu0 %v7758
    %8193 = vmatprep.subr.bf16.mxu0 %v7765
    %8194 = vmatpush1.bf16.msra.mxu0 %v7764
    %8195 = vmatprep.subr.bf16.mxu0 %v7771
    %8196 = vmatpush1.bf16.msra.mxu0 %v7770
    %8197 = vmatprep.subr.bf16.mxu0 %v7777
    %8198 = vmatpush1.bf16.msra.mxu0 %v7776
    %8199 = vmatprep.subr.bf16.mxu0 %v7783
    %8200 = vmatpush1.bf16.msra.mxu0 %v7782
    %8201 = vmatprep.subr.bf16.mxu0 %v7789
    %8202 = vmatpush1.bf16.msra.mxu0 %v7788
    %8203 = vmatprep.subr.bf16.mxu0 %v7795
    %8204 = vmatpush1.bf16.msra.mxu0 %v7794
    %8205 = vmatprep.subr.bf16.mxu0 %v7801
    %8206 = vmatpush1.bf16.msra.mxu0 %v7800
    %8207 = vmatprep.subr.bf16.mxu0 %v7807
    %8208 = vmatpush1.bf16.msra.mxu0 %v7806
    %8209 = vmatprep.subr.bf16.mxu0 %v7813
    %8210 = vmatpush1.bf16.msra.mxu0 %v7812
    %8211 = vmatprep.subr.bf16.mxu0 %v7819
    %8212 = vmatpush1.bf16.msra.mxu0 %v7818
    %8213 = vmatprep.subr.bf16.mxu0 %v7825
    %8214 = vmatpush1.bf16.msra.mxu0 %v7824
    %8215 = vmatprep.mubr.bf16.mxu0 %v7729
    %8216 = vmatmul.mubr.bf16.gmra.mrb[0].mxu0 %v7728
    %v8217 = vpop.f32.mrb[0].mxu0
    %v8218 = vadd.f32 %v8054, %v8217
    %v8219 = vpop.f32.mrb[0].mxu0
    %v8220 = vadd.f32 %v8056, %v8219
    %v8221 = vpop.f32.mrb[0].mxu0
    %v8222 = vpop.f32.mrb[0].mxu0
    %8223 = vdwg.mxu0
    %8224 = vmatprep.subr.bf16.mxu0 %v7831
    %8225 = vmatpush1.bf16.msra.mxu0 %v7830
    %8226 = vmatprep.subr.bf16.mxu0 %v7837
    %8227 = vmatpush1.bf16.msra.mxu0 %v7836
    %8228 = vmatprep.subr.bf16.mxu0 %v7843
    %8229 = vmatpush1.bf16.msra.mxu0 %v7842
    %8230 = vmatprep.subr.bf16.mxu0 %v7849
    %8231 = vmatpush1.bf16.msra.mxu0 %v7848
    %8232 = vmatprep.subr.bf16.mxu0 %v7855
    %8233 = vmatpush1.bf16.msra.mxu0 %v7854
    %8234 = vmatprep.subr.bf16.mxu0 %v7861
    %8235 = vmatpush1.bf16.msra.mxu0 %v7860
    %8236 = vmatprep.subr.bf16.mxu0 %v7867
    %8237 = vmatpush1.bf16.msra.mxu0 %v7866
    %8238 = vmatprep.subr.bf16.mxu0 %v7873
    %8239 = vmatpush1.bf16.msra.mxu0 %v7872
    %8240 = vmatprep.subr.bf16.mxu0 %v7879
    %8241 = vmatpush1.bf16.msra.mxu0 %v7878
    %8242 = vmatprep.subr.bf16.mxu0 %v7885
    %8243 = vmatpush1.bf16.msra.mxu0 %v7884
    %8244 = vmatprep.subr.bf16.mxu0 %v7891
    %8245 = vmatpush1.bf16.msra.mxu0 %v7890
    %8246 = vmatprep.subr.bf16.mxu0 %v7897
    %8247 = vmatpush1.bf16.msra.mxu0 %v7896
    %8248 = vmatprep.subr.bf16.mxu0 %v7903
    %8249 = vmatpush1.bf16.msra.mxu0 %v7902
    %8250 = vmatprep.subr.bf16.mxu0 %v7909
    %8251 = vmatpush1.bf16.msra.mxu0 %v7908
    %8252 = vmatprep.subr.bf16.mxu0 %v7915
    %8253 = vmatpush1.bf16.msra.mxu0 %v7914
    %8254 = vmatprep.subr.bf16.mxu0 %v7921
    %8255 = vmatpush1.bf16.msra.mxu0 %v7920
    %8256 = vmatprep.mubr.bf16.mxu0 %v7731
    %8257 = vmatmul.mubr.bf16.gmra.mrb[0].mxu0 %v7730
    %v8258 = vpop.f32.mrb[0].mxu0
    %v8259 = vadd.f32 %v8218, %v8258
    %v8260 = vpop.f32.mrb[0].mxu0
    %v8261 = vadd.f32 %v8220, %v8260
    %v8262 = vpop.f32.mrb[0].mxu0
    %v8263 = vpop.f32.mrb[0].mxu0
    %8264 = vdwg.mxu0
    %8265 = vmatprep.subr.bf16.mxu0 %v7737
    %8266 = vmatpush1.bf16.msra.mxu0 %v7736
    %8267 = vmatprep.subr.bf16.mxu0 %v7743
    %8268 = vmatpush1.bf16.msra.mxu0 %v7742
    %8269 = vmatprep.subr.bf16.mxu0 %v7749
    %8270 = vmatpush1.bf16.msra.mxu0 %v7748
    %8271 = vmatprep.subr.bf16.mxu0 %v7755
    %8272 = vmatpush1.bf16.msra.mxu0 %v7754
    %8273 = vmatprep.subr.bf16.mxu0 %v7761
    %8274 = vmatpush1.bf16.msra.mxu0 %v7760
    %8275 = vmatprep.subr.bf16.mxu0 %v7767
    %8276 = vmatpush1.bf16.msra.mxu0 %v7766
    %8277 = vmatprep.subr.bf16.mxu0 %v7773
    %8278 = vmatpush1.bf16.msra.mxu0 %v7772
    %8279 = vmatprep.subr.bf16.mxu0 %v7779
    %8280 = vmatpush1.bf16.msra.mxu0 %v7778
    %8281 = vmatprep.subr.bf16.mxu0 %v7785
    %8282 = vmatpush1.bf16.msra.mxu0 %v7784
    %8283 = vmatprep.subr.bf16.mxu0 %v7791
    %8284 = vmatpush1.bf16.msra.mxu0 %v7790
    %8285 = vmatprep.subr.bf16.mxu0 %v7797
    %8286 = vmatpush1.bf16.msra.mxu0 %v7796
    %8287 = vmatprep.subr.bf16.mxu0 %v7803
    %8288 = vmatpush1.bf16.msra.mxu0 %v7802
    %8289 = vmatprep.subr.bf16.mxu0 %v7809
    %8290 = vmatpush1.bf16.msra.mxu0 %v7808
    %8291 = vmatprep.subr.bf16.mxu0 %v7815
    %8292 = vmatpush1.bf16.msra.mxu0 %v7814
    %8293 = vmatprep.subr.bf16.mxu0 %v7821
    %8294 = vmatpush1.bf16.msra.mxu0 %v7820
    %8295 = vmatprep.subr.bf16.mxu0 %v7827
    %8296 = vmatpush1.bf16.msra.mxu0 %v7826
    %8297 = vmatprep.mubr.bf16.mxu0 %v7729
    %8298 = vmatmul.mubr.bf16.gmra.mrb[0].mxu0 %v7728
    %v8299 = vpop.f32.mrb[0].mxu0
    %v8300 = vadd.f32 %v8095, %v8299
    %v8301 = vpop.f32.mrb[0].mxu0
    %v8302 = vadd.f32 %v8097, %v8301
    %v8303 = vpop.f32.mrb[0].mxu0
    %v8304 = vpop.f32.mrb[0].mxu0
    %8305 = vdwg.mxu0
    %8306 = vmatprep.subr.bf16.mxu0 %v7833
    %8307 = vmatpush1.bf16.msra.mxu0 %v7832
    %8308 = vmatprep.subr.bf16.mxu0 %v7839
    %8309 = vmatpush1.bf16.msra.mxu0 %v7838
    %8310 = vmatprep.subr.bf16.mxu0 %v7845
    %8311 = vmatpush1.bf16.msra.mxu0 %v7844
    %8312 = vmatprep.subr.bf16.mxu0 %v7851
    %8313 = vmatpush1.bf16.msra.mxu0 %v7850
    %8314 = vmatprep.subr.bf16.mxu0 %v7857
    %8315 = vmatpush1.bf16.msra.mxu0 %v7856
    %8316 = vmatprep.subr.bf16.mxu0 %v7863
    %8317 = vmatpush1.bf16.msra.mxu0 %v7862
    %8318 = vmatprep.subr.bf16.mxu0 %v7869
    %8319 = vmatpush1.bf16.msra.mxu0 %v7868
    %8320 = vmatprep.subr.bf16.mxu0 %v7875
    %8321 = vmatpush1.bf16.msra.mxu0 %v7874
    %8322 = vmatprep.subr.bf16.mxu0 %v7881
    %8323 = vmatpush1.bf16.msra.mxu0 %v7880
    %8324 = vmatprep.subr.bf16.mxu0 %v7887
    %8325 = vmatpush1.bf16.msra.mxu0 %v7886
    %8326 = vmatprep.subr.bf16.mxu0 %v7893
    %8327 = vmatpush1.bf16.msra.mxu0 %v7892
    %8328 = vmatprep.subr.bf16.mxu0 %v7899
    %8329 = vmatpush1.bf16.msra.mxu0 %v7898
    %8330 = vmatprep.subr.bf16.mxu0 %v7905
    %8331 = vmatpush1.bf16.msra.mxu0 %v7904
    %8332 = vmatprep.subr.bf16.mxu0 %v7911
    %8333 = vmatpush1.bf16.msra.mxu0 %v7910
    %8334 = vmatprep.subr.bf16.mxu0 %v7917
    %8335 = vmatpush1.bf16.msra.mxu0 %v7916
    %8336 = vmatprep.subr.bf16.mxu0 %v7923
    %8337 = vmatpush1.bf16.msra.mxu0 %v7922
    %8338 = vmatprep.mubr.bf16.mxu0 %v7731
    %8339 = vmatmul.mubr.bf16.gmra.mrb[0].mxu0 %v7730
    %v8340 = vpop.f32.mrb[0].mxu0
    %v8341 = vadd.f32 %v8300, %v8340
    %v8342 = vpop.f32.mrb[0].mxu0
    %v8343 = vadd.f32 %v8302, %v8342
    %v8344 = vpop.f32.mrb[0].mxu0
    %v8345 = vpop.f32.mrb[0].mxu0
    %8346 = vdwg.mxu0
    %v8347 = vld [vmem:[#allocation11] sm:$0x3f]
    %v8349 = vlaneseq
    %v8350 = vshrl.u32 %v8349, 7
    %v8351 = vsub.s32 0, %v8350
    %v8352 = vrot.slane %v8347, %v8351
    %v8353 = vlaneseq
    %v8354 = vshrl.u32 %v8353, 7
    %v8355 = vsub.s32 1, %v8354
    %v8356 = vrot.slane %v8347, %v8355
    %v8357 = vlaneseq
    %v8358 = vshrl.u32 %v8357, 7
    %v8359 = vsub.s32 2, %v8358
    %v8360 = vrot.slane %v8347, %v8359
    %v8361 = vlaneseq
    %v8362 = vshrl.u32 %v8361, 7
    %v8363 = vsub.s32 3, %v8362
    %v8364 = vrot.slane %v8347, %v8363
    %v8365 = vlaneseq
    %v8366 = vshrl.u32 %v8365, 7
    %v8367 = vsub.s32 4, %v8366
    %v8368 = vrot.slane %v8347, %v8367
    %v8369 = vlaneseq
    %v8370 = vshrl.u32 %v8369, 7
    %v8371 = vsub.s32 5, %v8370
    %v8372 = vrot.slane %v8347, %v8371
    %v8379 = vadd.f32 %v8177, %v8352
    %v8380 = vadd.f32 %v8179, %v8356
    %v8381 = vadd.f32 %v8259, %v8360
    %v8382 = vadd.f32 %v8261, %v8364
    %v8383 = vadd.f32 %v8341, %v8368
    %v8384 = vadd.f32 %v8343, %v8372
    %v8385 = vmax.f32 %v8379, 0.0
    %v8386 = vmax.f32 %v8380, 0.0
    %v8387 = vmax.f32 %v8381, 0.0
    %v8388 = vmax.f32 %v8382, 0.0
    %v8389 = vmax.f32 %v8383, 0.0
    %v8390 = vmax.f32 %v8384, 0.0
    %v8391 = vpack.c.bf16 %v8385, %v8385
    %v8392 = vpack.c.bf16 %v8386, %v8386
    %v8393 = vpack.c.bf16 %v8387, %v8387
    %v8394 = vpack.c.bf16 %v8388, %v8388
    %v8395 = vpack.c.bf16 %v8389, %v8389
    %v8396 = vpack.c.bf16 %v8390, %v8390
    %v8397 = vld [vmem:[#allocation12] sm:$0xf]
    %v8398 = vld [vmem:[#allocation12 + $0x4] sm:$0xf]
    %v8399 = vld [vmem:[#allocation12 + $0x8] sm:$0xf]
    %v8400 = vld [vmem:[#allocation12 + $0xc] sm:$0xf]
    %v8401 = vld [vmem:[#allocation12 + $0x10] sm:$0xf]
    %v8402 = vld [vmem:[#allocation12 + $0x14] sm:$0xf]
    %v8403 = vld [vmem:[#allocation12 + $0x18] sm:$0xf]
    %v8404 = vld [vmem:[#allocation12 + $0x1c] sm:$0xf]
    %v8405 = vld [vmem:[#allocation12 + $0x20] sm:$0xf]
    %v8406 = vld [vmem:[#allocation12 + $0x24] sm:$0xf]
    %v8407 = vld [vmem:[#allocation12 + $0x28] sm:$0xf]
    %v8408 = vld [vmem:[#allocation12 + $0x2c] sm:$0xf]
    %v8409 = vld [vmem:[#allocation12 + $0x30] sm:$0xf]
    %v8410 = vld [vmem:[#allocation12 + $0x34] sm:$0xf]
    %v8411 = vld [vmem:[#allocation12 + $0x38] sm:$0xf]
    %v8412 = vld [vmem:[#allocation12 + $0x3c] sm:$0xf]
    %v8413 = vld [vmem:[#allocation12 + $0x40] sm:$0xf]
    %v8414 = vld [vmem:[#allocation12 + $0x44] sm:$0xf]
    %v8415 = vld [vmem:[#allocation12 + $0x48] sm:$0xf]
    %v8416 = vld [vmem:[#allocation12 + $0x4c] sm:$0xf]
    %v8417 = vld [vmem:[#allocation12 + $0x50] sm:$0xf]
    %v8418 = vld [vmem:[#allocation12 + $0x54] sm:$0xf]
    %v8419 = vld [vmem:[#allocation12 + $0x58] sm:$0xf]
    %v8420 = vld [vmem:[#allocation12 + $0x5c] sm:$0xf]
    %v8421 = vld [vmem:[#allocation12 + $0x60] sm:$0xf]
    %v8422 = vld [vmem:[#allocation12 + $0x64] sm:$0xf]
    %v8423 = vld [vmem:[#allocation12 + $0x68] sm:$0xf]
    %v8424 = vld [vmem:[#allocation12 + $0x6c] sm:$0xf]
    %v8425 = vld [vmem:[#allocation12 + $0x70] sm:$0xf]
    %v8426 = vld [vmem:[#allocation12 + $0x74] sm:$0xf]
    %v8427 = vld [vmem:[#allocation12 + $0x78] sm:$0xf]
    %v8428 = vld [vmem:[#allocation12 + $0x7c] sm:$0xf]
    %v8429 = vld [vmem:[#allocation12 + $0x80] sm:$0xf]
    %v8430 = vld [vmem:[#allocation12 + $0x84] sm:$0xf]
    %v8431 = vld [vmem:[#allocation12 + $0x88] sm:$0xf]
    %v8432 = vld [vmem:[#allocation12 + $0x8c] sm:$0xf]
    %v8433 = vld [vmem:[#allocation12 + $0x90] sm:$0xf]
    %v8434 = vld [vmem:[#allocation12 + $0x94] sm:$0xf]
    %v8435 = vld [vmem:[#allocation12 + $0x98] sm:$0xf]
    %v8436 = vld [vmem:[#allocation12 + $0x9c] sm:$0xf]
    %v8437 = vld [vmem:[#allocation12 + $0xa0] sm:$0xf]
    %v8438 = vld [vmem:[#allocation12 + $0xa4] sm:$0xf]
    %v8439 = vld [vmem:[#allocation12 + $0xa8] sm:$0xf]
    %v8440 = vld [vmem:[#allocation12 + $0xac] sm:$0xf]
    %v8441 = vld [vmem:[#allocation12 + $0xb0] sm:$0xf]
    %v8442 = vld [vmem:[#allocation12 + $0xb4] sm:$0xf]
    %v8443 = vld [vmem:[#allocation12 + $0xb8] sm:$0xf]
    %v8444 = vld [vmem:[#allocation12 + $0xbc] sm:$0xf]
    %v8445 = vld [vmem:[#allocation12 + $0xc0] sm:$0xf]
    %v8446 = vld [vmem:[#allocation12 + $0xc4] sm:$0xf]
    %v8447 = vld [vmem:[#allocation12 + $0xc8] sm:$0xf]
    %v8448 = vld [vmem:[#allocation12 + $0xcc] sm:$0xf]
    %v8449 = vld [vmem:[#allocation12 + $0xd0] sm:$0xf]
    %v8450 = vld [vmem:[#allocation12 + $0xd4] sm:$0xf]
    %v8451 = vld [vmem:[#allocation12 + $0xd8] sm:$0xf]
    %v8452 = vld [vmem:[#allocation12 + $0xdc] sm:$0xf]
    %v8453 = vld [vmem:[#allocation12 + $0xe0] sm:$0xf]
    %v8454 = vld [vmem:[#allocation12 + $0xe4] sm:$0xf]
    %v8455 = vld [vmem:[#allocation12 + $0xe8] sm:$0xf]
    %v8456 = vld [vmem:[#allocation12 + $0xec] sm:$0xf]
    %v8457 = vld [vmem:[#allocation12 + $0xf0] sm:$0xf]
    %v8458 = vld [vmem:[#allocation12 + $0xf4] sm:$0xf]
    %v8459 = vld [vmem:[#allocation12 + $0xf8] sm:$0xf]
    %v8460 = vld [vmem:[#allocation12 + $0xfc] sm:$0xf]
    %v8461 = vld [vmem:[#allocation12 + $0x100] sm:$0xf]
    %v8462 = vld [vmem:[#allocation12 + $0x104] sm:$0xf]
    %v8463 = vld [vmem:[#allocation12 + $0x108] sm:$0xf]
    %v8464 = vld [vmem:[#allocation12 + $0x10c] sm:$0xf]
    %v8465 = vld [vmem:[#allocation12 + $0x110] sm:$0xf]
    %v8466 = vld [vmem:[#allocation12 + $0x114] sm:$0xf]
    %v8467 = vld [vmem:[#allocation12 + $0x118] sm:$0xf]
    %v8468 = vld [vmem:[#allocation12 + $0x11c] sm:$0xf]
    %v8469 = vld [vmem:[#allocation12 + $0x120] sm:$0xf]
    %v8470 = vld [vmem:[#allocation12 + $0x124] sm:$0xf]
    %v8471 = vld [vmem:[#allocation12 + $0x128] sm:$0xf]
    %v8472 = vld [vmem:[#allocation12 + $0x12c] sm:$0xf]
    %v8473 = vld [vmem:[#allocation12 + $0x130] sm:$0xf]
    %v8474 = vld [vmem:[#allocation12 + $0x134] sm:$0xf]
    %v8475 = vld [vmem:[#allocation12 + $0x138] sm:$0xf]
    %v8476 = vld [vmem:[#allocation12 + $0x13c] sm:$0xf]
    %v8477 = vld [vmem:[#allocation12 + $0x140] sm:$0xf]
    %v8478 = vld [vmem:[#allocation12 + $0x144] sm:$0xf]
    %v8479 = vld [vmem:[#allocation12 + $0x148] sm:$0xf]
    %v8480 = vld [vmem:[#allocation12 + $0x14c] sm:$0xf]
    %v8481 = vld [vmem:[#allocation12 + $0x150] sm:$0xf]
    %v8482 = vld [vmem:[#allocation12 + $0x154] sm:$0xf]
    %v8483 = vld [vmem:[#allocation12 + $0x158] sm:$0xf]
    %v8484 = vld [vmem:[#allocation12 + $0x15c] sm:$0xf]
    %v8485 = vld [vmem:[#allocation12 + $0x160] sm:$0xf]
    %v8486 = vld [vmem:[#allocation12 + $0x164] sm:$0xf]
    %v8487 = vld [vmem:[#allocation12 + $0x168] sm:$0xf]
    %v8488 = vld [vmem:[#allocation12 + $0x16c] sm:$0xf]
    %v8489 = vld [vmem:[#allocation12 + $0x170] sm:$0xf]
    %v8490 = vld [vmem:[#allocation12 + $0x174] sm:$0xf]
    %v8491 = vld [vmem:[#allocation12 + $0x178] sm:$0xf]
    %v8492 = vld [vmem:[#allocation12 + $0x17c] sm:$0xf]
    %v8493 = vld [vmem:[#allocation14] sm:$0x1]
    %v8495 = vlaneseq
    %v8496 = vshrl.u32 %v8495, 7
    %v8497 = vsub.s32 0, %v8496
    %v8498 = vrot.slane %v8493, %v8497
    %v8596 = vunpack.c.l.b16 %v8397
    %v8597 = vunpack.c.l.b16 %v8398
    %v8598 = vunpack.c.l.b16 %v8399
    %v8599 = vunpack.c.l.b16 %v8400
    %v8600 = vunpack.c.l.b16 %v8401
    %v8601 = vunpack.c.l.b16 %v8402
    %v8602 = vunpack.c.l.b16 %v8403
    %v8603 = vunpack.c.l.b16 %v8404
    %v8604 = vunpack.c.l.b16 %v8405
    %v8605 = vunpack.c.l.b16 %v8406
    %v8606 = vunpack.c.l.b16 %v8407
    %v8607 = vunpack.c.l.b16 %v8408
    %v8608 = vunpack.c.l.b16 %v8409
    %v8609 = vunpack.c.l.b16 %v8410
    %v8610 = vunpack.c.l.b16 %v8411
    %v8611 = vunpack.c.l.b16 %v8412
    %v8612 = vunpack.c.l.b16 %v8413
    %v8613 = vunpack.c.l.b16 %v8414
    %v8614 = vunpack.c.l.b16 %v8415
    %v8615 = vunpack.c.l.b16 %v8416
    %v8616 = vunpack.c.l.b16 %v8417
    %v8617 = vunpack.c.l.b16 %v8418
    %v8618 = vunpack.c.l.b16 %v8419
    %v8619 = vunpack.c.l.b16 %v8420
    %v8620 = vunpack.c.l.b16 %v8421
    %v8621 = vunpack.c.l.b16 %v8422
    %v8622 = vunpack.c.l.b16 %v8423
    %v8623 = vunpack.c.l.b16 %v8424
    %v8624 = vunpack.c.l.b16 %v8425
    %v8625 = vunpack.c.l.b16 %v8426
    %v8626 = vunpack.c.l.b16 %v8427
    %v8627 = vunpack.c.l.b16 %v8428
    %v8628 = vunpack.c.l.b16 %v8429
    %v8629 = vunpack.c.l.b16 %v8430
    %v8630 = vunpack.c.l.b16 %v8431
    %v8631 = vunpack.c.l.b16 %v8432
    %v8632 = vunpack.c.l.b16 %v8433
    %v8633 = vunpack.c.l.b16 %v8434
    %v8634 = vunpack.c.l.b16 %v8435
    %v8635 = vunpack.c.l.b16 %v8436
    %v8636 = vunpack.c.l.b16 %v8437
    %v8637 = vunpack.c.l.b16 %v8438
    %v8638 = vunpack.c.l.b16 %v8439
    %v8639 = vunpack.c.l.b16 %v8440
    %v8640 = vunpack.c.l.b16 %v8441
    %v8641 = vunpack.c.l.b16 %v8442
    %v8642 = vunpack.c.l.b16 %v8443
    %v8643 = vunpack.c.l.b16 %v8444
    %v8644 = vunpack.c.l.b16 %v8445
    %v8645 = vunpack.c.l.b16 %v8446
    %v8646 = vunpack.c.l.b16 %v8447
    %v8647 = vunpack.c.l.b16 %v8448
    %v8648 = vunpack.c.l.b16 %v8449
    %v8649 = vunpack.c.l.b16 %v8450
    %v8650 = vunpack.c.l.b16 %v8451
    %v8651 = vunpack.c.l.b16 %v8452
    %v8652 = vunpack.c.l.b16 %v8453
    %v8653 = vunpack.c.l.b16 %v8454
    %v8654 = vunpack.c.l.b16 %v8455
    %v8655 = vunpack.c.l.b16 %v8456
    %v8656 = vunpack.c.l.b16 %v8457
    %v8657 = vunpack.c.l.b16 %v8458
    %v8658 = vunpack.c.l.b16 %v8459
    %v8659 = vunpack.c.l.b16 %v8460
    %v8660 = vunpack.c.l.b16 %v8461
    %v8661 = vunpack.c.l.b16 %v8462
    %v8662 = vunpack.c.l.b16 %v8463
    %v8663 = vunpack.c.l.b16 %v8464
    %v8664 = vunpack.c.l.b16 %v8465
    %v8665 = vunpack.c.l.b16 %v8466
    %v8666 = vunpack.c.l.b16 %v8467
    %v8667 = vunpack.c.l.b16 %v8468
    %v8668 = vunpack.c.l.b16 %v8469
    %v8669 = vunpack.c.l.b16 %v8470
    %v8670 = vunpack.c.l.b16 %v8471
    %v8671 = vunpack.c.l.b16 %v8472
    %v8672 = vunpack.c.l.b16 %v8473
    %v8673 = vunpack.c.l.b16 %v8474
    %v8674 = vunpack.c.l.b16 %v8475
    %v8675 = vunpack.c.l.b16 %v8476
    %v8676 = vunpack.c.l.b16 %v8477
    %v8677 = vunpack.c.l.b16 %v8478
    %v8678 = vunpack.c.l.b16 %v8479
    %v8679 = vunpack.c.l.b16 %v8480
    %v8680 = vunpack.c.l.b16 %v8481
    %v8681 = vunpack.c.l.b16 %v8482
    %v8682 = vunpack.c.l.b16 %v8483
    %v8683 = vunpack.c.l.b16 %v8484
    %v8684 = vunpack.c.l.b16 %v8485
    %v8685 = vunpack.c.l.b16 %v8486
    %v8686 = vunpack.c.l.b16 %v8487
    %v8687 = vunpack.c.l.b16 %v8488
    %v8688 = vunpack.c.l.b16 %v8489
    %v8689 = vunpack.c.l.b16 %v8490
    %v8690 = vunpack.c.l.b16 %v8491
    %v8691 = vunpack.c.l.b16 %v8492
    %v8692 = vpack.c.b16 %v8597, %v8596
    %v8693 = vpack.c.b16 %v8599, %v8598
    %v8694 = vpack.c.b16 %v8601, %v8600
    %v8695 = vpack.c.b16 %v8603, %v8602
    %v8696 = vpack.c.b16 %v8605, %v8604
    %v8697 = vpack.c.b16 %v8607, %v8606
    %v8698 = vpack.c.b16 %v8609, %v8608
    %v8699 = vpack.c.b16 %v8611, %v8610
    %v8700 = vpack.c.b16 %v8613, %v8612
    %v8701 = vpack.c.b16 %v8615, %v8614
    %v8702 = vpack.c.b16 %v8617, %v8616
    %v8703 = vpack.c.b16 %v8619, %v8618
    %v8704 = vpack.c.b16 %v8621, %v8620
    %v8705 = vpack.c.b16 %v8623, %v8622
    %v8706 = vpack.c.b16 %v8625, %v8624
    %v8707 = vpack.c.b16 %v8627, %v8626
    %v8708 = vpack.c.b16 %v8629, %v8628
    %v8709 = vpack.c.b16 %v8631, %v8630
    %v8710 = vpack.c.b16 %v8633, %v8632
    %v8711 = vpack.c.b16 %v8635, %v8634
    %v8712 = vpack.c.b16 %v8637, %v8636
    %v8713 = vpack.c.b16 %v8639, %v8638
    %v8714 = vpack.c.b16 %v8641, %v8640
    %v8715 = vpack.c.b16 %v8643, %v8642
    %v8716 = vpack.c.b16 %v8645, %v8644
    %v8717 = vpack.c.b16 %v8647, %v8646
    %v8718 = vpack.c.b16 %v8649, %v8648
    %v8719 = vpack.c.b16 %v8651, %v8650
    %v8720 = vpack.c.b16 %v8653, %v8652
    %v8721 = vpack.c.b16 %v8655, %v8654
    %v8722 = vpack.c.b16 %v8657, %v8656
    %v8723 = vpack.c.b16 %v8659, %v8658
    %v8724 = vpack.c.b16 %v8661, %v8660
    %v8725 = vpack.c.b16 %v8663, %v8662
    %v8726 = vpack.c.b16 %v8665, %v8664
    %v8727 = vpack.c.b16 %v8667, %v8666
    %v8728 = vpack.c.b16 %v8669, %v8668
    %v8729 = vpack.c.b16 %v8671, %v8670
    %v8730 = vpack.c.b16 %v8673, %v8672
    %v8731 = vpack.c.b16 %v8675, %v8674
    %v8732 = vpack.c.b16 %v8677, %v8676
    %v8733 = vpack.c.b16 %v8679, %v8678
    %v8734 = vpack.c.b16 %v8681, %v8680
    %v8735 = vpack.c.b16 %v8683, %v8682
    %v8736 = vpack.c.b16 %v8685, %v8684
    %v8737 = vpack.c.b16 %v8687, %v8686
    %v8738 = vpack.c.b16 %v8689, %v8688
    %v8739 = vpack.c.b16 %v8691, %v8690
    %8788 = vmatprep.subr.bf16.mxu0 0
    %8789 = vmatpush1.bf16.msra.mxu0 %v8692
    %8790 = vmatprep.subr.bf16.mxu0 0
    %8791 = vmatpush1.bf16.msra.mxu0 %v8693
    %8792 = vmatprep.subr.bf16.mxu0 0
    %8793 = vmatpush1.bf16.msra.mxu0 %v8694
    %8794 = vmatprep.subr.bf16.mxu0 0
    %8795 = vmatpush1.bf16.msra.mxu0 %v8695
    %8796 = vmatprep.subr.bf16.mxu0 0
    %8797 = vmatpush1.bf16.msra.mxu0 %v8696
    %8798 = vmatprep.subr.bf16.mxu0 0
    %8799 = vmatpush1.bf16.msra.mxu0 %v8697
    %8800 = vmatprep.subr.bf16.mxu0 0
    %8801 = vmatpush1.bf16.msra.mxu0 %v8698
    %8802 = vmatprep.subr.bf16.mxu0 0
    %8803 = vmatpush1.bf16.msra.mxu0 %v8699
    %8804 = vmatprep.subr.bf16.mxu0 0
    %8805 = vmatpush1.bf16.msra.mxu0 %v8700
    %8806 = vmatprep.subr.bf16.mxu0 0
    %8807 = vmatpush1.bf16.msra.mxu0 %v8701
    %8808 = vmatprep.subr.bf16.mxu0 0
    %8809 = vmatpush1.bf16.msra.mxu0 %v8702
    %8810 = vmatprep.subr.bf16.mxu0 0
    %8811 = vmatpush1.bf16.msra.mxu0 %v8703
    %8812 = vmatprep.subr.bf16.mxu0 0
    %8813 = vmatpush1.bf16.msra.mxu0 %v8704
    %8814 = vmatprep.subr.bf16.mxu0 0
    %8815 = vmatpush1.bf16.msra.mxu0 %v8705
    %8816 = vmatprep.subr.bf16.mxu0 0
    %8817 = vmatpush1.bf16.msra.mxu0 %v8706
    %8818 = vmatprep.subr.bf16.mxu0 0
    %8819 = vmatpush1.bf16.msra.mxu0 %v8707
    %8820 = vmatprep.mubr.bf16.mxu0 %v8392
    %8821 = vmatmul.mubr.bf16.gmra.mrb[0].mxu0 %v8391
    %v8822 = vpop.f32.mrb[0].mxu0
    %v8823 = vadd.f32 %v8498, %v8822
    %v8824 = vpop.f32.mrb[0].mxu0
    %v8825 = vpop.f32.mrb[0].mxu0
    %v8826 = vpop.f32.mrb[0].mxu0
    %8827 = vdwg.mxu0
    %8828 = vmatprep.subr.bf16.mxu0 0
    %8829 = vmatpush1.bf16.msra.mxu0 %v8708
    %8830 = vmatprep.subr.bf16.mxu0 0
    %8831 = vmatpush1.bf16.msra.mxu0 %v8709
    %8832 = vmatprep.subr.bf16.mxu0 0
    %8833 = vmatpush1.bf16.msra.mxu0 %v8710
    %8834 = vmatprep.subr.bf16.mxu0 0
    %8835 = vmatpush1.bf16.msra.mxu0 %v8711
    %8836 = vmatprep.subr.bf16.mxu0 0
    %8837 = vmatpush1.bf16.msra.mxu0 %v8712
    %8838 = vmatprep.subr.bf16.mxu0 0
    %8839 = vmatpush1.bf16.msra.mxu0 %v8713
    %8840 = vmatprep.subr.bf16.mxu0 0
    %8841 = vmatpush1.bf16.msra.mxu0 %v8714
    %8842 = vmatprep.subr.bf16.mxu0 0
    %8843 = vmatpush1.bf16.msra.mxu0 %v8715
    %8844 = vmatprep.subr.bf16.mxu0 0
    %8845 = vmatpush1.bf16.msra.mxu0 %v8716
    %8846 = vmatprep.subr.bf16.mxu0 0
    %8847 = vmatpush1.bf16.msra.mxu0 %v8717
    %8848 = vmatprep.subr.bf16.mxu0 0
    %8849 = vmatpush1.bf16.msra.mxu0 %v8718
    %8850 = vmatprep.subr.bf16.mxu0 0
    %8851 = vmatpush1.bf16.msra.mxu0 %v8719
    %8852 = vmatprep.subr.bf16.mxu0 0
    %8853 = vmatpush1.bf16.msra.mxu0 %v8720
    %8854 = vmatprep.subr.bf16.mxu0 0
    %8855 = vmatpush1.bf16.msra.mxu0 %v8721
    %8856 = vmatprep.subr.bf16.mxu0 0
    %8857 = vmatpush1.bf16.msra.mxu0 %v8722
    %8858 = vmatprep.subr.bf16.mxu0 0
    %8859 = vmatpush1.bf16.msra.mxu0 %v8723
    %8860 = vmatprep.mubr.bf16.mxu0 %v8394
    %8861 = vmatmul.mubr.bf16.gmra.mrb[0].mxu0 %v8393
    %v8862 = vpop.f32.mrb[0].mxu0
    %v8863 = vadd.f32 %v8823, %v8862
    %v8864 = vpop.f32.mrb[0].mxu0
    %v8865 = vpop.f32.mrb[0].mxu0
    %v8866 = vpop.f32.mrb[0].mxu0
    %8867 = vdwg.mxu0
    %8868 = vmatprep.subr.bf16.mxu0 0
    %8869 = vmatpush1.bf16.msra.mxu0 %v8724
    %8870 = vmatprep.subr.bf16.mxu0 0
    %8871 = vmatpush1.bf16.msra.mxu0 %v8725
    %8872 = vmatprep.subr.bf16.mxu0 0
    %8873 = vmatpush1.bf16.msra.mxu0 %v8726
    %8874 = vmatprep.subr.bf16.mxu0 0
    %8875 = vmatpush1.bf16.msra.mxu0 %v8727
    %8876 = vmatprep.subr.bf16.mxu0 0
    %8877 = vmatpush1.bf16.msra.mxu0 %v8728
    %8878 = vmatprep.subr.bf16.mxu0 0
    %8879 = vmatpush1.bf16.msra.mxu0 %v8729
    %8880 = vmatprep.subr.bf16.mxu0 0
    %8881 = vmatpush1.bf16.msra.mxu0 %v8730
    %8882 = vmatprep.subr.bf16.mxu0 0
    %8883 = vmatpush1.bf16.msra.mxu0 %v8731
    %8884 = vmatprep.subr.bf16.mxu0 0
    %8885 = vmatpush1.bf16.msra.mxu0 %v8732
    %8886 = vmatprep.subr.bf16.mxu0 0
    %8887 = vmatpush1.bf16.msra.mxu0 %v8733
    %8888 = vmatprep.subr.bf16.mxu0 0
    %8889 = vmatpush1.bf16.msra.mxu0 %v8734
    %8890 = vmatprep.subr.bf16.mxu0 0
    %8891 = vmatpush1.bf16.msra.mxu0 %v8735
    %8892 = vmatprep.subr.bf16.mxu0 0
    %8893 = vmatpush1.bf16.msra.mxu0 %v8736
    %8894 = vmatprep.subr.bf16.mxu0 0
    %8895 = vmatpush1.bf16.msra.mxu0 %v8737
    %8896 = vmatprep.subr.bf16.mxu0 0
    %8897 = vmatpush1.bf16.msra.mxu0 %v8738
    %8898 = vmatprep.subr.bf16.mxu0 0
    %8899 = vmatpush1.bf16.msra.mxu0 %v8739
    %8900 = vmatprep.mubr.bf16.mxu0 %v8396
    %8901 = vmatmul.mubr.bf16.gmra.mrb[0].mxu0 %v8395
    %v8902 = vpop.f32.mrb[0].mxu0
    %v8903 = vadd.f32 %v8863, %v8902
    %v8904 = vpop.f32.mrb[0].mxu0
    %v8905 = vpop.f32.mrb[0].mxu0
    %v8906 = vpop.f32.mrb[0].mxu0
    %8907 = vdwg.mxu0
    %8908 = vst [vmem:[%s10] sm:$0xff] %v8903
    // Predicated region
    $region54: #{critic_forward.1} parent=1 // pred_check
      _
    $region55: #{critic_forward.1} parent=1 // pred_check_branch
      %8910 = sbr.rel (0) target = $region57
    $region56: #{critic_forward.1} parent=1 // pred_region
      _
    $region57: #{critic_forward.1} parent=1 // pred_fallthru
      _
    // Predicated region
    $region58: #{critic_forward.1} parent=1 // pred_check
      _
    $region59: #{critic_forward.1} parent=1 // pred_check_branch
      %8912 = sbr.rel (0) target = $region61
    $region60: #{critic_forward.1} parent=1 // pred_region
      _
    $region61: #{critic_forward.1} parent=1 // pred_fallthru
      _
    %8913 = vsyncpa [#allocation8], 1
    %8914 = vsyncpa [#allocation10], 1
    %8915 = vsyncpa [#allocation13], 1
  %8916 = vsyncmov [#allocation6]
  %s8917 = vpop.sfrf %8916
  %p8918 = scmp.eq.s32.totalorder %s8917, 0
  %p8919 = pneg %p8918
  %8921 = shalt.err (%p8919)
  %s8922 = scalar_lea.sflag [#allocation6], 1
  %8923 = vsyncmov %s8922
  %s8924 = vpop.sfrf %8923
  %p8925 = scmp.eq.s32.totalorder %s8924, 0
  %p8926 = pneg %p8925
  %8928 = shalt.err (%p8926)
  %s8929 = scalar_lea.sflag [#allocation6], 2
  %8930 = vsyncmov %s8929
  %s8931 = vpop.sfrf %8930
  %p8932 = scmp.eq.s32.totalorder %s8931, 0
  %p8933 = pneg %p8932
  %8935 = shalt.err (%p8933)

</llo_original>
